<compile_context>
chip_gen: v7x
topology: tpu7x:2x2x1
jax: 0.10.0
libtpu: 0.0.40
codegen_flags: <defaults>
</compile_context>

<pallas_src>
import functools

import jax
import jax.numpy as jnp
from jax.experimental import pallas as pl
from jax.experimental.pallas import tpu as pltpu


# ----------------------------------------------------------------------------
# BlockSpec helpers (single grid step, whole-array blocks — everything is tiny)
# ----------------------------------------------------------------------------
def _full_spec(shape):
    nd = len(shape)
    return pl.BlockSpec(shape, lambda i, _nd=nd: (0,) * _nd)


def _specs(arrays):
    return [_full_spec(a.shape) for a in arrays]


# ----------------------------------------------------------------------------
# The single fused kernel
# ----------------------------------------------------------------------------
def _fused_kernel(
    # --- GIN branch inputs (VMEM) ---
    x_ref, ahat_ref, pool_ref, w1a_ref, w1r_ref, b1_ref, w2_ref, b2_ref,
    bns_ref, bnt_ref, fcgw_ref, fcgb_ref,
    # --- LSTM branch inputs (VMEM) ---
    emb_ref, wih_ref, whh_ref, lb_ref, h0_ref, c0_ref, fcxw_ref, fcxb_ref,
    # --- head biases (VMEM) ---
    fc1b_ref, fc2b_ref, outb_ref,
    # --- head weights (HBM, manual DMA) ---
    fc1w_hbm, fc2w_hbm, outw_hbm,
    # --- output ---
    o_ref,
    # --- scratch ---
    fc1w_v, fc2w_v, outw_v, sem,
    *, dim, T, B, H, od):
    f32 = jnp.float32
    bf16 = jnp.bfloat16

    # Kick off the head-weight DMAs immediately; they complete under the
    # branch compute below (P4-style manual copy, single-buffered).
    cp1 = pltpu.make_async_copy(fc1w_hbm, fc1w_v, sem.at[0]); cp1.start()
    cp2 = pltpu.make_async_copy(fc2w_hbm, fc2w_v, sem.at[1]); cp2.start()
    cp3 = pltpu.make_async_copy(outw_hbm, outw_v, sem.at[2]); cp3.start()

    # ------------------------- GIN / drug branch ----------------------------
    a_hat = ahat_ref[...]            # (N, N)  = I + A
    pool = pool_ref[...]             # (G, N)  one-hot global_add_pool
    h = x_ref[...]                   # (N, F_pad) zero-padded features
    acc_g = None
    for i in range(5):               # static unroll over the 5 GIN blocks
        w1 = w1a_ref[...] if i == 0 else w1r_ref[i - 1]
        # (A_hat @ h) @ W1 == A_hat @ (h @ W1): keep the narrow (N, dim) form.
        z = jnp.dot(a_hat, jnp.dot(h, w1, preferred_element_type=f32),
                    preferred_element_type=f32) + b1_ref[i]
        z = jnp.maximum(z, 0.0)                                    # MLP ReLU
        z = jnp.dot(z, w2_ref[i], preferred_element_type=f32) + b2_ref[i]
        z = jnp.maximum(z, 0.0)                                    # outer F.relu
        h = z * bns_ref[i] + bnt_ref[i]                            # eval BN
        pooled = jnp.dot(pool, h, preferred_element_type=f32)      # (G, dim)
        # concat([h1..h5]) @ fc_g1_w == sum_i pooled_i @ fc_g1_w[i*dim:(i+1)*dim]
        contrib = jnp.dot(pooled, fcgw_ref[i * dim:(i + 1) * dim, :],
                          preferred_element_type=f32)              # (G, od)
        acc_g = contrib if acc_g is None else acc_g + contrib
    xg = jnp.maximum(acc_g + fcgb_ref[...], 0.0)                   # fc_g1 + ReLU

    # ------------------------ LSTM / protein branch -------------------------
    # Input projections for BOTH directions and ALL timesteps hoisted out of
    # the recurrence: emb_cat row block t is [emb(t) || emb(T-1-t)], wih is
    # [wih_fwd ; wih_bwd] stacked on rows, gate columns lane-interleaved
    # [i_f i_b f_f f_b g_f g_b o_f o_b] (8H = 128 lanes).
    whh = whh_ref[...]                                             # (2H, 8H)
    x_proj = (jnp.dot(emb_ref[...], wih_ref[...], preferred_element_type=f32)
              + lb_ref[...])                                       # (T*B, 8H)
    hs = h0_ref[...]                                               # (B, 2H)
    cs = c0_ref[...]                                               # (B, 2H)
    acc_t = None
    for t in range(T):               # static unroll (T small & fixed)
        gates = (x_proj[t * B:(t + 1) * B, :]
                 + jnp.dot(hs, whh, preferred_element_type=f32))   # (B, 8H)
        sig = jax.nn.sigmoid(gates)  # one EUP pass over the full vreg
        tnh = jnp.tanh(gates)        # one EUP pass over the full vreg
        i_g = sig[:, 0:2 * H]
        f_g = sig[:, 2 * H:4 * H]
        g_g = tnh[:, 4 * H:6 * H]
        o_g = sig[:, 6 * H:8 * H]
        cs = f_g * cs + i_g * g_g
        hs = o_g * jnp.tanh(cs)
        # fc_xt over the flattened (B, T*2H) LSTM output, accumulated per step
        # against the pre-reordered per-step weight block (2H, od).
        contrib = jnp.dot(hs, fcxw_ref[t], preferred_element_type=f32)
        acc_t = contrib if acc_t is None else acc_t + contrib
    xt = acc_t + fcxb_ref[...]                                     # (B, od)

    # ------------------------------- head ------------------------------------
    cp1.wait(); cp2.wait(); cp3.wait()       # head weights now resident in VMEM
    # fc1 without concat: xc = [xg || xt]  =>  xg @ W1[:od] + xt @ W1[od:]
    h1 = (jnp.dot(xg.astype(bf16), fc1w_v[0:od, :], preferred_element_type=f32)
          + jnp.dot(xt.astype(bf16), fc1w_v[od:2 * od, :], preferred_element_type=f32)
          + fc1b_ref[...])
    h1 = jnp.maximum(h1, 0.0)
    h2 = (jnp.dot(h1.astype(bf16), fc2w_v[...], preferred_element_type=f32)
          + fc2b_ref[...])
    h2 = jnp.maximum(h2, 0.0)
    o_ref[...] = (jnp.dot(h2.astype(bf16), outw_v[...], preferred_element_type=f32)
                  + outb_ref[...])           # lane-dense (B, 128); col 0 is `out`


def fused_forward(params, x_pad, a_hat, pool_mat, emb_cat, h0, c0, T, B):
    gin = params["gin"]
    lstm = params["lstm"]
    dim = gin["w2"].shape[-1]
    od = params["fc_g1_w"].shape[1]
    H = lstm["whh"].shape[0] // 2
    out_pad_dim = params["out_w_bf16"].shape[1]

    vmem_ins = (
        x_pad, a_hat, pool_mat,
        gin["w1_0"], gin["w1_rest"], gin["b1"], gin["w2"], gin["b2"],
        gin["bn_scale"], gin["bn_shift"],
        params["fc_g1_w"], params["fc_g1_b"].reshape(1, od),
        emb_cat, lstm["wih"], lstm["whh"], lstm["bias"], h0, c0,
        params["fc_xt_w_step"], params["fc_xt_b"].reshape(1, od),
        params["fc1_b"].reshape(1, -1), params["fc2_b"].reshape(1, -1),
        params["out_b_pad"].reshape(1, -1),
    )
    hbm_ins = (params["fc1_w_bf16"], params["fc2_w_bf16"], params["out_w_bf16"])

    return pl.pallas_call(
        functools.partial(_fused_kernel, dim=dim, T=T, B=B, H=H, od=od),
        out_shape=jax.ShapeDtypeStruct((B, out_pad_dim), jnp.float32),
        grid=(1,),
        in_specs=_specs(vmem_ins) + [pl.BlockSpec(memory_space=pl.ANY)] * 3,
        out_specs=_full_spec((B, out_pad_dim)),
        scratch_shapes=[
            pltpu.VMEM(params["fc1_w_bf16"].shape, jnp.bfloat16),
            pltpu.VMEM(params["fc2_w_bf16"].shape, jnp.bfloat16),
            pltpu.VMEM(params["out_w_bf16"].shape, jnp.bfloat16),
            pltpu.SemaphoreType.DMA((3,)),
        ],
        compiler_params=pltpu.CompilerParams(
            dimension_semantics=("arbitrary",)),
    )(*vmem_ins, *hbm_ins)


# ----------------------------------------------------------------------------
# Parameters
# ----------------------------------------------------------------------------
def init_params(key, num_feature_xd=78, dim=32, embed_dim=16, seq_len=8,
                output_dim=128, num_feature_xt=25, n_output=1):
    keys = iter(jax.random.split(key, 64))

    def lin(fan_in, fan_out):
        k1, k2 = jax.random.split(next(keys))
        bound = 1.0 / jnp.sqrt(jnp.float32(fan_in))
        w = jax.random.uniform(k1, (fan_in, fan_out), jnp.float32, -bound, bound)
        b = jax.random.uniform(k2, (fan_out,), jnp.float32, -bound, bound)
        return w, b

    params = {}
    bn_eps = 1e-5
    f_pad = ((num_feature_xd + 127) // 128) * 128     # lane-dense feature dim

    # 5 GIN blocks: MLP = Linear(in, 32) -> ReLU -> Linear(32, 32); eval-mode BN.
    w1_list, b1_list, w2_list, b2_list = [], [], [], []
    in_dim = num_feature_xd
    for _ in range(5):
        w1, b1 = lin(in_dim, dim)
        w2, b2 = lin(dim, dim)
        w1_list.append(w1); b1_list.append(b1)
        w2_list.append(w2); b2_list.append(b2)
        in_dim = dim
    w1_0_pad = jnp.zeros((f_pad, dim), jnp.float32).at[:num_feature_xd].set(w1_list[0])
    params["gin"] = dict(
        w1_0=w1_0_pad,                                    # (F_pad, dim)
        w1_rest=jnp.stack(w1_list[1:]),                   # (4, dim, dim)
        b1=jnp.stack(b1_list)[:, None, :],                # (5, 1, dim)
        w2=jnp.stack(w2_list),                            # (5, dim, dim)
        b2=jnp.stack(b2_list)[:, None, :],                # (5, 1, dim)
        # fresh-init eval BN: mean=0, var=1, gamma=1, beta=0
        bn_scale=jnp.full((5, 1, dim), 1.0 / jnp.sqrt(1.0 + bn_eps), jnp.float32),
        bn_shift=jnp.zeros((5, 1, dim), jnp.float32),
    )
    params["fc_g1_w"], params["fc_g1_b"] = lin(dim * 5, output_dim)

    # Embedding table.
    params["emb"] = jax.random.normal(next(keys), (num_feature_xt + 1, embed_dim),
                                      jnp.float32)

    # Single-layer bidirectional LSTM (PyTorch gate order i,f,g,o), combined
    # into one block-diagonal weight set with lane-interleaved gates:
    #   columns = [i_f i_b f_f f_b g_f g_b o_f o_b], each H wide (8H = 128 lanes).
    H = embed_dim
    E = embed_dim

    def lstm_dir():
        kw1, kw2, kb1, kb2 = jax.random.split(next(keys), 4)
        bound = 1.0 / jnp.sqrt(jnp.float32(H))
        wih_t = jax.random.uniform(kw1, (E, 4 * H), jnp.float32, -bound, bound)
        whh_t = jax.random.uniform(kw2, (H, 4 * H), jnp.float32, -bound, bound)
        b_ih = jax.random.uniform(kb1, (4 * H,), jnp.float32, -bound, bound)
        b_hh = jax.random.uniform(kb2, (4 * H,), jnp.float32, -bound, bound)
        return dict(wih_t=wih_t, whh_t=whh_t, bias=b_ih + b_hh)

    fwd, bwd = lstm_dir(), lstm_dir()
    wih_c = jnp.zeros((2 * E, 8 * H), jnp.float32)
    whh_c = jnp.zeros((2 * H, 8 * H), jnp.float32)
    bias_c = jnp.zeros((8 * H,), jnp.float32)
    for gi in range(4):                              # gate i,f,g,o
        cf = slice(gi * 2 * H, gi * 2 * H + H)       # fwd gate columns
        cb = slice(gi * 2 * H + H, (gi + 1) * 2 * H)  # bwd gate columns
        sg = slice(gi * H, (gi + 1) * H)             # source gate slice
        wih_c = wih_c.at[0:E, cf].set(fwd["wih_t"][:, sg])
        wih_c = wih_c.at[E:2 * E, cb].set(bwd["wih_t"][:, sg])
        whh_c = whh_c.at[0:H, cf].set(fwd["whh_t"][:, sg])
        whh_c = whh_c.at[H:2 * H, cb].set(bwd["whh_t"][:, sg])
        bias_c = bias_c.at[cf].set(fwd["bias"][sg])
        bias_c = bias_c.at[cb].set(bwd["bias"][sg])
    params["lstm"] = dict(wih=wih_c, whh=whh_c, bias=bias_c.reshape(1, 8 * H))

    # fc_xt over the flattened (B, T*2H) LSTM output, stored as a per-timestep
    # reordered copy: step t of the combined recurrence holds
    # [h_fwd(pos t) || h_bwd(pos T-1-t)], so its weight block concatenates rows
    # [2H*t : 2H*t+H] and [2H*(T-1-t)+H : 2H*(T-1-t)+2H].
    fc_xt_w, params["fc_xt_b"] = lin(seq_len * 2 * embed_dim, output_dim)
    step_blocks = []
    for t in range(seq_len):
        rb = seq_len - 1 - t
        step_blocks.append(jnp.concatenate(
            [fc_xt_w[2 * H * t:2 * H * t + H, :],
             fc_xt_w[2 * H * rb + H:2 * H * rb + 2 * H, :]], axis=0))
    params["fc_xt_w_step"] = jnp.stack(step_blocks)   # (T, 2H, output_dim)

    # Head: fc1/fc2/out stored bf16 (weight-streaming bound); out padded to a
    # lane-dense 128-column slab.
    fc1_w, params["fc1_b"] = lin(2 * output_dim, 1024)
    fc2_w, params["fc2_b"] = lin(1024, 512)
    out_w, out_b = lin(512, n_output)
    out_pad = 128
    params["fc1_w_bf16"] = fc1_w.astype(jnp.bfloat16)
    params["fc2_w_bf16"] = fc2_w.astype(jnp.bfloat16)
    params["out_w_bf16"] = (jnp.zeros((512, out_pad), jnp.bfloat16)
                            .at[:, :n_output].set(out_w.astype(jnp.bfloat16)))
    params["out_b_pad"] = jnp.zeros((out_pad,), jnp.float32).at[:n_output].set(out_b)
    params["n_output"] = n_output
    return params


# ----------------------------------------------------------------------------
# Forward
# ----------------------------------------------------------------------------
def resgin_forward(params, x, edge_index, batch, num_graphs, target, hidden, cell):
    N, F = x.shape
    f_pad = params["gin"]["w1_0"].shape[0]
    src, dst = edge_index[0], edge_index[1]
    # Dense adjacency (messages flow source -> target): A[i, j] counts edges j->i.
    # GINConv(eps=0): MLP((1+eps)*x + sum_{j->i} x_j) == MLP((I + A) @ x).
    adj = jnp.zeros((N, N), jnp.float32).at[dst, src].add(1.0)
    a_hat = adj + jnp.eye(N, dtype=jnp.float32)
    # global_add_pool as one-hot pooling matmul (G, N).
    pool_mat = (batch[None, :] == jnp.arange(num_graphs)[:, None]).astype(jnp.float32)
    x_pad = jnp.pad(x.astype(jnp.float32), ((0, 0), (0, f_pad - F)))

    # Protein-branch glue: embedding gather + fwd/bwd time-pairing, time-major.
    emb = params["emb"][target]                        # (B, T, E)
    B, T, E = emb.shape
    emb_t = jnp.transpose(emb, (1, 0, 2))              # (T, B, E)
    emb_cat = jnp.concatenate([emb_t, emb_t[::-1]], axis=-1)   # step t: [x(t)||x(T-1-t)]
    emb_cat = emb_cat.reshape(T * B, 2 * E)
    h0 = jnp.concatenate([hidden[0], hidden[1]], axis=1)       # (B, 2H) [fwd || bwd]
    c0 = jnp.concatenate([cell[0], cell[1]], axis=1)

    assert num_graphs == B, "graph batch must equal protein batch for torch.cat"

    out_pad = fused_forward(params, x_pad, a_hat, pool_mat, emb_cat, h0, c0, T, B)
    return out_pad[:, :params["n_output"]]             # (B, n_output)


# ----------------------------------------------------------------------------
if __name__ == "__main__":
    key = jax.random.PRNGKey(0)
    pkey, xkey, e1key, e2key, tkey = jax.random.split(key, 5)

    # Small deterministic inputs:
    #   graph: 20 nodes (10 per graph, 2 graphs), 78 node features, 40 edges
    #   protein: batch 2, sequence length 8, embed_dim 16, num_layer 1
    N_NODES, N_FEAT, N_GRAPHS = 20, 78, 2
    SEQ_LEN, EMBED_DIM, NUM_LAYER = 8, 16, 1
    N_EDGES = 40

    params = init_params(pkey, num_feature_xd=N_FEAT, embed_dim=EMBED_DIM,
                         seq_len=SEQ_LEN)

    x = jax.random.normal(xkey, (N_NODES, N_FEAT), jnp.float32)
    src = jax.random.randint(e1key, (N_EDGES,), 0, N_NODES)
    dst = jax.random.randint(e2key, (N_EDGES,), 0, N_NODES)
    edge_index = jnp.stack([src, dst]).astype(jnp.int32)
    batch = jnp.concatenate([jnp.zeros(10, jnp.int32), jnp.ones(10, jnp.int32)])
    target = jax.random.randint(tkey, (N_GRAPHS, SEQ_LEN), 0, 26).astype(jnp.int32)
    hidden = jnp.zeros((2 * NUM_LAYER, N_GRAPHS, EMBED_DIM), jnp.float32)
    cell = jnp.zeros((2 * NUM_LAYER, N_GRAPHS, EMBED_DIM), jnp.float32)

    out = resgin_forward(params, x, edge_index, batch, N_GRAPHS, target, hidden, cell)
    jax.block_until_ready(out)
    assert out.shape == (N_GRAPHS, 1) and out.dtype == jnp.float32
    assert bool(jnp.all(jnp.isfinite(out)))
    print("KERNEL_OK")
</pallas_src>

<mosaic_0001>
module attributes {stable_mosaic.version = 11 : i64} {
  func.func @_fused_kernel(%arg0: i32, %arg1: memref<20x128xf32, #tpu.memory_space<vmem>>, %arg2: memref<20x20xf32, #tpu.memory_space<vmem>>, %arg3: memref<2x20xf32, #tpu.memory_space<vmem>>, %arg4: memref<128x32xf32, #tpu.memory_space<vmem>>, %arg5: memref<4x32x32xf32, #tpu.memory_space<vmem>>, %arg6: memref<5x1x32xf32, #tpu.memory_space<vmem>>, %arg7: memref<5x32x32xf32, #tpu.memory_space<vmem>>, %arg8: memref<5x1x32xf32, #tpu.memory_space<vmem>>, %arg9: memref<5x1x32xf32, #tpu.memory_space<vmem>>, %arg10: memref<5x1x32xf32, #tpu.memory_space<vmem>>, %arg11: memref<160x128xf32, #tpu.memory_space<vmem>>, %arg12: memref<1x128xf32, #tpu.memory_space<vmem>>, %arg13: memref<16x32xf32, #tpu.memory_space<vmem>>, %arg14: memref<32x128xf32, #tpu.memory_space<vmem>>, %arg15: memref<32x128xf32, #tpu.memory_space<vmem>>, %arg16: memref<1x128xf32, #tpu.memory_space<vmem>>, %arg17: memref<2x32xf32, #tpu.memory_space<vmem>>, %arg18: memref<2x32xf32, #tpu.memory_space<vmem>>, %arg19: memref<8x32x128xf32, #tpu.memory_space<vmem>>, %arg20: memref<1x128xf32, #tpu.memory_space<vmem>>, %arg21: memref<1x1024xf32, #tpu.memory_space<vmem>>, %arg22: memref<1x512xf32, #tpu.memory_space<vmem>>, %arg23: memref<1x128xf32, #tpu.memory_space<vmem>>, %arg24: memref<256x1024xbf16, #tpu.memory_space<any>>, %arg25: memref<1024x512xbf16, #tpu.memory_space<any>>, %arg26: memref<512x128xbf16, #tpu.memory_space<any>>, %arg27: memref<2x128xf32, #tpu.memory_space<vmem>>, %arg28: memref<256x1024xbf16, #tpu.memory_space<vmem>>, %arg29: memref<1024x512xbf16, #tpu.memory_space<vmem>>, %arg30: memref<512x128xbf16, #tpu.memory_space<vmem>>, %arg31: memref<3x!tpu.dma_semaphore, #tpu.memory_space<semaphore_mem>>) attributes {dimension_semantics = [#tpu.dimension_semantics<arbitrary>], iteration_bounds = array<i64: 1>, scalar_prefetch = 0 : i64, scratch_operands = 4 : i64, tpu.core_type = #tpu.core_type<tc>, window_params = [{pipeline_mode = #tpu.pipeline_mode<synchronous>, transform_indices = @transform_0, window_bounds = array<i64: 20, 128>}, {pipeline_mode = #tpu.pipeline_mode<synchronous>, transform_indices = @transform_1, window_bounds = array<i64: 20, 20>}, {pipeline_mode = #tpu.pipeline_mode<synchronous>, transform_indices = @transform_2, window_bounds = array<i64: 2, 20>}, {pipeline_mode = #tpu.pipeline_mode<synchronous>, transform_indices = @transform_3, window_bounds = array<i64: 128, 32>}, {pipeline_mode = #tpu.pipeline_mode<synchronous>, transform_indices = @transform_4, window_bounds = array<i64: 4, 32, 32>}, {pipeline_mode = #tpu.pipeline_mode<synchronous>, transform_indices = @transform_5, window_bounds = array<i64: 5, 1, 32>}, {pipeline_mode = #tpu.pipeline_mode<synchronous>, transform_indices = @transform_6, window_bounds = array<i64: 5, 32, 32>}, {pipeline_mode = #tpu.pipeline_mode<synchronous>, transform_indices = @transform_7, window_bounds = array<i64: 5, 1, 32>}, {pipeline_mode = #tpu.pipeline_mode<synchronous>, transform_indices = @transform_8, window_bounds = array<i64: 5, 1, 32>}, {pipeline_mode = #tpu.pipeline_mode<synchronous>, transform_indices = @transform_9, window_bounds = array<i64: 5, 1, 32>}, {pipeline_mode = #tpu.pipeline_mode<synchronous>, transform_indices = @transform_10, window_bounds = array<i64: 160, 128>}, {pipeline_mode = #tpu.pipeline_mode<synchronous>, transform_indices = @transform_11, window_bounds = array<i64: 1, 128>}, {pipeline_mode = #tpu.pipeline_mode<synchronous>, transform_indices = @transform_12, window_bounds = array<i64: 16, 32>}, {pipeline_mode = #tpu.pipeline_mode<synchronous>, transform_indices = @transform_13, window_bounds = array<i64: 32, 128>}, {pipeline_mode = #tpu.pipeline_mode<synchronous>, transform_indices = @transform_14, window_bounds = array<i64: 32, 128>}, {pipeline_mode = #tpu.pipeline_mode<synchronous>, transform_indices = @transform_15, window_bounds = array<i64: 1, 128>}, {pipeline_mode = #tpu.pipeline_mode<synchronous>, transform_indices = @transform_16, window_bounds = array<i64: 2, 32>}, {pipeline_mode = #tpu.pipeline_mode<synchronous>, transform_indices = @transform_17, window_bounds = array<i64: 2, 32>}, {pipeline_mode = #tpu.pipeline_mode<synchronous>, transform_indices = @transform_18, window_bounds = array<i64: 8, 32, 128>}, {pipeline_mode = #tpu.pipeline_mode<synchronous>, transform_indices = @transform_19, window_bounds = array<i64: 1, 128>}, {pipeline_mode = #tpu.pipeline_mode<synchronous>, transform_indices = @transform_20, window_bounds = array<i64: 1, 1024>}, {pipeline_mode = #tpu.pipeline_mode<synchronous>, transform_indices = @transform_21, window_bounds = array<i64: 1, 512>}, {pipeline_mode = #tpu.pipeline_mode<synchronous>, transform_indices = @transform_22, window_bounds = array<i64: 1, 128>}, {}, {}, {}, {pipeline_mode = #tpu.pipeline_mode<synchronous>, transform_indices = @transform_26, window_bounds = array<i64: 2, 128>}]} {
    %c0_i32 = arith.constant 0 : i32
    %0 = tpu.memref_slice %arg31[%c0_i32] : memref<3x!tpu.dma_semaphore, #tpu.memory_space<semaphore_mem>> -> memref<1x!tpu.dma_semaphore, #tpu.memory_space<semaphore_mem>>
    %1 = tpu.memref_squeeze %0 : memref<1x!tpu.dma_semaphore, #tpu.memory_space<semaphore_mem>> -> memref<!tpu.dma_semaphore, #tpu.memory_space<semaphore_mem>>
    tpu.enqueue_dma source(%arg24 : memref<256x1024xbf16, #tpu.memory_space<any>>) target(%arg28 : memref<256x1024xbf16, #tpu.memory_space<vmem>>) target_semaphore(%1 : memref<!tpu.dma_semaphore, #tpu.memory_space<semaphore_mem>>)
    %c1_i32 = arith.constant 1 : i32
    %2 = tpu.memref_slice %arg31[%c1_i32] : memref<3x!tpu.dma_semaphore, #tpu.memory_space<semaphore_mem>> -> memref<1x!tpu.dma_semaphore, #tpu.memory_space<semaphore_mem>>
    %3 = tpu.memref_squeeze %2 : memref<1x!tpu.dma_semaphore, #tpu.memory_space<semaphore_mem>> -> memref<!tpu.dma_semaphore, #tpu.memory_space<semaphore_mem>>
    tpu.enqueue_dma source(%arg25 : memref<1024x512xbf16, #tpu.memory_space<any>>) target(%arg29 : memref<1024x512xbf16, #tpu.memory_space<vmem>>) target_semaphore(%3 : memref<!tpu.dma_semaphore, #tpu.memory_space<semaphore_mem>>)
    %c2_i32 = arith.constant 2 : i32
    %4 = tpu.memref_slice %arg31[%c2_i32] : memref<3x!tpu.dma_semaphore, #tpu.memory_space<semaphore_mem>> -> memref<1x!tpu.dma_semaphore, #tpu.memory_space<semaphore_mem>>
    %5 = tpu.memref_squeeze %4 : memref<1x!tpu.dma_semaphore, #tpu.memory_space<semaphore_mem>> -> memref<!tpu.dma_semaphore, #tpu.memory_space<semaphore_mem>>
    tpu.enqueue_dma source(%arg26 : memref<512x128xbf16, #tpu.memory_space<any>>) target(%arg30 : memref<512x128xbf16, #tpu.memory_space<vmem>>) target_semaphore(%5 : memref<!tpu.dma_semaphore, #tpu.memory_space<semaphore_mem>>)
    %c0 = arith.constant 0 : index
    %c0_0 = arith.constant 0 : index
    %6 = vector.load %arg2[%c0, %c0_0] : memref<20x20xf32, #tpu.memory_space<vmem>>, vector<20x20xf32>
    %c0_1 = arith.constant 0 : index
    %c0_2 = arith.constant 0 : index
    %7 = vector.load %arg3[%c0_1, %c0_2] : memref<2x20xf32, #tpu.memory_space<vmem>>, vector<2x20xf32>
    %c0_3 = arith.constant 0 : index
    %c0_4 = arith.constant 0 : index
    %8 = vector.load %arg1[%c0_3, %c0_4] : memref<20x128xf32, #tpu.memory_space<vmem>>, vector<20x128xf32>
    %c0_5 = arith.constant 0 : index
    %c0_6 = arith.constant 0 : index
    %9 = vector.load %arg4[%c0_5, %c0_6] : memref<128x32xf32, #tpu.memory_space<vmem>>, vector<128x32xf32>
    %cst = arith.constant dense<0.000000e+00> : vector<20x32xf32>
    %10 = tpu.matmul %8, %9, %cst {dimension_numbers = #tpu.dot_dimension_numbers<[1], [0], [0], [1], [0, 0, 1, 1], [], []>} : vector<20x128xf32>, vector<128x32xf32>, vector<20x32xf32> -> vector<20x32xf32>
    %cst_7 = arith.constant dense<0.000000e+00> : vector<20x32xf32>
    %11 = tpu.matmul %6, %10, %cst_7 {dimension_numbers = #tpu.dot_dimension_numbers<[1], [0], [0], [1], [0, 0, 1, 1], [], []>} : vector<20x20xf32>, vector<20x32xf32>, vector<20x32xf32> -> vector<20x32xf32>
    %c0_8 = arith.constant 0 : index
    %c0_9 = arith.constant 0 : index
    %c0_10 = arith.constant 0 : index
    %12 = vector.load %arg6[%c0_8, %c0_9, %c0_10] : memref<5x1x32xf32, #tpu.memory_space<vmem>>, vector<1x1x32xf32>
    %13 = vector.shape_cast %12 : vector<1x1x32xf32> to vector<1x32xf32>
    %14 = vector.broadcast %13 : vector<1x32xf32> to vector<20x32xf32>
    %15 = arith.addf %11, %14 : vector<20x32xf32>
    %cst_11 = arith.constant 0.000000e+00 : f32
    %16 = vector.broadcast %cst_11 : f32 to vector<20x32xf32>
    %17 = arith.maximumf %15, %16 : vector<20x32xf32>
    %c0_12 = arith.constant 0 : index
    %c0_13 = arith.constant 0 : index
    %c0_14 = arith.constant 0 : index
    %18 = vector.load %arg7[%c0_12, %c0_13, %c0_14] : memref<5x32x32xf32, #tpu.memory_space<vmem>>, vector<1x32x32xf32>
    %19 = vector.shape_cast %18 : vector<1x32x32xf32> to vector<32x32xf32>
    %cst_15 = arith.constant dense<0.000000e+00> : vector<20x32xf32>
    %20 = tpu.matmul %17, %19, %cst_15 {dimension_numbers = #tpu.dot_dimension_numbers<[1], [0], [0], [1], [0, 0, 1, 1], [], []>} : vector<20x32xf32>, vector<32x32xf32>, vector<20x32xf32> -> vector<20x32xf32>
    %c0_16 = arith.constant 0 : index
    %c0_17 = arith.constant 0 : index
    %c0_18 = arith.constant 0 : index
    %21 = vector.load %arg8[%c0_16, %c0_17, %c0_18] : memref<5x1x32xf32, #tpu.memory_space<vmem>>, vector<1x1x32xf32>
    %22 = vector.shape_cast %21 : vector<1x1x32xf32> to vector<1x32xf32>
    %23 = vector.broadcast %22 : vector<1x32xf32> to vector<20x32xf32>
    %24 = arith.addf %20, %23 : vector<20x32xf32>
    %cst_19 = arith.constant 0.000000e+00 : f32
    %25 = vector.broadcast %cst_19 : f32 to vector<20x32xf32>
    %26 = arith.maximumf %24, %25 : vector<20x32xf32>
    %c0_20 = arith.constant 0 : index
    %c0_21 = arith.constant 0 : index
    %c0_22 = arith.constant 0 : index
    %27 = vector.load %arg9[%c0_20, %c0_21, %c0_22] : memref<5x1x32xf32, #tpu.memory_space<vmem>>, vector<1x1x32xf32>
    %28 = vector.shape_cast %27 : vector<1x1x32xf32> to vector<1x32xf32>
    %29 = vector.broadcast %28 : vector<1x32xf32> to vector<20x32xf32>
    %30 = arith.mulf %26, %29 : vector<20x32xf32>
    %c0_23 = arith.constant 0 : index
    %c0_24 = arith.constant 0 : index
    %c0_25 = arith.constant 0 : index
    %31 = vector.load %arg10[%c0_23, %c0_24, %c0_25] : memref<5x1x32xf32, #tpu.memory_space<vmem>>, vector<1x1x32xf32>
    %32 = vector.shape_cast %31 : vector<1x1x32xf32> to vector<1x32xf32>
    %33 = vector.broadcast %32 : vector<1x32xf32> to vector<20x32xf32>
    %34 = arith.addf %30, %33 : vector<20x32xf32>
    %cst_26 = arith.constant dense<0.000000e+00> : vector<2x32xf32>
    %35 = tpu.matmul %7, %34, %cst_26 {dimension_numbers = #tpu.dot_dimension_numbers<[1], [0], [0], [1], [0, 0, 1, 1], [], []>} : vector<2x20xf32>, vector<20x32xf32>, vector<2x32xf32> -> vector<2x32xf32>
    %c0_27 = arith.constant 0 : index
    %c0_28 = arith.constant 0 : index
    %36 = vector.load %arg11[%c0_27, %c0_28] : memref<160x128xf32, #tpu.memory_space<vmem>>, vector<32x128xf32>
    %cst_29 = arith.constant dense<0.000000e+00> : vector<2x128xf32>
    %37 = tpu.matmul %35, %36, %cst_29 {dimension_numbers = #tpu.dot_dimension_numbers<[1], [0], [0], [1], [0, 0, 1, 1], [], []>} : vector<2x32xf32>, vector<32x128xf32>, vector<2x128xf32> -> vector<2x128xf32>
    %c0_30 = arith.constant 0 : index
    %c0_31 = arith.constant 0 : index
    %c0_32 = arith.constant 0 : index
    %38 = vector.load %arg5[%c0_30, %c0_31, %c0_32] : memref<4x32x32xf32, #tpu.memory_space<vmem>>, vector<1x32x32xf32>
    %39 = vector.shape_cast %38 : vector<1x32x32xf32> to vector<32x32xf32>
    %cst_33 = arith.constant dense<0.000000e+00> : vector<20x32xf32>
    %40 = tpu.matmul %34, %39, %cst_33 {dimension_numbers = #tpu.dot_dimension_numbers<[1], [0], [0], [1], [0, 0, 1, 1], [], []>} : vector<20x32xf32>, vector<32x32xf32>, vector<20x32xf32> -> vector<20x32xf32>
    %cst_34 = arith.constant dense<0.000000e+00> : vector<20x32xf32>
    %41 = tpu.matmul %6, %40, %cst_34 {dimension_numbers = #tpu.dot_dimension_numbers<[1], [0], [0], [1], [0, 0, 1, 1], [], []>} : vector<20x20xf32>, vector<20x32xf32>, vector<20x32xf32> -> vector<20x32xf32>
    %c1 = arith.constant 1 : index
    %c0_35 = arith.constant 0 : index
    %c0_36 = arith.constant 0 : index
    %42 = vector.load %arg6[%c1, %c0_35, %c0_36] : memref<5x1x32xf32, #tpu.memory_space<vmem>>, vector<1x1x32xf32>
    %43 = vector.shape_cast %42 : vector<1x1x32xf32> to vector<1x32xf32>
    %44 = vector.broadcast %43 : vector<1x32xf32> to vector<20x32xf32>
    %45 = arith.addf %41, %44 : vector<20x32xf32>
    %cst_37 = arith.constant 0.000000e+00 : f32
    %46 = vector.broadcast %cst_37 : f32 to vector<20x32xf32>
    %47 = arith.maximumf %45, %46 : vector<20x32xf32>
    %c1_38 = arith.constant 1 : index
    %c0_39 = arith.constant 0 : index
    %c0_40 = arith.constant 0 : index
    %48 = vector.load %arg7[%c1_38, %c0_39, %c0_40] : memref<5x32x32xf32, #tpu.memory_space<vmem>>, vector<1x32x32xf32>
    %49 = vector.shape_cast %48 : vector<1x32x32xf32> to vector<32x32xf32>
    %cst_41 = arith.constant dense<0.000000e+00> : vector<20x32xf32>
    %50 = tpu.matmul %47, %49, %cst_41 {dimension_numbers = #tpu.dot_dimension_numbers<[1], [0], [0], [1], [0, 0, 1, 1], [], []>} : vector<20x32xf32>, vector<32x32xf32>, vector<20x32xf32> -> vector<20x32xf32>
    %c1_42 = arith.constant 1 : index
    %c0_43 = arith.constant 0 : index
    %c0_44 = arith.constant 0 : index
    %51 = vector.load %arg8[%c1_42, %c0_43, %c0_44] : memref<5x1x32xf32, #tpu.memory_space<vmem>>, vector<1x1x32xf32>
    %52 = vector.shape_cast %51 : vector<1x1x32xf32> to vector<1x32xf32>
    %53 = vector.broadcast %52 : vector<1x32xf32> to vector<20x32xf32>
    %54 = arith.addf %50, %53 : vector<20x32xf32>
    %cst_45 = arith.constant 0.000000e+00 : f32
    %55 = vector.broadcast %cst_45 : f32 to vector<20x32xf32>
    %56 = arith.maximumf %54, %55 : vector<20x32xf32>
    %c1_46 = arith.constant 1 : index
    %c0_47 = arith.constant 0 : index
    %c0_48 = arith.constant 0 : index
    %57 = vector.load %arg9[%c1_46, %c0_47, %c0_48] : memref<5x1x32xf32, #tpu.memory_space<vmem>>, vector<1x1x32xf32>
    %58 = vector.shape_cast %57 : vector<1x1x32xf32> to vector<1x32xf32>
    %59 = vector.broadcast %58 : vector<1x32xf32> to vector<20x32xf32>
    %60 = arith.mulf %56, %59 : vector<20x32xf32>
    %c1_49 = arith.constant 1 : index
    %c0_50 = arith.constant 0 : index
    %c0_51 = arith.constant 0 : index
    %61 = vector.load %arg10[%c1_49, %c0_50, %c0_51] : memref<5x1x32xf32, #tpu.memory_space<vmem>>, vector<1x1x32xf32>
    %62 = vector.shape_cast %61 : vector<1x1x32xf32> to vector<1x32xf32>
    %63 = vector.broadcast %62 : vector<1x32xf32> to vector<20x32xf32>
    %64 = arith.addf %60, %63 : vector<20x32xf32>
    %cst_52 = arith.constant dense<0.000000e+00> : vector<2x32xf32>
    %65 = tpu.matmul %7, %64, %cst_52 {dimension_numbers = #tpu.dot_dimension_numbers<[1], [0], [0], [1], [0, 0, 1, 1], [], []>} : vector<2x20xf32>, vector<20x32xf32>, vector<2x32xf32> -> vector<2x32xf32>
    %c32 = arith.constant 32 : index
    %c0_53 = arith.constant 0 : index
    %66 = vector.load %arg11[%c32, %c0_53] : memref<160x128xf32, #tpu.memory_space<vmem>>, vector<32x128xf32>
    %cst_54 = arith.constant dense<0.000000e+00> : vector<2x128xf32>
    %67 = tpu.matmul %65, %66, %cst_54 {dimension_numbers = #tpu.dot_dimension_numbers<[1], [0], [0], [1], [0, 0, 1, 1], [], []>} : vector<2x32xf32>, vector<32x128xf32>, vector<2x128xf32> -> vector<2x128xf32>
    %68 = arith.addf %37, %67 : vector<2x128xf32>
    %c1_55 = arith.constant 1 : index
    %c0_56 = arith.constant 0 : index
    %c0_57 = arith.constant 0 : index
    %69 = vector.load %arg5[%c1_55, %c0_56, %c0_57] : memref<4x32x32xf32, #tpu.memory_space<vmem>>, vector<1x32x32xf32>
    %70 = vector.shape_cast %69 : vector<1x32x32xf32> to vector<32x32xf32>
    %cst_58 = arith.constant dense<0.000000e+00> : vector<20x32xf32>
    %71 = tpu.matmul %64, %70, %cst_58 {dimension_numbers = #tpu.dot_dimension_numbers<[1], [0], [0], [1], [0, 0, 1, 1], [], []>} : vector<20x32xf32>, vector<32x32xf32>, vector<20x32xf32> -> vector<20x32xf32>
    %cst_59 = arith.constant dense<0.000000e+00> : vector<20x32xf32>
    %72 = tpu.matmul %6, %71, %cst_59 {dimension_numbers = #tpu.dot_dimension_numbers<[1], [0], [0], [1], [0, 0, 1, 1], [], []>} : vector<20x20xf32>, vector<20x32xf32>, vector<20x32xf32> -> vector<20x32xf32>
    %c2 = arith.constant 2 : index
    %c0_60 = arith.constant 0 : index
    %c0_61 = arith.constant 0 : index
    %73 = vector.load %arg6[%c2, %c0_60, %c0_61] : memref<5x1x32xf32, #tpu.memory_space<vmem>>, vector<1x1x32xf32>
    %74 = vector.shape_cast %73 : vector<1x1x32xf32> to vector<1x32xf32>
    %75 = vector.broadcast %74 : vector<1x32xf32> to vector<20x32xf32>
    %76 = arith.addf %72, %75 : vector<20x32xf32>
    %cst_62 = arith.constant 0.000000e+00 : f32
    %77 = vector.broadcast %cst_62 : f32 to vector<20x32xf32>
    %78 = arith.maximumf %76, %77 : vector<20x32xf32>
    %c2_63 = arith.constant 2 : index
    %c0_64 = arith.constant 0 : index
    %c0_65 = arith.constant 0 : index
    %79 = vector.load %arg7[%c2_63, %c0_64, %c0_65] : memref<5x32x32xf32, #tpu.memory_space<vmem>>, vector<1x32x32xf32>
    %80 = vector.shape_cast %79 : vector<1x32x32xf32> to vector<32x32xf32>
    %cst_66 = arith.constant dense<0.000000e+00> : vector<20x32xf32>
    %81 = tpu.matmul %78, %80, %cst_66 {dimension_numbers = #tpu.dot_dimension_numbers<[1], [0], [0], [1], [0, 0, 1, 1], [], []>} : vector<20x32xf32>, vector<32x32xf32>, vector<20x32xf32> -> vector<20x32xf32>
    %c2_67 = arith.constant 2 : index
    %c0_68 = arith.constant 0 : index
    %c0_69 = arith.constant 0 : index
    %82 = vector.load %arg8[%c2_67, %c0_68, %c0_69] : memref<5x1x32xf32, #tpu.memory_space<vmem>>, vector<1x1x32xf32>
    %83 = vector.shape_cast %82 : vector<1x1x32xf32> to vector<1x32xf32>
    %84 = vector.broadcast %83 : vector<1x32xf32> to vector<20x32xf32>
    %85 = arith.addf %81, %84 : vector<20x32xf32>
    %cst_70 = arith.constant 0.000000e+00 : f32
    %86 = vector.broadcast %cst_70 : f32 to vector<20x32xf32>
    %87 = arith.maximumf %85, %86 : vector<20x32xf32>
    %c2_71 = arith.constant 2 : index
    %c0_72 = arith.constant 0 : index
    %c0_73 = arith.constant 0 : index
    %88 = vector.load %arg9[%c2_71, %c0_72, %c0_73] : memref<5x1x32xf32, #tpu.memory_space<vmem>>, vector<1x1x32xf32>
    %89 = vector.shape_cast %88 : vector<1x1x32xf32> to vector<1x32xf32>
    %90 = vector.broadcast %89 : vector<1x32xf32> to vector<20x32xf32>
    %91 = arith.mulf %87, %90 : vector<20x32xf32>
    %c2_74 = arith.constant 2 : index
    %c0_75 = arith.constant 0 : index
    %c0_76 = arith.constant 0 : index
    %92 = vector.load %arg10[%c2_74, %c0_75, %c0_76] : memref<5x1x32xf32, #tpu.memory_space<vmem>>, vector<1x1x32xf32>
    %93 = vector.shape_cast %92 : vector<1x1x32xf32> to vector<1x32xf32>
    %94 = vector.broadcast %93 : vector<1x32xf32> to vector<20x32xf32>
    %95 = arith.addf %91, %94 : vector<20x32xf32>
    %cst_77 = arith.constant dense<0.000000e+00> : vector<2x32xf32>
    %96 = tpu.matmul %7, %95, %cst_77 {dimension_numbers = #tpu.dot_dimension_numbers<[1], [0], [0], [1], [0, 0, 1, 1], [], []>} : vector<2x20xf32>, vector<20x32xf32>, vector<2x32xf32> -> vector<2x32xf32>
    %c64 = arith.constant 64 : index
    %c0_78 = arith.constant 0 : index
    %97 = vector.load %arg11[%c64, %c0_78] : memref<160x128xf32, #tpu.memory_space<vmem>>, vector<32x128xf32>
    %cst_79 = arith.constant dense<0.000000e+00> : vector<2x128xf32>
    %98 = tpu.matmul %96, %97, %cst_79 {dimension_numbers = #tpu.dot_dimension_numbers<[1], [0], [0], [1], [0, 0, 1, 1], [], []>} : vector<2x32xf32>, vector<32x128xf32>, vector<2x128xf32> -> vector<2x128xf32>
    %99 = arith.addf %68, %98 : vector<2x128xf32>
    %c2_80 = arith.constant 2 : index
    %c0_81 = arith.constant 0 : index
    %c0_82 = arith.constant 0 : index
    %100 = vector.load %arg5[%c2_80, %c0_81, %c0_82] : memref<4x32x32xf32, #tpu.memory_space<vmem>>, vector<1x32x32xf32>
    %101 = vector.shape_cast %100 : vector<1x32x32xf32> to vector<32x32xf32>
    %cst_83 = arith.constant dense<0.000000e+00> : vector<20x32xf32>
    %102 = tpu.matmul %95, %101, %cst_83 {dimension_numbers = #tpu.dot_dimension_numbers<[1], [0], [0], [1], [0, 0, 1, 1], [], []>} : vector<20x32xf32>, vector<32x32xf32>, vector<20x32xf32> -> vector<20x32xf32>
    %cst_84 = arith.constant dense<0.000000e+00> : vector<20x32xf32>
    %103 = tpu.matmul %6, %102, %cst_84 {dimension_numbers = #tpu.dot_dimension_numbers<[1], [0], [0], [1], [0, 0, 1, 1], [], []>} : vector<20x20xf32>, vector<20x32xf32>, vector<20x32xf32> -> vector<20x32xf32>
    %c3 = arith.constant 3 : index
    %c0_85 = arith.constant 0 : index
    %c0_86 = arith.constant 0 : index
    %104 = vector.load %arg6[%c3, %c0_85, %c0_86] : memref<5x1x32xf32, #tpu.memory_space<vmem>>, vector<1x1x32xf32>
    %105 = vector.shape_cast %104 : vector<1x1x32xf32> to vector<1x32xf32>
    %106 = vector.broadcast %105 : vector<1x32xf32> to vector<20x32xf32>
    %107 = arith.addf %103, %106 : vector<20x32xf32>
    %cst_87 = arith.constant 0.000000e+00 : f32
    %108 = vector.broadcast %cst_87 : f32 to vector<20x32xf32>
    %109 = arith.maximumf %107, %108 : vector<20x32xf32>
    %c3_88 = arith.constant 3 : index
    %c0_89 = arith.constant 0 : index
    %c0_90 = arith.constant 0 : index
    %110 = vector.load %arg7[%c3_88, %c0_89, %c0_90] : memref<5x32x32xf32, #tpu.memory_space<vmem>>, vector<1x32x32xf32>
    %111 = vector.shape_cast %110 : vector<1x32x32xf32> to vector<32x32xf32>
    %cst_91 = arith.constant dense<0.000000e+00> : vector<20x32xf32>
    %112 = tpu.matmul %109, %111, %cst_91 {dimension_numbers = #tpu.dot_dimension_numbers<[1], [0], [0], [1], [0, 0, 1, 1], [], []>} : vector<20x32xf32>, vector<32x32xf32>, vector<20x32xf32> -> vector<20x32xf32>
    %c3_92 = arith.constant 3 : index
    %c0_93 = arith.constant 0 : index
    %c0_94 = arith.constant 0 : index
    %113 = vector.load %arg8[%c3_92, %c0_93, %c0_94] : memref<5x1x32xf32, #tpu.memory_space<vmem>>, vector<1x1x32xf32>
    %114 = vector.shape_cast %113 : vector<1x1x32xf32> to vector<1x32xf32>
    %115 = vector.broadcast %114 : vector<1x32xf32> to vector<20x32xf32>
    %116 = arith.addf %112, %115 : vector<20x32xf32>
    %cst_95 = arith.constant 0.000000e+00 : f32
    %117 = vector.broadcast %cst_95 : f32 to vector<20x32xf32>
    %118 = arith.maximumf %116, %117 : vector<20x32xf32>
    %c3_96 = arith.constant 3 : index
    %c0_97 = arith.constant 0 : index
    %c0_98 = arith.constant 0 : index
    %119 = vector.load %arg9[%c3_96, %c0_97, %c0_98] : memref<5x1x32xf32, #tpu.memory_space<vmem>>, vector<1x1x32xf32>
    %120 = vector.shape_cast %119 : vector<1x1x32xf32> to vector<1x32xf32>
    %121 = vector.broadcast %120 : vector<1x32xf32> to vector<20x32xf32>
    %122 = arith.mulf %118, %121 : vector<20x32xf32>
    %c3_99 = arith.constant 3 : index
    %c0_100 = arith.constant 0 : index
    %c0_101 = arith.constant 0 : index
    %123 = vector.load %arg10[%c3_99, %c0_100, %c0_101] : memref<5x1x32xf32, #tpu.memory_space<vmem>>, vector<1x1x32xf32>
    %124 = vector.shape_cast %123 : vector<1x1x32xf32> to vector<1x32xf32>
    %125 = vector.broadcast %124 : vector<1x32xf32> to vector<20x32xf32>
    %126 = arith.addf %122, %125 : vector<20x32xf32>
    %cst_102 = arith.constant dense<0.000000e+00> : vector<2x32xf32>
    %127 = tpu.matmul %7, %126, %cst_102 {dimension_numbers = #tpu.dot_dimension_numbers<[1], [0], [0], [1], [0, 0, 1, 1], [], []>} : vector<2x20xf32>, vector<20x32xf32>, vector<2x32xf32> -> vector<2x32xf32>
    %c96 = arith.constant 96 : index
    %c0_103 = arith.constant 0 : index
    %128 = vector.load %arg11[%c96, %c0_103] : memref<160x128xf32, #tpu.memory_space<vmem>>, vector<32x128xf32>
    %cst_104 = arith.constant dense<0.000000e+00> : vector<2x128xf32>
    %129 = tpu.matmul %127, %128, %cst_104 {dimension_numbers = #tpu.dot_dimension_numbers<[1], [0], [0], [1], [0, 0, 1, 1], [], []>} : vector<2x32xf32>, vector<32x128xf32>, vector<2x128xf32> -> vector<2x128xf32>
    %130 = arith.addf %99, %129 : vector<2x128xf32>
    %c3_105 = arith.constant 3 : index
    %c0_106 = arith.constant 0 : index
    %c0_107 = arith.constant 0 : index
    %131 = vector.load %arg5[%c3_105, %c0_106, %c0_107] : memref<4x32x32xf32, #tpu.memory_space<vmem>>, vector<1x32x32xf32>
    %132 = vector.shape_cast %131 : vector<1x32x32xf32> to vector<32x32xf32>
    %cst_108 = arith.constant dense<0.000000e+00> : vector<20x32xf32>
    %133 = tpu.matmul %126, %132, %cst_108 {dimension_numbers = #tpu.dot_dimension_numbers<[1], [0], [0], [1], [0, 0, 1, 1], [], []>} : vector<20x32xf32>, vector<32x32xf32>, vector<20x32xf32> -> vector<20x32xf32>
    %cst_109 = arith.constant dense<0.000000e+00> : vector<20x32xf32>
    %134 = tpu.matmul %6, %133, %cst_109 {dimension_numbers = #tpu.dot_dimension_numbers<[1], [0], [0], [1], [0, 0, 1, 1], [], []>} : vector<20x20xf32>, vector<20x32xf32>, vector<20x32xf32> -> vector<20x32xf32>
    %c4 = arith.constant 4 : index
    %c0_110 = arith.constant 0 : index
    %c0_111 = arith.constant 0 : index
    %135 = vector.load %arg6[%c4, %c0_110, %c0_111] : memref<5x1x32xf32, #tpu.memory_space<vmem>>, vector<1x1x32xf32>
    %136 = vector.shape_cast %135 : vector<1x1x32xf32> to vector<1x32xf32>
    %137 = vector.broadcast %136 : vector<1x32xf32> to vector<20x32xf32>
    %138 = arith.addf %134, %137 : vector<20x32xf32>
    %cst_112 = arith.constant 0.000000e+00 : f32
    %139 = vector.broadcast %cst_112 : f32 to vector<20x32xf32>
    %140 = arith.maximumf %138, %139 : vector<20x32xf32>
    %c4_113 = arith.constant 4 : index
    %c0_114 = arith.constant 0 : index
    %c0_115 = arith.constant 0 : index
    %141 = vector.load %arg7[%c4_113, %c0_114, %c0_115] : memref<5x32x32xf32, #tpu.memory_space<vmem>>, vector<1x32x32xf32>
    %142 = vector.shape_cast %141 : vector<1x32x32xf32> to vector<32x32xf32>
    %cst_116 = arith.constant dense<0.000000e+00> : vector<20x32xf32>
    %143 = tpu.matmul %140, %142, %cst_116 {dimension_numbers = #tpu.dot_dimension_numbers<[1], [0], [0], [1], [0, 0, 1, 1], [], []>} : vector<20x32xf32>, vector<32x32xf32>, vector<20x32xf32> -> vector<20x32xf32>
    %c4_117 = arith.constant 4 : index
    %c0_118 = arith.constant 0 : index
    %c0_119 = arith.constant 0 : index
    %144 = vector.load %arg8[%c4_117, %c0_118, %c0_119] : memref<5x1x32xf32, #tpu.memory_space<vmem>>, vector<1x1x32xf32>
    %145 = vector.shape_cast %144 : vector<1x1x32xf32> to vector<1x32xf32>
    %146 = vector.broadcast %145 : vector<1x32xf32> to vector<20x32xf32>
    %147 = arith.addf %143, %146 : vector<20x32xf32>
    %cst_120 = arith.constant 0.000000e+00 : f32
    %148 = vector.broadcast %cst_120 : f32 to vector<20x32xf32>
    %149 = arith.maximumf %147, %148 : vector<20x32xf32>
    %c4_121 = arith.constant 4 : index
    %c0_122 = arith.constant 0 : index
    %c0_123 = arith.constant 0 : index
    %150 = vector.load %arg9[%c4_121, %c0_122, %c0_123] : memref<5x1x32xf32, #tpu.memory_space<vmem>>, vector<1x1x32xf32>
    %151 = vector.shape_cast %150 : vector<1x1x32xf32> to vector<1x32xf32>
    %152 = vector.broadcast %151 : vector<1x32xf32> to vector<20x32xf32>
    %153 = arith.mulf %149, %152 : vector<20x32xf32>
    %c4_124 = arith.constant 4 : index
    %c0_125 = arith.constant 0 : index
    %c0_126 = arith.constant 0 : index
    %154 = vector.load %arg10[%c4_124, %c0_125, %c0_126] : memref<5x1x32xf32, #tpu.memory_space<vmem>>, vector<1x1x32xf32>
    %155 = vector.shape_cast %154 : vector<1x1x32xf32> to vector<1x32xf32>
    %156 = vector.broadcast %155 : vector<1x32xf32> to vector<20x32xf32>
    %157 = arith.addf %153, %156 : vector<20x32xf32>
    %cst_127 = arith.constant dense<0.000000e+00> : vector<2x32xf32>
    %158 = tpu.matmul %7, %157, %cst_127 {dimension_numbers = #tpu.dot_dimension_numbers<[1], [0], [0], [1], [0, 0, 1, 1], [], []>} : vector<2x20xf32>, vector<20x32xf32>, vector<2x32xf32> -> vector<2x32xf32>
    %c128 = arith.constant 128 : index
    %c0_128 = arith.constant 0 : index
    %159 = vector.load %arg11[%c128, %c0_128] : memref<160x128xf32, #tpu.memory_space<vmem>>, vector<32x128xf32>
    %cst_129 = arith.constant dense<0.000000e+00> : vector<2x128xf32>
    %160 = tpu.matmul %158, %159, %cst_129 {dimension_numbers = #tpu.dot_dimension_numbers<[1], [0], [0], [1], [0, 0, 1, 1], [], []>} : vector<2x32xf32>, vector<32x128xf32>, vector<2x128xf32> -> vector<2x128xf32>
    %161 = arith.addf %130, %160 : vector<2x128xf32>
    %c0_130 = arith.constant 0 : index
    %c0_131 = arith.constant 0 : index
    %162 = vector.load %arg12[%c0_130, %c0_131] : memref<1x128xf32, #tpu.memory_space<vmem>>, vector<1x128xf32>
    %163 = vector.broadcast %162 : vector<1x128xf32> to vector<2x128xf32>
    %164 = arith.addf %161, %163 : vector<2x128xf32>
    %cst_132 = arith.constant 0.000000e+00 : f32
    %165 = vector.broadcast %cst_132 : f32 to vector<2x128xf32>
    %166 = arith.maximumf %164, %165 : vector<2x128xf32>
    %c0_133 = arith.constant 0 : index
    %c0_134 = arith.constant 0 : index
    %167 = vector.load %arg15[%c0_133, %c0_134] : memref<32x128xf32, #tpu.memory_space<vmem>>, vector<32x128xf32>
    %c0_135 = arith.constant 0 : index
    %c0_136 = arith.constant 0 : index
    %168 = vector.load %arg13[%c0_135, %c0_136] : memref<16x32xf32, #tpu.memory_space<vmem>>, vector<16x32xf32>
    %c0_137 = arith.constant 0 : index
    %c0_138 = arith.constant 0 : index
    %169 = vector.load %arg14[%c0_137, %c0_138] : memref<32x128xf32, #tpu.memory_space<vmem>>, vector<32x128xf32>
    %cst_139 = arith.constant dense<0.000000e+00> : vector<16x128xf32>
    %170 = tpu.matmul %168, %169, %cst_139 {dimension_numbers = #tpu.dot_dimension_numbers<[1], [0], [0], [1], [0, 0, 1, 1], [], []>} : vector<16x32xf32>, vector<32x128xf32>, vector<16x128xf32> -> vector<16x128xf32>
    %c0_140 = arith.constant 0 : index
    %c0_141 = arith.constant 0 : index
    %171 = vector.load %arg16[%c0_140, %c0_141] : memref<1x128xf32, #tpu.memory_space<vmem>>, vector<1x128xf32>
    %172 = vector.broadcast %171 : vector<1x128xf32> to vector<16x128xf32>
    %173 = arith.addf %170, %172 : vector<16x128xf32>
    %c0_142 = arith.constant 0 : index
    %c0_143 = arith.constant 0 : index
    %174 = vector.load %arg17[%c0_142, %c0_143] : memref<2x32xf32, #tpu.memory_space<vmem>>, vector<2x32xf32>
    %c0_144 = arith.constant 0 : index
    %c0_145 = arith.constant 0 : index
    %175 = vector.load %arg18[%c0_144, %c0_145] : memref<2x32xf32, #tpu.memory_space<vmem>>, vector<2x32xf32>
    %176 = vector.extract_strided_slice %173 {offsets = [0, 0], sizes = [2, 128], strides = [1, 1]} : vector<16x128xf32> to vector<2x128xf32>
    %cst_146 = arith.constant dense<0.000000e+00> : vector<2x128xf32>
    %177 = tpu.matmul %174, %167, %cst_146 {dimension_numbers = #tpu.dot_dimension_numbers<[1], [0], [0], [1], [0, 0, 1, 1], [], []>} : vector<2x32xf32>, vector<32x128xf32>, vector<2x128xf32> -> vector<2x128xf32>
    %178 = arith.addf %176, %177 : vector<2x128xf32>
    %179 = arith.negf %178 : vector<2x128xf32>
    %180 = math.exp %179 : vector<2x128xf32>
    %cst_147 = arith.constant 1.000000e+00 : f32
    %181 = vector.broadcast %cst_147 : f32 to vector<2x128xf32>
    %182 = arith.addf %181, %180 : vector<2x128xf32>
    %183 = arith.divf %181, %182 : vector<2x128xf32>
    %184 = math.tanh %178 : vector<2x128xf32>
    %185 = vector.extract_strided_slice %183 {offsets = [0, 0], sizes = [2, 32], strides = [1, 1]} : vector<2x128xf32> to vector<2x32xf32>
    %186 = vector.extract_strided_slice %183 {offsets = [0, 32], sizes = [2, 32], strides = [1, 1]} : vector<2x128xf32> to vector<2x32xf32>
    %187 = vector.extract_strided_slice %184 {offsets = [0, 64], sizes = [2, 32], strides = [1, 1]} : vector<2x128xf32> to vector<2x32xf32>
    %188 = vector.extract_strided_slice %183 {offsets = [0, 96], sizes = [2, 32], strides = [1, 1]} : vector<2x128xf32> to vector<2x32xf32>
    %189 = arith.mulf %186, %175 : vector<2x32xf32>
    %190 = arith.mulf %185, %187 : vector<2x32xf32>
    %191 = arith.addf %189, %190 : vector<2x32xf32>
    %192 = math.tanh %191 : vector<2x32xf32>
    %193 = arith.mulf %188, %192 : vector<2x32xf32>
    %c0_148 = arith.constant 0 : index
    %c0_149 = arith.constant 0 : index
    %c0_150 = arith.constant 0 : index
    %194 = vector.load %arg19[%c0_148, %c0_149, %c0_150] : memref<8x32x128xf32, #tpu.memory_space<vmem>>, vector<1x32x128xf32>
    %195 = vector.shape_cast %194 : vector<1x32x128xf32> to vector<32x128xf32>
    %cst_151 = arith.constant dense<0.000000e+00> : vector<2x128xf32>
    %196 = tpu.matmul %193, %195, %cst_151 {dimension_numbers = #tpu.dot_dimension_numbers<[1], [0], [0], [1], [0, 0, 1, 1], [], []>} : vector<2x32xf32>, vector<32x128xf32>, vector<2x128xf32> -> vector<2x128xf32>
    %197 = vector.extract_strided_slice %173 {offsets = [2, 0], sizes = [2, 128], strides = [1, 1]} : vector<16x128xf32> to vector<2x128xf32>
    %cst_152 = arith.constant dense<0.000000e+00> : vector<2x128xf32>
    %198 = tpu.matmul %193, %167, %cst_152 {dimension_numbers = #tpu.dot_dimension_numbers<[1], [0], [0], [1], [0, 0, 1, 1], [], []>} : vector<2x32xf32>, vector<32x128xf32>, vector<2x128xf32> -> vector<2x128xf32>
    %199 = arith.addf %197, %198 : vector<2x128xf32>
    %200 = arith.negf %199 : vector<2x128xf32>
    %201 = math.exp %200 : vector<2x128xf32>
    %cst_153 = arith.constant 1.000000e+00 : f32
    %202 = vector.broadcast %cst_153 : f32 to vector<2x128xf32>
    %203 = arith.addf %202, %201 : vector<2x128xf32>
    %204 = arith.divf %202, %203 : vector<2x128xf32>
    %205 = math.tanh %199 : vector<2x128xf32>
    %206 = vector.extract_strided_slice %204 {offsets = [0, 0], sizes = [2, 32], strides = [1, 1]} : vector<2x128xf32> to vector<2x32xf32>
    %207 = vector.extract_strided_slice %204 {offsets = [0, 32], sizes = [2, 32], strides = [1, 1]} : vector<2x128xf32> to vector<2x32xf32>
    %208 = vector.extract_strided_slice %205 {offsets = [0, 64], sizes = [2, 32], strides = [1, 1]} : vector<2x128xf32> to vector<2x32xf32>
    %209 = vector.extract_strided_slice %204 {offsets = [0, 96], sizes = [2, 32], strides = [1, 1]} : vector<2x128xf32> to vector<2x32xf32>
    %210 = arith.mulf %207, %191 : vector<2x32xf32>
    %211 = arith.mulf %206, %208 : vector<2x32xf32>
    %212 = arith.addf %210, %211 : vector<2x32xf32>
    %213 = math.tanh %212 : vector<2x32xf32>
    %214 = arith.mulf %209, %213 : vector<2x32xf32>
    %c1_154 = arith.constant 1 : index
    %c0_155 = arith.constant 0 : index
    %c0_156 = arith.constant 0 : index
    %215 = vector.load %arg19[%c1_154, %c0_155, %c0_156] : memref<8x32x128xf32, #tpu.memory_space<vmem>>, vector<1x32x128xf32>
    %216 = vector.shape_cast %215 : vector<1x32x128xf32> to vector<32x128xf32>
    %cst_157 = arith.constant dense<0.000000e+00> : vector<2x128xf32>
    %217 = tpu.matmul %214, %216, %cst_157 {dimension_numbers = #tpu.dot_dimension_numbers<[1], [0], [0], [1], [0, 0, 1, 1], [], []>} : vector<2x32xf32>, vector<32x128xf32>, vector<2x128xf32> -> vector<2x128xf32>
    %218 = arith.addf %196, %217 : vector<2x128xf32>
    %219 = vector.extract_strided_slice %173 {offsets = [4, 0], sizes = [2, 128], strides = [1, 1]} : vector<16x128xf32> to vector<2x128xf32>
    %cst_158 = arith.constant dense<0.000000e+00> : vector<2x128xf32>
    %220 = tpu.matmul %214, %167, %cst_158 {dimension_numbers = #tpu.dot_dimension_numbers<[1], [0], [0], [1], [0, 0, 1, 1], [], []>} : vector<2x32xf32>, vector<32x128xf32>, vector<2x128xf32> -> vector<2x128xf32>
    %221 = arith.addf %219, %220 : vector<2x128xf32>
    %222 = arith.negf %221 : vector<2x128xf32>
    %223 = math.exp %222 : vector<2x128xf32>
    %cst_159 = arith.constant 1.000000e+00 : f32
    %224 = vector.broadcast %cst_159 : f32 to vector<2x128xf32>
    %225 = arith.addf %224, %223 : vector<2x128xf32>
    %226 = arith.divf %224, %225 : vector<2x128xf32>
    %227 = math.tanh %221 : vector<2x128xf32>
    %228 = vector.extract_strided_slice %226 {offsets = [0, 0], sizes = [2, 32], strides = [1, 1]} : vector<2x128xf32> to vector<2x32xf32>
    %229 = vector.extract_strided_slice %226 {offsets = [0, 32], sizes = [2, 32], strides = [1, 1]} : vector<2x128xf32> to vector<2x32xf32>
    %230 = vector.extract_strided_slice %227 {offsets = [0, 64], sizes = [2, 32], strides = [1, 1]} : vector<2x128xf32> to vector<2x32xf32>
    %231 = vector.extract_strided_slice %226 {offsets = [0, 96], sizes = [2, 32], strides = [1, 1]} : vector<2x128xf32> to vector<2x32xf32>
    %232 = arith.mulf %229, %212 : vector<2x32xf32>
    %233 = arith.mulf %228, %230 : vector<2x32xf32>
    %234 = arith.addf %232, %233 : vector<2x32xf32>
    %235 = math.tanh %234 : vector<2x32xf32>
    %236 = arith.mulf %231, %235 : vector<2x32xf32>
    %c2_160 = arith.constant 2 : index
    %c0_161 = arith.constant 0 : index
    %c0_162 = arith.constant 0 : index
    %237 = vector.load %arg19[%c2_160, %c0_161, %c0_162] : memref<8x32x128xf32, #tpu.memory_space<vmem>>, vector<1x32x128xf32>
    %238 = vector.shape_cast %237 : vector<1x32x128xf32> to vector<32x128xf32>
    %cst_163 = arith.constant dense<0.000000e+00> : vector<2x128xf32>
    %239 = tpu.matmul %236, %238, %cst_163 {dimension_numbers = #tpu.dot_dimension_numbers<[1], [0], [0], [1], [0, 0, 1, 1], [], []>} : vector<2x32xf32>, vector<32x128xf32>, vector<2x128xf32> -> vector<2x128xf32>
    %240 = arith.addf %218, %239 : vector<2x128xf32>
    %241 = vector.extract_strided_slice %173 {offsets = [6, 0], sizes = [2, 128], strides = [1, 1]} : vector<16x128xf32> to vector<2x128xf32>
    %cst_164 = arith.constant dense<0.000000e+00> : vector<2x128xf32>
    %242 = tpu.matmul %236, %167, %cst_164 {dimension_numbers = #tpu.dot_dimension_numbers<[1], [0], [0], [1], [0, 0, 1, 1], [], []>} : vector<2x32xf32>, vector<32x128xf32>, vector<2x128xf32> -> vector<2x128xf32>
    %243 = arith.addf %241, %242 : vector<2x128xf32>
    %244 = arith.negf %243 : vector<2x128xf32>
    %245 = math.exp %244 : vector<2x128xf32>
    %cst_165 = arith.constant 1.000000e+00 : f32
    %246 = vector.broadcast %cst_165 : f32 to vector<2x128xf32>
    %247 = arith.addf %246, %245 : vector<2x128xf32>
    %248 = arith.divf %246, %247 : vector<2x128xf32>
    %249 = math.tanh %243 : vector<2x128xf32>
    %250 = vector.extract_strided_slice %248 {offsets = [0, 0], sizes = [2, 32], strides = [1, 1]} : vector<2x128xf32> to vector<2x32xf32>
    %251 = vector.extract_strided_slice %248 {offsets = [0, 32], sizes = [2, 32], strides = [1, 1]} : vector<2x128xf32> to vector<2x32xf32>
    %252 = vector.extract_strided_slice %249 {offsets = [0, 64], sizes = [2, 32], strides = [1, 1]} : vector<2x128xf32> to vector<2x32xf32>
    %253 = vector.extract_strided_slice %248 {offsets = [0, 96], sizes = [2, 32], strides = [1, 1]} : vector<2x128xf32> to vector<2x32xf32>
    %254 = arith.mulf %251, %234 : vector<2x32xf32>
    %255 = arith.mulf %250, %252 : vector<2x32xf32>
    %256 = arith.addf %254, %255 : vector<2x32xf32>
    %257 = math.tanh %256 : vector<2x32xf32>
    %258 = arith.mulf %253, %257 : vector<2x32xf32>
    %c3_166 = arith.constant 3 : index
    %c0_167 = arith.constant 0 : index
    %c0_168 = arith.constant 0 : index
    %259 = vector.load %arg19[%c3_166, %c0_167, %c0_168] : memref<8x32x128xf32, #tpu.memory_space<vmem>>, vector<1x32x128xf32>
    %260 = vector.shape_cast %259 : vector<1x32x128xf32> to vector<32x128xf32>
    %cst_169 = arith.constant dense<0.000000e+00> : vector<2x128xf32>
    %261 = tpu.matmul %258, %260, %cst_169 {dimension_numbers = #tpu.dot_dimension_numbers<[1], [0], [0], [1], [0, 0, 1, 1], [], []>} : vector<2x32xf32>, vector<32x128xf32>, vector<2x128xf32> -> vector<2x128xf32>
    %262 = arith.addf %240, %261 : vector<2x128xf32>
    %263 = vector.extract_strided_slice %173 {offsets = [8, 0], sizes = [2, 128], strides = [1, 1]} : vector<16x128xf32> to vector<2x128xf32>
    %cst_170 = arith.constant dense<0.000000e+00> : vector<2x128xf32>
    %264 = tpu.matmul %258, %167, %cst_170 {dimension_numbers = #tpu.dot_dimension_numbers<[1], [0], [0], [1], [0, 0, 1, 1], [], []>} : vector<2x32xf32>, vector<32x128xf32>, vector<2x128xf32> -> vector<2x128xf32>
    %265 = arith.addf %263, %264 : vector<2x128xf32>
    %266 = arith.negf %265 : vector<2x128xf32>
    %267 = math.exp %266 : vector<2x128xf32>
    %cst_171 = arith.constant 1.000000e+00 : f32
    %268 = vector.broadcast %cst_171 : f32 to vector<2x128xf32>
    %269 = arith.addf %268, %267 : vector<2x128xf32>
    %270 = arith.divf %268, %269 : vector<2x128xf32>
    %271 = math.tanh %265 : vector<2x128xf32>
    %272 = vector.extract_strided_slice %270 {offsets = [0, 0], sizes = [2, 32], strides = [1, 1]} : vector<2x128xf32> to vector<2x32xf32>
    %273 = vector.extract_strided_slice %270 {offsets = [0, 32], sizes = [2, 32], strides = [1, 1]} : vector<2x128xf32> to vector<2x32xf32>
    %274 = vector.extract_strided_slice %271 {offsets = [0, 64], sizes = [2, 32], strides = [1, 1]} : vector<2x128xf32> to vector<2x32xf32>
    %275 = vector.extract_strided_slice %270 {offsets = [0, 96], sizes = [2, 32], strides = [1, 1]} : vector<2x128xf32> to vector<2x32xf32>
    %276 = arith.mulf %273, %256 : vector<2x32xf32>
    %277 = arith.mulf %272, %274 : vector<2x32xf32>
    %278 = arith.addf %276, %277 : vector<2x32xf32>
    %279 = math.tanh %278 : vector<2x32xf32>
    %280 = arith.mulf %275, %279 : vector<2x32xf32>
    %c4_172 = arith.constant 4 : index
    %c0_173 = arith.constant 0 : index
    %c0_174 = arith.constant 0 : index
    %281 = vector.load %arg19[%c4_172, %c0_173, %c0_174] : memref<8x32x128xf32, #tpu.memory_space<vmem>>, vector<1x32x128xf32>
    %282 = vector.shape_cast %281 : vector<1x32x128xf32> to vector<32x128xf32>
    %cst_175 = arith.constant dense<0.000000e+00> : vector<2x128xf32>
    %283 = tpu.matmul %280, %282, %cst_175 {dimension_numbers = #tpu.dot_dimension_numbers<[1], [0], [0], [1], [0, 0, 1, 1], [], []>} : vector<2x32xf32>, vector<32x128xf32>, vector<2x128xf32> -> vector<2x128xf32>
    %284 = arith.addf %262, %283 : vector<2x128xf32>
    %285 = vector.extract_strided_slice %173 {offsets = [10, 0], sizes = [2, 128], strides = [1, 1]} : vector<16x128xf32> to vector<2x128xf32>
    %cst_176 = arith.constant dense<0.000000e+00> : vector<2x128xf32>
    %286 = tpu.matmul %280, %167, %cst_176 {dimension_numbers = #tpu.dot_dimension_numbers<[1], [0], [0], [1], [0, 0, 1, 1], [], []>} : vector<2x32xf32>, vector<32x128xf32>, vector<2x128xf32> -> vector<2x128xf32>
    %287 = arith.addf %285, %286 : vector<2x128xf32>
    %288 = arith.negf %287 : vector<2x128xf32>
    %289 = math.exp %288 : vector<2x128xf32>
    %cst_177 = arith.constant 1.000000e+00 : f32
    %290 = vector.broadcast %cst_177 : f32 to vector<2x128xf32>
    %291 = arith.addf %290, %289 : vector<2x128xf32>
    %292 = arith.divf %290, %291 : vector<2x128xf32>
    %293 = math.tanh %287 : vector<2x128xf32>
    %294 = vector.extract_strided_slice %292 {offsets = [0, 0], sizes = [2, 32], strides = [1, 1]} : vector<2x128xf32> to vector<2x32xf32>
    %295 = vector.extract_strided_slice %292 {offsets = [0, 32], sizes = [2, 32], strides = [1, 1]} : vector<2x128xf32> to vector<2x32xf32>
    %296 = vector.extract_strided_slice %293 {offsets = [0, 64], sizes = [2, 32], strides = [1, 1]} : vector<2x128xf32> to vector<2x32xf32>
    %297 = vector.extract_strided_slice %292 {offsets = [0, 96], sizes = [2, 32], strides = [1, 1]} : vector<2x128xf32> to vector<2x32xf32>
    %298 = arith.mulf %295, %278 : vector<2x32xf32>
    %299 = arith.mulf %294, %296 : vector<2x32xf32>
    %300 = arith.addf %298, %299 : vector<2x32xf32>
    %301 = math.tanh %300 : vector<2x32xf32>
    %302 = arith.mulf %297, %301 : vector<2x32xf32>
    %c5 = arith.constant 5 : index
    %c0_178 = arith.constant 0 : index
    %c0_179 = arith.constant 0 : index
    %303 = vector.load %arg19[%c5, %c0_178, %c0_179] : memref<8x32x128xf32, #tpu.memory_space<vmem>>, vector<1x32x128xf32>
    %304 = vector.shape_cast %303 : vector<1x32x128xf32> to vector<32x128xf32>
    %cst_180 = arith.constant dense<0.000000e+00> : vector<2x128xf32>
    %305 = tpu.matmul %302, %304, %cst_180 {dimension_numbers = #tpu.dot_dimension_numbers<[1], [0], [0], [1], [0, 0, 1, 1], [], []>} : vector<2x32xf32>, vector<32x128xf32>, vector<2x128xf32> -> vector<2x128xf32>
    %306 = arith.addf %284, %305 : vector<2x128xf32>
    %307 = vector.extract_strided_slice %173 {offsets = [12, 0], sizes = [2, 128], strides = [1, 1]} : vector<16x128xf32> to vector<2x128xf32>
    %cst_181 = arith.constant dense<0.000000e+00> : vector<2x128xf32>
    %308 = tpu.matmul %302, %167, %cst_181 {dimension_numbers = #tpu.dot_dimension_numbers<[1], [0], [0], [1], [0, 0, 1, 1], [], []>} : vector<2x32xf32>, vector<32x128xf32>, vector<2x128xf32> -> vector<2x128xf32>
    %309 = arith.addf %307, %308 : vector<2x128xf32>
    %310 = arith.negf %309 : vector<2x128xf32>
    %311 = math.exp %310 : vector<2x128xf32>
    %cst_182 = arith.constant 1.000000e+00 : f32
    %312 = vector.broadcast %cst_182 : f32 to vector<2x128xf32>
    %313 = arith.addf %312, %311 : vector<2x128xf32>
    %314 = arith.divf %312, %313 : vector<2x128xf32>
    %315 = math.tanh %309 : vector<2x128xf32>
    %316 = vector.extract_strided_slice %314 {offsets = [0, 0], sizes = [2, 32], strides = [1, 1]} : vector<2x128xf32> to vector<2x32xf32>
    %317 = vector.extract_strided_slice %314 {offsets = [0, 32], sizes = [2, 32], strides = [1, 1]} : vector<2x128xf32> to vector<2x32xf32>
    %318 = vector.extract_strided_slice %315 {offsets = [0, 64], sizes = [2, 32], strides = [1, 1]} : vector<2x128xf32> to vector<2x32xf32>
    %319 = vector.extract_strided_slice %314 {offsets = [0, 96], sizes = [2, 32], strides = [1, 1]} : vector<2x128xf32> to vector<2x32xf32>
    %320 = arith.mulf %317, %300 : vector<2x32xf32>
    %321 = arith.mulf %316, %318 : vector<2x32xf32>
    %322 = arith.addf %320, %321 : vector<2x32xf32>
    %323 = math.tanh %322 : vector<2x32xf32>
    %324 = arith.mulf %319, %323 : vector<2x32xf32>
    %c6 = arith.constant 6 : index
    %c0_183 = arith.constant 0 : index
    %c0_184 = arith.constant 0 : index
    %325 = vector.load %arg19[%c6, %c0_183, %c0_184] : memref<8x32x128xf32, #tpu.memory_space<vmem>>, vector<1x32x128xf32>
    %326 = vector.shape_cast %325 : vector<1x32x128xf32> to vector<32x128xf32>
    %cst_185 = arith.constant dense<0.000000e+00> : vector<2x128xf32>
    %327 = tpu.matmul %324, %326, %cst_185 {dimension_numbers = #tpu.dot_dimension_numbers<[1], [0], [0], [1], [0, 0, 1, 1], [], []>} : vector<2x32xf32>, vector<32x128xf32>, vector<2x128xf32> -> vector<2x128xf32>
    %328 = arith.addf %306, %327 : vector<2x128xf32>
    %329 = vector.extract_strided_slice %173 {offsets = [14, 0], sizes = [2, 128], strides = [1, 1]} : vector<16x128xf32> to vector<2x128xf32>
    %cst_186 = arith.constant dense<0.000000e+00> : vector<2x128xf32>
    %330 = tpu.matmul %324, %167, %cst_186 {dimension_numbers = #tpu.dot_dimension_numbers<[1], [0], [0], [1], [0, 0, 1, 1], [], []>} : vector<2x32xf32>, vector<32x128xf32>, vector<2x128xf32> -> vector<2x128xf32>
    %331 = arith.addf %329, %330 : vector<2x128xf32>
    %332 = arith.negf %331 : vector<2x128xf32>
    %333 = math.exp %332 : vector<2x128xf32>
    %cst_187 = arith.constant 1.000000e+00 : f32
    %334 = vector.broadcast %cst_187 : f32 to vector<2x128xf32>
    %335 = arith.addf %334, %333 : vector<2x128xf32>
    %336 = arith.divf %334, %335 : vector<2x128xf32>
    %337 = math.tanh %331 : vector<2x128xf32>
    %338 = vector.extract_strided_slice %336 {offsets = [0, 0], sizes = [2, 32], strides = [1, 1]} : vector<2x128xf32> to vector<2x32xf32>
    %339 = vector.extract_strided_slice %336 {offsets = [0, 32], sizes = [2, 32], strides = [1, 1]} : vector<2x128xf32> to vector<2x32xf32>
    %340 = vector.extract_strided_slice %337 {offsets = [0, 64], sizes = [2, 32], strides = [1, 1]} : vector<2x128xf32> to vector<2x32xf32>
    %341 = vector.extract_strided_slice %336 {offsets = [0, 96], sizes = [2, 32], strides = [1, 1]} : vector<2x128xf32> to vector<2x32xf32>
    %342 = arith.mulf %339, %322 : vector<2x32xf32>
    %343 = arith.mulf %338, %340 : vector<2x32xf32>
    %344 = arith.addf %342, %343 : vector<2x32xf32>
    %345 = math.tanh %344 : vector<2x32xf32>
    %346 = arith.mulf %341, %345 : vector<2x32xf32>
    %c7 = arith.constant 7 : index
    %c0_188 = arith.constant 0 : index
    %c0_189 = arith.constant 0 : index
    %347 = vector.load %arg19[%c7, %c0_188, %c0_189] : memref<8x32x128xf32, #tpu.memory_space<vmem>>, vector<1x32x128xf32>
    %348 = vector.shape_cast %347 : vector<1x32x128xf32> to vector<32x128xf32>
    %cst_190 = arith.constant dense<0.000000e+00> : vector<2x128xf32>
    %349 = tpu.matmul %346, %348, %cst_190 {dimension_numbers = #tpu.dot_dimension_numbers<[1], [0], [0], [1], [0, 0, 1, 1], [], []>} : vector<2x32xf32>, vector<32x128xf32>, vector<2x128xf32> -> vector<2x128xf32>
    %350 = arith.addf %328, %349 : vector<2x128xf32>
    %c0_191 = arith.constant 0 : index
    %c0_192 = arith.constant 0 : index
    %351 = vector.load %arg20[%c0_191, %c0_192] : memref<1x128xf32, #tpu.memory_space<vmem>>, vector<1x128xf32>
    %352 = vector.broadcast %351 : vector<1x128xf32> to vector<2x128xf32>
    %353 = arith.addf %350, %352 : vector<2x128xf32>
    %c0_i32_193 = arith.constant 0 : i32
    %354 = tpu.memref_slice %arg31[%c0_i32_193] : memref<3x!tpu.dma_semaphore, #tpu.memory_space<semaphore_mem>> -> memref<1x!tpu.dma_semaphore, #tpu.memory_space<semaphore_mem>>
    %355 = tpu.memref_squeeze %354 : memref<1x!tpu.dma_semaphore, #tpu.memory_space<semaphore_mem>> -> memref<!tpu.dma_semaphore, #tpu.memory_space<semaphore_mem>>
    tpu.wait_dma2 semaphore(%355 : memref<!tpu.dma_semaphore, #tpu.memory_space<semaphore_mem>>) src(%arg24 : memref<256x1024xbf16, #tpu.memory_space<any>>) dst(%arg28 : memref<256x1024xbf16, #tpu.memory_space<vmem>>)
    %c1_i32_194 = arith.constant 1 : i32
    %356 = tpu.memref_slice %arg31[%c1_i32_194] : memref<3x!tpu.dma_semaphore, #tpu.memory_space<semaphore_mem>> -> memref<1x!tpu.dma_semaphore, #tpu.memory_space<semaphore_mem>>
    %357 = tpu.memref_squeeze %356 : memref<1x!tpu.dma_semaphore, #tpu.memory_space<semaphore_mem>> -> memref<!tpu.dma_semaphore, #tpu.memory_space<semaphore_mem>>
    tpu.wait_dma2 semaphore(%357 : memref<!tpu.dma_semaphore, #tpu.memory_space<semaphore_mem>>) src(%arg25 : memref<1024x512xbf16, #tpu.memory_space<any>>) dst(%arg29 : memref<1024x512xbf16, #tpu.memory_space<vmem>>)
    %c2_i32_195 = arith.constant 2 : i32
    %358 = tpu.memref_slice %arg31[%c2_i32_195] : memref<3x!tpu.dma_semaphore, #tpu.memory_space<semaphore_mem>> -> memref<1x!tpu.dma_semaphore, #tpu.memory_space<semaphore_mem>>
    %359 = tpu.memref_squeeze %358 : memref<1x!tpu.dma_semaphore, #tpu.memory_space<semaphore_mem>> -> memref<!tpu.dma_semaphore, #tpu.memory_space<semaphore_mem>>
    tpu.wait_dma2 semaphore(%359 : memref<!tpu.dma_semaphore, #tpu.memory_space<semaphore_mem>>) src(%arg26 : memref<512x128xbf16, #tpu.memory_space<any>>) dst(%arg30 : memref<512x128xbf16, #tpu.memory_space<vmem>>)
    %360 = arith.truncf %166 : vector<2x128xf32> to vector<2x128xbf16>
    %c0_196 = arith.constant 0 : index
    %c0_197 = arith.constant 0 : index
    %361 = vector.load %arg28[%c0_196, %c0_197] : memref<256x1024xbf16, #tpu.memory_space<vmem>>, vector<128x1024xbf16>
    %cst_198 = arith.constant dense<0.000000e+00> : vector<2x1024xf32>
    %362 = tpu.matmul %360, %361, %cst_198 {dimension_numbers = #tpu.dot_dimension_numbers<[1], [0], [0], [1], [0, 0, 1, 1], [], []>} : vector<2x128xbf16>, vector<128x1024xbf16>, vector<2x1024xf32> -> vector<2x1024xf32>
    %363 = arith.truncf %353 : vector<2x128xf32> to vector<2x128xbf16>
    %c128_199 = arith.constant 128 : index
    %c0_200 = arith.constant 0 : index
    %364 = vector.load %arg28[%c128_199, %c0_200] : memref<256x1024xbf16, #tpu.memory_space<vmem>>, vector<128x1024xbf16>
    %cst_201 = arith.constant dense<0.000000e+00> : vector<2x1024xf32>
    %365 = tpu.matmul %363, %364, %cst_201 {dimension_numbers = #tpu.dot_dimension_numbers<[1], [0], [0], [1], [0, 0, 1, 1], [], []>} : vector<2x128xbf16>, vector<128x1024xbf16>, vector<2x1024xf32> -> vector<2x1024xf32>
    %366 = arith.addf %362, %365 : vector<2x1024xf32>
    %c0_202 = arith.constant 0 : index
    %c0_203 = arith.constant 0 : index
    %367 = vector.load %arg21[%c0_202, %c0_203] : memref<1x1024xf32, #tpu.memory_space<vmem>>, vector<1x1024xf32>
    %368 = vector.broadcast %367 : vector<1x1024xf32> to vector<2x1024xf32>
    %369 = arith.addf %366, %368 : vector<2x1024xf32>
    %cst_204 = arith.constant 0.000000e+00 : f32
    %370 = vector.broadcast %cst_204 : f32 to vector<2x1024xf32>
    %371 = arith.maximumf %369, %370 : vector<2x1024xf32>
    %372 = arith.truncf %371 : vector<2x1024xf32> to vector<2x1024xbf16>
    %c0_205 = arith.constant 0 : index
    %c0_206 = arith.constant 0 : index
    %373 = vector.load %arg29[%c0_205, %c0_206] : memref<1024x512xbf16, #tpu.memory_space<vmem>>, vector<1024x512xbf16>
    %cst_207 = arith.constant dense<0.000000e+00> : vector<2x512xf32>
    %374 = tpu.matmul %372, %373, %cst_207 {dimension_numbers = #tpu.dot_dimension_numbers<[1], [0], [0], [1], [0, 0, 1, 1], [], []>} : vector<2x1024xbf16>, vector<1024x512xbf16>, vector<2x512xf32> -> vector<2x512xf32>
    %c0_208 = arith.constant 0 : index
    %c0_209 = arith.constant 0 : index
    %375 = vector.load %arg22[%c0_208, %c0_209] : memref<1x512xf32, #tpu.memory_space<vmem>>, vector<1x512xf32>
    %376 = vector.broadcast %375 : vector<1x512xf32> to vector<2x512xf32>
    %377 = arith.addf %374, %376 : vector<2x512xf32>
    %cst_210 = arith.constant 0.000000e+00 : f32
    %378 = vector.broadcast %cst_210 : f32 to vector<2x512xf32>
    %379 = arith.maximumf %377, %378 : vector<2x512xf32>
    %380 = arith.truncf %379 : vector<2x512xf32> to vector<2x512xbf16>
    %c0_211 = arith.constant 0 : index
    %c0_212 = arith.constant 0 : index
    %381 = vector.load %arg30[%c0_211, %c0_212] : memref<512x128xbf16, #tpu.memory_space<vmem>>, vector<512x128xbf16>
    %cst_213 = arith.constant dense<0.000000e+00> : vector<2x128xf32>
    %382 = tpu.matmul %380, %381, %cst_213 {dimension_numbers = #tpu.dot_dimension_numbers<[1], [0], [0], [1], [0, 0, 1, 1], [], []>} : vector<2x512xbf16>, vector<512x128xbf16>, vector<2x128xf32> -> vector<2x128xf32>
    %c0_214 = arith.constant 0 : index
    %c0_215 = arith.constant 0 : index
    %383 = vector.load %arg23[%c0_214, %c0_215] : memref<1x128xf32, #tpu.memory_space<vmem>>, vector<1x128xf32>
    %384 = vector.broadcast %383 : vector<1x128xf32> to vector<2x128xf32>
    %385 = arith.addf %382, %384 : vector<2x128xf32>
    %c0_216 = arith.constant 0 : index
    %c0_217 = arith.constant 0 : index
    %386 = vector.load %arg27[%c0_216, %c0_217] : memref<2x128xf32, #tpu.memory_space<vmem>>, vector<2x128xf32>
    tpu.vector_store %arg27[%c0_216, %c0_217], %385 {strides = array<i32>} : memref<2x128xf32, #tpu.memory_space<vmem>>, vector<2x128xf32>,
    return
  }
  func.func @transform_0(%arg0: i32) -> (i32, i32) {
    %c0_i32 = arith.constant 0 : i32
    %c0_i32_0 = arith.constant 0 : i32
    %c0_i32_1 = arith.constant 0 : i32
    return %c0_i32, %c0_i32_0 : i32, i32
  }
  func.func @transform_1(%arg0: i32) -> (i32, i32) {
    %c0_i32 = arith.constant 0 : i32
    %c0_i32_0 = arith.constant 0 : i32
    %c0_i32_1 = arith.constant 0 : i32
    return %c0_i32, %c0_i32_0 : i32, i32
  }
  func.func @transform_2(%arg0: i32) -> (i32, i32) {
    %c0_i32 = arith.constant 0 : i32
    %c0_i32_0 = arith.constant 0 : i32
    %c0_i32_1 = arith.constant 0 : i32
    return %c0_i32, %c0_i32_0 : i32, i32
  }
  func.func @transform_3(%arg0: i32) -> (i32, i32) {
    %c0_i32 = arith.constant 0 : i32
    %c0_i32_0 = arith.constant 0 : i32
    %c0_i32_1 = arith.constant 0 : i32
    return %c0_i32, %c0_i32_0 : i32, i32
  }
  func.func @transform_4(%arg0: i32) -> (i32, i32, i32) {
    %c0_i32 = arith.constant 0 : i32
    %c0_i32_0 = arith.constant 0 : i32
    %c0_i32_1 = arith.constant 0 : i32
    %c0_i32_2 = arith.constant 0 : i32
    return %c0_i32, %c0_i32_0, %c0_i32_1 : i32, i32, i32
  }
  func.func @transform_5(%arg0: i32) -> (i32, i32, i32) {
    %c0_i32 = arith.constant 0 : i32
    %c0_i32_0 = arith.constant 0 : i32
    %c0_i32_1 = arith.constant 0 : i32
    %c0_i32_2 = arith.constant 0 : i32
    return %c0_i32, %c0_i32_0, %c0_i32_1 : i32, i32, i32
  }
  func.func @transform_6(%arg0: i32) -> (i32, i32, i32) {
    %c0_i32 = arith.constant 0 : i32
    %c0_i32_0 = arith.constant 0 : i32
    %c0_i32_1 = arith.constant 0 : i32
    %c0_i32_2 = arith.constant 0 : i32
    return %c0_i32, %c0_i32_0, %c0_i32_1 : i32, i32, i32
  }
  func.func @transform_7(%arg0: i32) -> (i32, i32, i32) {
    %c0_i32 = arith.constant 0 : i32
    %c0_i32_0 = arith.constant 0 : i32
    %c0_i32_1 = arith.constant 0 : i32
    %c0_i32_2 = arith.constant 0 : i32
    return %c0_i32, %c0_i32_0, %c0_i32_1 : i32, i32, i32
  }
  func.func @transform_8(%arg0: i32) -> (i32, i32, i32) {
    %c0_i32 = arith.constant 0 : i32
    %c0_i32_0 = arith.constant 0 : i32
    %c0_i32_1 = arith.constant 0 : i32
    %c0_i32_2 = arith.constant 0 : i32
    return %c0_i32, %c0_i32_0, %c0_i32_1 : i32, i32, i32
  }
  func.func @transform_9(%arg0: i32) -> (i32, i32, i32) {
    %c0_i32 = arith.constant 0 : i32
    %c0_i32_0 = arith.constant 0 : i32
    %c0_i32_1 = arith.constant 0 : i32
    %c0_i32_2 = arith.constant 0 : i32
    return %c0_i32, %c0_i32_0, %c0_i32_1 : i32, i32, i32
  }
  func.func @transform_10(%arg0: i32) -> (i32, i32) {
    %c0_i32 = arith.constant 0 : i32
    %c0_i32_0 = arith.constant 0 : i32
    %c0_i32_1 = arith.constant 0 : i32
    return %c0_i32, %c0_i32_0 : i32, i32
  }
  func.func @transform_11(%arg0: i32) -> (i32, i32) {
    %c0_i32 = arith.constant 0 : i32
    %c0_i32_0 = arith.constant 0 : i32
    %c0_i32_1 = arith.constant 0 : i32
    return %c0_i32, %c0_i32_0 : i32, i32
  }
  func.func @transform_12(%arg0: i32) -> (i32, i32) {
    %c0_i32 = arith.constant 0 : i32
    %c0_i32_0 = arith.constant 0 : i32
    %c0_i32_1 = arith.constant 0 : i32
    return %c0_i32, %c0_i32_0 : i32, i32
  }
  func.func @transform_13(%arg0: i32) -> (i32, i32) {
    %c0_i32 = arith.constant 0 : i32
    %c0_i32_0 = arith.constant 0 : i32
    %c0_i32_1 = arith.constant 0 : i32
    return %c0_i32, %c0_i32_0 : i32, i32
  }
  func.func @transform_14(%arg0: i32) -> (i32, i32) {
    %c0_i32 = arith.constant 0 : i32
    %c0_i32_0 = arith.constant 0 : i32
    %c0_i32_1 = arith.constant 0 : i32
    return %c0_i32, %c0_i32_0 : i32, i32
  }
  func.func @transform_15(%arg0: i32) -> (i32, i32) {
    %c0_i32 = arith.constant 0 : i32
    %c0_i32_0 = arith.constant 0 : i32
    %c0_i32_1 = arith.constant 0 : i32
    return %c0_i32, %c0_i32_0 : i32, i32
  }
  func.func @transform_16(%arg0: i32) -> (i32, i32) {
    %c0_i32 = arith.constant 0 : i32
    %c0_i32_0 = arith.constant 0 : i32
    %c0_i32_1 = arith.constant 0 : i32
    return %c0_i32, %c0_i32_0 : i32, i32
  }
  func.func @transform_17(%arg0: i32) -> (i32, i32) {
    %c0_i32 = arith.constant 0 : i32
    %c0_i32_0 = arith.constant 0 : i32
    %c0_i32_1 = arith.constant 0 : i32
    return %c0_i32, %c0_i32_0 : i32, i32
  }
  func.func @transform_18(%arg0: i32) -> (i32, i32, i32) {
    %c0_i32 = arith.constant 0 : i32
    %c0_i32_0 = arith.constant 0 : i32
    %c0_i32_1 = arith.constant 0 : i32
    %c0_i32_2 = arith.constant 0 : i32
    return %c0_i32, %c0_i32_0, %c0_i32_1 : i32, i32, i32
  }
  func.func @transform_19(%arg0: i32) -> (i32, i32) {
    %c0_i32 = arith.constant 0 : i32
    %c0_i32_0 = arith.constant 0 : i32
    %c0_i32_1 = arith.constant 0 : i32
    return %c0_i32, %c0_i32_0 : i32, i32
  }
  func.func @transform_20(%arg0: i32) -> (i32, i32) {
    %c0_i32 = arith.constant 0 : i32
    %c0_i32_0 = arith.constant 0 : i32
    %c0_i32_1 = arith.constant 0 : i32
    return %c0_i32, %c0_i32_0 : i32, i32
  }
  func.func @transform_21(%arg0: i32) -> (i32, i32) {
    %c0_i32 = arith.constant 0 : i32
    %c0_i32_0 = arith.constant 0 : i32
    %c0_i32_1 = arith.constant 0 : i32
    return %c0_i32, %c0_i32_0 : i32, i32
  }
  func.func @transform_22(%arg0: i32) -> (i32, i32) {
    %c0_i32 = arith.constant 0 : i32
    %c0_i32_0 = arith.constant 0 : i32
    %c0_i32_1 = arith.constant 0 : i32
    return %c0_i32, %c0_i32_0 : i32, i32
  }
  func.func @transform_26(%arg0: i32) -> (i32, i32) {
    %c0_i32 = arith.constant 0 : i32
    %c0_i32_0 = arith.constant 0 : i32
    %c0_i32_1 = arith.constant 0 : i32
    return %c0_i32, %c0_i32_0 : i32, i32
  }
}

</mosaic_0001>

<llo_original>
// kernel: tpu_custom_call.1
$region0: #{tpu_custom_call.1}
  #allocation0 [shape = 'u32[]', space=smem, size = 0x4, offset = 0x4, fixed_abs, tag = 'smem constant byte address 0x4 - core index']
  #allocation1 [shape = 'u32[144,128]{1,0:T(1,128)}', space=vmem, size = 0x12000, scoped, tag = 'internal scratch']
  #allocation2 [shape = 'bf16[256,1024]{1,0:T(16,128)(2,1)}', space=vmem, size = 0x80000, scoped, tag = 'scratch operand']
  #allocation3 [shape = 'bf16[1024,512]{1,0:T(16,128)(2,1)}', space=vmem, size = 0x100000, scoped, tag = 'scratch operand']
  #allocation4 [shape = 'bf16[512,128]{1,0:T(16,128)(2,1)}', space=vmem, size = 0x20000, scoped, tag = 'scratch operand']
  #allocation5 [shape = 's32[3]{0}', space=sflag, size = 0xc, scoped, tag = 'scratch operand']
  #allocation27 [shape = 's32[]', space=sflag, size = 0x4, offset = 0, fixed_abs, tag = 'sflag constant byte address 0x0 - dummy sync flag']
  #allocation29 [shape = 's32[]', space=sflag, size = 0x4, offset = 0, fixed_abs, tag = 'sflag constant byte address 0x0 - dummy sync flag']
  #allocation31 [shape = 's32[]', space=sflag, size = 0x4, offset = 0, fixed_abs, tag = 'sflag constant byte address 0x0 - dummy sync flag']
  #allocation32 [shape = 's32[]', space=sflag, size = 0x4, offset = 0, fixed_abs, tag = 'sflag constant byte address 0x0 - dummy sync flag']
  #allocation33 [shape = 'u32[]', space=smem, size = 0x4, offset = 0x44, fixed_abs, tag = 'smem constant byte address 0x44 - assertion arg 0']
  #allocation34 [shape = 'u32[]', space=smem, size = 0x4, offset = 0x48, fixed_abs, tag = 'smem constant byte address 0x48 - assertion arg 1']
  %s0 = inlined_call_operand.hbm [shape: f32[20,128], index: 0, kind: input, shape index: {}]
  %s1 = inlined_call_operand.hbm [shape: f32[20,20], index: 1, kind: input, shape index: {}]
  %s2 = inlined_call_operand.hbm [shape: f32[2,20], index: 2, kind: input, shape index: {}]
  %s3 = inlined_call_operand.vmem [shape: f32[128,32], index: 3, kind: input, shape index: {}]
  %s4 = inlined_call_operand.hbm [shape: f32[4,32,32], index: 4, kind: input, shape index: {}]
  %s5 = inlined_call_operand.hbm [shape: f32[5,1,32], index: 5, kind: input, shape index: {}]
  %s6 = inlined_call_operand.vmem [shape: f32[5,32,32], index: 6, kind: input, shape index: {}]
  %s7 = inlined_call_operand.hbm [shape: f32[5,1,32], index: 7, kind: input, shape index: {}]
  %s8 = inlined_call_operand.hbm [shape: f32[5,1,32], index: 8, kind: input, shape index: {}]
  %s9 = inlined_call_operand.hbm [shape: f32[5,1,32], index: 9, kind: input, shape index: {}]
  %s10 = inlined_call_operand.hbm [shape: f32[160,128], index: 10, kind: input, shape index: {}]
  %s11 = inlined_call_operand.vmem [shape: f32[1,128], index: 11, kind: input, shape index: {}]
  %s12 = inlined_call_operand.hbm [shape: f32[16,32], index: 12, kind: input, shape index: {}]
  %s13 = inlined_call_operand.vmem [shape: f32[32,128], index: 13, kind: input, shape index: {}]
  %s14 = inlined_call_operand.hbm [shape: f32[32,128], index: 14, kind: input, shape index: {}]
  %s15 = inlined_call_operand.vmem [shape: f32[1,128], index: 15, kind: input, shape index: {}]
  %s16 = inlined_call_operand.vmem [shape: f32[2,32], index: 16, kind: input, shape index: {}]
  %s17 = inlined_call_operand.vmem [shape: f32[2,32], index: 17, kind: input, shape index: {}]
  %s18 = inlined_call_operand.hbm [shape: f32[8,32,128], index: 18, kind: input, shape index: {}]
  %s19 = inlined_call_operand.vmem [shape: f32[1,128], index: 19, kind: input, shape index: {}]
  %s20 = inlined_call_operand.vmem [shape: f32[1,1024], index: 20, kind: input, shape index: {}]
  %s21 = inlined_call_operand.vmem [shape: f32[1,512], index: 21, kind: input, shape index: {}]
  %s22 = inlined_call_operand.vmem [shape: f32[1,128], index: 22, kind: input, shape index: {}]
  %s23 = inlined_call_operand.hbm [shape: bf16[256,1024], index: 23, kind: input, shape index: {}]
  %s24 = inlined_call_operand.hbm [shape: bf16[1024,512], index: 24, kind: input, shape index: {}]
  %s25 = inlined_call_operand.hbm [shape: bf16[512,128], index: 25, kind: input, shape index: {}]
  %s26 = inlined_call_operand.hbm [shape: f32[2,128], index: 26, kind: output, shape index: {}]
  %s27 = sld [smem:[#allocation0]]
  $region154: #{tpu_custom_call.1} parent=0
    _
  %s29 = ssub.s32 1, %s27
  %s30 = scalar_select 0, %s29, %s27
  $region1: #{tpu_custom_call.1} parent=0
    #allocation6 [shape = 'u8[12288]{0}', space=vmem, size = 0x3000, scoped, tag = 'input window, operand 0, single buffered']
    #allocation7 [shape = 's32[1]{0}', space=sflag, size = 0x4, scoped, tag = 'scoped memory for tpu_custom_call.1']
    #allocation8 [shape = 's32[1]{0}', space=sflag, size = 0x4, scoped, tag = 'scoped memory for tpu_custom_call.1']
    #allocation9 [shape = 'u8[12288]{0}', space=vmem, size = 0x3000, scoped, tag = 'input window, operand 1, single buffered']
    #allocation10 [shape = 's32[1]{0}', space=sflag, size = 0x4, scoped, tag = 'scoped memory for tpu_custom_call.1']
    #allocation11 [shape = 'u8[1024]{0}', space=vmem, size = 0x400, scoped, tag = 'input window, operand 2, single buffered']
    #allocation12 [shape = 'u8[65536]{0}', space=vmem, size = 0x10000, scoped, tag = 'input window, operand 4, single buffered']
    #allocation13 [shape = 's32[1]{0}', space=sflag, size = 0x4, scoped, tag = 'scoped memory for tpu_custom_call.1']
    #allocation14 [shape = 'u8[2560]{0}', space=vmem, size = 0xc00, scoped, tag = 'input window, operand 5, single buffered']
    #allocation15 [shape = 'u8[2560]{0}', space=vmem, size = 0xc00, scoped, tag = 'input window, operand 7, single buffered']
    #allocation16 [shape = 's32[1]{0}', space=sflag, size = 0x4, scoped, tag = 'scoped memory for tpu_custom_call.1']
    #allocation17 [shape = 'u8[2560]{0}', space=vmem, size = 0xc00, scoped, tag = 'input window, operand 8, single buffered']
    #allocation18 [shape = 'u8[2560]{0}', space=vmem, size = 0xc00, scoped, tag = 'input window, operand 9, single buffered']
    #allocation19 [shape = 's32[1]{0}', space=sflag, size = 0x4, scoped, tag = 'scoped memory for tpu_custom_call.1']
    #allocation20 [shape = 'u8[81920]{0}', space=vmem, size = 0x14000, scoped, tag = 'input window, operand 10, single buffered']
    #allocation21 [shape = 'u8[8192]{0}', space=vmem, size = 0x2000, scoped, tag = 'input window, operand 12, single buffered']
    #allocation22 [shape = 's32[1]{0}', space=sflag, size = 0x4, scoped, tag = 'scoped memory for tpu_custom_call.1']
    #allocation23 [shape = 'u8[16384]{0}', space=vmem, size = 0x4000, scoped, tag = 'input window, operand 14, single buffered']
    #allocation24 [shape = 'u8[131072]{0}', space=vmem, size = 0x20000, scoped, tag = 'input window, operand 18, single buffered']
    #allocation25 [shape = 's32[1]{0}', space=sflag, size = 0x4, scoped, tag = 'scoped memory for tpu_custom_call.1']
    #allocation26 [shape = 'u8[1024]{0}', space=vmem, size = 0x400, scoped, tag = 'output window, operand 0, single buffered']
    #allocation28 [shape = 'u32[9]{0}', space=smem, size = 0x24, scoped, tag = 'DMA stride descriptor']
    #allocation30 [shape = 'u32[9]{0}', space=smem, size = 0x24, scoped, tag = 'DMA stride descriptor']
    %31 = vsyncpa [#allocation7], 0
    %32 = vsyncpa [#allocation10], 0
    %33 = vsyncpa [#allocation13], 0
    %34 = vsyncpa [#allocation16], 0
    %35 = vsyncpa [#allocation19], 0
    %36 = vsyncpa [#allocation22], 0
    %37 = vsyncpa [#allocation25], 0
    %38 = vsyncpa [#allocation8], 0
    // Predicated region
    $region2: #{tpu_custom_call.1} parent=1 // pred_check
      _
    $region3: #{tpu_custom_call.1} parent=1 // pred_check_branch
      %40 = sbr.rel (0) target = $region5
    $region4: #{tpu_custom_call.1} parent=1 // pred_region
      %s42 = ssub.s32 384, 384
      %43 = vsyncadd [#allocation7], %s42
      %s44 = sshll.u32 [#allocation6], 4
      %s45 = int_to_ptr.vmem [resolvable:$true] %s44
      %50 = dma.hbm_to_vmem [thread:$0]  %s0, 384, %s45, [#allocation7], 128, 128, 8
    $region5: #{tpu_custom_call.1} parent=1 // pred_fallthru
      _
    // Predicated region
    $region6: #{tpu_custom_call.1} parent=1 // pred_check
      _
    $region7: #{tpu_custom_call.1} parent=1 // pred_check_branch
      %52 = sbr.rel (0) target = $region9
    $region8: #{tpu_custom_call.1} parent=1 // pred_region
      %s54 = ssub.s32 384, 384
      %55 = vsyncadd [#allocation10], %s54
      %s56 = sshll.u32 [#allocation9], 4
      %s57 = int_to_ptr.vmem [resolvable:$true] %s56
      %62 = dma.hbm_to_vmem [thread:$0]  %s1, 384, %s57, [#allocation10], 128, 128, 8
    $region9: #{tpu_custom_call.1} parent=1 // pred_fallthru
      _
    // Predicated region
    $region10: #{tpu_custom_call.1} parent=1 // pred_check
      _
    $region11: #{tpu_custom_call.1} parent=1 // pred_check_branch
      %64 = sbr.rel (0) target = $region13
    $region12: #{tpu_custom_call.1} parent=1 // pred_region
      %s66 = ssub.s32 32, 32
      %67 = vsyncadd [#allocation10], %s66
      %s69 = sshll.u32 [#allocation11], 4
      %s70 = int_to_ptr.vmem [resolvable:$true] %s69
      %72 = dma.hbm_to_vmem [thread:$0]  %s2, 32, %s70, [#allocation10]
    $region13: #{tpu_custom_call.1} parent=1 // pred_fallthru
      _
    // Predicated region
    $region14: #{tpu_custom_call.1} parent=1 // pred_check
      _
    $region15: #{tpu_custom_call.1} parent=1 // pred_check_branch
      %74 = sbr.rel (0) target = $region17
    $region16: #{tpu_custom_call.1} parent=1 // pred_region
      _
    $region17: #{tpu_custom_call.1} parent=1 // pred_fallthru
      _
    // Predicated region
    $region18: #{tpu_custom_call.1} parent=1 // pred_check
      _
    $region19: #{tpu_custom_call.1} parent=1 // pred_check_branch
      %76 = sbr.rel (0) target = $region21
    $region20: #{tpu_custom_call.1} parent=1 // pred_region
      %s78 = ssub.s32 2048, 2048
      %79 = vsyncadd [#allocation13], %s78
      %s80 = sshll.u32 [#allocation12], 4
      %s81 = int_to_ptr.vmem [resolvable:$true] %s80
      %86 = dma.hbm_to_vmem [thread:$0]  %s4, 2048, %s81, [#allocation13], 128, 128, 8
    $region21: #{tpu_custom_call.1} parent=1 // pred_fallthru
      _
    // Predicated region
    $region22: #{tpu_custom_call.1} parent=1 // pred_check
      _
    $region23: #{tpu_custom_call.1} parent=1 // pred_check_branch
      %88 = sbr.rel (0) target = $region25
    $region24: #{tpu_custom_call.1} parent=1 // pred_region
      %s90 = ssub.s32 80, 80
      %91 = vsyncadd [#allocation13], %s90
      %s92 = sshll.u32 [#allocation14], 4
      %s93 = int_to_ptr.vmem [resolvable:$true] %s92
      %98 = dma.hbm_to_vmem [thread:$0]  %s5, 80, %s93, [#allocation13], 16, 16, 1
    $region25: #{tpu_custom_call.1} parent=1 // pred_fallthru
      _
    // Predicated region
    $region26: #{tpu_custom_call.1} parent=1 // pred_check
      _
    $region27: #{tpu_custom_call.1} parent=1 // pred_check_branch
      %100 = sbr.rel (0) target = $region29
    $region28: #{tpu_custom_call.1} parent=1 // pred_region
      _
    $region29: #{tpu_custom_call.1} parent=1 // pred_fallthru
      _
    // Predicated region
    $region30: #{tpu_custom_call.1} parent=1 // pred_check
      _
    $region31: #{tpu_custom_call.1} parent=1 // pred_check_branch
      %102 = sbr.rel (0) target = $region33
    $region32: #{tpu_custom_call.1} parent=1 // pred_region
      %s104 = ssub.s32 80, 80
      %105 = vsyncadd [#allocation16], %s104
      %s106 = sshll.u32 [#allocation15], 4
      %s107 = int_to_ptr.vmem [resolvable:$true] %s106
      %112 = dma.hbm_to_vmem [thread:$0]  %s7, 80, %s107, [#allocation16], 16, 16, 1
    $region33: #{tpu_custom_call.1} parent=1 // pred_fallthru
      _
    // Predicated region
    $region34: #{tpu_custom_call.1} parent=1 // pred_check
      _
    $region35: #{tpu_custom_call.1} parent=1 // pred_check_branch
      %114 = sbr.rel (0) target = $region37
    $region36: #{tpu_custom_call.1} parent=1 // pred_region
      %s116 = ssub.s32 80, 80
      %117 = vsyncadd [#allocation16], %s116
      %s118 = sshll.u32 [#allocation17], 4
      %s119 = int_to_ptr.vmem [resolvable:$true] %s118
      %124 = dma.hbm_to_vmem [thread:$0]  %s8, 80, %s119, [#allocation16], 16, 16, 1
    $region37: #{tpu_custom_call.1} parent=1 // pred_fallthru
      _
    // Predicated region
    $region38: #{tpu_custom_call.1} parent=1 // pred_check
      _
    $region39: #{tpu_custom_call.1} parent=1 // pred_check_branch
      %126 = sbr.rel (0) target = $region41
    $region40: #{tpu_custom_call.1} parent=1 // pred_region
      %s128 = ssub.s32 80, 80
      %129 = vsyncadd [#allocation19], %s128
      %s130 = sshll.u32 [#allocation18], 4
      %s131 = int_to_ptr.vmem [resolvable:$true] %s130
      %136 = dma.hbm_to_vmem [thread:$0]  %s9, 80, %s131, [#allocation19], 16, 16, 1
    $region41: #{tpu_custom_call.1} parent=1 // pred_fallthru
      _
    // Predicated region
    $region42: #{tpu_custom_call.1} parent=1 // pred_check
      _
    $region43: #{tpu_custom_call.1} parent=1 // pred_check_branch
      %138 = sbr.rel (0) target = $region45
    $region44: #{tpu_custom_call.1} parent=1 // pred_region
      %s140 = ssub.s32 2560, 2560
      %141 = vsyncadd [#allocation19], %s140
      %s142 = sshll.u32 [#allocation20], 4
      %s143 = int_to_ptr.vmem [resolvable:$true] %s142
      %148 = dma.hbm_to_vmem [thread:$0]  %s10, 2560, %s143, [#allocation19], 128, 128, 8
    $region45: #{tpu_custom_call.1} parent=1 // pred_fallthru
      _
    // Predicated region
    $region46: #{tpu_custom_call.1} parent=1 // pred_check
      _
    $region47: #{tpu_custom_call.1} parent=1 // pred_check_branch
      %150 = sbr.rel (0) target = $region49
    $region48: #{tpu_custom_call.1} parent=1 // pred_region
      _
    $region49: #{tpu_custom_call.1} parent=1 // pred_fallthru
      _
    // Predicated region
    $region50: #{tpu_custom_call.1} parent=1 // pred_check
      _
    $region51: #{tpu_custom_call.1} parent=1 // pred_check_branch
      %152 = sbr.rel (0) target = $region53
    $region52: #{tpu_custom_call.1} parent=1 // pred_region
      %s154 = ssub.s32 256, 256
      %155 = vsyncadd [#allocation22], %s154
      %s156 = sshll.u32 [#allocation21], 4
      %s157 = int_to_ptr.vmem [resolvable:$true] %s156
      %162 = dma.hbm_to_vmem [thread:$0]  %s12, 256, %s157, [#allocation22], 128, 128, 8
    $region53: #{tpu_custom_call.1} parent=1 // pred_fallthru
      _
    // Predicated region
    $region54: #{tpu_custom_call.1} parent=1 // pred_check
      _
    $region55: #{tpu_custom_call.1} parent=1 // pred_check_branch
      %164 = sbr.rel (0) target = $region57
    $region56: #{tpu_custom_call.1} parent=1 // pred_region
      _
    $region57: #{tpu_custom_call.1} parent=1 // pred_fallthru
      _
    // Predicated region
    $region58: #{tpu_custom_call.1} parent=1 // pred_check
      _
    $region59: #{tpu_custom_call.1} parent=1 // pred_check_branch
      %166 = sbr.rel (0) target = $region61
    $region60: #{tpu_custom_call.1} parent=1 // pred_region
      %s168 = ssub.s32 512, 512
      %169 = vsyncadd [#allocation22], %s168
      %s170 = sshll.u32 [#allocation23], 4
      %s171 = int_to_ptr.vmem [resolvable:$true] %s170
      %176 = dma.hbm_to_vmem [thread:$0]  %s14, 512, %s171, [#allocation22], 128, 128, 8
    $region61: #{tpu_custom_call.1} parent=1 // pred_fallthru
      _
    // Predicated region
    $region62: #{tpu_custom_call.1} parent=1 // pred_check
      _
    $region63: #{tpu_custom_call.1} parent=1 // pred_check_branch
      %178 = sbr.rel (0) target = $region65
    $region64: #{tpu_custom_call.1} parent=1 // pred_region
      _
    $region65: #{tpu_custom_call.1} parent=1 // pred_fallthru
      _
    // Predicated region
    $region66: #{tpu_custom_call.1} parent=1 // pred_check
      _
    $region67: #{tpu_custom_call.1} parent=1 // pred_check_branch
      %180 = sbr.rel (0) target = $region69
    $region68: #{tpu_custom_call.1} parent=1 // pred_region
      _
    $region69: #{tpu_custom_call.1} parent=1 // pred_fallthru
      _
    // Predicated region
    $region70: #{tpu_custom_call.1} parent=1 // pred_check
      _
    $region71: #{tpu_custom_call.1} parent=1 // pred_check_branch
      %182 = sbr.rel (0) target = $region73
    $region72: #{tpu_custom_call.1} parent=1 // pred_region
      _
    $region73: #{tpu_custom_call.1} parent=1 // pred_fallthru
      _
    // Predicated region
    $region74: #{tpu_custom_call.1} parent=1 // pred_check
      _
    $region75: #{tpu_custom_call.1} parent=1 // pred_check_branch
      %184 = sbr.rel (0) target = $region77
    $region76: #{tpu_custom_call.1} parent=1 // pred_region
      %s186 = ssub.s32 4096, 4096
      %187 = vsyncadd [#allocation25], %s186
      %s188 = sshll.u32 [#allocation24], 4
      %s189 = int_to_ptr.vmem [resolvable:$true] %s188
      %194 = dma.hbm_to_vmem [thread:$0]  %s18, 4096, %s189, [#allocation25], 128, 128, 8
    $region77: #{tpu_custom_call.1} parent=1 // pred_fallthru
      _
    // Predicated region
    $region78: #{tpu_custom_call.1} parent=1 // pred_check
      _
    $region79: #{tpu_custom_call.1} parent=1 // pred_check_branch
      %196 = sbr.rel (0) target = $region81
    $region80: #{tpu_custom_call.1} parent=1 // pred_region
      _
    $region81: #{tpu_custom_call.1} parent=1 // pred_fallthru
      _
    // Predicated region
    $region82: #{tpu_custom_call.1} parent=1 // pred_check
      _
    $region83: #{tpu_custom_call.1} parent=1 // pred_check_branch
      %198 = sbr.rel (0) target = $region85
    $region84: #{tpu_custom_call.1} parent=1 // pred_region
      _
    $region85: #{tpu_custom_call.1} parent=1 // pred_fallthru
      _
    // Predicated region
    $region86: #{tpu_custom_call.1} parent=1 // pred_check
      _
    $region87: #{tpu_custom_call.1} parent=1 // pred_check_branch
      %200 = sbr.rel (0) target = $region89
    $region88: #{tpu_custom_call.1} parent=1 // pred_region
      _
    $region89: #{tpu_custom_call.1} parent=1 // pred_fallthru
      _
    // Predicated region
    $region90: #{tpu_custom_call.1} parent=1 // pred_check
      _
    $region91: #{tpu_custom_call.1} parent=1 // pred_check_branch
      %202 = sbr.rel (0) target = $region93
    $region92: #{tpu_custom_call.1} parent=1 // pred_region
      _
    $region93: #{tpu_custom_call.1} parent=1 // pred_fallthru
      _
    // Predicated region
    $region94: #{tpu_custom_call.1} parent=1 // pred_check
      _
    $region95: #{tpu_custom_call.1} parent=1 // pred_check_branch
      %204 = sbr.rel (0) target = $region97
    $region96: #{tpu_custom_call.1} parent=1 // pred_region
      %205 = dma.done [#allocation7], 384
    $region97: #{tpu_custom_call.1} parent=1 // pred_fallthru
      _
    // Predicated region
    $region98: #{tpu_custom_call.1} parent=1 // pred_check
      _
    $region99: #{tpu_custom_call.1} parent=1 // pred_check_branch
      %207 = sbr.rel (0) target = $region101
    $region100: #{tpu_custom_call.1} parent=1 // pred_region
      %208 = dma.done [#allocation10], 384
    $region101: #{tpu_custom_call.1} parent=1 // pred_fallthru
      _
    // Predicated region
    $region102: #{tpu_custom_call.1} parent=1 // pred_check
      _
    $region103: #{tpu_custom_call.1} parent=1 // pred_check_branch
      %210 = sbr.rel (0) target = $region105
    $region104: #{tpu_custom_call.1} parent=1 // pred_region
      %211 = dma.done [#allocation10], 32
    $region105: #{tpu_custom_call.1} parent=1 // pred_fallthru
      _
    // Predicated region
    $region106: #{tpu_custom_call.1} parent=1 // pred_check
      _
    $region107: #{tpu_custom_call.1} parent=1 // pred_check_branch
      %213 = sbr.rel (0) target = $region109
    $region108: #{tpu_custom_call.1} parent=1 // pred_region
      %214 = dma.done [#allocation13], 2048
    $region109: #{tpu_custom_call.1} parent=1 // pred_fallthru
      _
    // Predicated region
    $region110: #{tpu_custom_call.1} parent=1 // pred_check
      _
    $region111: #{tpu_custom_call.1} parent=1 // pred_check_branch
      %216 = sbr.rel (0) target = $region113
    $region112: #{tpu_custom_call.1} parent=1 // pred_region
      %217 = dma.done [#allocation13], 80
    $region113: #{tpu_custom_call.1} parent=1 // pred_fallthru
      _
    // Predicated region
    $region114: #{tpu_custom_call.1} parent=1 // pred_check
      _
    $region115: #{tpu_custom_call.1} parent=1 // pred_check_branch
      %219 = sbr.rel (0) target = $region117
    $region116: #{tpu_custom_call.1} parent=1 // pred_region
      %220 = dma.done [#allocation16], 80
    $region117: #{tpu_custom_call.1} parent=1 // pred_fallthru
      _
    // Predicated region
    $region118: #{tpu_custom_call.1} parent=1 // pred_check
      _
    $region119: #{tpu_custom_call.1} parent=1 // pred_check_branch
      %222 = sbr.rel (0) target = $region121
    $region120: #{tpu_custom_call.1} parent=1 // pred_region
      %223 = dma.done [#allocation16], 80
    $region121: #{tpu_custom_call.1} parent=1 // pred_fallthru
      _
    // Predicated region
    $region122: #{tpu_custom_call.1} parent=1 // pred_check
      _
    $region123: #{tpu_custom_call.1} parent=1 // pred_check_branch
      %225 = sbr.rel (0) target = $region125
    $region124: #{tpu_custom_call.1} parent=1 // pred_region
      %226 = dma.done [#allocation19], 80
    $region125: #{tpu_custom_call.1} parent=1 // pred_fallthru
      _
    // Predicated region
    $region126: #{tpu_custom_call.1} parent=1 // pred_check
      _
    $region127: #{tpu_custom_call.1} parent=1 // pred_check_branch
      %228 = sbr.rel (0) target = $region129
    $region128: #{tpu_custom_call.1} parent=1 // pred_region
      %229 = dma.done [#allocation19], 2560
    $region129: #{tpu_custom_call.1} parent=1 // pred_fallthru
      _
    // Predicated region
    $region130: #{tpu_custom_call.1} parent=1 // pred_check
      _
    $region131: #{tpu_custom_call.1} parent=1 // pred_check_branch
      %231 = sbr.rel (0) target = $region133
    $region132: #{tpu_custom_call.1} parent=1 // pred_region
      %232 = dma.done [#allocation22], 256
    $region133: #{tpu_custom_call.1} parent=1 // pred_fallthru
      _
    // Predicated region
    $region134: #{tpu_custom_call.1} parent=1 // pred_check
      _
    $region135: #{tpu_custom_call.1} parent=1 // pred_check_branch
      %234 = sbr.rel (0) target = $region137
    $region136: #{tpu_custom_call.1} parent=1 // pred_region
      %235 = dma.done [#allocation22], 512
    $region137: #{tpu_custom_call.1} parent=1 // pred_fallthru
      _
    // Predicated region
    $region138: #{tpu_custom_call.1} parent=1 // pred_check
      _
    $region139: #{tpu_custom_call.1} parent=1 // pred_check_branch
      %237 = sbr.rel (0) target = $region141
    $region140: #{tpu_custom_call.1} parent=1 // pred_region
      %238 = dma.done [#allocation25], 4096
    $region141: #{tpu_custom_call.1} parent=1 // pred_fallthru
      _
    %s241 = sshll.u32 1, 14
    %s242 = sxor.u32 4294967295, %s241
    %s244 = sld [smem:[#allocation0]]
    %s245 = sadd.s32 2, %s244
    %s247 = sshll.u32 7, 26
    %s248 = sxor.u32 4294967295, %s247
    %s249 = sand.u32 0, %s248
    %s250 = sshll.u32 %s245, 26
    %s251 = sor.u32 %s249, %s250
    %s252 = sshll.u32 [#allocation2], 4
    %s253 = int_to_ptr.vmem [resolvable:$true] %s252
    %256 = sst [smem:[#allocation28]] 1024
    %s257 = scalar_lea.smem [#allocation28], 1
    %258 = sst [smem:[%s257]] 1024
    %s259 = scalar_lea.smem [#allocation28], 2
    %260 = sst [smem:[%s259]] 8
    %s261 = scalar_lea.smem [#allocation28], 3
    %262 = sst [smem:[%s261]] 64
    %s263 = scalar_lea.smem [#allocation28], 4
    %264 = sst [smem:[%s263]] 128
    %s265 = scalar_lea.smem [#allocation28], 5
    %266 = sst [smem:[%s265]] 2
    %s267 = scalar_lea.smem [#allocation28], 6
    %268 = sst [smem:[%s267]] 512
    %s269 = scalar_lea.smem [#allocation28], 7
    %270 = sst [smem:[%s269]] 64
    %s271 = scalar_lea.smem [#allocation28], 8
    %272 = sst [smem:[%s271]] 4
    %274 = dma.general %s23, 16384, %s253, [#allocation5], [#allocation27], [#allocation28], %s251, 0
    %s275 = scalar_lea.sflag [#allocation5], 1
    %s277 = sshll.u32 1, 14
    %s278 = sxor.u32 4294967295, %s277
    %s280 = sadd.s32 2, %s244
    %s282 = sshll.u32 7, 26
    %s283 = sxor.u32 4294967295, %s282
    %s284 = sand.u32 0, %s283
    %s285 = sshll.u32 %s280, 26
    %s286 = sor.u32 %s284, %s285
    %s287 = sshll.u32 [#allocation3], 4
    %s288 = int_to_ptr.vmem [resolvable:$true] %s287
    %291 = sst [smem:[#allocation30]] 512
    %s292 = scalar_lea.smem [#allocation30], 1
    %293 = sst [smem:[%s292]] 512
    %s294 = scalar_lea.smem [#allocation30], 2
    %295 = sst [smem:[%s294]] 4
    %s296 = scalar_lea.smem [#allocation30], 3
    %297 = sst [smem:[%s296]] 64
    %s298 = scalar_lea.smem [#allocation30], 4
    %299 = sst [smem:[%s298]] 128
    %s300 = scalar_lea.smem [#allocation30], 5
    %301 = sst [smem:[%s300]] 2
    %s302 = scalar_lea.smem [#allocation30], 6
    %303 = sst [smem:[%s302]] 256
    %s304 = scalar_lea.smem [#allocation30], 7
    %305 = sst [smem:[%s304]] 64
    %s306 = scalar_lea.smem [#allocation30], 8
    %307 = sst [smem:[%s306]] 4
    %309 = dma.general %s24, 32768, %s288, %s275, [#allocation29], [#allocation30], %s286, 0
    %s310 = scalar_lea.sflag [#allocation5], 2
    // Predicated region
    $region142: #{tpu_custom_call.1} parent=1 // pred_check
      _
    $region143: #{tpu_custom_call.1} parent=1 // pred_check_branch
      %312 = sbr.rel target = $region145
    $region144: #{tpu_custom_call.1} parent=1 // pred_region
      %313 = sst [smem:[#allocation33]] [#allocation32]
      %314 = sst [smem:[#allocation34]] [#allocation31]
    $region145: #{tpu_custom_call.1} parent=1 // pred_fallthru
      _
    %316 = shalt.err (0)
    %s318 = sshll.u32 [#allocation4], 4
    %s319 = int_to_ptr.vmem [resolvable:$true] %s318
    %321 = dma.hbm_to_vmem [thread:$0]  %s25, 4096, %s319, %s310
    %v322 = vld [vmem:[#allocation9] sm:$0xff]
    %v323 = vld [vmem:[#allocation9 + $0x8] sm:$0xff]
    %v324 = vld [vmem:[#allocation9 + $0x10] sm:$0xf]
    %v325 = vld [vmem:[#allocation11] sm:$0x3]
    %v326 = vld [vmem:[#allocation6] sm:$0xff]
    %v327 = vld [vmem:[#allocation6 + $0x8] sm:$0xff]
    %v328 = vld [vmem:[#allocation6 + $0x10] sm:$0xf]
    %v329 = vld [vmem:[%s3] sm:$0xff]
    %v330 = vld [vmem:[%s3 + $0x8] sm:$0xff]
    %v331 = vld [vmem:[%s3 + $0x10] sm:$0xff]
    %v332 = vld [vmem:[%s3 + $0x18] sm:$0xff]
    %v333 = vld [vmem:[%s3 + $0x20] sm:$0xff]
    %v334 = vld [vmem:[%s3 + $0x28] sm:$0xff]
    %v335 = vld [vmem:[%s3 + $0x30] sm:$0xff]
    %v336 = vld [vmem:[%s3 + $0x38] sm:$0xff]
    %v337 = vld [vmem:[%s3 + $0x40] sm:$0xff]
    %v338 = vld [vmem:[%s3 + $0x48] sm:$0xff]
    %v339 = vld [vmem:[%s3 + $0x50] sm:$0xff]
    %v340 = vld [vmem:[%s3 + $0x58] sm:$0xff]
    %v341 = vld [vmem:[%s3 + $0x60] sm:$0xff]
    %v342 = vld [vmem:[%s3 + $0x68] sm:$0xff]
    %v343 = vld [vmem:[%s3 + $0x70] sm:$0xff]
    %v344 = vld [vmem:[%s3 + $0x78] sm:$0xff]
    %345 = vmatprep.subr.mxu0 0.0
    %346 = vmatpush1.msra.mxu0 %v329
    %347 = vmatprep.subr.mxu0 0.0
    %348 = vmatpush1.msra.mxu0 %v330
    %349 = vmatprep.subr.mxu0 0.0
    %350 = vmatpush1.msra.mxu0 %v331
    %351 = vmatprep.subr.mxu0 0.0
    %352 = vmatpush1.msra.mxu0 %v332
    %353 = vmatprep.subr.mxu0 0.0
    %354 = vmatpush1.msra.mxu0 %v333
    %355 = vmatprep.subr.mxu0 0.0
    %356 = vmatpush1.msra.mxu0 %v334
    %357 = vmatprep.subr.mxu0 0.0
    %358 = vmatpush1.msra.mxu0 %v335
    %359 = vmatprep.subr.mxu0 0.0
    %360 = vmatpush1.msra.mxu0 %v336
    %361 = vmatprep.subr.mxu0 0.0
    %362 = vmatpush1.msra.mxu0 %v337
    %363 = vmatprep.subr.mxu0 0.0
    %364 = vmatpush1.msra.mxu0 %v338
    %365 = vmatprep.subr.mxu0 0.0
    %366 = vmatpush1.msra.mxu0 %v339
    %367 = vmatprep.subr.mxu0 0.0
    %368 = vmatpush1.msra.mxu0 %v340
    %369 = vmatprep.subr.mxu0 0.0
    %370 = vmatpush1.msra.mxu0 %v341
    %371 = vmatprep.subr.mxu0 0.0
    %372 = vmatpush1.msra.mxu0 %v342
    %373 = vmatprep.subr.mxu0 0.0
    %374 = vmatpush1.msra.mxu0 %v343
    %375 = vmatprep.subr.mxu0 0.0
    %376 = vmatpush1.msra.mxu0 %v344
    %377 = vmatprep.subr.mxu0 0.0
    %378 = vmatpush1.msra.mxu0 0.0
    %379 = vmatprep.subr.mxu0 0.0
    %380 = vmatpush1.msra.mxu0 0.0
    %381 = vmatprep.subr.mxu0 0.0
    %382 = vmatpush1.msra.mxu0 0.0
    %383 = vmatprep.subr.mxu0 0.0
    %384 = vmatpush1.msra.mxu0 0.0
    %385 = vmatprep.subr.mxu0 0.0
    %386 = vmatpush1.msra.mxu0 0.0
    %387 = vmatprep.subr.mxu0 0.0
    %388 = vmatpush1.msra.mxu0 0.0
    %389 = vmatprep.subr.mxu0 0.0
    %390 = vmatpush1.msra.mxu0 0.0
    %391 = vmatprep.subr.mxu0 0.0
    %392 = vmatpush1.msra.mxu0 0.0
    %393 = vmatprep.subr.mxu0 0.0
    %394 = vmatpush1.msra.mxu0 0.0
    %395 = vmatprep.subr.mxu0 0.0
    %396 = vmatpush1.msra.mxu0 0.0
    %397 = vmatprep.subr.mxu0 0.0
    %398 = vmatpush1.msra.mxu0 0.0
    %399 = vmatprep.subr.mxu0 0.0
    %400 = vmatpush1.msra.mxu0 0.0
    %401 = vmatprep.subr.mxu0 0.0
    %402 = vmatpush1.msra.mxu0 0.0
    %403 = vmatprep.subr.mxu0 0.0
    %404 = vmatpush1.msra.mxu0 0.0
    %405 = vmatprep.subr.mxu0 0.0
    %406 = vmatpush1.msra.mxu0 0.0
    %407 = vmatprep.subr.mxu0 0.0
    %408 = vmatpush1.msra.mxu0 0.0
    %409 = vmatprep.mubr.f32.mxu0 0.0
    %410 = vmatmul.mubr.f32.gmra.mrb[0].mxu0 %v326
    %v411 = vpop.f32.mrb[0].mxu0
    %v412 = vadd.f32 0.0, %v411
    %v413 = vpop.f32.mrb[0].mxu0
    %414 = vmatprep.mubr.f32.mxu0 0.0
    %415 = vmatmul.mubr.f32.gmra.mrb[0].mxu0 %v327
    %v416 = vpop.f32.mrb[0].mxu0
    %v417 = vadd.f32 0.0, %v416
    %v418 = vpop.f32.mrb[0].mxu0
    %419 = vmatprep.mubr.f32.mxu0 0.0
    %420 = vmatmul.mubr.f32.gmra.mrb[0].mxu0 %v328
    %v421 = vpop.f32.mrb[0].mxu0
    %v422 = vadd.f32 0.0, %v421
    %v423 = vpop.f32.mrb[0].mxu0
    %424 = vdwg.mxu0
    %v425 = vld [vmem:[#allocation14] sm:$0x1]
    %v427 = vlaneseq
    %v428 = vshrl.u32 %v427, 7
    %v429 = vsub.s32 0, %v428
    %v430 = vrot.slane %v425, %v429
    %vm432 = vcmask 162816
    %v434 = vsel %vm432, %v322, 0
    %v437 = vsel %vm432, %v323, 0
    %v440 = vsel %vm432, %v324, 0
    %vm442 = vcmask 1043456
    %v444 = vsel %vm442, %v422, 0
    %446 = vmatprep.subr.mxu0 0.0
    %447 = vmatpush1.msra.mxu0 %v412
    %448 = vmatprep.subr.mxu0 0.0
    %449 = vmatpush1.msra.mxu0 %v417
    %450 = vmatprep.subr.mxu0 0.0
    %451 = vmatpush1.msra.mxu0 %v444
    %452 = vmatprep.subr.mxu0 0.0
    %453 = vmatpush1.msra.mxu0 0.0
    %454 = vmatprep.subr.mxu0 0.0
    %455 = vmatpush1.msra.mxu0 0.0
    %456 = vmatprep.subr.mxu0 0.0
    %457 = vmatpush1.msra.mxu0 0.0
    %458 = vmatprep.subr.mxu0 0.0
    %459 = vmatpush1.msra.mxu0 0.0
    %460 = vmatprep.subr.mxu0 0.0
    %461 = vmatpush1.msra.mxu0 0.0
    %462 = vmatprep.subr.mxu0 0.0
    %463 = vmatpush1.msra.mxu0 0.0
    %464 = vmatprep.subr.mxu0 0.0
    %465 = vmatpush1.msra.mxu0 0.0
    %466 = vmatprep.subr.mxu0 0.0
    %467 = vmatpush1.msra.mxu0 0.0
    %468 = vmatprep.subr.mxu0 0.0
    %469 = vmatpush1.msra.mxu0 0.0
    %470 = vmatprep.subr.mxu0 0.0
    %471 = vmatpush1.msra.mxu0 0.0
    %472 = vmatprep.subr.mxu0 0.0
    %473 = vmatpush1.msra.mxu0 0.0
    %474 = vmatprep.subr.mxu0 0.0
    %475 = vmatpush1.msra.mxu0 0.0
    %476 = vmatprep.subr.mxu0 0.0
    %477 = vmatpush1.msra.mxu0 0.0
    %478 = vmatprep.subr.mxu0 0.0
    %479 = vmatpush1.msra.mxu0 0.0
    %480 = vmatprep.subr.mxu0 0.0
    %481 = vmatpush1.msra.mxu0 0.0
    %482 = vmatprep.subr.mxu0 0.0
    %483 = vmatpush1.msra.mxu0 0.0
    %484 = vmatprep.subr.mxu0 0.0
    %485 = vmatpush1.msra.mxu0 0.0
    %486 = vmatprep.subr.mxu0 0.0
    %487 = vmatpush1.msra.mxu0 0.0
    %488 = vmatprep.subr.mxu0 0.0
    %489 = vmatpush1.msra.mxu0 0.0
    %490 = vmatprep.subr.mxu0 0.0
    %491 = vmatpush1.msra.mxu0 0.0
    %492 = vmatprep.subr.mxu0 0.0
    %493 = vmatpush1.msra.mxu0 0.0
    %494 = vmatprep.subr.mxu0 0.0
    %495 = vmatpush1.msra.mxu0 0.0
    %496 = vmatprep.subr.mxu0 0.0
    %497 = vmatpush1.msra.mxu0 0.0
    %498 = vmatprep.subr.mxu0 0.0
    %499 = vmatpush1.msra.mxu0 0.0
    %500 = vmatprep.subr.mxu0 0.0
    %501 = vmatpush1.msra.mxu0 0.0
    %502 = vmatprep.subr.mxu0 0.0
    %503 = vmatpush1.msra.mxu0 0.0
    %504 = vmatprep.subr.mxu0 0.0
    %505 = vmatpush1.msra.mxu0 0.0
    %506 = vmatprep.subr.mxu0 0.0
    %507 = vmatpush1.msra.mxu0 0.0
    %508 = vmatprep.subr.mxu0 0.0
    %509 = vmatpush1.msra.mxu0 0.0
    %510 = vmatprep.mubr.f32.mxu0 0.0
    %511 = vmatmul.mubr.f32.gmra.mrb[0].mxu0 %v434
    %v512 = vpop.f32.mrb[0].mxu0
    %v513 = vadd.f32 %v430, %v512
    %v514 = vpop.f32.mrb[0].mxu0
    %515 = vmatprep.mubr.f32.mxu0 0.0
    %516 = vmatmul.mubr.f32.gmra.mrb[0].mxu0 %v437
    %v517 = vpop.f32.mrb[0].mxu0
    %v518 = vadd.f32 %v430, %v517
    %v519 = vpop.f32.mrb[0].mxu0
    %520 = vmatprep.mubr.f32.mxu0 0.0
    %521 = vmatmul.mubr.f32.gmra.mrb[0].mxu0 %v440
    %v522 = vpop.f32.mrb[0].mxu0
    %v523 = vadd.f32 %v430, %v522
    %v524 = vpop.f32.mrb[0].mxu0
    %525 = vdwg.mxu0
    %v526 = vmax.f32 %v513, 0.0
    %v527 = vmax.f32 %v518, 0.0
    %v528 = vmax.f32 %v523, 0.0
    %v529 = vld [vmem:[%s6] sm:$0xff]
    %v530 = vld [vmem:[%s6 + $0x8] sm:$0xff]
    %v531 = vld [vmem:[%s6 + $0x10] sm:$0xff]
    %v532 = vld [vmem:[%s6 + $0x18] sm:$0xff]
    %v533 = vld [vmem:[#allocation15] sm:$0x1]
    %v535 = vlaneseq
    %v536 = vshrl.u32 %v535, 7
    %v537 = vsub.s32 0, %v536
    %v538 = vrot.slane %v533, %v537
    %vm540 = vcmask 261120
    %v542 = vsel %vm540, %v526, 0
    %v545 = vsel %vm540, %v527, 0
    %v548 = vsel %vm540, %v528, 0
    %550 = vmatprep.subr.mxu0 0.0
    %551 = vmatpush1.msra.mxu0 %v529
    %552 = vmatprep.subr.mxu0 0.0
    %553 = vmatpush1.msra.mxu0 %v530
    %554 = vmatprep.subr.mxu0 0.0
    %555 = vmatpush1.msra.mxu0 %v531
    %556 = vmatprep.subr.mxu0 0.0
    %557 = vmatpush1.msra.mxu0 %v532
    %558 = vmatprep.subr.mxu0 0.0
    %559 = vmatpush1.msra.mxu0 0.0
    %560 = vmatprep.subr.mxu0 0.0
    %561 = vmatpush1.msra.mxu0 0.0
    %562 = vmatprep.subr.mxu0 0.0
    %563 = vmatpush1.msra.mxu0 0.0
    %564 = vmatprep.subr.mxu0 0.0
    %565 = vmatpush1.msra.mxu0 0.0
    %566 = vmatprep.subr.mxu0 0.0
    %567 = vmatpush1.msra.mxu0 0.0
    %568 = vmatprep.subr.mxu0 0.0
    %569 = vmatpush1.msra.mxu0 0.0
    %570 = vmatprep.subr.mxu0 0.0
    %571 = vmatpush1.msra.mxu0 0.0
    %572 = vmatprep.subr.mxu0 0.0
    %573 = vmatpush1.msra.mxu0 0.0
    %574 = vmatprep.subr.mxu0 0.0
    %575 = vmatpush1.msra.mxu0 0.0
    %576 = vmatprep.subr.mxu0 0.0
    %577 = vmatpush1.msra.mxu0 0.0
    %578 = vmatprep.subr.mxu0 0.0
    %579 = vmatpush1.msra.mxu0 0.0
    %580 = vmatprep.subr.mxu0 0.0
    %581 = vmatpush1.msra.mxu0 0.0
    %582 = vmatprep.subr.mxu0 0.0
    %583 = vmatpush1.msra.mxu0 0.0
    %584 = vmatprep.subr.mxu0 0.0
    %585 = vmatpush1.msra.mxu0 0.0
    %586 = vmatprep.subr.mxu0 0.0
    %587 = vmatpush1.msra.mxu0 0.0
    %588 = vmatprep.subr.mxu0 0.0
    %589 = vmatpush1.msra.mxu0 0.0
    %590 = vmatprep.subr.mxu0 0.0
    %591 = vmatpush1.msra.mxu0 0.0
    %592 = vmatprep.subr.mxu0 0.0
    %593 = vmatpush1.msra.mxu0 0.0
    %594 = vmatprep.subr.mxu0 0.0
    %595 = vmatpush1.msra.mxu0 0.0
    %596 = vmatprep.subr.mxu0 0.0
    %597 = vmatpush1.msra.mxu0 0.0
    %598 = vmatprep.subr.mxu0 0.0
    %599 = vmatpush1.msra.mxu0 0.0
    %600 = vmatprep.subr.mxu0 0.0
    %601 = vmatpush1.msra.mxu0 0.0
    %602 = vmatprep.subr.mxu0 0.0
    %603 = vmatpush1.msra.mxu0 0.0
    %604 = vmatprep.subr.mxu0 0.0
    %605 = vmatpush1.msra.mxu0 0.0
    %606 = vmatprep.subr.mxu0 0.0
    %607 = vmatpush1.msra.mxu0 0.0
    %608 = vmatprep.subr.mxu0 0.0
    %609 = vmatpush1.msra.mxu0 0.0
    %610 = vmatprep.subr.mxu0 0.0
    %611 = vmatpush1.msra.mxu0 0.0
    %612 = vmatprep.subr.mxu0 0.0
    %613 = vmatpush1.msra.mxu0 0.0
    %614 = vmatprep.mubr.f32.mxu0 0.0
    %615 = vmatmul.mubr.f32.gmra.mrb[0].mxu0 %v542
    %v616 = vpop.f32.mrb[0].mxu0
    %v617 = vadd.f32 %v538, %v616
    %v618 = vpop.f32.mrb[0].mxu0
    %619 = vmatprep.mubr.f32.mxu0 0.0
    %620 = vmatmul.mubr.f32.gmra.mrb[0].mxu0 %v545
    %v621 = vpop.f32.mrb[0].mxu0
    %v622 = vadd.f32 %v538, %v621
    %v623 = vpop.f32.mrb[0].mxu0
    %624 = vmatprep.mubr.f32.mxu0 0.0
    %625 = vmatmul.mubr.f32.gmra.mrb[0].mxu0 %v548
    %v626 = vpop.f32.mrb[0].mxu0
    %v627 = vadd.f32 %v538, %v626
    %v628 = vpop.f32.mrb[0].mxu0
    %629 = vdwg.mxu0
    %v630 = vmax.f32 %v617, 0.0
    %v631 = vmax.f32 %v622, 0.0
    %v632 = vmax.f32 %v627, 0.0
    %v633 = vld [vmem:[#allocation17] sm:$0x1]
    %v635 = vlaneseq
    %v636 = vshrl.u32 %v635, 7
    %v637 = vsub.s32 0, %v636
    %v638 = vrot.slane %v633, %v637
    %v640 = vmul.f32 %v630, %v638
    %v641 = vmul.f32 %v631, %v638
    %v642 = vmul.f32 %v632, %v638
    %v643 = vld [vmem:[#allocation18] sm:$0x1]
    %v645 = vlaneseq
    %v646 = vshrl.u32 %v645, 7
    %v647 = vsub.s32 0, %v646
    %v648 = vrot.slane %v643, %v647
    %v650 = vadd.f32 %v640, %v648
    %v651 = vadd.f32 %v641, %v648
    %v652 = vadd.f32 %v642, %v648
    %v654 = vsel %vm432, %v325, 0
    %v657 = vsel %vm442, %v652, 0
    %659 = vmatprep.subr.mxu0 0.0
    %660 = vmatpush1.msra.mxu0 %v650
    %661 = vmatprep.subr.mxu0 0.0
    %662 = vmatpush1.msra.mxu0 %v651
    %663 = vmatprep.subr.mxu0 0.0
    %664 = vmatpush1.msra.mxu0 %v657
    %665 = vmatprep.subr.mxu0 0.0
    %666 = vmatpush1.msra.mxu0 0.0
    %667 = vmatprep.subr.mxu0 0.0
    %668 = vmatpush1.msra.mxu0 0.0
    %669 = vmatprep.subr.mxu0 0.0
    %670 = vmatpush1.msra.mxu0 0.0
    %671 = vmatprep.subr.mxu0 0.0
    %672 = vmatpush1.msra.mxu0 0.0
    %673 = vmatprep.subr.mxu0 0.0
    %674 = vmatpush1.msra.mxu0 0.0
    %675 = vmatprep.subr.mxu0 0.0
    %676 = vmatpush1.msra.mxu0 0.0
    %677 = vmatprep.subr.mxu0 0.0
    %678 = vmatpush1.msra.mxu0 0.0
    %679 = vmatprep.subr.mxu0 0.0
    %680 = vmatpush1.msra.mxu0 0.0
    %681 = vmatprep.subr.mxu0 0.0
    %682 = vmatpush1.msra.mxu0 0.0
    %683 = vmatprep.subr.mxu0 0.0
    %684 = vmatpush1.msra.mxu0 0.0
    %685 = vmatprep.subr.mxu0 0.0
    %686 = vmatpush1.msra.mxu0 0.0
    %687 = vmatprep.subr.mxu0 0.0
    %688 = vmatpush1.msra.mxu0 0.0
    %689 = vmatprep.subr.mxu0 0.0
    %690 = vmatpush1.msra.mxu0 0.0
    %691 = vmatprep.subr.mxu0 0.0
    %692 = vmatpush1.msra.mxu0 0.0
    %693 = vmatprep.subr.mxu0 0.0
    %694 = vmatpush1.msra.mxu0 0.0
    %695 = vmatprep.subr.mxu0 0.0
    %696 = vmatpush1.msra.mxu0 0.0
    %697 = vmatprep.subr.mxu0 0.0
    %698 = vmatpush1.msra.mxu0 0.0
    %699 = vmatprep.subr.mxu0 0.0
    %700 = vmatpush1.msra.mxu0 0.0
    %701 = vmatprep.subr.mxu0 0.0
    %702 = vmatpush1.msra.mxu0 0.0
    %703 = vmatprep.subr.mxu0 0.0
    %704 = vmatpush1.msra.mxu0 0.0
    %705 = vmatprep.subr.mxu0 0.0
    %706 = vmatpush1.msra.mxu0 0.0
    %707 = vmatprep.subr.mxu0 0.0
    %708 = vmatpush1.msra.mxu0 0.0
    %709 = vmatprep.subr.mxu0 0.0
    %710 = vmatpush1.msra.mxu0 0.0
    %711 = vmatprep.subr.mxu0 0.0
    %712 = vmatpush1.msra.mxu0 0.0
    %713 = vmatprep.subr.mxu0 0.0
    %714 = vmatpush1.msra.mxu0 0.0
    %715 = vmatprep.subr.mxu0 0.0
    %716 = vmatpush1.msra.mxu0 0.0
    %717 = vmatprep.subr.mxu0 0.0
    %718 = vmatpush1.msra.mxu0 0.0
    %719 = vmatprep.subr.mxu0 0.0
    %720 = vmatpush1.msra.mxu0 0.0
    %721 = vmatprep.subr.mxu0 0.0
    %722 = vmatpush1.msra.mxu0 0.0
    %723 = vmatprep.mubr.f32.mxu0 0.0
    %724 = vmatmul.mubr.f32.gmra.mrb[0].mxu0 %v654
    %v725 = vpop.f32.mrb[0].mxu0
    %v726 = vadd.f32 0.0, %v725
    %v727 = vpop.f32.mrb[0].mxu0
    %728 = vdwg.mxu0
    %v729 = vld [vmem:[#allocation20] sm:$0xff]
    %v730 = vld [vmem:[#allocation20 + $0x8] sm:$0xff]
    %v731 = vld [vmem:[#allocation20 + $0x10] sm:$0xff]
    %v732 = vld [vmem:[#allocation20 + $0x18] sm:$0xff]
    %v733 = vld [vmem:[#allocation12] sm:$0xff]
    %v734 = vld [vmem:[#allocation12 + $0x8] sm:$0xff]
    %v735 = vld [vmem:[#allocation12 + $0x10] sm:$0xff]
    %v736 = vld [vmem:[#allocation12 + $0x18] sm:$0xff]
    %v738 = vsel %vm540, %v650, 0
    %v741 = vsel %vm540, %v651, 0
    %v743 = vsel %vm540, %v652, 0
    %745 = vmatprep.subr.mxu0 0.0
    %746 = vmatpush1.msra.mxu0 %v733
    %747 = vmatprep.subr.mxu0 0.0
    %748 = vmatpush1.msra.mxu0 %v734
    %749 = vmatprep.subr.mxu0 0.0
    %750 = vmatpush1.msra.mxu0 %v735
    %751 = vmatprep.subr.mxu0 0.0
    %752 = vmatpush1.msra.mxu0 %v736
    %753 = vmatprep.subr.mxu0 0.0
    %754 = vmatpush1.msra.mxu0 0.0
    %755 = vmatprep.subr.mxu0 0.0
    %756 = vmatpush1.msra.mxu0 0.0
    %757 = vmatprep.subr.mxu0 0.0
    %758 = vmatpush1.msra.mxu0 0.0
    %759 = vmatprep.subr.mxu0 0.0
    %760 = vmatpush1.msra.mxu0 0.0
    %761 = vmatprep.subr.mxu0 0.0
    %762 = vmatpush1.msra.mxu0 0.0
    %763 = vmatprep.subr.mxu0 0.0
    %764 = vmatpush1.msra.mxu0 0.0
    %765 = vmatprep.subr.mxu0 0.0
    %766 = vmatpush1.msra.mxu0 0.0
    %767 = vmatprep.subr.mxu0 0.0
    %768 = vmatpush1.msra.mxu0 0.0
    %769 = vmatprep.subr.mxu0 0.0
    %770 = vmatpush1.msra.mxu0 0.0
    %771 = vmatprep.subr.mxu0 0.0
    %772 = vmatpush1.msra.mxu0 0.0
    %773 = vmatprep.subr.mxu0 0.0
    %774 = vmatpush1.msra.mxu0 0.0
    %775 = vmatprep.subr.mxu0 0.0
    %776 = vmatpush1.msra.mxu0 0.0
    %777 = vmatprep.subr.mxu0 0.0
    %778 = vmatpush1.msra.mxu0 0.0
    %779 = vmatprep.subr.mxu0 0.0
    %780 = vmatpush1.msra.mxu0 0.0
    %781 = vmatprep.subr.mxu0 0.0
    %782 = vmatpush1.msra.mxu0 0.0
    %783 = vmatprep.subr.mxu0 0.0
    %784 = vmatpush1.msra.mxu0 0.0
    %785 = vmatprep.subr.mxu0 0.0
    %786 = vmatpush1.msra.mxu0 0.0
    %787 = vmatprep.subr.mxu0 0.0
    %788 = vmatpush1.msra.mxu0 0.0
    %789 = vmatprep.subr.mxu0 0.0
    %790 = vmatpush1.msra.mxu0 0.0
    %791 = vmatprep.subr.mxu0 0.0
    %792 = vmatpush1.msra.mxu0 0.0
    %793 = vmatprep.subr.mxu0 0.0
    %794 = vmatpush1.msra.mxu0 0.0
    %795 = vmatprep.subr.mxu0 0.0
    %796 = vmatpush1.msra.mxu0 0.0
    %797 = vmatprep.subr.mxu0 0.0
    %798 = vmatpush1.msra.mxu0 0.0
    %799 = vmatprep.subr.mxu0 0.0
    %800 = vmatpush1.msra.mxu0 0.0
    %801 = vmatprep.subr.mxu0 0.0
    %802 = vmatpush1.msra.mxu0 0.0
    %803 = vmatprep.subr.mxu0 0.0
    %804 = vmatpush1.msra.mxu0 0.0
    %805 = vmatprep.subr.mxu0 0.0
    %806 = vmatpush1.msra.mxu0 0.0
    %807 = vmatprep.subr.mxu0 0.0
    %808 = vmatpush1.msra.mxu0 0.0
    %809 = vmatprep.mubr.f32.mxu0 0.0
    %810 = vmatmul.mubr.f32.gmra.mrb[0].mxu0 %v738
    %v811 = vpop.f32.mrb[0].mxu0
    %v812 = vadd.f32 0.0, %v811
    %v813 = vpop.f32.mrb[0].mxu0
    %814 = vmatprep.mubr.f32.mxu0 0.0
    %815 = vmatmul.mubr.f32.gmra.mrb[0].mxu0 %v741
    %v816 = vpop.f32.mrb[0].mxu0
    %v817 = vadd.f32 0.0, %v816
    %v818 = vpop.f32.mrb[0].mxu0
    %819 = vmatprep.mubr.f32.mxu0 0.0
    %820 = vmatmul.mubr.f32.gmra.mrb[0].mxu0 %v743
    %v821 = vpop.f32.mrb[0].mxu0
    %v822 = vadd.f32 0.0, %v821
    %v823 = vpop.f32.mrb[0].mxu0
    %824 = vdwg.mxu0
    %s825 = scalar_lea.vmem [#allocation14], 1
    %v826 = vld [vmem:[%s825] sm:$0x1]
    %v828 = vlaneseq
    %v829 = vshrl.u32 %v828, 7
    %v830 = vsub.s32 0, %v829
    %v831 = vrot.slane %v826, %v830
    %v834 = vsel %vm442, %v822, 0
    %836 = vmatprep.subr.mxu0 0.0
    %837 = vmatpush1.msra.mxu0 %v812
    %838 = vmatprep.subr.mxu0 0.0
    %839 = vmatpush1.msra.mxu0 %v817
    %840 = vmatprep.subr.mxu0 0.0
    %841 = vmatpush1.msra.mxu0 %v834
    %842 = vmatprep.subr.mxu0 0.0
    %843 = vmatpush1.msra.mxu0 0.0
    %844 = vmatprep.subr.mxu0 0.0
    %845 = vmatpush1.msra.mxu0 0.0
    %846 = vmatprep.subr.mxu0 0.0
    %847 = vmatpush1.msra.mxu0 0.0
    %848 = vmatprep.subr.mxu0 0.0
    %849 = vmatpush1.msra.mxu0 0.0
    %850 = vmatprep.subr.mxu0 0.0
    %851 = vmatpush1.msra.mxu0 0.0
    %852 = vmatprep.subr.mxu0 0.0
    %853 = vmatpush1.msra.mxu0 0.0
    %854 = vmatprep.subr.mxu0 0.0
    %855 = vmatpush1.msra.mxu0 0.0
    %856 = vmatprep.subr.mxu0 0.0
    %857 = vmatpush1.msra.mxu0 0.0
    %858 = vmatprep.subr.mxu0 0.0
    %859 = vmatpush1.msra.mxu0 0.0
    %860 = vmatprep.subr.mxu0 0.0
    %861 = vmatpush1.msra.mxu0 0.0
    %862 = vmatprep.subr.mxu0 0.0
    %863 = vmatpush1.msra.mxu0 0.0
    %864 = vmatprep.subr.mxu0 0.0
    %865 = vmatpush1.msra.mxu0 0.0
    %866 = vmatprep.subr.mxu0 0.0
    %867 = vmatpush1.msra.mxu0 0.0
    %868 = vmatprep.subr.mxu0 0.0
    %869 = vmatpush1.msra.mxu0 0.0
    %870 = vmatprep.subr.mxu0 0.0
    %871 = vmatpush1.msra.mxu0 0.0
    %872 = vmatprep.subr.mxu0 0.0
    %873 = vmatpush1.msra.mxu0 0.0
    %874 = vmatprep.subr.mxu0 0.0
    %875 = vmatpush1.msra.mxu0 0.0
    %876 = vmatprep.subr.mxu0 0.0
    %877 = vmatpush1.msra.mxu0 0.0
    %878 = vmatprep.subr.mxu0 0.0
    %879 = vmatpush1.msra.mxu0 0.0
    %880 = vmatprep.subr.mxu0 0.0
    %881 = vmatpush1.msra.mxu0 0.0
    %882 = vmatprep.subr.mxu0 0.0
    %883 = vmatpush1.msra.mxu0 0.0
    %884 = vmatprep.subr.mxu0 0.0
    %885 = vmatpush1.msra.mxu0 0.0
    %886 = vmatprep.subr.mxu0 0.0
    %887 = vmatpush1.msra.mxu0 0.0
    %888 = vmatprep.subr.mxu0 0.0
    %889 = vmatpush1.msra.mxu0 0.0
    %890 = vmatprep.subr.mxu0 0.0
    %891 = vmatpush1.msra.mxu0 0.0
    %892 = vmatprep.subr.mxu0 0.0
    %893 = vmatpush1.msra.mxu0 0.0
    %894 = vmatprep.subr.mxu0 0.0
    %895 = vmatpush1.msra.mxu0 0.0
    %896 = vmatprep.subr.mxu0 0.0
    %897 = vmatpush1.msra.mxu0 0.0
    %898 = vmatprep.subr.mxu0 0.0
    %899 = vmatpush1.msra.mxu0 0.0
    %900 = vmatprep.mubr.f32.mxu0 0.0
    %901 = vmatmul.mubr.f32.gmra.mrb[0].mxu0 %v434
    %v902 = vpop.f32.mrb[0].mxu0
    %v903 = vadd.f32 %v831, %v902
    %v904 = vpop.f32.mrb[0].mxu0
    %905 = vmatprep.mubr.f32.mxu0 0.0
    %906 = vmatmul.mubr.f32.gmra.mrb[0].mxu0 %v437
    %v907 = vpop.f32.mrb[0].mxu0
    %v908 = vadd.f32 %v831, %v907
    %v909 = vpop.f32.mrb[0].mxu0
    %910 = vmatprep.mubr.f32.mxu0 0.0
    %911 = vmatmul.mubr.f32.gmra.mrb[0].mxu0 %v440
    %v912 = vpop.f32.mrb[0].mxu0
    %v913 = vadd.f32 %v831, %v912
    %v914 = vpop.f32.mrb[0].mxu0
    %915 = vdwg.mxu0
    %v916 = vmax.f32 %v903, 0.0
    %v917 = vmax.f32 %v908, 0.0
    %v918 = vmax.f32 %v913, 0.0
    %s919 = scalar_lea.vmem %s6, 32
    %v920 = vld [vmem:[%s919] sm:$0xff]
    %v921 = vld [vmem:[%s919 + $0x8] sm:$0xff]
    %v922 = vld [vmem:[%s919 + $0x10] sm:$0xff]
    %v923 = vld [vmem:[%s919 + $0x18] sm:$0xff]
    %s924 = scalar_lea.vmem [#allocation15], 1
    %v925 = vld [vmem:[%s924] sm:$0x1]
    %v927 = vlaneseq
    %v928 = vshrl.u32 %v927, 7
    %v929 = vsub.s32 0, %v928
    %v930 = vrot.slane %v925, %v929
    %v933 = vsel %vm540, %v916, 0
    %v936 = vsel %vm540, %v917, 0
    %v939 = vsel %vm540, %v918, 0
    %941 = vmatprep.subr.mxu0 0.0
    %942 = vmatpush1.msra.mxu0 %v920
    %943 = vmatprep.subr.mxu0 0.0
    %944 = vmatpush1.msra.mxu0 %v921
    %945 = vmatprep.subr.mxu0 0.0
    %946 = vmatpush1.msra.mxu0 %v922
    %947 = vmatprep.subr.mxu0 0.0
    %948 = vmatpush1.msra.mxu0 %v923
    %949 = vmatprep.subr.mxu0 0.0
    %950 = vmatpush1.msra.mxu0 0.0
    %951 = vmatprep.subr.mxu0 0.0
    %952 = vmatpush1.msra.mxu0 0.0
    %953 = vmatprep.subr.mxu0 0.0
    %954 = vmatpush1.msra.mxu0 0.0
    %955 = vmatprep.subr.mxu0 0.0
    %956 = vmatpush1.msra.mxu0 0.0
    %957 = vmatprep.subr.mxu0 0.0
    %958 = vmatpush1.msra.mxu0 0.0
    %959 = vmatprep.subr.mxu0 0.0
    %960 = vmatpush1.msra.mxu0 0.0
    %961 = vmatprep.subr.mxu0 0.0
    %962 = vmatpush1.msra.mxu0 0.0
    %963 = vmatprep.subr.mxu0 0.0
    %964 = vmatpush1.msra.mxu0 0.0
    %965 = vmatprep.subr.mxu0 0.0
    %966 = vmatpush1.msra.mxu0 0.0
    %967 = vmatprep.subr.mxu0 0.0
    %968 = vmatpush1.msra.mxu0 0.0
    %969 = vmatprep.subr.mxu0 0.0
    %970 = vmatpush1.msra.mxu0 0.0
    %971 = vmatprep.subr.mxu0 0.0
    %972 = vmatpush1.msra.mxu0 0.0
    %973 = vmatprep.subr.mxu0 0.0
    %974 = vmatpush1.msra.mxu0 0.0
    %975 = vmatprep.subr.mxu0 0.0
    %976 = vmatpush1.msra.mxu0 0.0
    %977 = vmatprep.subr.mxu0 0.0
    %978 = vmatpush1.msra.mxu0 0.0
    %979 = vmatprep.subr.mxu0 0.0
    %980 = vmatpush1.msra.mxu0 0.0
    %981 = vmatprep.subr.mxu0 0.0
    %982 = vmatpush1.msra.mxu0 0.0
    %983 = vmatprep.subr.mxu0 0.0
    %984 = vmatpush1.msra.mxu0 0.0
    %985 = vmatprep.subr.mxu0 0.0
    %986 = vmatpush1.msra.mxu0 0.0
    %987 = vmatprep.subr.mxu0 0.0
    %988 = vmatpush1.msra.mxu0 0.0
    %989 = vmatprep.subr.mxu0 0.0
    %990 = vmatpush1.msra.mxu0 0.0
    %991 = vmatprep.subr.mxu0 0.0
    %992 = vmatpush1.msra.mxu0 0.0
    %993 = vmatprep.subr.mxu0 0.0
    %994 = vmatpush1.msra.mxu0 0.0
    %995 = vmatprep.subr.mxu0 0.0
    %996 = vmatpush1.msra.mxu0 0.0
    %997 = vmatprep.subr.mxu0 0.0
    %998 = vmatpush1.msra.mxu0 0.0
    %999 = vmatprep.subr.mxu0 0.0
    %1000 = vmatpush1.msra.mxu0 0.0
    %1001 = vmatprep.subr.mxu0 0.0
    %1002 = vmatpush1.msra.mxu0 0.0
    %1003 = vmatprep.subr.mxu0 0.0
    %1004 = vmatpush1.msra.mxu0 0.0
    %1005 = vmatprep.mubr.f32.mxu0 0.0
    %1006 = vmatmul.mubr.f32.gmra.mrb[0].mxu0 %v933
    %v1007 = vpop.f32.mrb[0].mxu0
    %v1008 = vadd.f32 %v930, %v1007
    %v1009 = vpop.f32.mrb[0].mxu0
    %1010 = vmatprep.mubr.f32.mxu0 0.0
    %1011 = vmatmul.mubr.f32.gmra.mrb[0].mxu0 %v936
    %v1012 = vpop.f32.mrb[0].mxu0
    %v1013 = vadd.f32 %v930, %v1012
    %v1014 = vpop.f32.mrb[0].mxu0
    %1015 = vmatprep.mubr.f32.mxu0 0.0
    %1016 = vmatmul.mubr.f32.gmra.mrb[0].mxu0 %v939
    %v1017 = vpop.f32.mrb[0].mxu0
    %v1018 = vadd.f32 %v930, %v1017
    %v1019 = vpop.f32.mrb[0].mxu0
    %1020 = vdwg.mxu0
    %v1021 = vmax.f32 %v1008, 0.0
    %v1022 = vmax.f32 %v1013, 0.0
    %v1023 = vmax.f32 %v1018, 0.0
    %s1024 = scalar_lea.vmem [#allocation17], 1
    %v1025 = vld [vmem:[%s1024] sm:$0x1]
    %v1027 = vlaneseq
    %v1028 = vshrl.u32 %v1027, 7
    %v1029 = vsub.s32 0, %v1028
    %v1030 = vrot.slane %v1025, %v1029
    %v1032 = vmul.f32 %v1021, %v1030
    %v1033 = vmul.f32 %v1022, %v1030
    %v1034 = vmul.f32 %v1023, %v1030
    %s1035 = scalar_lea.vmem [#allocation18], 1
    %v1036 = vld [vmem:[%s1035] sm:$0x1]
    %v1038 = vlaneseq
    %v1039 = vshrl.u32 %v1038, 7
    %v1040 = vsub.s32 0, %v1039
    %v1041 = vrot.slane %v1036, %v1040
    %v1043 = vadd.f32 %v1032, %v1041
    %v1044 = vadd.f32 %v1033, %v1041
    %v1045 = vadd.f32 %v1034, %v1041
    %v1047 = vsel %vm442, %v1045, 0
    %1049 = vmatprep.subr.mxu0 0.0
    %1050 = vmatpush1.msra.mxu0 %v1043
    %1051 = vmatprep.subr.mxu0 0.0
    %1052 = vmatpush1.msra.mxu0 %v1044
    %1053 = vmatprep.subr.mxu0 0.0
    %1054 = vmatpush1.msra.mxu0 %v1047
    %1055 = vmatprep.subr.mxu0 0.0
    %1056 = vmatpush1.msra.mxu0 0.0
    %1057 = vmatprep.subr.mxu0 0.0
    %1058 = vmatpush1.msra.mxu0 0.0
    %1059 = vmatprep.subr.mxu0 0.0
    %1060 = vmatpush1.msra.mxu0 0.0
    %1061 = vmatprep.subr.mxu0 0.0
    %1062 = vmatpush1.msra.mxu0 0.0
    %1063 = vmatprep.subr.mxu0 0.0
    %1064 = vmatpush1.msra.mxu0 0.0
    %1065 = vmatprep.subr.mxu0 0.0
    %1066 = vmatpush1.msra.mxu0 0.0
    %1067 = vmatprep.subr.mxu0 0.0
    %1068 = vmatpush1.msra.mxu0 0.0
    %1069 = vmatprep.subr.mxu0 0.0
    %1070 = vmatpush1.msra.mxu0 0.0
    %1071 = vmatprep.subr.mxu0 0.0
    %1072 = vmatpush1.msra.mxu0 0.0
    %1073 = vmatprep.subr.mxu0 0.0
    %1074 = vmatpush1.msra.mxu0 0.0
    %1075 = vmatprep.subr.mxu0 0.0
    %1076 = vmatpush1.msra.mxu0 0.0
    %1077 = vmatprep.subr.mxu0 0.0
    %1078 = vmatpush1.msra.mxu0 0.0
    %1079 = vmatprep.subr.mxu0 0.0
    %1080 = vmatpush1.msra.mxu0 0.0
    %1081 = vmatprep.subr.mxu0 0.0
    %1082 = vmatpush1.msra.mxu0 0.0
    %1083 = vmatprep.subr.mxu0 0.0
    %1084 = vmatpush1.msra.mxu0 0.0
    %1085 = vmatprep.subr.mxu0 0.0
    %1086 = vmatpush1.msra.mxu0 0.0
    %1087 = vmatprep.subr.mxu0 0.0
    %1088 = vmatpush1.msra.mxu0 0.0
    %1089 = vmatprep.subr.mxu0 0.0
    %1090 = vmatpush1.msra.mxu0 0.0
    %1091 = vmatprep.subr.mxu0 0.0
    %1092 = vmatpush1.msra.mxu0 0.0
    %1093 = vmatprep.subr.mxu0 0.0
    %1094 = vmatpush1.msra.mxu0 0.0
    %1095 = vmatprep.subr.mxu0 0.0
    %1096 = vmatpush1.msra.mxu0 0.0
    %1097 = vmatprep.subr.mxu0 0.0
    %1098 = vmatpush1.msra.mxu0 0.0
    %1099 = vmatprep.subr.mxu0 0.0
    %1100 = vmatpush1.msra.mxu0 0.0
    %1101 = vmatprep.subr.mxu0 0.0
    %1102 = vmatpush1.msra.mxu0 0.0
    %1103 = vmatprep.subr.mxu0 0.0
    %1104 = vmatpush1.msra.mxu0 0.0
    %1105 = vmatprep.subr.mxu0 0.0
    %1106 = vmatpush1.msra.mxu0 0.0
    %1107 = vmatprep.subr.mxu0 0.0
    %1108 = vmatpush1.msra.mxu0 0.0
    %1109 = vmatprep.subr.mxu0 0.0
    %1110 = vmatpush1.msra.mxu0 0.0
    %1111 = vmatprep.subr.mxu0 0.0
    %1112 = vmatpush1.msra.mxu0 0.0
    %1113 = vmatprep.mubr.f32.mxu0 0.0
    %1114 = vmatmul.mubr.f32.gmra.mrb[0].mxu0 %v654
    %v1115 = vpop.f32.mrb[0].mxu0
    %v1116 = vadd.f32 0.0, %v1115
    %v1117 = vpop.f32.mrb[0].mxu0
    %1118 = vdwg.mxu0
    %v1119 = vld [vmem:[#allocation20 + $0x20] sm:$0xff]
    %v1120 = vld [vmem:[#allocation20 + $0x28] sm:$0xff]
    %v1121 = vld [vmem:[#allocation20 + $0x30] sm:$0xff]
    %v1122 = vld [vmem:[#allocation20 + $0x38] sm:$0xff]
    %v1124 = vsel %vm540, %v1116, 0
    %1126 = vmatprep.subr.mxu0 0.0
    %1127 = vmatpush1.msra.mxu0 %v1119
    %1128 = vmatprep.subr.mxu0 0.0
    %1129 = vmatpush1.msra.mxu0 %v1120
    %1130 = vmatprep.subr.mxu0 0.0
    %1131 = vmatpush1.msra.mxu0 %v1121
    %1132 = vmatprep.subr.mxu0 0.0
    %1133 = vmatpush1.msra.mxu0 %v1122
    %1134 = vmatprep.subr.mxu0 0.0
    %1135 = vmatpush1.msra.mxu0 0.0
    %1136 = vmatprep.subr.mxu0 0.0
    %1137 = vmatpush1.msra.mxu0 0.0
    %1138 = vmatprep.subr.mxu0 0.0
    %1139 = vmatpush1.msra.mxu0 0.0
    %1140 = vmatprep.subr.mxu0 0.0
    %1141 = vmatpush1.msra.mxu0 0.0
    %1142 = vmatprep.subr.mxu0 0.0
    %1143 = vmatpush1.msra.mxu0 0.0
    %1144 = vmatprep.subr.mxu0 0.0
    %1145 = vmatpush1.msra.mxu0 0.0
    %1146 = vmatprep.subr.mxu0 0.0
    %1147 = vmatpush1.msra.mxu0 0.0
    %1148 = vmatprep.subr.mxu0 0.0
    %1149 = vmatpush1.msra.mxu0 0.0
    %1150 = vmatprep.subr.mxu0 0.0
    %1151 = vmatpush1.msra.mxu0 0.0
    %1152 = vmatprep.subr.mxu0 0.0
    %1153 = vmatpush1.msra.mxu0 0.0
    %1154 = vmatprep.subr.mxu0 0.0
    %1155 = vmatpush1.msra.mxu0 0.0
    %1156 = vmatprep.subr.mxu0 0.0
    %1157 = vmatpush1.msra.mxu0 0.0
    %1158 = vmatprep.subr.mxu0 0.0
    %1159 = vmatpush1.msra.mxu0 0.0
    %1160 = vmatprep.subr.mxu0 0.0
    %1161 = vmatpush1.msra.mxu0 0.0
    %1162 = vmatprep.subr.mxu0 0.0
    %1163 = vmatpush1.msra.mxu0 0.0
    %1164 = vmatprep.subr.mxu0 0.0
    %1165 = vmatpush1.msra.mxu0 0.0
    %1166 = vmatprep.subr.mxu0 0.0
    %1167 = vmatpush1.msra.mxu0 0.0
    %1168 = vmatprep.subr.mxu0 0.0
    %1169 = vmatpush1.msra.mxu0 0.0
    %1170 = vmatprep.subr.mxu0 0.0
    %1171 = vmatpush1.msra.mxu0 0.0
    %1172 = vmatprep.subr.mxu0 0.0
    %1173 = vmatpush1.msra.mxu0 0.0
    %1174 = vmatprep.subr.mxu0 0.0
    %1175 = vmatpush1.msra.mxu0 0.0
    %1176 = vmatprep.subr.mxu0 0.0
    %1177 = vmatpush1.msra.mxu0 0.0
    %1178 = vmatprep.subr.mxu0 0.0
    %1179 = vmatpush1.msra.mxu0 0.0
    %1180 = vmatprep.subr.mxu0 0.0
    %1181 = vmatpush1.msra.mxu0 0.0
    %1182 = vmatprep.subr.mxu0 0.0
    %1183 = vmatpush1.msra.mxu0 0.0
    %1184 = vmatprep.subr.mxu0 0.0
    %1185 = vmatpush1.msra.mxu0 0.0
    %1186 = vmatprep.subr.mxu0 0.0
    %1187 = vmatpush1.msra.mxu0 0.0
    %1188 = vmatprep.subr.mxu0 0.0
    %1189 = vmatpush1.msra.mxu0 0.0
    %1190 = vmatprep.mubr.f32.mxu0 0.0
    %1191 = vmatmul.mubr.f32.gmra.mrb[0].mxu0 %v1124
    %v1192 = vpop.f32.mrb[0].mxu0
    %v1193 = vadd.f32 0.0, %v1192
    %v1194 = vpop.f32.mrb[0].mxu0
    %1195 = vdwg.mxu0
    %v1197 = vsel %vm540, %v726, 0
    %1199 = vmatprep.subr.mxu0 0.0
    %1200 = vmatpush1.msra.mxu0 %v729
    %1201 = vmatprep.subr.mxu0 0.0
    %1202 = vmatpush1.msra.mxu0 %v730
    %1203 = vmatprep.subr.mxu0 0.0
    %1204 = vmatpush1.msra.mxu0 %v731
    %1205 = vmatprep.subr.mxu0 0.0
    %1206 = vmatpush1.msra.mxu0 %v732
    %1207 = vmatprep.subr.mxu0 0.0
    %1208 = vmatpush1.msra.mxu0 0.0
    %1209 = vmatprep.subr.mxu0 0.0
    %1210 = vmatpush1.msra.mxu0 0.0
    %1211 = vmatprep.subr.mxu0 0.0
    %1212 = vmatpush1.msra.mxu0 0.0
    %1213 = vmatprep.subr.mxu0 0.0
    %1214 = vmatpush1.msra.mxu0 0.0
    %1215 = vmatprep.subr.mxu0 0.0
    %1216 = vmatpush1.msra.mxu0 0.0
    %1217 = vmatprep.subr.mxu0 0.0
    %1218 = vmatpush1.msra.mxu0 0.0
    %1219 = vmatprep.subr.mxu0 0.0
    %1220 = vmatpush1.msra.mxu0 0.0
    %1221 = vmatprep.subr.mxu0 0.0
    %1222 = vmatpush1.msra.mxu0 0.0
    %1223 = vmatprep.subr.mxu0 0.0
    %1224 = vmatpush1.msra.mxu0 0.0
    %1225 = vmatprep.subr.mxu0 0.0
    %1226 = vmatpush1.msra.mxu0 0.0
    %1227 = vmatprep.subr.mxu0 0.0
    %1228 = vmatpush1.msra.mxu0 0.0
    %1229 = vmatprep.subr.mxu0 0.0
    %1230 = vmatpush1.msra.mxu0 0.0
    %1231 = vmatprep.subr.mxu0 0.0
    %1232 = vmatpush1.msra.mxu0 0.0
    %1233 = vmatprep.subr.mxu0 0.0
    %1234 = vmatpush1.msra.mxu0 0.0
    %1235 = vmatprep.subr.mxu0 0.0
    %1236 = vmatpush1.msra.mxu0 0.0
    %1237 = vmatprep.subr.mxu0 0.0
    %1238 = vmatpush1.msra.mxu0 0.0
    %1239 = vmatprep.subr.mxu0 0.0
    %1240 = vmatpush1.msra.mxu0 0.0
    %1241 = vmatprep.subr.mxu0 0.0
    %1242 = vmatpush1.msra.mxu0 0.0
    %1243 = vmatprep.subr.mxu0 0.0
    %1244 = vmatpush1.msra.mxu0 0.0
    %1245 = vmatprep.subr.mxu0 0.0
    %1246 = vmatpush1.msra.mxu0 0.0
    %1247 = vmatprep.subr.mxu0 0.0
    %1248 = vmatpush1.msra.mxu0 0.0
    %1249 = vmatprep.subr.mxu0 0.0
    %1250 = vmatpush1.msra.mxu0 0.0
    %1251 = vmatprep.subr.mxu0 0.0
    %1252 = vmatpush1.msra.mxu0 0.0
    %1253 = vmatprep.subr.mxu0 0.0
    %1254 = vmatpush1.msra.mxu0 0.0
    %1255 = vmatprep.subr.mxu0 0.0
    %1256 = vmatpush1.msra.mxu0 0.0
    %1257 = vmatprep.subr.mxu0 0.0
    %1258 = vmatpush1.msra.mxu0 0.0
    %1259 = vmatprep.subr.mxu0 0.0
    %1260 = vmatpush1.msra.mxu0 0.0
    %1261 = vmatprep.subr.mxu0 0.0
    %1262 = vmatpush1.msra.mxu0 0.0
    %1263 = vmatprep.mubr.f32.mxu0 0.0
    %1264 = vmatmul.mubr.f32.gmra.mrb[0].mxu0 %v1197
    %v1265 = vpop.f32.mrb[0].mxu0
    %v1266 = vadd.f32 %v1193, %v1265
    %v1267 = vpop.f32.mrb[0].mxu0
    %1268 = vdwg.mxu0
    %s1269 = scalar_lea.vmem [#allocation12], 32
    %v1270 = vld [vmem:[%s1269] sm:$0xff]
    %v1271 = vld [vmem:[%s1269 + $0x8] sm:$0xff]
    %v1272 = vld [vmem:[%s1269 + $0x10] sm:$0xff]
    %v1273 = vld [vmem:[%s1269 + $0x18] sm:$0xff]
    %v1275 = vsel %vm540, %v1043, 0
    %v1278 = vsel %vm540, %v1044, 0
    %v1280 = vsel %vm540, %v1045, 0
    %1282 = vmatprep.subr.mxu0 0.0
    %1283 = vmatpush1.msra.mxu0 %v1270
    %1284 = vmatprep.subr.mxu0 0.0
    %1285 = vmatpush1.msra.mxu0 %v1271
    %1286 = vmatprep.subr.mxu0 0.0
    %1287 = vmatpush1.msra.mxu0 %v1272
    %1288 = vmatprep.subr.mxu0 0.0
    %1289 = vmatpush1.msra.mxu0 %v1273
    %1290 = vmatprep.subr.mxu0 0.0
    %1291 = vmatpush1.msra.mxu0 0.0
    %1292 = vmatprep.subr.mxu0 0.0
    %1293 = vmatpush1.msra.mxu0 0.0
    %1294 = vmatprep.subr.mxu0 0.0
    %1295 = vmatpush1.msra.mxu0 0.0
    %1296 = vmatprep.subr.mxu0 0.0
    %1297 = vmatpush1.msra.mxu0 0.0
    %1298 = vmatprep.subr.mxu0 0.0
    %1299 = vmatpush1.msra.mxu0 0.0
    %1300 = vmatprep.subr.mxu0 0.0
    %1301 = vmatpush1.msra.mxu0 0.0
    %1302 = vmatprep.subr.mxu0 0.0
    %1303 = vmatpush1.msra.mxu0 0.0
    %1304 = vmatprep.subr.mxu0 0.0
    %1305 = vmatpush1.msra.mxu0 0.0
    %1306 = vmatprep.subr.mxu0 0.0
    %1307 = vmatpush1.msra.mxu0 0.0
    %1308 = vmatprep.subr.mxu0 0.0
    %1309 = vmatpush1.msra.mxu0 0.0
    %1310 = vmatprep.subr.mxu0 0.0
    %1311 = vmatpush1.msra.mxu0 0.0
    %1312 = vmatprep.subr.mxu0 0.0
    %1313 = vmatpush1.msra.mxu0 0.0
    %1314 = vmatprep.subr.mxu0 0.0
    %1315 = vmatpush1.msra.mxu0 0.0
    %1316 = vmatprep.subr.mxu0 0.0
    %1317 = vmatpush1.msra.mxu0 0.0
    %1318 = vmatprep.subr.mxu0 0.0
    %1319 = vmatpush1.msra.mxu0 0.0
    %1320 = vmatprep.subr.mxu0 0.0
    %1321 = vmatpush1.msra.mxu0 0.0
    %1322 = vmatprep.subr.mxu0 0.0
    %1323 = vmatpush1.msra.mxu0 0.0
    %1324 = vmatprep.subr.mxu0 0.0
    %1325 = vmatpush1.msra.mxu0 0.0
    %1326 = vmatprep.subr.mxu0 0.0
    %1327 = vmatpush1.msra.mxu0 0.0
    %1328 = vmatprep.subr.mxu0 0.0
    %1329 = vmatpush1.msra.mxu0 0.0
    %1330 = vmatprep.subr.mxu0 0.0
    %1331 = vmatpush1.msra.mxu0 0.0
    %1332 = vmatprep.subr.mxu0 0.0
    %1333 = vmatpush1.msra.mxu0 0.0
    %1334 = vmatprep.subr.mxu0 0.0
    %1335 = vmatpush1.msra.mxu0 0.0
    %1336 = vmatprep.subr.mxu0 0.0
    %1337 = vmatpush1.msra.mxu0 0.0
    %1338 = vmatprep.subr.mxu0 0.0
    %1339 = vmatpush1.msra.mxu0 0.0
    %1340 = vmatprep.subr.mxu0 0.0
    %1341 = vmatpush1.msra.mxu0 0.0
    %1342 = vmatprep.subr.mxu0 0.0
    %1343 = vmatpush1.msra.mxu0 0.0
    %1344 = vmatprep.subr.mxu0 0.0
    %1345 = vmatpush1.msra.mxu0 0.0
    %1346 = vmatprep.mubr.f32.mxu0 0.0
    %1347 = vmatmul.mubr.f32.gmra.mrb[0].mxu0 %v1275
    %v1348 = vpop.f32.mrb[0].mxu0
    %v1349 = vadd.f32 0.0, %v1348
    %v1350 = vpop.f32.mrb[0].mxu0
    %1351 = vmatprep.mubr.f32.mxu0 0.0
    %1352 = vmatmul.mubr.f32.gmra.mrb[0].mxu0 %v1278
    %v1353 = vpop.f32.mrb[0].mxu0
    %v1354 = vadd.f32 0.0, %v1353
    %v1355 = vpop.f32.mrb[0].mxu0
    %1356 = vmatprep.mubr.f32.mxu0 0.0
    %1357 = vmatmul.mubr.f32.gmra.mrb[0].mxu0 %v1280
    %v1358 = vpop.f32.mrb[0].mxu0
    %v1359 = vadd.f32 0.0, %v1358
    %v1360 = vpop.f32.mrb[0].mxu0
    %1361 = vdwg.mxu0
    %s1362 = scalar_lea.vmem [#allocation14], 2
    %v1363 = vld [vmem:[%s1362] sm:$0x1]
    %v1365 = vlaneseq
    %v1366 = vshrl.u32 %v1365, 7
    %v1367 = vsub.s32 0, %v1366
    %v1368 = vrot.slane %v1363, %v1367
    %v1371 = vsel %vm442, %v1359, 0
    %1373 = vmatprep.subr.mxu0 0.0
    %1374 = vmatpush1.msra.mxu0 %v1349
    %1375 = vmatprep.subr.mxu0 0.0
    %1376 = vmatpush1.msra.mxu0 %v1354
    %1377 = vmatprep.subr.mxu0 0.0
    %1378 = vmatpush1.msra.mxu0 %v1371
    %1379 = vmatprep.subr.mxu0 0.0
    %1380 = vmatpush1.msra.mxu0 0.0
    %1381 = vmatprep.subr.mxu0 0.0
    %1382 = vmatpush1.msra.mxu0 0.0
    %1383 = vmatprep.subr.mxu0 0.0
    %1384 = vmatpush1.msra.mxu0 0.0
    %1385 = vmatprep.subr.mxu0 0.0
    %1386 = vmatpush1.msra.mxu0 0.0
    %1387 = vmatprep.subr.mxu0 0.0
    %1388 = vmatpush1.msra.mxu0 0.0
    %1389 = vmatprep.subr.mxu0 0.0
    %1390 = vmatpush1.msra.mxu0 0.0
    %1391 = vmatprep.subr.mxu0 0.0
    %1392 = vmatpush1.msra.mxu0 0.0
    %1393 = vmatprep.subr.mxu0 0.0
    %1394 = vmatpush1.msra.mxu0 0.0
    %1395 = vmatprep.subr.mxu0 0.0
    %1396 = vmatpush1.msra.mxu0 0.0
    %1397 = vmatprep.subr.mxu0 0.0
    %1398 = vmatpush1.msra.mxu0 0.0
    %1399 = vmatprep.subr.mxu0 0.0
    %1400 = vmatpush1.msra.mxu0 0.0
    %1401 = vmatprep.subr.mxu0 0.0
    %1402 = vmatpush1.msra.mxu0 0.0
    %1403 = vmatprep.subr.mxu0 0.0
    %1404 = vmatpush1.msra.mxu0 0.0
    %1405 = vmatprep.subr.mxu0 0.0
    %1406 = vmatpush1.msra.mxu0 0.0
    %1407 = vmatprep.subr.mxu0 0.0
    %1408 = vmatpush1.msra.mxu0 0.0
    %1409 = vmatprep.subr.mxu0 0.0
    %1410 = vmatpush1.msra.mxu0 0.0
    %1411 = vmatprep.subr.mxu0 0.0
    %1412 = vmatpush1.msra.mxu0 0.0
    %1413 = vmatprep.subr.mxu0 0.0
    %1414 = vmatpush1.msra.mxu0 0.0
    %1415 = vmatprep.subr.mxu0 0.0
    %1416 = vmatpush1.msra.mxu0 0.0
    %1417 = vmatprep.subr.mxu0 0.0
    %1418 = vmatpush1.msra.mxu0 0.0
    %1419 = vmatprep.subr.mxu0 0.0
    %1420 = vmatpush1.msra.mxu0 0.0
    %1421 = vmatprep.subr.mxu0 0.0
    %1422 = vmatpush1.msra.mxu0 0.0
    %1423 = vmatprep.subr.mxu0 0.0
    %1424 = vmatpush1.msra.mxu0 0.0
    %1425 = vmatprep.subr.mxu0 0.0
    %1426 = vmatpush1.msra.mxu0 0.0
    %1427 = vmatprep.subr.mxu0 0.0
    %1428 = vmatpush1.msra.mxu0 0.0
    %1429 = vmatprep.subr.mxu0 0.0
    %1430 = vmatpush1.msra.mxu0 0.0
    %1431 = vmatprep.subr.mxu0 0.0
    %1432 = vmatpush1.msra.mxu0 0.0
    %1433 = vmatprep.subr.mxu0 0.0
    %1434 = vmatpush1.msra.mxu0 0.0
    %1435 = vmatprep.subr.mxu0 0.0
    %1436 = vmatpush1.msra.mxu0 0.0
    %1437 = vmatprep.mubr.f32.mxu0 0.0
    %1438 = vmatmul.mubr.f32.gmra.mrb[0].mxu0 %v434
    %v1439 = vpop.f32.mrb[0].mxu0
    %v1440 = vadd.f32 %v1368, %v1439
    %v1441 = vpop.f32.mrb[0].mxu0
    %1442 = vmatprep.mubr.f32.mxu0 0.0
    %1443 = vmatmul.mubr.f32.gmra.mrb[0].mxu0 %v437
    %v1444 = vpop.f32.mrb[0].mxu0
    %v1445 = vadd.f32 %v1368, %v1444
    %v1446 = vpop.f32.mrb[0].mxu0
    %1447 = vmatprep.mubr.f32.mxu0 0.0
    %1448 = vmatmul.mubr.f32.gmra.mrb[0].mxu0 %v440
    %v1449 = vpop.f32.mrb[0].mxu0
    %v1450 = vadd.f32 %v1368, %v1449
    %v1451 = vpop.f32.mrb[0].mxu0
    %1452 = vdwg.mxu0
    %v1453 = vmax.f32 %v1440, 0.0
    %v1454 = vmax.f32 %v1445, 0.0
    %v1455 = vmax.f32 %v1450, 0.0
    %s1456 = scalar_lea.vmem %s6, 64
    %v1457 = vld [vmem:[%s1456] sm:$0xff]
    %v1458 = vld [vmem:[%s1456 + $0x8] sm:$0xff]
    %v1459 = vld [vmem:[%s1456 + $0x10] sm:$0xff]
    %v1460 = vld [vmem:[%s1456 + $0x18] sm:$0xff]
    %s1461 = scalar_lea.vmem [#allocation15], 2
    %v1462 = vld [vmem:[%s1461] sm:$0x1]
    %v1464 = vlaneseq
    %v1465 = vshrl.u32 %v1464, 7
    %v1466 = vsub.s32 0, %v1465
    %v1467 = vrot.slane %v1462, %v1466
    %v1470 = vsel %vm540, %v1453, 0
    %v1473 = vsel %vm540, %v1454, 0
    %v1476 = vsel %vm540, %v1455, 0
    %1478 = vmatprep.subr.mxu0 0.0
    %1479 = vmatpush1.msra.mxu0 %v1457
    %1480 = vmatprep.subr.mxu0 0.0
    %1481 = vmatpush1.msra.mxu0 %v1458
    %1482 = vmatprep.subr.mxu0 0.0
    %1483 = vmatpush1.msra.mxu0 %v1459
    %1484 = vmatprep.subr.mxu0 0.0
    %1485 = vmatpush1.msra.mxu0 %v1460
    %1486 = vmatprep.subr.mxu0 0.0
    %1487 = vmatpush1.msra.mxu0 0.0
    %1488 = vmatprep.subr.mxu0 0.0
    %1489 = vmatpush1.msra.mxu0 0.0
    %1490 = vmatprep.subr.mxu0 0.0
    %1491 = vmatpush1.msra.mxu0 0.0
    %1492 = vmatprep.subr.mxu0 0.0
    %1493 = vmatpush1.msra.mxu0 0.0
    %1494 = vmatprep.subr.mxu0 0.0
    %1495 = vmatpush1.msra.mxu0 0.0
    %1496 = vmatprep.subr.mxu0 0.0
    %1497 = vmatpush1.msra.mxu0 0.0
    %1498 = vmatprep.subr.mxu0 0.0
    %1499 = vmatpush1.msra.mxu0 0.0
    %1500 = vmatprep.subr.mxu0 0.0
    %1501 = vmatpush1.msra.mxu0 0.0
    %1502 = vmatprep.subr.mxu0 0.0
    %1503 = vmatpush1.msra.mxu0 0.0
    %1504 = vmatprep.subr.mxu0 0.0
    %1505 = vmatpush1.msra.mxu0 0.0
    %1506 = vmatprep.subr.mxu0 0.0
    %1507 = vmatpush1.msra.mxu0 0.0
    %1508 = vmatprep.subr.mxu0 0.0
    %1509 = vmatpush1.msra.mxu0 0.0
    %1510 = vmatprep.subr.mxu0 0.0
    %1511 = vmatpush1.msra.mxu0 0.0
    %1512 = vmatprep.subr.mxu0 0.0
    %1513 = vmatpush1.msra.mxu0 0.0
    %1514 = vmatprep.subr.mxu0 0.0
    %1515 = vmatpush1.msra.mxu0 0.0
    %1516 = vmatprep.subr.mxu0 0.0
    %1517 = vmatpush1.msra.mxu0 0.0
    %1518 = vmatprep.subr.mxu0 0.0
    %1519 = vmatpush1.msra.mxu0 0.0
    %1520 = vmatprep.subr.mxu0 0.0
    %1521 = vmatpush1.msra.mxu0 0.0
    %1522 = vmatprep.subr.mxu0 0.0
    %1523 = vmatpush1.msra.mxu0 0.0
    %1524 = vmatprep.subr.mxu0 0.0
    %1525 = vmatpush1.msra.mxu0 0.0
    %1526 = vmatprep.subr.mxu0 0.0
    %1527 = vmatpush1.msra.mxu0 0.0
    %1528 = vmatprep.subr.mxu0 0.0
    %1529 = vmatpush1.msra.mxu0 0.0
    %1530 = vmatprep.subr.mxu0 0.0
    %1531 = vmatpush1.msra.mxu0 0.0
    %1532 = vmatprep.subr.mxu0 0.0
    %1533 = vmatpush1.msra.mxu0 0.0
    %1534 = vmatprep.subr.mxu0 0.0
    %1535 = vmatpush1.msra.mxu0 0.0
    %1536 = vmatprep.subr.mxu0 0.0
    %1537 = vmatpush1.msra.mxu0 0.0
    %1538 = vmatprep.subr.mxu0 0.0
    %1539 = vmatpush1.msra.mxu0 0.0
    %1540 = vmatprep.subr.mxu0 0.0
    %1541 = vmatpush1.msra.mxu0 0.0
    %1542 = vmatprep.mubr.f32.mxu0 0.0
    %1543 = vmatmul.mubr.f32.gmra.mrb[0].mxu0 %v1470
    %v1544 = vpop.f32.mrb[0].mxu0
    %v1545 = vadd.f32 %v1467, %v1544
    %v1546 = vpop.f32.mrb[0].mxu0
    %1547 = vmatprep.mubr.f32.mxu0 0.0
    %1548 = vmatmul.mubr.f32.gmra.mrb[0].mxu0 %v1473
    %v1549 = vpop.f32.mrb[0].mxu0
    %v1550 = vadd.f32 %v1467, %v1549
    %v1551 = vpop.f32.mrb[0].mxu0
    %1552 = vmatprep.mubr.f32.mxu0 0.0
    %1553 = vmatmul.mubr.f32.gmra.mrb[0].mxu0 %v1476
    %v1554 = vpop.f32.mrb[0].mxu0
    %v1555 = vadd.f32 %v1467, %v1554
    %v1556 = vpop.f32.mrb[0].mxu0
    %1557 = vdwg.mxu0
    %v1558 = vmax.f32 %v1545, 0.0
    %v1559 = vmax.f32 %v1550, 0.0
    %v1560 = vmax.f32 %v1555, 0.0
    %s1561 = scalar_lea.vmem [#allocation17], 2
    %v1562 = vld [vmem:[%s1561] sm:$0x1]
    %v1564 = vlaneseq
    %v1565 = vshrl.u32 %v1564, 7
    %v1566 = vsub.s32 0, %v1565
    %v1567 = vrot.slane %v1562, %v1566
    %v1569 = vmul.f32 %v1558, %v1567
    %v1570 = vmul.f32 %v1559, %v1567
    %v1571 = vmul.f32 %v1560, %v1567
    %s1572 = scalar_lea.vmem [#allocation18], 2
    %v1573 = vld [vmem:[%s1572] sm:$0x1]
    %v1575 = vlaneseq
    %v1576 = vshrl.u32 %v1575, 7
    %v1577 = vsub.s32 0, %v1576
    %v1578 = vrot.slane %v1573, %v1577
    %v1580 = vadd.f32 %v1569, %v1578
    %v1581 = vadd.f32 %v1570, %v1578
    %v1582 = vadd.f32 %v1571, %v1578
    %v1584 = vsel %vm442, %v1582, 0
    %1586 = vmatprep.subr.mxu0 0.0
    %1587 = vmatpush1.msra.mxu0 %v1580
    %1588 = vmatprep.subr.mxu0 0.0
    %1589 = vmatpush1.msra.mxu0 %v1581
    %1590 = vmatprep.subr.mxu0 0.0
    %1591 = vmatpush1.msra.mxu0 %v1584
    %1592 = vmatprep.subr.mxu0 0.0
    %1593 = vmatpush1.msra.mxu0 0.0
    %1594 = vmatprep.subr.mxu0 0.0
    %1595 = vmatpush1.msra.mxu0 0.0
    %1596 = vmatprep.subr.mxu0 0.0
    %1597 = vmatpush1.msra.mxu0 0.0
    %1598 = vmatprep.subr.mxu0 0.0
    %1599 = vmatpush1.msra.mxu0 0.0
    %1600 = vmatprep.subr.mxu0 0.0
    %1601 = vmatpush1.msra.mxu0 0.0
    %1602 = vmatprep.subr.mxu0 0.0
    %1603 = vmatpush1.msra.mxu0 0.0
    %1604 = vmatprep.subr.mxu0 0.0
    %1605 = vmatpush1.msra.mxu0 0.0
    %1606 = vmatprep.subr.mxu0 0.0
    %1607 = vmatpush1.msra.mxu0 0.0
    %1608 = vmatprep.subr.mxu0 0.0
    %1609 = vmatpush1.msra.mxu0 0.0
    %1610 = vmatprep.subr.mxu0 0.0
    %1611 = vmatpush1.msra.mxu0 0.0
    %1612 = vmatprep.subr.mxu0 0.0
    %1613 = vmatpush1.msra.mxu0 0.0
    %1614 = vmatprep.subr.mxu0 0.0
    %1615 = vmatpush1.msra.mxu0 0.0
    %1616 = vmatprep.subr.mxu0 0.0
    %1617 = vmatpush1.msra.mxu0 0.0
    %1618 = vmatprep.subr.mxu0 0.0
    %1619 = vmatpush1.msra.mxu0 0.0
    %1620 = vmatprep.subr.mxu0 0.0
    %1621 = vmatpush1.msra.mxu0 0.0
    %1622 = vmatprep.subr.mxu0 0.0
    %1623 = vmatpush1.msra.mxu0 0.0
    %1624 = vmatprep.subr.mxu0 0.0
    %1625 = vmatpush1.msra.mxu0 0.0
    %1626 = vmatprep.subr.mxu0 0.0
    %1627 = vmatpush1.msra.mxu0 0.0
    %1628 = vmatprep.subr.mxu0 0.0
    %1629 = vmatpush1.msra.mxu0 0.0
    %1630 = vmatprep.subr.mxu0 0.0
    %1631 = vmatpush1.msra.mxu0 0.0
    %1632 = vmatprep.subr.mxu0 0.0
    %1633 = vmatpush1.msra.mxu0 0.0
    %1634 = vmatprep.subr.mxu0 0.0
    %1635 = vmatpush1.msra.mxu0 0.0
    %1636 = vmatprep.subr.mxu0 0.0
    %1637 = vmatpush1.msra.mxu0 0.0
    %1638 = vmatprep.subr.mxu0 0.0
    %1639 = vmatpush1.msra.mxu0 0.0
    %1640 = vmatprep.subr.mxu0 0.0
    %1641 = vmatpush1.msra.mxu0 0.0
    %1642 = vmatprep.subr.mxu0 0.0
    %1643 = vmatpush1.msra.mxu0 0.0
    %1644 = vmatprep.subr.mxu0 0.0
    %1645 = vmatpush1.msra.mxu0 0.0
    %1646 = vmatprep.subr.mxu0 0.0
    %1647 = vmatpush1.msra.mxu0 0.0
    %1648 = vmatprep.subr.mxu0 0.0
    %1649 = vmatpush1.msra.mxu0 0.0
    %1650 = vmatprep.mubr.f32.mxu0 0.0
    %1651 = vmatmul.mubr.f32.gmra.mrb[0].mxu0 %v654
    %v1652 = vpop.f32.mrb[0].mxu0
    %v1653 = vadd.f32 0.0, %v1652
    %v1654 = vpop.f32.mrb[0].mxu0
    %1655 = vdwg.mxu0
    %v1656 = vld [vmem:[#allocation20 + $0x40] sm:$0xff]
    %v1657 = vld [vmem:[#allocation20 + $0x48] sm:$0xff]
    %v1658 = vld [vmem:[#allocation20 + $0x50] sm:$0xff]
    %v1659 = vld [vmem:[#allocation20 + $0x58] sm:$0xff]
    %v1661 = vsel %vm540, %v1653, 0
    %1663 = vmatprep.subr.mxu0 0.0
    %1664 = vmatpush1.msra.mxu0 %v1656
    %1665 = vmatprep.subr.mxu0 0.0
    %1666 = vmatpush1.msra.mxu0 %v1657
    %1667 = vmatprep.subr.mxu0 0.0
    %1668 = vmatpush1.msra.mxu0 %v1658
    %1669 = vmatprep.subr.mxu0 0.0
    %1670 = vmatpush1.msra.mxu0 %v1659
    %1671 = vmatprep.subr.mxu0 0.0
    %1672 = vmatpush1.msra.mxu0 0.0
    %1673 = vmatprep.subr.mxu0 0.0
    %1674 = vmatpush1.msra.mxu0 0.0
    %1675 = vmatprep.subr.mxu0 0.0
    %1676 = vmatpush1.msra.mxu0 0.0
    %1677 = vmatprep.subr.mxu0 0.0
    %1678 = vmatpush1.msra.mxu0 0.0
    %1679 = vmatprep.subr.mxu0 0.0
    %1680 = vmatpush1.msra.mxu0 0.0
    %1681 = vmatprep.subr.mxu0 0.0
    %1682 = vmatpush1.msra.mxu0 0.0
    %1683 = vmatprep.subr.mxu0 0.0
    %1684 = vmatpush1.msra.mxu0 0.0
    %1685 = vmatprep.subr.mxu0 0.0
    %1686 = vmatpush1.msra.mxu0 0.0
    %1687 = vmatprep.subr.mxu0 0.0
    %1688 = vmatpush1.msra.mxu0 0.0
    %1689 = vmatprep.subr.mxu0 0.0
    %1690 = vmatpush1.msra.mxu0 0.0
    %1691 = vmatprep.subr.mxu0 0.0
    %1692 = vmatpush1.msra.mxu0 0.0
    %1693 = vmatprep.subr.mxu0 0.0
    %1694 = vmatpush1.msra.mxu0 0.0
    %1695 = vmatprep.subr.mxu0 0.0
    %1696 = vmatpush1.msra.mxu0 0.0
    %1697 = vmatprep.subr.mxu0 0.0
    %1698 = vmatpush1.msra.mxu0 0.0
    %1699 = vmatprep.subr.mxu0 0.0
    %1700 = vmatpush1.msra.mxu0 0.0
    %1701 = vmatprep.subr.mxu0 0.0
    %1702 = vmatpush1.msra.mxu0 0.0
    %1703 = vmatprep.subr.mxu0 0.0
    %1704 = vmatpush1.msra.mxu0 0.0
    %1705 = vmatprep.subr.mxu0 0.0
    %1706 = vmatpush1.msra.mxu0 0.0
    %1707 = vmatprep.subr.mxu0 0.0
    %1708 = vmatpush1.msra.mxu0 0.0
    %1709 = vmatprep.subr.mxu0 0.0
    %1710 = vmatpush1.msra.mxu0 0.0
    %1711 = vmatprep.subr.mxu0 0.0
    %1712 = vmatpush1.msra.mxu0 0.0
    %1713 = vmatprep.subr.mxu0 0.0
    %1714 = vmatpush1.msra.mxu0 0.0
    %1715 = vmatprep.subr.mxu0 0.0
    %1716 = vmatpush1.msra.mxu0 0.0
    %1717 = vmatprep.subr.mxu0 0.0
    %1718 = vmatpush1.msra.mxu0 0.0
    %1719 = vmatprep.subr.mxu0 0.0
    %1720 = vmatpush1.msra.mxu0 0.0
    %1721 = vmatprep.subr.mxu0 0.0
    %1722 = vmatpush1.msra.mxu0 0.0
    %1723 = vmatprep.subr.mxu0 0.0
    %1724 = vmatpush1.msra.mxu0 0.0
    %1725 = vmatprep.subr.mxu0 0.0
    %1726 = vmatpush1.msra.mxu0 0.0
    %1727 = vmatprep.mubr.f32.mxu0 0.0
    %1728 = vmatmul.mubr.f32.gmra.mrb[0].mxu0 %v1661
    %v1729 = vpop.f32.mrb[0].mxu0
    %v1730 = vadd.f32 0.0, %v1729
    %v1731 = vpop.f32.mrb[0].mxu0
    %1732 = vdwg.mxu0
    %v1733 = vadd.f32 %v1266, %v1730
    %s1734 = scalar_lea.vmem [#allocation12], 64
    %v1735 = vld [vmem:[%s1734] sm:$0xff]
    %v1736 = vld [vmem:[%s1734 + $0x8] sm:$0xff]
    %v1737 = vld [vmem:[%s1734 + $0x10] sm:$0xff]
    %v1738 = vld [vmem:[%s1734 + $0x18] sm:$0xff]
    %v1740 = vsel %vm540, %v1580, 0
    %v1743 = vsel %vm540, %v1581, 0
    %v1745 = vsel %vm540, %v1582, 0
    %1747 = vmatprep.subr.mxu0 0.0
    %1748 = vmatpush1.msra.mxu0 %v1735
    %1749 = vmatprep.subr.mxu0 0.0
    %1750 = vmatpush1.msra.mxu0 %v1736
    %1751 = vmatprep.subr.mxu0 0.0
    %1752 = vmatpush1.msra.mxu0 %v1737
    %1753 = vmatprep.subr.mxu0 0.0
    %1754 = vmatpush1.msra.mxu0 %v1738
    %1755 = vmatprep.subr.mxu0 0.0
    %1756 = vmatpush1.msra.mxu0 0.0
    %1757 = vmatprep.subr.mxu0 0.0
    %1758 = vmatpush1.msra.mxu0 0.0
    %1759 = vmatprep.subr.mxu0 0.0
    %1760 = vmatpush1.msra.mxu0 0.0
    %1761 = vmatprep.subr.mxu0 0.0
    %1762 = vmatpush1.msra.mxu0 0.0
    %1763 = vmatprep.subr.mxu0 0.0
    %1764 = vmatpush1.msra.mxu0 0.0
    %1765 = vmatprep.subr.mxu0 0.0
    %1766 = vmatpush1.msra.mxu0 0.0
    %1767 = vmatprep.subr.mxu0 0.0
    %1768 = vmatpush1.msra.mxu0 0.0
    %1769 = vmatprep.subr.mxu0 0.0
    %1770 = vmatpush1.msra.mxu0 0.0
    %1771 = vmatprep.subr.mxu0 0.0
    %1772 = vmatpush1.msra.mxu0 0.0
    %1773 = vmatprep.subr.mxu0 0.0
    %1774 = vmatpush1.msra.mxu0 0.0
    %1775 = vmatprep.subr.mxu0 0.0
    %1776 = vmatpush1.msra.mxu0 0.0
    %1777 = vmatprep.subr.mxu0 0.0
    %1778 = vmatpush1.msra.mxu0 0.0
    %1779 = vmatprep.subr.mxu0 0.0
    %1780 = vmatpush1.msra.mxu0 0.0
    %1781 = vmatprep.subr.mxu0 0.0
    %1782 = vmatpush1.msra.mxu0 0.0
    %1783 = vmatprep.subr.mxu0 0.0
    %1784 = vmatpush1.msra.mxu0 0.0
    %1785 = vmatprep.subr.mxu0 0.0
    %1786 = vmatpush1.msra.mxu0 0.0
    %1787 = vmatprep.subr.mxu0 0.0
    %1788 = vmatpush1.msra.mxu0 0.0
    %1789 = vmatprep.subr.mxu0 0.0
    %1790 = vmatpush1.msra.mxu0 0.0
    %1791 = vmatprep.subr.mxu0 0.0
    %1792 = vmatpush1.msra.mxu0 0.0
    %1793 = vmatprep.subr.mxu0 0.0
    %1794 = vmatpush1.msra.mxu0 0.0
    %1795 = vmatprep.subr.mxu0 0.0
    %1796 = vmatpush1.msra.mxu0 0.0
    %1797 = vmatprep.subr.mxu0 0.0
    %1798 = vmatpush1.msra.mxu0 0.0
    %1799 = vmatprep.subr.mxu0 0.0
    %1800 = vmatpush1.msra.mxu0 0.0
    %1801 = vmatprep.subr.mxu0 0.0
    %1802 = vmatpush1.msra.mxu0 0.0
    %1803 = vmatprep.subr.mxu0 0.0
    %1804 = vmatpush1.msra.mxu0 0.0
    %1805 = vmatprep.subr.mxu0 0.0
    %1806 = vmatpush1.msra.mxu0 0.0
    %1807 = vmatprep.subr.mxu0 0.0
    %1808 = vmatpush1.msra.mxu0 0.0
    %1809 = vmatprep.subr.mxu0 0.0
    %1810 = vmatpush1.msra.mxu0 0.0
    %1811 = vmatprep.mubr.f32.mxu0 0.0
    %1812 = vmatmul.mubr.f32.gmra.mrb[0].mxu0 %v1740
    %v1813 = vpop.f32.mrb[0].mxu0
    %v1814 = vadd.f32 0.0, %v1813
    %v1815 = vpop.f32.mrb[0].mxu0
    %1816 = vmatprep.mubr.f32.mxu0 0.0
    %1817 = vmatmul.mubr.f32.gmra.mrb[0].mxu0 %v1743
    %v1818 = vpop.f32.mrb[0].mxu0
    %v1819 = vadd.f32 0.0, %v1818
    %v1820 = vpop.f32.mrb[0].mxu0
    %1821 = vmatprep.mubr.f32.mxu0 0.0
    %1822 = vmatmul.mubr.f32.gmra.mrb[0].mxu0 %v1745
    %v1823 = vpop.f32.mrb[0].mxu0
    %v1824 = vadd.f32 0.0, %v1823
    %v1825 = vpop.f32.mrb[0].mxu0
    %1826 = vdwg.mxu0
    %s1827 = scalar_lea.vmem [#allocation14], 3
    %v1828 = vld [vmem:[%s1827] sm:$0x1]
    %v1830 = vlaneseq
    %v1831 = vshrl.u32 %v1830, 7
    %v1832 = vsub.s32 0, %v1831
    %v1833 = vrot.slane %v1828, %v1832
    %v1836 = vsel %vm442, %v1824, 0
    %1838 = vmatprep.subr.mxu0 0.0
    %1839 = vmatpush1.msra.mxu0 %v1814
    %1840 = vmatprep.subr.mxu0 0.0
    %1841 = vmatpush1.msra.mxu0 %v1819
    %1842 = vmatprep.subr.mxu0 0.0
    %1843 = vmatpush1.msra.mxu0 %v1836
    %1844 = vmatprep.subr.mxu0 0.0
    %1845 = vmatpush1.msra.mxu0 0.0
    %1846 = vmatprep.subr.mxu0 0.0
    %1847 = vmatpush1.msra.mxu0 0.0
    %1848 = vmatprep.subr.mxu0 0.0
    %1849 = vmatpush1.msra.mxu0 0.0
    %1850 = vmatprep.subr.mxu0 0.0
    %1851 = vmatpush1.msra.mxu0 0.0
    %1852 = vmatprep.subr.mxu0 0.0
    %1853 = vmatpush1.msra.mxu0 0.0
    %1854 = vmatprep.subr.mxu0 0.0
    %1855 = vmatpush1.msra.mxu0 0.0
    %1856 = vmatprep.subr.mxu0 0.0
    %1857 = vmatpush1.msra.mxu0 0.0
    %1858 = vmatprep.subr.mxu0 0.0
    %1859 = vmatpush1.msra.mxu0 0.0
    %1860 = vmatprep.subr.mxu0 0.0
    %1861 = vmatpush1.msra.mxu0 0.0
    %1862 = vmatprep.subr.mxu0 0.0
    %1863 = vmatpush1.msra.mxu0 0.0
    %1864 = vmatprep.subr.mxu0 0.0
    %1865 = vmatpush1.msra.mxu0 0.0
    %1866 = vmatprep.subr.mxu0 0.0
    %1867 = vmatpush1.msra.mxu0 0.0
    %1868 = vmatprep.subr.mxu0 0.0
    %1869 = vmatpush1.msra.mxu0 0.0
    %1870 = vmatprep.subr.mxu0 0.0
    %1871 = vmatpush1.msra.mxu0 0.0
    %1872 = vmatprep.subr.mxu0 0.0
    %1873 = vmatpush1.msra.mxu0 0.0
    %1874 = vmatprep.subr.mxu0 0.0
    %1875 = vmatpush1.msra.mxu0 0.0
    %1876 = vmatprep.subr.mxu0 0.0
    %1877 = vmatpush1.msra.mxu0 0.0
    %1878 = vmatprep.subr.mxu0 0.0
    %1879 = vmatpush1.msra.mxu0 0.0
    %1880 = vmatprep.subr.mxu0 0.0
    %1881 = vmatpush1.msra.mxu0 0.0
    %1882 = vmatprep.subr.mxu0 0.0
    %1883 = vmatpush1.msra.mxu0 0.0
    %1884 = vmatprep.subr.mxu0 0.0
    %1885 = vmatpush1.msra.mxu0 0.0
    %1886 = vmatprep.subr.mxu0 0.0
    %1887 = vmatpush1.msra.mxu0 0.0
    %1888 = vmatprep.subr.mxu0 0.0
    %1889 = vmatpush1.msra.mxu0 0.0
    %1890 = vmatprep.subr.mxu0 0.0
    %1891 = vmatpush1.msra.mxu0 0.0
    %1892 = vmatprep.subr.mxu0 0.0
    %1893 = vmatpush1.msra.mxu0 0.0
    %1894 = vmatprep.subr.mxu0 0.0
    %1895 = vmatpush1.msra.mxu0 0.0
    %1896 = vmatprep.subr.mxu0 0.0
    %1897 = vmatpush1.msra.mxu0 0.0
    %1898 = vmatprep.subr.mxu0 0.0
    %1899 = vmatpush1.msra.mxu0 0.0
    %1900 = vmatprep.subr.mxu0 0.0
    %1901 = vmatpush1.msra.mxu0 0.0
    %1902 = vmatprep.mubr.f32.mxu0 0.0
    %1903 = vmatmul.mubr.f32.gmra.mrb[0].mxu0 %v434
    %v1904 = vpop.f32.mrb[0].mxu0
    %v1905 = vadd.f32 %v1833, %v1904
    %v1906 = vpop.f32.mrb[0].mxu0
    %1907 = vmatprep.mubr.f32.mxu0 0.0
    %1908 = vmatmul.mubr.f32.gmra.mrb[0].mxu0 %v437
    %v1909 = vpop.f32.mrb[0].mxu0
    %v1910 = vadd.f32 %v1833, %v1909
    %v1911 = vpop.f32.mrb[0].mxu0
    %1912 = vmatprep.mubr.f32.mxu0 0.0
    %1913 = vmatmul.mubr.f32.gmra.mrb[0].mxu0 %v440
    %v1914 = vpop.f32.mrb[0].mxu0
    %v1915 = vadd.f32 %v1833, %v1914
    %v1916 = vpop.f32.mrb[0].mxu0
    %1917 = vdwg.mxu0
    %v1918 = vmax.f32 %v1905, 0.0
    %v1919 = vmax.f32 %v1910, 0.0
    %v1920 = vmax.f32 %v1915, 0.0
    %s1921 = scalar_lea.vmem %s6, 96
    %v1922 = vld [vmem:[%s1921] sm:$0xff]
    %v1923 = vld [vmem:[%s1921 + $0x8] sm:$0xff]
    %v1924 = vld [vmem:[%s1921 + $0x10] sm:$0xff]
    %v1925 = vld [vmem:[%s1921 + $0x18] sm:$0xff]
    %s1926 = scalar_lea.vmem [#allocation15], 3
    %v1927 = vld [vmem:[%s1926] sm:$0x1]
    %v1929 = vlaneseq
    %v1930 = vshrl.u32 %v1929, 7
    %v1931 = vsub.s32 0, %v1930
    %v1932 = vrot.slane %v1927, %v1931
    %v1935 = vsel %vm540, %v1918, 0
    %v1938 = vsel %vm540, %v1919, 0
    %v1941 = vsel %vm540, %v1920, 0
    %1943 = vmatprep.subr.mxu0 0.0
    %1944 = vmatpush1.msra.mxu0 %v1922
    %1945 = vmatprep.subr.mxu0 0.0
    %1946 = vmatpush1.msra.mxu0 %v1923
    %1947 = vmatprep.subr.mxu0 0.0
    %1948 = vmatpush1.msra.mxu0 %v1924
    %1949 = vmatprep.subr.mxu0 0.0
    %1950 = vmatpush1.msra.mxu0 %v1925
    %1951 = vmatprep.subr.mxu0 0.0
    %1952 = vmatpush1.msra.mxu0 0.0
    %1953 = vmatprep.subr.mxu0 0.0
    %1954 = vmatpush1.msra.mxu0 0.0
    %1955 = vmatprep.subr.mxu0 0.0
    %1956 = vmatpush1.msra.mxu0 0.0
    %1957 = vmatprep.subr.mxu0 0.0
    %1958 = vmatpush1.msra.mxu0 0.0
    %1959 = vmatprep.subr.mxu0 0.0
    %1960 = vmatpush1.msra.mxu0 0.0
    %1961 = vmatprep.subr.mxu0 0.0
    %1962 = vmatpush1.msra.mxu0 0.0
    %1963 = vmatprep.subr.mxu0 0.0
    %1964 = vmatpush1.msra.mxu0 0.0
    %1965 = vmatprep.subr.mxu0 0.0
    %1966 = vmatpush1.msra.mxu0 0.0
    %1967 = vmatprep.subr.mxu0 0.0
    %1968 = vmatpush1.msra.mxu0 0.0
    %1969 = vmatprep.subr.mxu0 0.0
    %1970 = vmatpush1.msra.mxu0 0.0
    %1971 = vmatprep.subr.mxu0 0.0
    %1972 = vmatpush1.msra.mxu0 0.0
    %1973 = vmatprep.subr.mxu0 0.0
    %1974 = vmatpush1.msra.mxu0 0.0
    %1975 = vmatprep.subr.mxu0 0.0
    %1976 = vmatpush1.msra.mxu0 0.0
    %1977 = vmatprep.subr.mxu0 0.0
    %1978 = vmatpush1.msra.mxu0 0.0
    %1979 = vmatprep.subr.mxu0 0.0
    %1980 = vmatpush1.msra.mxu0 0.0
    %1981 = vmatprep.subr.mxu0 0.0
    %1982 = vmatpush1.msra.mxu0 0.0
    %1983 = vmatprep.subr.mxu0 0.0
    %1984 = vmatpush1.msra.mxu0 0.0
    %1985 = vmatprep.subr.mxu0 0.0
    %1986 = vmatpush1.msra.mxu0 0.0
    %1987 = vmatprep.subr.mxu0 0.0
    %1988 = vmatpush1.msra.mxu0 0.0
    %1989 = vmatprep.subr.mxu0 0.0
    %1990 = vmatpush1.msra.mxu0 0.0
    %1991 = vmatprep.subr.mxu0 0.0
    %1992 = vmatpush1.msra.mxu0 0.0
    %1993 = vmatprep.subr.mxu0 0.0
    %1994 = vmatpush1.msra.mxu0 0.0
    %1995 = vmatprep.subr.mxu0 0.0
    %1996 = vmatpush1.msra.mxu0 0.0
    %1997 = vmatprep.subr.mxu0 0.0
    %1998 = vmatpush1.msra.mxu0 0.0
    %1999 = vmatprep.subr.mxu0 0.0
    %2000 = vmatpush1.msra.mxu0 0.0
    %2001 = vmatprep.subr.mxu0 0.0
    %2002 = vmatpush1.msra.mxu0 0.0
    %2003 = vmatprep.subr.mxu0 0.0
    %2004 = vmatpush1.msra.mxu0 0.0
    %2005 = vmatprep.subr.mxu0 0.0
    %2006 = vmatpush1.msra.mxu0 0.0
    %2007 = vmatprep.mubr.f32.mxu0 0.0
    %2008 = vmatmul.mubr.f32.gmra.mrb[0].mxu0 %v1935
    %v2009 = vpop.f32.mrb[0].mxu0
    %v2010 = vadd.f32 %v1932, %v2009
    %v2011 = vpop.f32.mrb[0].mxu0
    %2012 = vmatprep.mubr.f32.mxu0 0.0
    %2013 = vmatmul.mubr.f32.gmra.mrb[0].mxu0 %v1938
    %v2014 = vpop.f32.mrb[0].mxu0
    %v2015 = vadd.f32 %v1932, %v2014
    %v2016 = vpop.f32.mrb[0].mxu0
    %2017 = vmatprep.mubr.f32.mxu0 0.0
    %2018 = vmatmul.mubr.f32.gmra.mrb[0].mxu0 %v1941
    %v2019 = vpop.f32.mrb[0].mxu0
    %v2020 = vadd.f32 %v1932, %v2019
    %v2021 = vpop.f32.mrb[0].mxu0
    %2022 = vdwg.mxu0
    %v2023 = vmax.f32 %v2010, 0.0
    %v2024 = vmax.f32 %v2015, 0.0
    %v2025 = vmax.f32 %v2020, 0.0
    %s2026 = scalar_lea.vmem [#allocation17], 3
    %v2027 = vld [vmem:[%s2026] sm:$0x1]
    %v2029 = vlaneseq
    %v2030 = vshrl.u32 %v2029, 7
    %v2031 = vsub.s32 0, %v2030
    %v2032 = vrot.slane %v2027, %v2031
    %v2034 = vmul.f32 %v2023, %v2032
    %v2035 = vmul.f32 %v2024, %v2032
    %v2036 = vmul.f32 %v2025, %v2032
    %s2037 = scalar_lea.vmem [#allocation18], 3
    %v2038 = vld [vmem:[%s2037] sm:$0x1]
    %v2040 = vlaneseq
    %v2041 = vshrl.u32 %v2040, 7
    %v2042 = vsub.s32 0, %v2041
    %v2043 = vrot.slane %v2038, %v2042
    %v2045 = vadd.f32 %v2034, %v2043
    %v2046 = vadd.f32 %v2035, %v2043
    %v2047 = vadd.f32 %v2036, %v2043
    %v2049 = vsel %vm442, %v2047, 0
    %2051 = vmatprep.subr.mxu0 0.0
    %2052 = vmatpush1.msra.mxu0 %v2045
    %2053 = vmatprep.subr.mxu0 0.0
    %2054 = vmatpush1.msra.mxu0 %v2046
    %2055 = vmatprep.subr.mxu0 0.0
    %2056 = vmatpush1.msra.mxu0 %v2049
    %2057 = vmatprep.subr.mxu0 0.0
    %2058 = vmatpush1.msra.mxu0 0.0
    %2059 = vmatprep.subr.mxu0 0.0
    %2060 = vmatpush1.msra.mxu0 0.0
    %2061 = vmatprep.subr.mxu0 0.0
    %2062 = vmatpush1.msra.mxu0 0.0
    %2063 = vmatprep.subr.mxu0 0.0
    %2064 = vmatpush1.msra.mxu0 0.0
    %2065 = vmatprep.subr.mxu0 0.0
    %2066 = vmatpush1.msra.mxu0 0.0
    %2067 = vmatprep.subr.mxu0 0.0
    %2068 = vmatpush1.msra.mxu0 0.0
    %2069 = vmatprep.subr.mxu0 0.0
    %2070 = vmatpush1.msra.mxu0 0.0
    %2071 = vmatprep.subr.mxu0 0.0
    %2072 = vmatpush1.msra.mxu0 0.0
    %2073 = vmatprep.subr.mxu0 0.0
    %2074 = vmatpush1.msra.mxu0 0.0
    %2075 = vmatprep.subr.mxu0 0.0
    %2076 = vmatpush1.msra.mxu0 0.0
    %2077 = vmatprep.subr.mxu0 0.0
    %2078 = vmatpush1.msra.mxu0 0.0
    %2079 = vmatprep.subr.mxu0 0.0
    %2080 = vmatpush1.msra.mxu0 0.0
    %2081 = vmatprep.subr.mxu0 0.0
    %2082 = vmatpush1.msra.mxu0 0.0
    %2083 = vmatprep.subr.mxu0 0.0
    %2084 = vmatpush1.msra.mxu0 0.0
    %2085 = vmatprep.subr.mxu0 0.0
    %2086 = vmatpush1.msra.mxu0 0.0
    %2087 = vmatprep.subr.mxu0 0.0
    %2088 = vmatpush1.msra.mxu0 0.0
    %2089 = vmatprep.subr.mxu0 0.0
    %2090 = vmatpush1.msra.mxu0 0.0
    %2091 = vmatprep.subr.mxu0 0.0
    %2092 = vmatpush1.msra.mxu0 0.0
    %2093 = vmatprep.subr.mxu0 0.0
    %2094 = vmatpush1.msra.mxu0 0.0
    %2095 = vmatprep.subr.mxu0 0.0
    %2096 = vmatpush1.msra.mxu0 0.0
    %2097 = vmatprep.subr.mxu0 0.0
    %2098 = vmatpush1.msra.mxu0 0.0
    %2099 = vmatprep.subr.mxu0 0.0
    %2100 = vmatpush1.msra.mxu0 0.0
    %2101 = vmatprep.subr.mxu0 0.0
    %2102 = vmatpush1.msra.mxu0 0.0
    %2103 = vmatprep.subr.mxu0 0.0
    %2104 = vmatpush1.msra.mxu0 0.0
    %2105 = vmatprep.subr.mxu0 0.0
    %2106 = vmatpush1.msra.mxu0 0.0
    %2107 = vmatprep.subr.mxu0 0.0
    %2108 = vmatpush1.msra.mxu0 0.0
    %2109 = vmatprep.subr.mxu0 0.0
    %2110 = vmatpush1.msra.mxu0 0.0
    %2111 = vmatprep.subr.mxu0 0.0
    %2112 = vmatpush1.msra.mxu0 0.0
    %2113 = vmatprep.subr.mxu0 0.0
    %2114 = vmatpush1.msra.mxu0 0.0
    %2115 = vmatprep.mubr.f32.mxu0 0.0
    %2116 = vmatmul.mubr.f32.gmra.mrb[0].mxu0 %v654
    %v2117 = vpop.f32.mrb[0].mxu0
    %v2118 = vadd.f32 0.0, %v2117
    %v2119 = vpop.f32.mrb[0].mxu0
    %2120 = vdwg.mxu0
    %v2121 = vld [vmem:[#allocation20 + $0x60] sm:$0xff]
    %v2122 = vld [vmem:[#allocation20 + $0x68] sm:$0xff]
    %v2123 = vld [vmem:[#allocation20 + $0x70] sm:$0xff]
    %v2124 = vld [vmem:[#allocation20 + $0x78] sm:$0xff]
    %v2126 = vsel %vm540, %v2118, 0
    %2128 = vmatprep.subr.mxu0 0.0
    %2129 = vmatpush1.msra.mxu0 %v2121
    %2130 = vmatprep.subr.mxu0 0.0
    %2131 = vmatpush1.msra.mxu0 %v2122
    %2132 = vmatprep.subr.mxu0 0.0
    %2133 = vmatpush1.msra.mxu0 %v2123
    %2134 = vmatprep.subr.mxu0 0.0
    %2135 = vmatpush1.msra.mxu0 %v2124
    %2136 = vmatprep.subr.mxu0 0.0
    %2137 = vmatpush1.msra.mxu0 0.0
    %2138 = vmatprep.subr.mxu0 0.0
    %2139 = vmatpush1.msra.mxu0 0.0
    %2140 = vmatprep.subr.mxu0 0.0
    %2141 = vmatpush1.msra.mxu0 0.0
    %2142 = vmatprep.subr.mxu0 0.0
    %2143 = vmatpush1.msra.mxu0 0.0
    %2144 = vmatprep.subr.mxu0 0.0
    %2145 = vmatpush1.msra.mxu0 0.0
    %2146 = vmatprep.subr.mxu0 0.0
    %2147 = vmatpush1.msra.mxu0 0.0
    %2148 = vmatprep.subr.mxu0 0.0
    %2149 = vmatpush1.msra.mxu0 0.0
    %2150 = vmatprep.subr.mxu0 0.0
    %2151 = vmatpush1.msra.mxu0 0.0
    %2152 = vmatprep.subr.mxu0 0.0
    %2153 = vmatpush1.msra.mxu0 0.0
    %2154 = vmatprep.subr.mxu0 0.0
    %2155 = vmatpush1.msra.mxu0 0.0
    %2156 = vmatprep.subr.mxu0 0.0
    %2157 = vmatpush1.msra.mxu0 0.0
    %2158 = vmatprep.subr.mxu0 0.0
    %2159 = vmatpush1.msra.mxu0 0.0
    %2160 = vmatprep.subr.mxu0 0.0
    %2161 = vmatpush1.msra.mxu0 0.0
    %2162 = vmatprep.subr.mxu0 0.0
    %2163 = vmatpush1.msra.mxu0 0.0
    %2164 = vmatprep.subr.mxu0 0.0
    %2165 = vmatpush1.msra.mxu0 0.0
    %2166 = vmatprep.subr.mxu0 0.0
    %2167 = vmatpush1.msra.mxu0 0.0
    %2168 = vmatprep.subr.mxu0 0.0
    %2169 = vmatpush1.msra.mxu0 0.0
    %2170 = vmatprep.subr.mxu0 0.0
    %2171 = vmatpush1.msra.mxu0 0.0
    %2172 = vmatprep.subr.mxu0 0.0
    %2173 = vmatpush1.msra.mxu0 0.0
    %2174 = vmatprep.subr.mxu0 0.0
    %2175 = vmatpush1.msra.mxu0 0.0
    %2176 = vmatprep.subr.mxu0 0.0
    %2177 = vmatpush1.msra.mxu0 0.0
    %2178 = vmatprep.subr.mxu0 0.0
    %2179 = vmatpush1.msra.mxu0 0.0
    %2180 = vmatprep.subr.mxu0 0.0
    %2181 = vmatpush1.msra.mxu0 0.0
    %2182 = vmatprep.subr.mxu0 0.0
    %2183 = vmatpush1.msra.mxu0 0.0
    %2184 = vmatprep.subr.mxu0 0.0
    %2185 = vmatpush1.msra.mxu0 0.0
    %2186 = vmatprep.subr.mxu0 0.0
    %2187 = vmatpush1.msra.mxu0 0.0
    %2188 = vmatprep.subr.mxu0 0.0
    %2189 = vmatpush1.msra.mxu0 0.0
    %2190 = vmatprep.subr.mxu0 0.0
    %2191 = vmatpush1.msra.mxu0 0.0
    %2192 = vmatprep.mubr.f32.mxu0 0.0
    %2193 = vmatmul.mubr.f32.gmra.mrb[0].mxu0 %v2126
    %v2194 = vpop.f32.mrb[0].mxu0
    %v2195 = vadd.f32 0.0, %v2194
    %v2196 = vpop.f32.mrb[0].mxu0
    %2197 = vdwg.mxu0
    %v2198 = vadd.f32 %v1733, %v2195
    %s2199 = scalar_lea.vmem [#allocation12], 96
    %v2200 = vld [vmem:[%s2199] sm:$0xff]
    %v2201 = vld [vmem:[%s2199 + $0x8] sm:$0xff]
    %v2202 = vld [vmem:[%s2199 + $0x10] sm:$0xff]
    %v2203 = vld [vmem:[%s2199 + $0x18] sm:$0xff]
    %v2205 = vsel %vm540, %v2045, 0
    %v2208 = vsel %vm540, %v2046, 0
    %v2210 = vsel %vm540, %v2047, 0
    %2212 = vmatprep.subr.mxu0 0.0
    %2213 = vmatpush1.msra.mxu0 %v2200
    %2214 = vmatprep.subr.mxu0 0.0
    %2215 = vmatpush1.msra.mxu0 %v2201
    %2216 = vmatprep.subr.mxu0 0.0
    %2217 = vmatpush1.msra.mxu0 %v2202
    %2218 = vmatprep.subr.mxu0 0.0
    %2219 = vmatpush1.msra.mxu0 %v2203
    %2220 = vmatprep.subr.mxu0 0.0
    %2221 = vmatpush1.msra.mxu0 0.0
    %2222 = vmatprep.subr.mxu0 0.0
    %2223 = vmatpush1.msra.mxu0 0.0
    %2224 = vmatprep.subr.mxu0 0.0
    %2225 = vmatpush1.msra.mxu0 0.0
    %2226 = vmatprep.subr.mxu0 0.0
    %2227 = vmatpush1.msra.mxu0 0.0
    %2228 = vmatprep.subr.mxu0 0.0
    %2229 = vmatpush1.msra.mxu0 0.0
    %2230 = vmatprep.subr.mxu0 0.0
    %2231 = vmatpush1.msra.mxu0 0.0
    %2232 = vmatprep.subr.mxu0 0.0
    %2233 = vmatpush1.msra.mxu0 0.0
    %2234 = vmatprep.subr.mxu0 0.0
    %2235 = vmatpush1.msra.mxu0 0.0
    %2236 = vmatprep.subr.mxu0 0.0
    %2237 = vmatpush1.msra.mxu0 0.0
    %2238 = vmatprep.subr.mxu0 0.0
    %2239 = vmatpush1.msra.mxu0 0.0
    %2240 = vmatprep.subr.mxu0 0.0
    %2241 = vmatpush1.msra.mxu0 0.0
    %2242 = vmatprep.subr.mxu0 0.0
    %2243 = vmatpush1.msra.mxu0 0.0
    %2244 = vmatprep.subr.mxu0 0.0
    %2245 = vmatpush1.msra.mxu0 0.0
    %2246 = vmatprep.subr.mxu0 0.0
    %2247 = vmatpush1.msra.mxu0 0.0
    %2248 = vmatprep.subr.mxu0 0.0
    %2249 = vmatpush1.msra.mxu0 0.0
    %2250 = vmatprep.subr.mxu0 0.0
    %2251 = vmatpush1.msra.mxu0 0.0
    %2252 = vmatprep.subr.mxu0 0.0
    %2253 = vmatpush1.msra.mxu0 0.0
    %2254 = vmatprep.subr.mxu0 0.0
    %2255 = vmatpush1.msra.mxu0 0.0
    %2256 = vmatprep.subr.mxu0 0.0
    %2257 = vmatpush1.msra.mxu0 0.0
    %2258 = vmatprep.subr.mxu0 0.0
    %2259 = vmatpush1.msra.mxu0 0.0
    %2260 = vmatprep.subr.mxu0 0.0
    %2261 = vmatpush1.msra.mxu0 0.0
    %2262 = vmatprep.subr.mxu0 0.0
    %2263 = vmatpush1.msra.mxu0 0.0
    %2264 = vmatprep.subr.mxu0 0.0
    %2265 = vmatpush1.msra.mxu0 0.0
    %2266 = vmatprep.subr.mxu0 0.0
    %2267 = vmatpush1.msra.mxu0 0.0
    %2268 = vmatprep.subr.mxu0 0.0
    %2269 = vmatpush1.msra.mxu0 0.0
    %2270 = vmatprep.subr.mxu0 0.0
    %2271 = vmatpush1.msra.mxu0 0.0
    %2272 = vmatprep.subr.mxu0 0.0
    %2273 = vmatpush1.msra.mxu0 0.0
    %2274 = vmatprep.subr.mxu0 0.0
    %2275 = vmatpush1.msra.mxu0 0.0
    %2276 = vmatprep.mubr.f32.mxu0 0.0
    %2277 = vmatmul.mubr.f32.gmra.mrb[0].mxu0 %v2205
    %v2278 = vpop.f32.mrb[0].mxu0
    %v2279 = vadd.f32 0.0, %v2278
    %v2280 = vpop.f32.mrb[0].mxu0
    %2281 = vmatprep.mubr.f32.mxu0 0.0
    %2282 = vmatmul.mubr.f32.gmra.mrb[0].mxu0 %v2208
    %v2283 = vpop.f32.mrb[0].mxu0
    %v2284 = vadd.f32 0.0, %v2283
    %v2285 = vpop.f32.mrb[0].mxu0
    %2286 = vmatprep.mubr.f32.mxu0 0.0
    %2287 = vmatmul.mubr.f32.gmra.mrb[0].mxu0 %v2210
    %v2288 = vpop.f32.mrb[0].mxu0
    %v2289 = vadd.f32 0.0, %v2288
    %v2290 = vpop.f32.mrb[0].mxu0
    %2291 = vdwg.mxu0
    %s2292 = scalar_lea.vmem [#allocation14], 4
    %v2293 = vld [vmem:[%s2292] sm:$0x1]
    %v2295 = vlaneseq
    %v2296 = vshrl.u32 %v2295, 7
    %v2297 = vsub.s32 0, %v2296
    %v2298 = vrot.slane %v2293, %v2297
    %v2301 = vsel %vm442, %v2289, 0
    %2303 = vmatprep.subr.mxu0 0.0
    %2304 = vmatpush1.msra.mxu0 %v2279
    %2305 = vmatprep.subr.mxu0 0.0
    %2306 = vmatpush1.msra.mxu0 %v2284
    %2307 = vmatprep.subr.mxu0 0.0
    %2308 = vmatpush1.msra.mxu0 %v2301
    %2309 = vmatprep.subr.mxu0 0.0
    %2310 = vmatpush1.msra.mxu0 0.0
    %2311 = vmatprep.subr.mxu0 0.0
    %2312 = vmatpush1.msra.mxu0 0.0
    %2313 = vmatprep.subr.mxu0 0.0
    %2314 = vmatpush1.msra.mxu0 0.0
    %2315 = vmatprep.subr.mxu0 0.0
    %2316 = vmatpush1.msra.mxu0 0.0
    %2317 = vmatprep.subr.mxu0 0.0
    %2318 = vmatpush1.msra.mxu0 0.0
    %2319 = vmatprep.subr.mxu0 0.0
    %2320 = vmatpush1.msra.mxu0 0.0
    %2321 = vmatprep.subr.mxu0 0.0
    %2322 = vmatpush1.msra.mxu0 0.0
    %2323 = vmatprep.subr.mxu0 0.0
    %2324 = vmatpush1.msra.mxu0 0.0
    %2325 = vmatprep.subr.mxu0 0.0
    %2326 = vmatpush1.msra.mxu0 0.0
    %2327 = vmatprep.subr.mxu0 0.0
    %2328 = vmatpush1.msra.mxu0 0.0
    %2329 = vmatprep.subr.mxu0 0.0
    %2330 = vmatpush1.msra.mxu0 0.0
    %2331 = vmatprep.subr.mxu0 0.0
    %2332 = vmatpush1.msra.mxu0 0.0
    %2333 = vmatprep.subr.mxu0 0.0
    %2334 = vmatpush1.msra.mxu0 0.0
    %2335 = vmatprep.subr.mxu0 0.0
    %2336 = vmatpush1.msra.mxu0 0.0
    %2337 = vmatprep.subr.mxu0 0.0
    %2338 = vmatpush1.msra.mxu0 0.0
    %2339 = vmatprep.subr.mxu0 0.0
    %2340 = vmatpush1.msra.mxu0 0.0
    %2341 = vmatprep.subr.mxu0 0.0
    %2342 = vmatpush1.msra.mxu0 0.0
    %2343 = vmatprep.subr.mxu0 0.0
    %2344 = vmatpush1.msra.mxu0 0.0
    %2345 = vmatprep.subr.mxu0 0.0
    %2346 = vmatpush1.msra.mxu0 0.0
    %2347 = vmatprep.subr.mxu0 0.0
    %2348 = vmatpush1.msra.mxu0 0.0
    %2349 = vmatprep.subr.mxu0 0.0
    %2350 = vmatpush1.msra.mxu0 0.0
    %2351 = vmatprep.subr.mxu0 0.0
    %2352 = vmatpush1.msra.mxu0 0.0
    %2353 = vmatprep.subr.mxu0 0.0
    %2354 = vmatpush1.msra.mxu0 0.0
    %2355 = vmatprep.subr.mxu0 0.0
    %2356 = vmatpush1.msra.mxu0 0.0
    %2357 = vmatprep.subr.mxu0 0.0
    %2358 = vmatpush1.msra.mxu0 0.0
    %2359 = vmatprep.subr.mxu0 0.0
    %2360 = vmatpush1.msra.mxu0 0.0
    %2361 = vmatprep.subr.mxu0 0.0
    %2362 = vmatpush1.msra.mxu0 0.0
    %2363 = vmatprep.subr.mxu0 0.0
    %2364 = vmatpush1.msra.mxu0 0.0
    %2365 = vmatprep.subr.mxu0 0.0
    %2366 = vmatpush1.msra.mxu0 0.0
    %2367 = vmatprep.mubr.f32.mxu0 0.0
    %2368 = vmatmul.mubr.f32.gmra.mrb[0].mxu0 %v434
    %v2369 = vpop.f32.mrb[0].mxu0
    %v2370 = vadd.f32 %v2298, %v2369
    %v2371 = vpop.f32.mrb[0].mxu0
    %2372 = vmatprep.mubr.f32.mxu0 0.0
    %2373 = vmatmul.mubr.f32.gmra.mrb[0].mxu0 %v437
    %v2374 = vpop.f32.mrb[0].mxu0
    %v2375 = vadd.f32 %v2298, %v2374
    %v2376 = vpop.f32.mrb[0].mxu0
    %2377 = vmatprep.mubr.f32.mxu0 0.0
    %2378 = vmatmul.mubr.f32.gmra.mrb[0].mxu0 %v440
    %v2379 = vpop.f32.mrb[0].mxu0
    %v2380 = vadd.f32 %v2298, %v2379
    %v2381 = vpop.f32.mrb[0].mxu0
    %2382 = vdwg.mxu0
    %v2383 = vmax.f32 %v2370, 0.0
    %v2384 = vmax.f32 %v2375, 0.0
    %v2385 = vmax.f32 %v2380, 0.0
    %s2386 = scalar_lea.vmem %s6, 128
    %v2387 = vld [vmem:[%s2386] sm:$0xff]
    %v2388 = vld [vmem:[%s2386 + $0x8] sm:$0xff]
    %v2389 = vld [vmem:[%s2386 + $0x10] sm:$0xff]
    %v2390 = vld [vmem:[%s2386 + $0x18] sm:$0xff]
    %s2391 = scalar_lea.vmem [#allocation15], 4
    %v2392 = vld [vmem:[%s2391] sm:$0x1]
    %v2394 = vlaneseq
    %v2395 = vshrl.u32 %v2394, 7
    %v2396 = vsub.s32 0, %v2395
    %v2397 = vrot.slane %v2392, %v2396
    %v2400 = vsel %vm540, %v2383, 0
    %v2403 = vsel %vm540, %v2384, 0
    %v2406 = vsel %vm540, %v2385, 0
    %2408 = vmatprep.subr.mxu0 0.0
    %2409 = vmatpush1.msra.mxu0 %v2387
    %2410 = vmatprep.subr.mxu0 0.0
    %2411 = vmatpush1.msra.mxu0 %v2388
    %2412 = vmatprep.subr.mxu0 0.0
    %2413 = vmatpush1.msra.mxu0 %v2389
    %2414 = vmatprep.subr.mxu0 0.0
    %2415 = vmatpush1.msra.mxu0 %v2390
    %2416 = vmatprep.subr.mxu0 0.0
    %2417 = vmatpush1.msra.mxu0 0.0
    %2418 = vmatprep.subr.mxu0 0.0
    %2419 = vmatpush1.msra.mxu0 0.0
    %2420 = vmatprep.subr.mxu0 0.0
    %2421 = vmatpush1.msra.mxu0 0.0
    %2422 = vmatprep.subr.mxu0 0.0
    %2423 = vmatpush1.msra.mxu0 0.0
    %2424 = vmatprep.subr.mxu0 0.0
    %2425 = vmatpush1.msra.mxu0 0.0
    %2426 = vmatprep.subr.mxu0 0.0
    %2427 = vmatpush1.msra.mxu0 0.0
    %2428 = vmatprep.subr.mxu0 0.0
    %2429 = vmatpush1.msra.mxu0 0.0
    %2430 = vmatprep.subr.mxu0 0.0
    %2431 = vmatpush1.msra.mxu0 0.0
    %2432 = vmatprep.subr.mxu0 0.0
    %2433 = vmatpush1.msra.mxu0 0.0
    %2434 = vmatprep.subr.mxu0 0.0
    %2435 = vmatpush1.msra.mxu0 0.0
    %2436 = vmatprep.subr.mxu0 0.0
    %2437 = vmatpush1.msra.mxu0 0.0
    %2438 = vmatprep.subr.mxu0 0.0
    %2439 = vmatpush1.msra.mxu0 0.0
    %2440 = vmatprep.subr.mxu0 0.0
    %2441 = vmatpush1.msra.mxu0 0.0
    %2442 = vmatprep.subr.mxu0 0.0
    %2443 = vmatpush1.msra.mxu0 0.0
    %2444 = vmatprep.subr.mxu0 0.0
    %2445 = vmatpush1.msra.mxu0 0.0
    %2446 = vmatprep.subr.mxu0 0.0
    %2447 = vmatpush1.msra.mxu0 0.0
    %2448 = vmatprep.subr.mxu0 0.0
    %2449 = vmatpush1.msra.mxu0 0.0
    %2450 = vmatprep.subr.mxu0 0.0
    %2451 = vmatpush1.msra.mxu0 0.0
    %2452 = vmatprep.subr.mxu0 0.0
    %2453 = vmatpush1.msra.mxu0 0.0
    %2454 = vmatprep.subr.mxu0 0.0
    %2455 = vmatpush1.msra.mxu0 0.0
    %2456 = vmatprep.subr.mxu0 0.0
    %2457 = vmatpush1.msra.mxu0 0.0
    %2458 = vmatprep.subr.mxu0 0.0
    %2459 = vmatpush1.msra.mxu0 0.0
    %2460 = vmatprep.subr.mxu0 0.0
    %2461 = vmatpush1.msra.mxu0 0.0
    %2462 = vmatprep.subr.mxu0 0.0
    %2463 = vmatpush1.msra.mxu0 0.0
    %2464 = vmatprep.subr.mxu0 0.0
    %2465 = vmatpush1.msra.mxu0 0.0
    %2466 = vmatprep.subr.mxu0 0.0
    %2467 = vmatpush1.msra.mxu0 0.0
    %2468 = vmatprep.subr.mxu0 0.0
    %2469 = vmatpush1.msra.mxu0 0.0
    %2470 = vmatprep.subr.mxu0 0.0
    %2471 = vmatpush1.msra.mxu0 0.0
    %2472 = vmatprep.mubr.f32.mxu0 0.0
    %2473 = vmatmul.mubr.f32.gmra.mrb[0].mxu0 %v2400
    %v2474 = vpop.f32.mrb[0].mxu0
    %v2475 = vadd.f32 %v2397, %v2474
    %v2476 = vpop.f32.mrb[0].mxu0
    %2477 = vmatprep.mubr.f32.mxu0 0.0
    %2478 = vmatmul.mubr.f32.gmra.mrb[0].mxu0 %v2403
    %v2479 = vpop.f32.mrb[0].mxu0
    %v2480 = vadd.f32 %v2397, %v2479
    %v2481 = vpop.f32.mrb[0].mxu0
    %2482 = vmatprep.mubr.f32.mxu0 0.0
    %2483 = vmatmul.mubr.f32.gmra.mrb[0].mxu0 %v2406
    %v2484 = vpop.f32.mrb[0].mxu0
    %v2485 = vadd.f32 %v2397, %v2484
    %v2486 = vpop.f32.mrb[0].mxu0
    %2487 = vdwg.mxu0
    %v2488 = vmax.f32 %v2475, 0.0
    %v2489 = vmax.f32 %v2480, 0.0
    %v2490 = vmax.f32 %v2485, 0.0
    %s2491 = scalar_lea.vmem [#allocation17], 4
    %v2492 = vld [vmem:[%s2491] sm:$0x1]
    %v2494 = vlaneseq
    %v2495 = vshrl.u32 %v2494, 7
    %v2496 = vsub.s32 0, %v2495
    %v2497 = vrot.slane %v2492, %v2496
    %v2499 = vmul.f32 %v2488, %v2497
    %v2500 = vmul.f32 %v2489, %v2497
    %v2501 = vmul.f32 %v2490, %v2497
    %s2502 = scalar_lea.vmem [#allocation18], 4
    %v2503 = vld [vmem:[%s2502] sm:$0x1]
    %v2505 = vlaneseq
    %v2506 = vshrl.u32 %v2505, 7
    %v2507 = vsub.s32 0, %v2506
    %v2508 = vrot.slane %v2503, %v2507
    %v2510 = vadd.f32 %v2499, %v2508
    %v2511 = vadd.f32 %v2500, %v2508
    %v2512 = vadd.f32 %v2501, %v2508
    %v2514 = vsel %vm442, %v2512, 0
    %2516 = vmatprep.subr.mxu0 0.0
    %2517 = vmatpush1.msra.mxu0 %v2510
    %2518 = vmatprep.subr.mxu0 0.0
    %2519 = vmatpush1.msra.mxu0 %v2511
    %2520 = vmatprep.subr.mxu0 0.0
    %2521 = vmatpush1.msra.mxu0 %v2514
    %2522 = vmatprep.subr.mxu0 0.0
    %2523 = vmatpush1.msra.mxu0 0.0
    %2524 = vmatprep.subr.mxu0 0.0
    %2525 = vmatpush1.msra.mxu0 0.0
    %2526 = vmatprep.subr.mxu0 0.0
    %2527 = vmatpush1.msra.mxu0 0.0
    %2528 = vmatprep.subr.mxu0 0.0
    %2529 = vmatpush1.msra.mxu0 0.0
    %2530 = vmatprep.subr.mxu0 0.0
    %2531 = vmatpush1.msra.mxu0 0.0
    %2532 = vmatprep.subr.mxu0 0.0
    %2533 = vmatpush1.msra.mxu0 0.0
    %2534 = vmatprep.subr.mxu0 0.0
    %2535 = vmatpush1.msra.mxu0 0.0
    %2536 = vmatprep.subr.mxu0 0.0
    %2537 = vmatpush1.msra.mxu0 0.0
    %2538 = vmatprep.subr.mxu0 0.0
    %2539 = vmatpush1.msra.mxu0 0.0
    %2540 = vmatprep.subr.mxu0 0.0
    %2541 = vmatpush1.msra.mxu0 0.0
    %2542 = vmatprep.subr.mxu0 0.0
    %2543 = vmatpush1.msra.mxu0 0.0
    %2544 = vmatprep.subr.mxu0 0.0
    %2545 = vmatpush1.msra.mxu0 0.0
    %2546 = vmatprep.subr.mxu0 0.0
    %2547 = vmatpush1.msra.mxu0 0.0
    %2548 = vmatprep.subr.mxu0 0.0
    %2549 = vmatpush1.msra.mxu0 0.0
    %2550 = vmatprep.subr.mxu0 0.0
    %2551 = vmatpush1.msra.mxu0 0.0
    %2552 = vmatprep.subr.mxu0 0.0
    %2553 = vmatpush1.msra.mxu0 0.0
    %2554 = vmatprep.subr.mxu0 0.0
    %2555 = vmatpush1.msra.mxu0 0.0
    %2556 = vmatprep.subr.mxu0 0.0
    %2557 = vmatpush1.msra.mxu0 0.0
    %2558 = vmatprep.subr.mxu0 0.0
    %2559 = vmatpush1.msra.mxu0 0.0
    %2560 = vmatprep.subr.mxu0 0.0
    %2561 = vmatpush1.msra.mxu0 0.0
    %2562 = vmatprep.subr.mxu0 0.0
    %2563 = vmatpush1.msra.mxu0 0.0
    %2564 = vmatprep.subr.mxu0 0.0
    %2565 = vmatpush1.msra.mxu0 0.0
    %2566 = vmatprep.subr.mxu0 0.0
    %2567 = vmatpush1.msra.mxu0 0.0
    %2568 = vmatprep.subr.mxu0 0.0
    %2569 = vmatpush1.msra.mxu0 0.0
    %2570 = vmatprep.subr.mxu0 0.0
    %2571 = vmatpush1.msra.mxu0 0.0
    %2572 = vmatprep.subr.mxu0 0.0
    %2573 = vmatpush1.msra.mxu0 0.0
    %2574 = vmatprep.subr.mxu0 0.0
    %2575 = vmatpush1.msra.mxu0 0.0
    %2576 = vmatprep.subr.mxu0 0.0
    %2577 = vmatpush1.msra.mxu0 0.0
    %2578 = vmatprep.subr.mxu0 0.0
    %2579 = vmatpush1.msra.mxu0 0.0
    %2580 = vmatprep.mubr.f32.mxu0 0.0
    %2581 = vmatmul.mubr.f32.gmra.mrb[0].mxu0 %v654
    %v2582 = vpop.f32.mrb[0].mxu0
    %v2583 = vadd.f32 0.0, %v2582
    %v2584 = vpop.f32.mrb[0].mxu0
    %2585 = vdwg.mxu0
    %v2586 = vld [vmem:[#allocation20 + $0x80] sm:$0xff]
    %v2587 = vld [vmem:[#allocation20 + $0x88] sm:$0xff]
    %v2588 = vld [vmem:[#allocation20 + $0x90] sm:$0xff]
    %v2589 = vld [vmem:[#allocation20 + $0x98] sm:$0xff]
    %v2591 = vsel %vm540, %v2583, 0
    %2593 = vmatprep.subr.mxu0 0.0
    %2594 = vmatpush1.msra.mxu0 %v2586
    %2595 = vmatprep.subr.mxu0 0.0
    %2596 = vmatpush1.msra.mxu0 %v2587
    %2597 = vmatprep.subr.mxu0 0.0
    %2598 = vmatpush1.msra.mxu0 %v2588
    %2599 = vmatprep.subr.mxu0 0.0
    %2600 = vmatpush1.msra.mxu0 %v2589
    %2601 = vmatprep.subr.mxu0 0.0
    %2602 = vmatpush1.msra.mxu0 0.0
    %2603 = vmatprep.subr.mxu0 0.0
    %2604 = vmatpush1.msra.mxu0 0.0
    %2605 = vmatprep.subr.mxu0 0.0
    %2606 = vmatpush1.msra.mxu0 0.0
    %2607 = vmatprep.subr.mxu0 0.0
    %2608 = vmatpush1.msra.mxu0 0.0
    %2609 = vmatprep.subr.mxu0 0.0
    %2610 = vmatpush1.msra.mxu0 0.0
    %2611 = vmatprep.subr.mxu0 0.0
    %2612 = vmatpush1.msra.mxu0 0.0
    %2613 = vmatprep.subr.mxu0 0.0
    %2614 = vmatpush1.msra.mxu0 0.0
    %2615 = vmatprep.subr.mxu0 0.0
    %2616 = vmatpush1.msra.mxu0 0.0
    %2617 = vmatprep.subr.mxu0 0.0
    %2618 = vmatpush1.msra.mxu0 0.0
    %2619 = vmatprep.subr.mxu0 0.0
    %2620 = vmatpush1.msra.mxu0 0.0
    %2621 = vmatprep.subr.mxu0 0.0
    %2622 = vmatpush1.msra.mxu0 0.0
    %2623 = vmatprep.subr.mxu0 0.0
    %2624 = vmatpush1.msra.mxu0 0.0
    %2625 = vmatprep.subr.mxu0 0.0
    %2626 = vmatpush1.msra.mxu0 0.0
    %2627 = vmatprep.subr.mxu0 0.0
    %2628 = vmatpush1.msra.mxu0 0.0
    %2629 = vmatprep.subr.mxu0 0.0
    %2630 = vmatpush1.msra.mxu0 0.0
    %2631 = vmatprep.subr.mxu0 0.0
    %2632 = vmatpush1.msra.mxu0 0.0
    %2633 = vmatprep.subr.mxu0 0.0
    %2634 = vmatpush1.msra.mxu0 0.0
    %2635 = vmatprep.subr.mxu0 0.0
    %2636 = vmatpush1.msra.mxu0 0.0
    %2637 = vmatprep.subr.mxu0 0.0
    %2638 = vmatpush1.msra.mxu0 0.0
    %2639 = vmatprep.subr.mxu0 0.0
    %2640 = vmatpush1.msra.mxu0 0.0
    %2641 = vmatprep.subr.mxu0 0.0
    %2642 = vmatpush1.msra.mxu0 0.0
    %2643 = vmatprep.subr.mxu0 0.0
    %2644 = vmatpush1.msra.mxu0 0.0
    %2645 = vmatprep.subr.mxu0 0.0
    %2646 = vmatpush1.msra.mxu0 0.0
    %2647 = vmatprep.subr.mxu0 0.0
    %2648 = vmatpush1.msra.mxu0 0.0
    %2649 = vmatprep.subr.mxu0 0.0
    %2650 = vmatpush1.msra.mxu0 0.0
    %2651 = vmatprep.subr.mxu0 0.0
    %2652 = vmatpush1.msra.mxu0 0.0
    %2653 = vmatprep.subr.mxu0 0.0
    %2654 = vmatpush1.msra.mxu0 0.0
    %2655 = vmatprep.subr.mxu0 0.0
    %2656 = vmatpush1.msra.mxu0 0.0
    %2657 = vmatprep.mubr.f32.mxu0 0.0
    %2658 = vmatmul.mubr.f32.gmra.mrb[0].mxu0 %v2591
    %v2659 = vpop.f32.mrb[0].mxu0
    %v2660 = vadd.f32 0.0, %v2659
    %v2661 = vpop.f32.mrb[0].mxu0
    %2662 = vdwg.mxu0
    %v2663 = vadd.f32 %v2198, %v2660
    %v2664 = vld [vmem:[%s11] sm:$0x1]
    %v2666 = vlaneseq
    %v2667 = vshrl.u32 %v2666, 7
    %v2668 = vsub.s32 0, %v2667
    %v2669 = vrot.slane %v2664, %v2668
    %v2671 = vadd.f32 %v2663, %v2669
    %v2672 = vmax.f32 %v2671, 0.0
    %v2673 = vld [vmem:[#allocation23] sm:$0xff]
    %v2674 = vld [vmem:[#allocation23 + $0x8] sm:$0xff]
    %v2675 = vld [vmem:[#allocation23 + $0x10] sm:$0xff]
    %v2676 = vld [vmem:[#allocation23 + $0x18] sm:$0xff]
    %v2677 = vld [vmem:[#allocation21] sm:$0xff]
    %v2678 = vld [vmem:[#allocation21 + $0x8] sm:$0xff]
    %v2679 = vld [vmem:[%s13] sm:$0xff]
    %v2680 = vld [vmem:[%s13 + $0x8] sm:$0xff]
    %v2681 = vld [vmem:[%s13 + $0x10] sm:$0xff]
    %v2682 = vld [vmem:[%s13 + $0x18] sm:$0xff]
    %v2683 = vld [vmem:[%s15] sm:$0x1]
    %v2685 = vlaneseq
    %v2686 = vshrl.u32 %v2685, 7
    %v2687 = vsub.s32 0, %v2686
    %v2688 = vrot.slane %v2683, %v2687
    %v2691 = vsel %vm540, %v2677, 0
    %v2694 = vsel %vm540, %v2678, 0
    %2696 = vmatprep.subr.mxu0 0.0
    %2697 = vmatpush1.msra.mxu0 %v2679
    %2698 = vmatprep.subr.mxu0 0.0
    %2699 = vmatpush1.msra.mxu0 %v2680
    %2700 = vmatprep.subr.mxu0 0.0
    %2701 = vmatpush1.msra.mxu0 %v2681
    %2702 = vmatprep.subr.mxu0 0.0
    %2703 = vmatpush1.msra.mxu0 %v2682
    %2704 = vmatprep.subr.mxu0 0.0
    %2705 = vmatpush1.msra.mxu0 0.0
    %2706 = vmatprep.subr.mxu0 0.0
    %2707 = vmatpush1.msra.mxu0 0.0
    %2708 = vmatprep.subr.mxu0 0.0
    %2709 = vmatpush1.msra.mxu0 0.0
    %2710 = vmatprep.subr.mxu0 0.0
    %2711 = vmatpush1.msra.mxu0 0.0
    %2712 = vmatprep.subr.mxu0 0.0
    %2713 = vmatpush1.msra.mxu0 0.0
    %2714 = vmatprep.subr.mxu0 0.0
    %2715 = vmatpush1.msra.mxu0 0.0
    %2716 = vmatprep.subr.mxu0 0.0
    %2717 = vmatpush1.msra.mxu0 0.0
    %2718 = vmatprep.subr.mxu0 0.0
    %2719 = vmatpush1.msra.mxu0 0.0
    %2720 = vmatprep.subr.mxu0 0.0
    %2721 = vmatpush1.msra.mxu0 0.0
    %2722 = vmatprep.subr.mxu0 0.0
    %2723 = vmatpush1.msra.mxu0 0.0
    %2724 = vmatprep.subr.mxu0 0.0
    %2725 = vmatpush1.msra.mxu0 0.0
    %2726 = vmatprep.subr.mxu0 0.0
    %2727 = vmatpush1.msra.mxu0 0.0
    %2728 = vmatprep.subr.mxu0 0.0
    %2729 = vmatpush1.msra.mxu0 0.0
    %2730 = vmatprep.subr.mxu0 0.0
    %2731 = vmatpush1.msra.mxu0 0.0
    %2732 = vmatprep.subr.mxu0 0.0
    %2733 = vmatpush1.msra.mxu0 0.0
    %2734 = vmatprep.subr.mxu0 0.0
    %2735 = vmatpush1.msra.mxu0 0.0
    %2736 = vmatprep.subr.mxu0 0.0
    %2737 = vmatpush1.msra.mxu0 0.0
    %2738 = vmatprep.subr.mxu0 0.0
    %2739 = vmatpush1.msra.mxu0 0.0
    %2740 = vmatprep.subr.mxu0 0.0
    %2741 = vmatpush1.msra.mxu0 0.0
    %2742 = vmatprep.subr.mxu0 0.0
    %2743 = vmatpush1.msra.mxu0 0.0
    %2744 = vmatprep.subr.mxu0 0.0
    %2745 = vmatpush1.msra.mxu0 0.0
    %2746 = vmatprep.subr.mxu0 0.0
    %2747 = vmatpush1.msra.mxu0 0.0
    %2748 = vmatprep.subr.mxu0 0.0
    %2749 = vmatpush1.msra.mxu0 0.0
    %2750 = vmatprep.subr.mxu0 0.0
    %2751 = vmatpush1.msra.mxu0 0.0
    %2752 = vmatprep.subr.mxu0 0.0
    %2753 = vmatpush1.msra.mxu0 0.0
    %2754 = vmatprep.subr.mxu0 0.0
    %2755 = vmatpush1.msra.mxu0 0.0
    %2756 = vmatprep.subr.mxu0 0.0
    %2757 = vmatpush1.msra.mxu0 0.0
    %2758 = vmatprep.subr.mxu0 0.0
    %2759 = vmatpush1.msra.mxu0 0.0
    %2760 = vmatprep.mubr.f32.mxu0 0.0
    %2761 = vmatmul.mubr.f32.gmra.mrb[0].mxu0 %v2691
    %v2762 = vpop.f32.mrb[0].mxu0
    %v2763 = vadd.f32 %v2688, %v2762
    %v2764 = vpop.f32.mrb[0].mxu0
    %2765 = vmatprep.mubr.f32.mxu0 0.0
    %2766 = vmatmul.mubr.f32.gmra.mrb[0].mxu0 %v2694
    %v2767 = vpop.f32.mrb[0].mxu0
    %v2768 = vadd.f32 %v2688, %v2767
    %v2769 = vpop.f32.mrb[0].mxu0
    %2770 = vdwg.mxu0
    %v2771 = vld [vmem:[%s16] sm:$0x3]
    %v2772 = vld [vmem:[%s17] sm:$0x3]
    %v2774 = vsel %vm540, %v2771, 0
    %2776 = vmatprep.subr.mxu0 0.0
    %2777 = vmatpush1.msra.mxu0 %v2673
    %2778 = vmatprep.subr.mxu0 0.0
    %2779 = vmatpush1.msra.mxu0 %v2674
    %2780 = vmatprep.subr.mxu0 0.0
    %2781 = vmatpush1.msra.mxu0 %v2675
    %2782 = vmatprep.subr.mxu0 0.0
    %2783 = vmatpush1.msra.mxu0 %v2676
    %2784 = vmatprep.subr.mxu0 0.0
    %2785 = vmatpush1.msra.mxu0 0.0
    %2786 = vmatprep.subr.mxu0 0.0
    %2787 = vmatpush1.msra.mxu0 0.0
    %2788 = vmatprep.subr.mxu0 0.0
    %2789 = vmatpush1.msra.mxu0 0.0
    %2790 = vmatprep.subr.mxu0 0.0
    %2791 = vmatpush1.msra.mxu0 0.0
    %2792 = vmatprep.subr.mxu0 0.0
    %2793 = vmatpush1.msra.mxu0 0.0
    %2794 = vmatprep.subr.mxu0 0.0
    %2795 = vmatpush1.msra.mxu0 0.0
    %2796 = vmatprep.subr.mxu0 0.0
    %2797 = vmatpush1.msra.mxu0 0.0
    %2798 = vmatprep.subr.mxu0 0.0
    %2799 = vmatpush1.msra.mxu0 0.0
    %2800 = vmatprep.subr.mxu0 0.0
    %2801 = vmatpush1.msra.mxu0 0.0
    %2802 = vmatprep.subr.mxu0 0.0
    %2803 = vmatpush1.msra.mxu0 0.0
    %2804 = vmatprep.subr.mxu0 0.0
    %2805 = vmatpush1.msra.mxu0 0.0
    %2806 = vmatprep.subr.mxu0 0.0
    %2807 = vmatpush1.msra.mxu0 0.0
    %2808 = vmatprep.subr.mxu0 0.0
    %2809 = vmatpush1.msra.mxu0 0.0
    %2810 = vmatprep.subr.mxu0 0.0
    %2811 = vmatpush1.msra.mxu0 0.0
    %2812 = vmatprep.subr.mxu0 0.0
    %2813 = vmatpush1.msra.mxu0 0.0
    %2814 = vmatprep.subr.mxu0 0.0
    %2815 = vmatpush1.msra.mxu0 0.0
    %2816 = vmatprep.subr.mxu0 0.0
    %2817 = vmatpush1.msra.mxu0 0.0
    %2818 = vmatprep.subr.mxu0 0.0
    %2819 = vmatpush1.msra.mxu0 0.0
    %2820 = vmatprep.subr.mxu0 0.0
    %2821 = vmatpush1.msra.mxu0 0.0
    %2822 = vmatprep.subr.mxu0 0.0
    %2823 = vmatpush1.msra.mxu0 0.0
    %2824 = vmatprep.subr.mxu0 0.0
    %2825 = vmatpush1.msra.mxu0 0.0
    %2826 = vmatprep.subr.mxu0 0.0
    %2827 = vmatpush1.msra.mxu0 0.0
    %2828 = vmatprep.subr.mxu0 0.0
    %2829 = vmatpush1.msra.mxu0 0.0
    %2830 = vmatprep.subr.mxu0 0.0
    %2831 = vmatpush1.msra.mxu0 0.0
    %2832 = vmatprep.subr.mxu0 0.0
    %2833 = vmatpush1.msra.mxu0 0.0
    %2834 = vmatprep.subr.mxu0 0.0
    %2835 = vmatpush1.msra.mxu0 0.0
    %2836 = vmatprep.subr.mxu0 0.0
    %2837 = vmatpush1.msra.mxu0 0.0
    %2838 = vmatprep.subr.mxu0 0.0
    %2839 = vmatpush1.msra.mxu0 0.0
    %2840 = vmatprep.mubr.f32.mxu0 0.0
    %2841 = vmatmul.mubr.f32.gmra.mrb[0].mxu0 %v2774
    %v2842 = vpop.f32.mrb[0].mxu0
    %v2843 = vadd.f32 0.0, %v2842
    %v2844 = vpop.f32.mrb[0].mxu0
    %2845 = vdwg.mxu0
    %v2846 = vadd.f32 %v2763, %v2843
    %v2847 = vxor.u32 %v2846, 2147483648
    %v2848 = vmul.f32 %v2847, 1.442695
    %v2849 = vpow.pop %v2848
    %v2850 = vadd.f32 %v2849, 1.0
    %v2851 = vrcp.pop %v2850
    %v2852 = vmul.f32 1.0, %v2851
    %v2853 = vtanh.pop %v2846
    %2855 = vrot.lane.b32.xlu0 %v2772, 32
    %v2856 = vpop.permute.xlu0 %2855
    %v2858 = vmul.f32 %v2852, %v2856
    %2860 = vrot.lane.b32.xlu0 %v2853, 64
    %v2861 = vpop.permute.xlu0 %2860
    %v2863 = vmul.f32 %v2852, %v2861
    %2865 = vrot.lane.b32.xlu0 %v2863, 32
    %v2866 = vpop.permute.xlu0 %2865
    %v2868 = vadd.f32 %v2858, %v2866
    %v2869 = vtanh.pop %v2868
    %2871 = vrot.lane.b32.xlu0 %v2869, 64
    %v2872 = vpop.permute.xlu0 %2871
    %v2874 = vmul.f32 %v2852, %v2872
    %v2875 = vld [vmem:[#allocation24] sm:$0xff]
    %v2876 = vld [vmem:[#allocation24 + $0x8] sm:$0xff]
    %v2877 = vld [vmem:[#allocation24 + $0x10] sm:$0xff]
    %v2878 = vld [vmem:[#allocation24 + $0x18] sm:$0xff]
    %2880 = vrot.lane.b32.xlu0 %v2874, 32
    %v2881 = vpop.permute.xlu0 %2880
    %v2882 = vsel %vm540, %v2881, 0
    %2884 = vmatprep.subr.mxu0 0.0
    %2885 = vmatpush1.msra.mxu0 %v2673
    %2886 = vmatprep.subr.mxu0 0.0
    %2887 = vmatpush1.msra.mxu0 %v2674
    %2888 = vmatprep.subr.mxu0 0.0
    %2889 = vmatpush1.msra.mxu0 %v2675
    %2890 = vmatprep.subr.mxu0 0.0
    %2891 = vmatpush1.msra.mxu0 %v2676
    %2892 = vmatprep.subr.mxu0 0.0
    %2893 = vmatpush1.msra.mxu0 0.0
    %2894 = vmatprep.subr.mxu0 0.0
    %2895 = vmatpush1.msra.mxu0 0.0
    %2896 = vmatprep.subr.mxu0 0.0
    %2897 = vmatpush1.msra.mxu0 0.0
    %2898 = vmatprep.subr.mxu0 0.0
    %2899 = vmatpush1.msra.mxu0 0.0
    %2900 = vmatprep.subr.mxu0 0.0
    %2901 = vmatpush1.msra.mxu0 0.0
    %2902 = vmatprep.subr.mxu0 0.0
    %2903 = vmatpush1.msra.mxu0 0.0
    %2904 = vmatprep.subr.mxu0 0.0
    %2905 = vmatpush1.msra.mxu0 0.0
    %2906 = vmatprep.subr.mxu0 0.0
    %2907 = vmatpush1.msra.mxu0 0.0
    %2908 = vmatprep.subr.mxu0 0.0
    %2909 = vmatpush1.msra.mxu0 0.0
    %2910 = vmatprep.subr.mxu0 0.0
    %2911 = vmatpush1.msra.mxu0 0.0
    %2912 = vmatprep.subr.mxu0 0.0
    %2913 = vmatpush1.msra.mxu0 0.0
    %2914 = vmatprep.subr.mxu0 0.0
    %2915 = vmatpush1.msra.mxu0 0.0
    %2916 = vmatprep.subr.mxu0 0.0
    %2917 = vmatpush1.msra.mxu0 0.0
    %2918 = vmatprep.subr.mxu0 0.0
    %2919 = vmatpush1.msra.mxu0 0.0
    %2920 = vmatprep.subr.mxu0 0.0
    %2921 = vmatpush1.msra.mxu0 0.0
    %2922 = vmatprep.subr.mxu0 0.0
    %2923 = vmatpush1.msra.mxu0 0.0
    %2924 = vmatprep.subr.mxu0 0.0
    %2925 = vmatpush1.msra.mxu0 0.0
    %2926 = vmatprep.subr.mxu0 0.0
    %2927 = vmatpush1.msra.mxu0 0.0
    %2928 = vmatprep.subr.mxu0 0.0
    %2929 = vmatpush1.msra.mxu0 0.0
    %2930 = vmatprep.subr.mxu0 0.0
    %2931 = vmatpush1.msra.mxu0 0.0
    %2932 = vmatprep.subr.mxu0 0.0
    %2933 = vmatpush1.msra.mxu0 0.0
    %2934 = vmatprep.subr.mxu0 0.0
    %2935 = vmatpush1.msra.mxu0 0.0
    %2936 = vmatprep.subr.mxu0 0.0
    %2937 = vmatpush1.msra.mxu0 0.0
    %2938 = vmatprep.subr.mxu0 0.0
    %2939 = vmatpush1.msra.mxu0 0.0
    %2940 = vmatprep.subr.mxu0 0.0
    %2941 = vmatpush1.msra.mxu0 0.0
    %2942 = vmatprep.subr.mxu0 0.0
    %2943 = vmatpush1.msra.mxu0 0.0
    %2944 = vmatprep.subr.mxu0 0.0
    %2945 = vmatpush1.msra.mxu0 0.0
    %2946 = vmatprep.subr.mxu0 0.0
    %2947 = vmatpush1.msra.mxu0 0.0
    %2948 = vmatprep.mubr.f32.mxu0 0.0
    %2949 = vmatmul.mubr.f32.gmra.mrb[0].mxu0 %v2882
    %v2950 = vpop.f32.mrb[0].mxu0
    %v2951 = vadd.f32 0.0, %v2950
    %v2952 = vpop.f32.mrb[0].mxu0
    %2953 = vdwg.mxu0
    %v2955 = vrot.slane %v2951, 6
    %v2957 = vadd.f32 %v2763, %v2955
    %v2958 = vxor.u32 %v2957, 2147483648
    %v2959 = vmul.f32 %v2958, 1.442695
    %v2960 = vpow.pop %v2959
    %v2961 = vadd.f32 %v2960, 1.0
    %v2962 = vrcp.pop %v2961
    %v2963 = vmul.f32 1.0, %v2962
    %v2964 = vtanh.pop %v2957
    %v2966 = vrot.slane %v2868, 6
    %v2968 = vmul.f32 %v2963, %v2966
    %2970 = vrot.lane.b32.xlu0 %v2964, 64
    %v2971 = vpop.permute.xlu0 %2970
    %v2973 = vmul.f32 %v2963, %v2971
    %2975 = vrot.lane.b32.xlu0 %v2973, 32
    %v2976 = vpop.permute.xlu0 %2975
    %v2978 = vadd.f32 %v2968, %v2976
    %v2979 = vtanh.pop %v2978
    %2981 = vrot.lane.b32.xlu0 %v2979, 64
    %v2982 = vpop.permute.xlu0 %2981
    %v2984 = vmul.f32 %v2963, %v2982
    %s2985 = scalar_lea.vmem [#allocation24], 32
    %v2986 = vld [vmem:[%s2985] sm:$0xff]
    %v2987 = vld [vmem:[%s2985 + $0x8] sm:$0xff]
    %v2988 = vld [vmem:[%s2985 + $0x10] sm:$0xff]
    %v2989 = vld [vmem:[%s2985 + $0x18] sm:$0xff]
    %v2991 = vrot.slane %v2984, 2
    %2992 = vrot.lane.b32.xlu0 %v2991, 32
    %v2993 = vpop.permute.xlu0 %2992
    %v2994 = vsel %vm540, %v2993, 0
    %2996 = vmatprep.subr.mxu0 0.0
    %2997 = vmatpush1.msra.mxu0 %v2986
    %2998 = vmatprep.subr.mxu0 0.0
    %2999 = vmatpush1.msra.mxu0 %v2987
    %3000 = vmatprep.subr.mxu0 0.0
    %3001 = vmatpush1.msra.mxu0 %v2988
    %3002 = vmatprep.subr.mxu0 0.0
    %3003 = vmatpush1.msra.mxu0 %v2989
    %3004 = vmatprep.subr.mxu0 0.0
    %3005 = vmatpush1.msra.mxu0 0.0
    %3006 = vmatprep.subr.mxu0 0.0
    %3007 = vmatpush1.msra.mxu0 0.0
    %3008 = vmatprep.subr.mxu0 0.0
    %3009 = vmatpush1.msra.mxu0 0.0
    %3010 = vmatprep.subr.mxu0 0.0
    %3011 = vmatpush1.msra.mxu0 0.0
    %3012 = vmatprep.subr.mxu0 0.0
    %3013 = vmatpush1.msra.mxu0 0.0
    %3014 = vmatprep.subr.mxu0 0.0
    %3015 = vmatpush1.msra.mxu0 0.0
    %3016 = vmatprep.subr.mxu0 0.0
    %3017 = vmatpush1.msra.mxu0 0.0
    %3018 = vmatprep.subr.mxu0 0.0
    %3019 = vmatpush1.msra.mxu0 0.0
    %3020 = vmatprep.subr.mxu0 0.0
    %3021 = vmatpush1.msra.mxu0 0.0
    %3022 = vmatprep.subr.mxu0 0.0
    %3023 = vmatpush1.msra.mxu0 0.0
    %3024 = vmatprep.subr.mxu0 0.0
    %3025 = vmatpush1.msra.mxu0 0.0
    %3026 = vmatprep.subr.mxu0 0.0
    %3027 = vmatpush1.msra.mxu0 0.0
    %3028 = vmatprep.subr.mxu0 0.0
    %3029 = vmatpush1.msra.mxu0 0.0
    %3030 = vmatprep.subr.mxu0 0.0
    %3031 = vmatpush1.msra.mxu0 0.0
    %3032 = vmatprep.subr.mxu0 0.0
    %3033 = vmatpush1.msra.mxu0 0.0
    %3034 = vmatprep.subr.mxu0 0.0
    %3035 = vmatpush1.msra.mxu0 0.0
    %3036 = vmatprep.subr.mxu0 0.0
    %3037 = vmatpush1.msra.mxu0 0.0
    %3038 = vmatprep.subr.mxu0 0.0
    %3039 = vmatpush1.msra.mxu0 0.0
    %3040 = vmatprep.subr.mxu0 0.0
    %3041 = vmatpush1.msra.mxu0 0.0
    %3042 = vmatprep.subr.mxu0 0.0
    %3043 = vmatpush1.msra.mxu0 0.0
    %3044 = vmatprep.subr.mxu0 0.0
    %3045 = vmatpush1.msra.mxu0 0.0
    %3046 = vmatprep.subr.mxu0 0.0
    %3047 = vmatpush1.msra.mxu0 0.0
    %3048 = vmatprep.subr.mxu0 0.0
    %3049 = vmatpush1.msra.mxu0 0.0
    %3050 = vmatprep.subr.mxu0 0.0
    %3051 = vmatpush1.msra.mxu0 0.0
    %3052 = vmatprep.subr.mxu0 0.0
    %3053 = vmatpush1.msra.mxu0 0.0
    %3054 = vmatprep.subr.mxu0 0.0
    %3055 = vmatpush1.msra.mxu0 0.0
    %3056 = vmatprep.subr.mxu0 0.0
    %3057 = vmatpush1.msra.mxu0 0.0
    %3058 = vmatprep.subr.mxu0 0.0
    %3059 = vmatpush1.msra.mxu0 0.0
    %3060 = vmatprep.mubr.f32.mxu0 0.0
    %3061 = vmatmul.mubr.f32.gmra.mrb[0].mxu0 %v2994
    %v3062 = vpop.f32.mrb[0].mxu0
    %v3063 = vadd.f32 0.0, %v3062
    %v3064 = vpop.f32.mrb[0].mxu0
    %3065 = vdwg.mxu0
    %3066 = vmatprep.subr.mxu0 0.0
    %3067 = vmatpush1.msra.mxu0 %v2875
    %3068 = vmatprep.subr.mxu0 0.0
    %3069 = vmatpush1.msra.mxu0 %v2876
    %3070 = vmatprep.subr.mxu0 0.0
    %3071 = vmatpush1.msra.mxu0 %v2877
    %3072 = vmatprep.subr.mxu0 0.0
    %3073 = vmatpush1.msra.mxu0 %v2878
    %3074 = vmatprep.subr.mxu0 0.0
    %3075 = vmatpush1.msra.mxu0 0.0
    %3076 = vmatprep.subr.mxu0 0.0
    %3077 = vmatpush1.msra.mxu0 0.0
    %3078 = vmatprep.subr.mxu0 0.0
    %3079 = vmatpush1.msra.mxu0 0.0
    %3080 = vmatprep.subr.mxu0 0.0
    %3081 = vmatpush1.msra.mxu0 0.0
    %3082 = vmatprep.subr.mxu0 0.0
    %3083 = vmatpush1.msra.mxu0 0.0
    %3084 = vmatprep.subr.mxu0 0.0
    %3085 = vmatpush1.msra.mxu0 0.0
    %3086 = vmatprep.subr.mxu0 0.0
    %3087 = vmatpush1.msra.mxu0 0.0
    %3088 = vmatprep.subr.mxu0 0.0
    %3089 = vmatpush1.msra.mxu0 0.0
    %3090 = vmatprep.subr.mxu0 0.0
    %3091 = vmatpush1.msra.mxu0 0.0
    %3092 = vmatprep.subr.mxu0 0.0
    %3093 = vmatpush1.msra.mxu0 0.0
    %3094 = vmatprep.subr.mxu0 0.0
    %3095 = vmatpush1.msra.mxu0 0.0
    %3096 = vmatprep.subr.mxu0 0.0
    %3097 = vmatpush1.msra.mxu0 0.0
    %3098 = vmatprep.subr.mxu0 0.0
    %3099 = vmatpush1.msra.mxu0 0.0
    %3100 = vmatprep.subr.mxu0 0.0
    %3101 = vmatpush1.msra.mxu0 0.0
    %3102 = vmatprep.subr.mxu0 0.0
    %3103 = vmatpush1.msra.mxu0 0.0
    %3104 = vmatprep.subr.mxu0 0.0
    %3105 = vmatpush1.msra.mxu0 0.0
    %3106 = vmatprep.subr.mxu0 0.0
    %3107 = vmatpush1.msra.mxu0 0.0
    %3108 = vmatprep.subr.mxu0 0.0
    %3109 = vmatpush1.msra.mxu0 0.0
    %3110 = vmatprep.subr.mxu0 0.0
    %3111 = vmatpush1.msra.mxu0 0.0
    %3112 = vmatprep.subr.mxu0 0.0
    %3113 = vmatpush1.msra.mxu0 0.0
    %3114 = vmatprep.subr.mxu0 0.0
    %3115 = vmatpush1.msra.mxu0 0.0
    %3116 = vmatprep.subr.mxu0 0.0
    %3117 = vmatpush1.msra.mxu0 0.0
    %3118 = vmatprep.subr.mxu0 0.0
    %3119 = vmatpush1.msra.mxu0 0.0
    %3120 = vmatprep.subr.mxu0 0.0
    %3121 = vmatpush1.msra.mxu0 0.0
    %3122 = vmatprep.subr.mxu0 0.0
    %3123 = vmatpush1.msra.mxu0 0.0
    %3124 = vmatprep.subr.mxu0 0.0
    %3125 = vmatpush1.msra.mxu0 0.0
    %3126 = vmatprep.subr.mxu0 0.0
    %3127 = vmatpush1.msra.mxu0 0.0
    %3128 = vmatprep.subr.mxu0 0.0
    %3129 = vmatpush1.msra.mxu0 0.0
    %3130 = vmatprep.mubr.f32.mxu0 0.0
    %3131 = vmatmul.mubr.f32.gmra.mrb[0].mxu0 %v2882
    %v3132 = vpop.f32.mrb[0].mxu0
    %v3133 = vadd.f32 %v3063, %v3132
    %v3134 = vpop.f32.mrb[0].mxu0
    %3135 = vdwg.mxu0
    %3136 = vmatprep.subr.mxu0 0.0
    %3137 = vmatpush1.msra.mxu0 %v2673
    %3138 = vmatprep.subr.mxu0 0.0
    %3139 = vmatpush1.msra.mxu0 %v2674
    %3140 = vmatprep.subr.mxu0 0.0
    %3141 = vmatpush1.msra.mxu0 %v2675
    %3142 = vmatprep.subr.mxu0 0.0
    %3143 = vmatpush1.msra.mxu0 %v2676
    %3144 = vmatprep.subr.mxu0 0.0
    %3145 = vmatpush1.msra.mxu0 0.0
    %3146 = vmatprep.subr.mxu0 0.0
    %3147 = vmatpush1.msra.mxu0 0.0
    %3148 = vmatprep.subr.mxu0 0.0
    %3149 = vmatpush1.msra.mxu0 0.0
    %3150 = vmatprep.subr.mxu0 0.0
    %3151 = vmatpush1.msra.mxu0 0.0
    %3152 = vmatprep.subr.mxu0 0.0
    %3153 = vmatpush1.msra.mxu0 0.0
    %3154 = vmatprep.subr.mxu0 0.0
    %3155 = vmatpush1.msra.mxu0 0.0
    %3156 = vmatprep.subr.mxu0 0.0
    %3157 = vmatpush1.msra.mxu0 0.0
    %3158 = vmatprep.subr.mxu0 0.0
    %3159 = vmatpush1.msra.mxu0 0.0
    %3160 = vmatprep.subr.mxu0 0.0
    %3161 = vmatpush1.msra.mxu0 0.0
    %3162 = vmatprep.subr.mxu0 0.0
    %3163 = vmatpush1.msra.mxu0 0.0
    %3164 = vmatprep.subr.mxu0 0.0
    %3165 = vmatpush1.msra.mxu0 0.0
    %3166 = vmatprep.subr.mxu0 0.0
    %3167 = vmatpush1.msra.mxu0 0.0
    %3168 = vmatprep.subr.mxu0 0.0
    %3169 = vmatpush1.msra.mxu0 0.0
    %3170 = vmatprep.subr.mxu0 0.0
    %3171 = vmatpush1.msra.mxu0 0.0
    %3172 = vmatprep.subr.mxu0 0.0
    %3173 = vmatpush1.msra.mxu0 0.0
    %3174 = vmatprep.subr.mxu0 0.0
    %3175 = vmatpush1.msra.mxu0 0.0
    %3176 = vmatprep.subr.mxu0 0.0
    %3177 = vmatpush1.msra.mxu0 0.0
    %3178 = vmatprep.subr.mxu0 0.0
    %3179 = vmatpush1.msra.mxu0 0.0
    %3180 = vmatprep.subr.mxu0 0.0
    %3181 = vmatpush1.msra.mxu0 0.0
    %3182 = vmatprep.subr.mxu0 0.0
    %3183 = vmatpush1.msra.mxu0 0.0
    %3184 = vmatprep.subr.mxu0 0.0
    %3185 = vmatpush1.msra.mxu0 0.0
    %3186 = vmatprep.subr.mxu0 0.0
    %3187 = vmatpush1.msra.mxu0 0.0
    %3188 = vmatprep.subr.mxu0 0.0
    %3189 = vmatpush1.msra.mxu0 0.0
    %3190 = vmatprep.subr.mxu0 0.0
    %3191 = vmatpush1.msra.mxu0 0.0
    %3192 = vmatprep.subr.mxu0 0.0
    %3193 = vmatpush1.msra.mxu0 0.0
    %3194 = vmatprep.subr.mxu0 0.0
    %3195 = vmatpush1.msra.mxu0 0.0
    %3196 = vmatprep.subr.mxu0 0.0
    %3197 = vmatpush1.msra.mxu0 0.0
    %3198 = vmatprep.subr.mxu0 0.0
    %3199 = vmatpush1.msra.mxu0 0.0
    %3200 = vmatprep.mubr.f32.mxu0 0.0
    %3201 = vmatmul.mubr.f32.gmra.mrb[0].mxu0 %v2994
    %v3202 = vpop.f32.mrb[0].mxu0
    %v3203 = vadd.f32 0.0, %v3202
    %v3204 = vpop.f32.mrb[0].mxu0
    %3205 = vdwg.mxu0
    %v3207 = vrot.slane %v3203, 4
    %v3209 = vadd.f32 %v2763, %v3207
    %v3210 = vxor.u32 %v3209, 2147483648
    %v3211 = vmul.f32 %v3210, 1.442695
    %v3212 = vpow.pop %v3211
    %v3213 = vadd.f32 %v3212, 1.0
    %v3214 = vrcp.pop %v3213
    %v3215 = vmul.f32 1.0, %v3214
    %v3216 = vtanh.pop %v3209
    %v3218 = vrot.slane %v2978, 6
    %v3220 = vmul.f32 %v3215, %v3218
    %3222 = vrot.lane.b32.xlu0 %v3216, 64
    %v3223 = vpop.permute.xlu0 %3222
    %v3225 = vmul.f32 %v3215, %v3223
    %3227 = vrot.lane.b32.xlu0 %v3225, 32
    %v3228 = vpop.permute.xlu0 %3227
    %v3230 = vadd.f32 %v3220, %v3228
    %v3231 = vtanh.pop %v3230
    %3233 = vrot.lane.b32.xlu0 %v3231, 64
    %v3234 = vpop.permute.xlu0 %3233
    %v3236 = vmul.f32 %v3215, %v3234
    %s3237 = scalar_lea.vmem [#allocation24], 64
    %v3238 = vld [vmem:[%s3237] sm:$0xff]
    %v3239 = vld [vmem:[%s3237 + $0x8] sm:$0xff]
    %v3240 = vld [vmem:[%s3237 + $0x10] sm:$0xff]
    %v3241 = vld [vmem:[%s3237 + $0x18] sm:$0xff]
    %v3243 = vrot.slane %v3236, 4
    %3244 = vrot.lane.b32.xlu0 %v3243, 32
    %v3245 = vpop.permute.xlu0 %3244
    %v3246 = vsel %vm540, %v3245, 0
    %3248 = vmatprep.subr.mxu0 0.0
    %3249 = vmatpush1.msra.mxu0 %v3238
    %3250 = vmatprep.subr.mxu0 0.0
    %3251 = vmatpush1.msra.mxu0 %v3239
    %3252 = vmatprep.subr.mxu0 0.0
    %3253 = vmatpush1.msra.mxu0 %v3240
    %3254 = vmatprep.subr.mxu0 0.0
    %3255 = vmatpush1.msra.mxu0 %v3241
    %3256 = vmatprep.subr.mxu0 0.0
    %3257 = vmatpush1.msra.mxu0 0.0
    %3258 = vmatprep.subr.mxu0 0.0
    %3259 = vmatpush1.msra.mxu0 0.0
    %3260 = vmatprep.subr.mxu0 0.0
    %3261 = vmatpush1.msra.mxu0 0.0
    %3262 = vmatprep.subr.mxu0 0.0
    %3263 = vmatpush1.msra.mxu0 0.0
    %3264 = vmatprep.subr.mxu0 0.0
    %3265 = vmatpush1.msra.mxu0 0.0
    %3266 = vmatprep.subr.mxu0 0.0
    %3267 = vmatpush1.msra.mxu0 0.0
    %3268 = vmatprep.subr.mxu0 0.0
    %3269 = vmatpush1.msra.mxu0 0.0
    %3270 = vmatprep.subr.mxu0 0.0
    %3271 = vmatpush1.msra.mxu0 0.0
    %3272 = vmatprep.subr.mxu0 0.0
    %3273 = vmatpush1.msra.mxu0 0.0
    %3274 = vmatprep.subr.mxu0 0.0
    %3275 = vmatpush1.msra.mxu0 0.0
    %3276 = vmatprep.subr.mxu0 0.0
    %3277 = vmatpush1.msra.mxu0 0.0
    %3278 = vmatprep.subr.mxu0 0.0
    %3279 = vmatpush1.msra.mxu0 0.0
    %3280 = vmatprep.subr.mxu0 0.0
    %3281 = vmatpush1.msra.mxu0 0.0
    %3282 = vmatprep.subr.mxu0 0.0
    %3283 = vmatpush1.msra.mxu0 0.0
    %3284 = vmatprep.subr.mxu0 0.0
    %3285 = vmatpush1.msra.mxu0 0.0
    %3286 = vmatprep.subr.mxu0 0.0
    %3287 = vmatpush1.msra.mxu0 0.0
    %3288 = vmatprep.subr.mxu0 0.0
    %3289 = vmatpush1.msra.mxu0 0.0
    %3290 = vmatprep.subr.mxu0 0.0
    %3291 = vmatpush1.msra.mxu0 0.0
    %3292 = vmatprep.subr.mxu0 0.0
    %3293 = vmatpush1.msra.mxu0 0.0
    %3294 = vmatprep.subr.mxu0 0.0
    %3295 = vmatpush1.msra.mxu0 0.0
    %3296 = vmatprep.subr.mxu0 0.0
    %3297 = vmatpush1.msra.mxu0 0.0
    %3298 = vmatprep.subr.mxu0 0.0
    %3299 = vmatpush1.msra.mxu0 0.0
    %3300 = vmatprep.subr.mxu0 0.0
    %3301 = vmatpush1.msra.mxu0 0.0
    %3302 = vmatprep.subr.mxu0 0.0
    %3303 = vmatpush1.msra.mxu0 0.0
    %3304 = vmatprep.subr.mxu0 0.0
    %3305 = vmatpush1.msra.mxu0 0.0
    %3306 = vmatprep.subr.mxu0 0.0
    %3307 = vmatpush1.msra.mxu0 0.0
    %3308 = vmatprep.subr.mxu0 0.0
    %3309 = vmatpush1.msra.mxu0 0.0
    %3310 = vmatprep.subr.mxu0 0.0
    %3311 = vmatpush1.msra.mxu0 0.0
    %3312 = vmatprep.mubr.f32.mxu0 0.0
    %3313 = vmatmul.mubr.f32.gmra.mrb[0].mxu0 %v3246
    %v3314 = vpop.f32.mrb[0].mxu0
    %v3315 = vadd.f32 0.0, %v3314
    %v3316 = vpop.f32.mrb[0].mxu0
    %3317 = vdwg.mxu0
    %v3318 = vadd.f32 %v3133, %v3315
    %3319 = vmatprep.subr.mxu0 0.0
    %3320 = vmatpush1.msra.mxu0 %v2673
    %3321 = vmatprep.subr.mxu0 0.0
    %3322 = vmatpush1.msra.mxu0 %v2674
    %3323 = vmatprep.subr.mxu0 0.0
    %3324 = vmatpush1.msra.mxu0 %v2675
    %3325 = vmatprep.subr.mxu0 0.0
    %3326 = vmatpush1.msra.mxu0 %v2676
    %3327 = vmatprep.subr.mxu0 0.0
    %3328 = vmatpush1.msra.mxu0 0.0
    %3329 = vmatprep.subr.mxu0 0.0
    %3330 = vmatpush1.msra.mxu0 0.0
    %3331 = vmatprep.subr.mxu0 0.0
    %3332 = vmatpush1.msra.mxu0 0.0
    %3333 = vmatprep.subr.mxu0 0.0
    %3334 = vmatpush1.msra.mxu0 0.0
    %3335 = vmatprep.subr.mxu0 0.0
    %3336 = vmatpush1.msra.mxu0 0.0
    %3337 = vmatprep.subr.mxu0 0.0
    %3338 = vmatpush1.msra.mxu0 0.0
    %3339 = vmatprep.subr.mxu0 0.0
    %3340 = vmatpush1.msra.mxu0 0.0
    %3341 = vmatprep.subr.mxu0 0.0
    %3342 = vmatpush1.msra.mxu0 0.0
    %3343 = vmatprep.subr.mxu0 0.0
    %3344 = vmatpush1.msra.mxu0 0.0
    %3345 = vmatprep.subr.mxu0 0.0
    %3346 = vmatpush1.msra.mxu0 0.0
    %3347 = vmatprep.subr.mxu0 0.0
    %3348 = vmatpush1.msra.mxu0 0.0
    %3349 = vmatprep.subr.mxu0 0.0
    %3350 = vmatpush1.msra.mxu0 0.0
    %3351 = vmatprep.subr.mxu0 0.0
    %3352 = vmatpush1.msra.mxu0 0.0
    %3353 = vmatprep.subr.mxu0 0.0
    %3354 = vmatpush1.msra.mxu0 0.0
    %3355 = vmatprep.subr.mxu0 0.0
    %3356 = vmatpush1.msra.mxu0 0.0
    %3357 = vmatprep.subr.mxu0 0.0
    %3358 = vmatpush1.msra.mxu0 0.0
    %3359 = vmatprep.subr.mxu0 0.0
    %3360 = vmatpush1.msra.mxu0 0.0
    %3361 = vmatprep.subr.mxu0 0.0
    %3362 = vmatpush1.msra.mxu0 0.0
    %3363 = vmatprep.subr.mxu0 0.0
    %3364 = vmatpush1.msra.mxu0 0.0
    %3365 = vmatprep.subr.mxu0 0.0
    %3366 = vmatpush1.msra.mxu0 0.0
    %3367 = vmatprep.subr.mxu0 0.0
    %3368 = vmatpush1.msra.mxu0 0.0
    %3369 = vmatprep.subr.mxu0 0.0
    %3370 = vmatpush1.msra.mxu0 0.0
    %3371 = vmatprep.subr.mxu0 0.0
    %3372 = vmatpush1.msra.mxu0 0.0
    %3373 = vmatprep.subr.mxu0 0.0
    %3374 = vmatpush1.msra.mxu0 0.0
    %3375 = vmatprep.subr.mxu0 0.0
    %3376 = vmatpush1.msra.mxu0 0.0
    %3377 = vmatprep.subr.mxu0 0.0
    %3378 = vmatpush1.msra.mxu0 0.0
    %3379 = vmatprep.subr.mxu0 0.0
    %3380 = vmatpush1.msra.mxu0 0.0
    %3381 = vmatprep.subr.mxu0 0.0
    %3382 = vmatpush1.msra.mxu0 0.0
    %3383 = vmatprep.mubr.f32.mxu0 0.0
    %3384 = vmatmul.mubr.f32.gmra.mrb[0].mxu0 %v3246
    %v3385 = vpop.f32.mrb[0].mxu0
    %v3386 = vadd.f32 0.0, %v3385
    %v3387 = vpop.f32.mrb[0].mxu0
    %3388 = vdwg.mxu0
    %v3390 = vrot.slane %v3386, 2
    %v3392 = vadd.f32 %v2763, %v3390
    %v3393 = vxor.u32 %v3392, 2147483648
    %v3394 = vmul.f32 %v3393, 1.442695
    %v3395 = vpow.pop %v3394
    %v3396 = vadd.f32 %v3395, 1.0
    %v3397 = vrcp.pop %v3396
    %v3398 = vmul.f32 1.0, %v3397
    %v3399 = vtanh.pop %v3392
    %v3401 = vrot.slane %v3230, 6
    %v3403 = vmul.f32 %v3398, %v3401
    %3405 = vrot.lane.b32.xlu0 %v3399, 64
    %v3406 = vpop.permute.xlu0 %3405
    %v3408 = vmul.f32 %v3398, %v3406
    %3410 = vrot.lane.b32.xlu0 %v3408, 32
    %v3411 = vpop.permute.xlu0 %3410
    %v3413 = vadd.f32 %v3403, %v3411
    %v3414 = vtanh.pop %v3413
    %3416 = vrot.lane.b32.xlu0 %v3414, 64
    %v3417 = vpop.permute.xlu0 %3416
    %v3419 = vmul.f32 %v3398, %v3417
    %s3420 = scalar_lea.vmem [#allocation24], 96
    %v3421 = vld [vmem:[%s3420] sm:$0xff]
    %v3422 = vld [vmem:[%s3420 + $0x8] sm:$0xff]
    %v3423 = vld [vmem:[%s3420 + $0x10] sm:$0xff]
    %v3424 = vld [vmem:[%s3420 + $0x18] sm:$0xff]
    %v3426 = vrot.slane %v3419, 6
    %3427 = vrot.lane.b32.xlu0 %v3426, 32
    %v3428 = vpop.permute.xlu0 %3427
    %v3429 = vsel %vm540, %v3428, 0
    %3431 = vmatprep.subr.mxu0 0.0
    %3432 = vmatpush1.msra.mxu0 %v3421
    %3433 = vmatprep.subr.mxu0 0.0
    %3434 = vmatpush1.msra.mxu0 %v3422
    %3435 = vmatprep.subr.mxu0 0.0
    %3436 = vmatpush1.msra.mxu0 %v3423
    %3437 = vmatprep.subr.mxu0 0.0
    %3438 = vmatpush1.msra.mxu0 %v3424
    %3439 = vmatprep.subr.mxu0 0.0
    %3440 = vmatpush1.msra.mxu0 0.0
    %3441 = vmatprep.subr.mxu0 0.0
    %3442 = vmatpush1.msra.mxu0 0.0
    %3443 = vmatprep.subr.mxu0 0.0
    %3444 = vmatpush1.msra.mxu0 0.0
    %3445 = vmatprep.subr.mxu0 0.0
    %3446 = vmatpush1.msra.mxu0 0.0
    %3447 = vmatprep.subr.mxu0 0.0
    %3448 = vmatpush1.msra.mxu0 0.0
    %3449 = vmatprep.subr.mxu0 0.0
    %3450 = vmatpush1.msra.mxu0 0.0
    %3451 = vmatprep.subr.mxu0 0.0
    %3452 = vmatpush1.msra.mxu0 0.0
    %3453 = vmatprep.subr.mxu0 0.0
    %3454 = vmatpush1.msra.mxu0 0.0
    %3455 = vmatprep.subr.mxu0 0.0
    %3456 = vmatpush1.msra.mxu0 0.0
    %3457 = vmatprep.subr.mxu0 0.0
    %3458 = vmatpush1.msra.mxu0 0.0
    %3459 = vmatprep.subr.mxu0 0.0
    %3460 = vmatpush1.msra.mxu0 0.0
    %3461 = vmatprep.subr.mxu0 0.0
    %3462 = vmatpush1.msra.mxu0 0.0
    %3463 = vmatprep.subr.mxu0 0.0
    %3464 = vmatpush1.msra.mxu0 0.0
    %3465 = vmatprep.subr.mxu0 0.0
    %3466 = vmatpush1.msra.mxu0 0.0
    %3467 = vmatprep.subr.mxu0 0.0
    %3468 = vmatpush1.msra.mxu0 0.0
    %3469 = vmatprep.subr.mxu0 0.0
    %3470 = vmatpush1.msra.mxu0 0.0
    %3471 = vmatprep.subr.mxu0 0.0
    %3472 = vmatpush1.msra.mxu0 0.0
    %3473 = vmatprep.subr.mxu0 0.0
    %3474 = vmatpush1.msra.mxu0 0.0
    %3475 = vmatprep.subr.mxu0 0.0
    %3476 = vmatpush1.msra.mxu0 0.0
    %3477 = vmatprep.subr.mxu0 0.0
    %3478 = vmatpush1.msra.mxu0 0.0
    %3479 = vmatprep.subr.mxu0 0.0
    %3480 = vmatpush1.msra.mxu0 0.0
    %3481 = vmatprep.subr.mxu0 0.0
    %3482 = vmatpush1.msra.mxu0 0.0
    %3483 = vmatprep.subr.mxu0 0.0
    %3484 = vmatpush1.msra.mxu0 0.0
    %3485 = vmatprep.subr.mxu0 0.0
    %3486 = vmatpush1.msra.mxu0 0.0
    %3487 = vmatprep.subr.mxu0 0.0
    %3488 = vmatpush1.msra.mxu0 0.0
    %3489 = vmatprep.subr.mxu0 0.0
    %3490 = vmatpush1.msra.mxu0 0.0
    %3491 = vmatprep.subr.mxu0 0.0
    %3492 = vmatpush1.msra.mxu0 0.0
    %3493 = vmatprep.subr.mxu0 0.0
    %3494 = vmatpush1.msra.mxu0 0.0
    %3495 = vmatprep.mubr.f32.mxu0 0.0
    %3496 = vmatmul.mubr.f32.gmra.mrb[0].mxu0 %v3429
    %v3497 = vpop.f32.mrb[0].mxu0
    %v3498 = vadd.f32 0.0, %v3497
    %v3499 = vpop.f32.mrb[0].mxu0
    %3500 = vdwg.mxu0
    %v3501 = vadd.f32 %v3318, %v3498
    %3502 = vmatprep.subr.mxu0 0.0
    %3503 = vmatpush1.msra.mxu0 %v2673
    %3504 = vmatprep.subr.mxu0 0.0
    %3505 = vmatpush1.msra.mxu0 %v2674
    %3506 = vmatprep.subr.mxu0 0.0
    %3507 = vmatpush1.msra.mxu0 %v2675
    %3508 = vmatprep.subr.mxu0 0.0
    %3509 = vmatpush1.msra.mxu0 %v2676
    %3510 = vmatprep.subr.mxu0 0.0
    %3511 = vmatpush1.msra.mxu0 0.0
    %3512 = vmatprep.subr.mxu0 0.0
    %3513 = vmatpush1.msra.mxu0 0.0
    %3514 = vmatprep.subr.mxu0 0.0
    %3515 = vmatpush1.msra.mxu0 0.0
    %3516 = vmatprep.subr.mxu0 0.0
    %3517 = vmatpush1.msra.mxu0 0.0
    %3518 = vmatprep.subr.mxu0 0.0
    %3519 = vmatpush1.msra.mxu0 0.0
    %3520 = vmatprep.subr.mxu0 0.0
    %3521 = vmatpush1.msra.mxu0 0.0
    %3522 = vmatprep.subr.mxu0 0.0
    %3523 = vmatpush1.msra.mxu0 0.0
    %3524 = vmatprep.subr.mxu0 0.0
    %3525 = vmatpush1.msra.mxu0 0.0
    %3526 = vmatprep.subr.mxu0 0.0
    %3527 = vmatpush1.msra.mxu0 0.0
    %3528 = vmatprep.subr.mxu0 0.0
    %3529 = vmatpush1.msra.mxu0 0.0
    %3530 = vmatprep.subr.mxu0 0.0
    %3531 = vmatpush1.msra.mxu0 0.0
    %3532 = vmatprep.subr.mxu0 0.0
    %3533 = vmatpush1.msra.mxu0 0.0
    %3534 = vmatprep.subr.mxu0 0.0
    %3535 = vmatpush1.msra.mxu0 0.0
    %3536 = vmatprep.subr.mxu0 0.0
    %3537 = vmatpush1.msra.mxu0 0.0
    %3538 = vmatprep.subr.mxu0 0.0
    %3539 = vmatpush1.msra.mxu0 0.0
    %3540 = vmatprep.subr.mxu0 0.0
    %3541 = vmatpush1.msra.mxu0 0.0
    %3542 = vmatprep.subr.mxu0 0.0
    %3543 = vmatpush1.msra.mxu0 0.0
    %3544 = vmatprep.subr.mxu0 0.0
    %3545 = vmatpush1.msra.mxu0 0.0
    %3546 = vmatprep.subr.mxu0 0.0
    %3547 = vmatpush1.msra.mxu0 0.0
    %3548 = vmatprep.subr.mxu0 0.0
    %3549 = vmatpush1.msra.mxu0 0.0
    %3550 = vmatprep.subr.mxu0 0.0
    %3551 = vmatpush1.msra.mxu0 0.0
    %3552 = vmatprep.subr.mxu0 0.0
    %3553 = vmatpush1.msra.mxu0 0.0
    %3554 = vmatprep.subr.mxu0 0.0
    %3555 = vmatpush1.msra.mxu0 0.0
    %3556 = vmatprep.subr.mxu0 0.0
    %3557 = vmatpush1.msra.mxu0 0.0
    %3558 = vmatprep.subr.mxu0 0.0
    %3559 = vmatpush1.msra.mxu0 0.0
    %3560 = vmatprep.subr.mxu0 0.0
    %3561 = vmatpush1.msra.mxu0 0.0
    %3562 = vmatprep.subr.mxu0 0.0
    %3563 = vmatpush1.msra.mxu0 0.0
    %3564 = vmatprep.subr.mxu0 0.0
    %3565 = vmatpush1.msra.mxu0 0.0
    %3566 = vmatprep.mubr.f32.mxu0 0.0
    %3567 = vmatmul.mubr.f32.gmra.mrb[0].mxu0 %v3429
    %v3568 = vpop.f32.mrb[0].mxu0
    %v3569 = vadd.f32 0.0, %v3568
    %v3570 = vpop.f32.mrb[0].mxu0
    %3571 = vdwg.mxu0
    %v3572 = vadd.f32 %v2768, %v3569
    %v3573 = vxor.u32 %v3572, 2147483648
    %v3574 = vmul.f32 %v3573, 1.442695
    %v3575 = vpow.pop %v3574
    %v3576 = vadd.f32 %v3575, 1.0
    %v3577 = vrcp.pop %v3576
    %v3578 = vmul.f32 1.0, %v3577
    %v3579 = vtanh.pop %v3572
    %v3581 = vrot.slane %v3413, 6
    %v3583 = vmul.f32 %v3578, %v3581
    %3585 = vrot.lane.b32.xlu0 %v3579, 64
    %v3586 = vpop.permute.xlu0 %3585
    %v3588 = vmul.f32 %v3578, %v3586
    %3590 = vrot.lane.b32.xlu0 %v3588, 32
    %v3591 = vpop.permute.xlu0 %3590
    %v3593 = vadd.f32 %v3583, %v3591
    %v3594 = vtanh.pop %v3593
    %3596 = vrot.lane.b32.xlu0 %v3594, 64
    %v3597 = vpop.permute.xlu0 %3596
    %v3599 = vmul.f32 %v3578, %v3597
    %s3600 = scalar_lea.vmem [#allocation24], 128
    %v3601 = vld [vmem:[%s3600] sm:$0xff]
    %v3602 = vld [vmem:[%s3600 + $0x8] sm:$0xff]
    %v3603 = vld [vmem:[%s3600 + $0x10] sm:$0xff]
    %v3604 = vld [vmem:[%s3600 + $0x18] sm:$0xff]
    %3606 = vrot.lane.b32.xlu0 %v3599, 32
    %v3607 = vpop.permute.xlu0 %3606
    %v3608 = vsel %vm540, %v3607, 0
    %3610 = vmatprep.subr.mxu0 0.0
    %3611 = vmatpush1.msra.mxu0 %v3601
    %3612 = vmatprep.subr.mxu0 0.0
    %3613 = vmatpush1.msra.mxu0 %v3602
    %3614 = vmatprep.subr.mxu0 0.0
    %3615 = vmatpush1.msra.mxu0 %v3603
    %3616 = vmatprep.subr.mxu0 0.0
    %3617 = vmatpush1.msra.mxu0 %v3604
    %3618 = vmatprep.subr.mxu0 0.0
    %3619 = vmatpush1.msra.mxu0 0.0
    %3620 = vmatprep.subr.mxu0 0.0
    %3621 = vmatpush1.msra.mxu0 0.0
    %3622 = vmatprep.subr.mxu0 0.0
    %3623 = vmatpush1.msra.mxu0 0.0
    %3624 = vmatprep.subr.mxu0 0.0
    %3625 = vmatpush1.msra.mxu0 0.0
    %3626 = vmatprep.subr.mxu0 0.0
    %3627 = vmatpush1.msra.mxu0 0.0
    %3628 = vmatprep.subr.mxu0 0.0
    %3629 = vmatpush1.msra.mxu0 0.0
    %3630 = vmatprep.subr.mxu0 0.0
    %3631 = vmatpush1.msra.mxu0 0.0
    %3632 = vmatprep.subr.mxu0 0.0
    %3633 = vmatpush1.msra.mxu0 0.0
    %3634 = vmatprep.subr.mxu0 0.0
    %3635 = vmatpush1.msra.mxu0 0.0
    %3636 = vmatprep.subr.mxu0 0.0
    %3637 = vmatpush1.msra.mxu0 0.0
    %3638 = vmatprep.subr.mxu0 0.0
    %3639 = vmatpush1.msra.mxu0 0.0
    %3640 = vmatprep.subr.mxu0 0.0
    %3641 = vmatpush1.msra.mxu0 0.0
    %3642 = vmatprep.subr.mxu0 0.0
    %3643 = vmatpush1.msra.mxu0 0.0
    %3644 = vmatprep.subr.mxu0 0.0
    %3645 = vmatpush1.msra.mxu0 0.0
    %3646 = vmatprep.subr.mxu0 0.0
    %3647 = vmatpush1.msra.mxu0 0.0
    %3648 = vmatprep.subr.mxu0 0.0
    %3649 = vmatpush1.msra.mxu0 0.0
    %3650 = vmatprep.subr.mxu0 0.0
    %3651 = vmatpush1.msra.mxu0 0.0
    %3652 = vmatprep.subr.mxu0 0.0
    %3653 = vmatpush1.msra.mxu0 0.0
    %3654 = vmatprep.subr.mxu0 0.0
    %3655 = vmatpush1.msra.mxu0 0.0
    %3656 = vmatprep.subr.mxu0 0.0
    %3657 = vmatpush1.msra.mxu0 0.0
    %3658 = vmatprep.subr.mxu0 0.0
    %3659 = vmatpush1.msra.mxu0 0.0
    %3660 = vmatprep.subr.mxu0 0.0
    %3661 = vmatpush1.msra.mxu0 0.0
    %3662 = vmatprep.subr.mxu0 0.0
    %3663 = vmatpush1.msra.mxu0 0.0
    %3664 = vmatprep.subr.mxu0 0.0
    %3665 = vmatpush1.msra.mxu0 0.0
    %3666 = vmatprep.subr.mxu0 0.0
    %3667 = vmatpush1.msra.mxu0 0.0
    %3668 = vmatprep.subr.mxu0 0.0
    %3669 = vmatpush1.msra.mxu0 0.0
    %3670 = vmatprep.subr.mxu0 0.0
    %3671 = vmatpush1.msra.mxu0 0.0
    %3672 = vmatprep.subr.mxu0 0.0
    %3673 = vmatpush1.msra.mxu0 0.0
    %3674 = vmatprep.mubr.f32.mxu0 0.0
    %3675 = vmatmul.mubr.f32.gmra.mrb[0].mxu0 %v3608
    %v3676 = vpop.f32.mrb[0].mxu0
    %v3677 = vadd.f32 0.0, %v3676
    %v3678 = vpop.f32.mrb[0].mxu0
    %3679 = vdwg.mxu0
    %v3680 = vadd.f32 %v3501, %v3677
    %3681 = vmatprep.subr.mxu0 0.0
    %3682 = vmatpush1.msra.mxu0 %v2673
    %3683 = vmatprep.subr.mxu0 0.0
    %3684 = vmatpush1.msra.mxu0 %v2674
    %3685 = vmatprep.subr.mxu0 0.0
    %3686 = vmatpush1.msra.mxu0 %v2675
    %3687 = vmatprep.subr.mxu0 0.0
    %3688 = vmatpush1.msra.mxu0 %v2676
    %3689 = vmatprep.subr.mxu0 0.0
    %3690 = vmatpush1.msra.mxu0 0.0
    %3691 = vmatprep.subr.mxu0 0.0
    %3692 = vmatpush1.msra.mxu0 0.0
    %3693 = vmatprep.subr.mxu0 0.0
    %3694 = vmatpush1.msra.mxu0 0.0
    %3695 = vmatprep.subr.mxu0 0.0
    %3696 = vmatpush1.msra.mxu0 0.0
    %3697 = vmatprep.subr.mxu0 0.0
    %3698 = vmatpush1.msra.mxu0 0.0
    %3699 = vmatprep.subr.mxu0 0.0
    %3700 = vmatpush1.msra.mxu0 0.0
    %3701 = vmatprep.subr.mxu0 0.0
    %3702 = vmatpush1.msra.mxu0 0.0
    %3703 = vmatprep.subr.mxu0 0.0
    %3704 = vmatpush1.msra.mxu0 0.0
    %3705 = vmatprep.subr.mxu0 0.0
    %3706 = vmatpush1.msra.mxu0 0.0
    %3707 = vmatprep.subr.mxu0 0.0
    %3708 = vmatpush1.msra.mxu0 0.0
    %3709 = vmatprep.subr.mxu0 0.0
    %3710 = vmatpush1.msra.mxu0 0.0
    %3711 = vmatprep.subr.mxu0 0.0
    %3712 = vmatpush1.msra.mxu0 0.0
    %3713 = vmatprep.subr.mxu0 0.0
    %3714 = vmatpush1.msra.mxu0 0.0
    %3715 = vmatprep.subr.mxu0 0.0
    %3716 = vmatpush1.msra.mxu0 0.0
    %3717 = vmatprep.subr.mxu0 0.0
    %3718 = vmatpush1.msra.mxu0 0.0
    %3719 = vmatprep.subr.mxu0 0.0
    %3720 = vmatpush1.msra.mxu0 0.0
    %3721 = vmatprep.subr.mxu0 0.0
    %3722 = vmatpush1.msra.mxu0 0.0
    %3723 = vmatprep.subr.mxu0 0.0
    %3724 = vmatpush1.msra.mxu0 0.0
    %3725 = vmatprep.subr.mxu0 0.0
    %3726 = vmatpush1.msra.mxu0 0.0
    %3727 = vmatprep.subr.mxu0 0.0
    %3728 = vmatpush1.msra.mxu0 0.0
    %3729 = vmatprep.subr.mxu0 0.0
    %3730 = vmatpush1.msra.mxu0 0.0
    %3731 = vmatprep.subr.mxu0 0.0
    %3732 = vmatpush1.msra.mxu0 0.0
    %3733 = vmatprep.subr.mxu0 0.0
    %3734 = vmatpush1.msra.mxu0 0.0
    %3735 = vmatprep.subr.mxu0 0.0
    %3736 = vmatpush1.msra.mxu0 0.0
    %3737 = vmatprep.subr.mxu0 0.0
    %3738 = vmatpush1.msra.mxu0 0.0
    %3739 = vmatprep.subr.mxu0 0.0
    %3740 = vmatpush1.msra.mxu0 0.0
    %3741 = vmatprep.subr.mxu0 0.0
    %3742 = vmatpush1.msra.mxu0 0.0
    %3743 = vmatprep.subr.mxu0 0.0
    %3744 = vmatpush1.msra.mxu0 0.0
    %3745 = vmatprep.mubr.f32.mxu0 0.0
    %3746 = vmatmul.mubr.f32.gmra.mrb[0].mxu0 %v3608
    %v3747 = vpop.f32.mrb[0].mxu0
    %v3748 = vadd.f32 0.0, %v3747
    %v3749 = vpop.f32.mrb[0].mxu0
    %3750 = vdwg.mxu0
    %v3752 = vrot.slane %v3748, 6
    %v3754 = vadd.f32 %v2768, %v3752
    %v3755 = vxor.u32 %v3754, 2147483648
    %v3756 = vmul.f32 %v3755, 1.442695
    %v3757 = vpow.pop %v3756
    %v3758 = vadd.f32 %v3757, 1.0
    %v3759 = vrcp.pop %v3758
    %v3760 = vmul.f32 1.0, %v3759
    %v3761 = vtanh.pop %v3754
    %v3763 = vrot.slane %v3593, 6
    %v3765 = vmul.f32 %v3760, %v3763
    %3767 = vrot.lane.b32.xlu0 %v3761, 64
    %v3768 = vpop.permute.xlu0 %3767
    %v3770 = vmul.f32 %v3760, %v3768
    %3772 = vrot.lane.b32.xlu0 %v3770, 32
    %v3773 = vpop.permute.xlu0 %3772
    %v3775 = vadd.f32 %v3765, %v3773
    %v3776 = vtanh.pop %v3775
    %3778 = vrot.lane.b32.xlu0 %v3776, 64
    %v3779 = vpop.permute.xlu0 %3778
    %v3781 = vmul.f32 %v3760, %v3779
    %s3782 = scalar_lea.vmem [#allocation24], 160
    %v3783 = vld [vmem:[%s3782] sm:$0xff]
    %v3784 = vld [vmem:[%s3782 + $0x8] sm:$0xff]
    %v3785 = vld [vmem:[%s3782 + $0x10] sm:$0xff]
    %v3786 = vld [vmem:[%s3782 + $0x18] sm:$0xff]
    %v3788 = vrot.slane %v3781, 2
    %3789 = vrot.lane.b32.xlu0 %v3788, 32
    %v3790 = vpop.permute.xlu0 %3789
    %v3791 = vsel %vm540, %v3790, 0
    %3793 = vmatprep.subr.mxu0 0.0
    %3794 = vmatpush1.msra.mxu0 %v3783
    %3795 = vmatprep.subr.mxu0 0.0
    %3796 = vmatpush1.msra.mxu0 %v3784
    %3797 = vmatprep.subr.mxu0 0.0
    %3798 = vmatpush1.msra.mxu0 %v3785
    %3799 = vmatprep.subr.mxu0 0.0
    %3800 = vmatpush1.msra.mxu0 %v3786
    %3801 = vmatprep.subr.mxu0 0.0
    %3802 = vmatpush1.msra.mxu0 0.0
    %3803 = vmatprep.subr.mxu0 0.0
    %3804 = vmatpush1.msra.mxu0 0.0
    %3805 = vmatprep.subr.mxu0 0.0
    %3806 = vmatpush1.msra.mxu0 0.0
    %3807 = vmatprep.subr.mxu0 0.0
    %3808 = vmatpush1.msra.mxu0 0.0
    %3809 = vmatprep.subr.mxu0 0.0
    %3810 = vmatpush1.msra.mxu0 0.0
    %3811 = vmatprep.subr.mxu0 0.0
    %3812 = vmatpush1.msra.mxu0 0.0
    %3813 = vmatprep.subr.mxu0 0.0
    %3814 = vmatpush1.msra.mxu0 0.0
    %3815 = vmatprep.subr.mxu0 0.0
    %3816 = vmatpush1.msra.mxu0 0.0
    %3817 = vmatprep.subr.mxu0 0.0
    %3818 = vmatpush1.msra.mxu0 0.0
    %3819 = vmatprep.subr.mxu0 0.0
    %3820 = vmatpush1.msra.mxu0 0.0
    %3821 = vmatprep.subr.mxu0 0.0
    %3822 = vmatpush1.msra.mxu0 0.0
    %3823 = vmatprep.subr.mxu0 0.0
    %3824 = vmatpush1.msra.mxu0 0.0
    %3825 = vmatprep.subr.mxu0 0.0
    %3826 = vmatpush1.msra.mxu0 0.0
    %3827 = vmatprep.subr.mxu0 0.0
    %3828 = vmatpush1.msra.mxu0 0.0
    %3829 = vmatprep.subr.mxu0 0.0
    %3830 = vmatpush1.msra.mxu0 0.0
    %3831 = vmatprep.subr.mxu0 0.0
    %3832 = vmatpush1.msra.mxu0 0.0
    %3833 = vmatprep.subr.mxu0 0.0
    %3834 = vmatpush1.msra.mxu0 0.0
    %3835 = vmatprep.subr.mxu0 0.0
    %3836 = vmatpush1.msra.mxu0 0.0
    %3837 = vmatprep.subr.mxu0 0.0
    %3838 = vmatpush1.msra.mxu0 0.0
    %3839 = vmatprep.subr.mxu0 0.0
    %3840 = vmatpush1.msra.mxu0 0.0
    %3841 = vmatprep.subr.mxu0 0.0
    %3842 = vmatpush1.msra.mxu0 0.0
    %3843 = vmatprep.subr.mxu0 0.0
    %3844 = vmatpush1.msra.mxu0 0.0
    %3845 = vmatprep.subr.mxu0 0.0
    %3846 = vmatpush1.msra.mxu0 0.0
    %3847 = vmatprep.subr.mxu0 0.0
    %3848 = vmatpush1.msra.mxu0 0.0
    %3849 = vmatprep.subr.mxu0 0.0
    %3850 = vmatpush1.msra.mxu0 0.0
    %3851 = vmatprep.subr.mxu0 0.0
    %3852 = vmatpush1.msra.mxu0 0.0
    %3853 = vmatprep.subr.mxu0 0.0
    %3854 = vmatpush1.msra.mxu0 0.0
    %3855 = vmatprep.subr.mxu0 0.0
    %3856 = vmatpush1.msra.mxu0 0.0
    %3857 = vmatprep.mubr.f32.mxu0 0.0
    %3858 = vmatmul.mubr.f32.gmra.mrb[0].mxu0 %v3791
    %v3859 = vpop.f32.mrb[0].mxu0
    %v3860 = vadd.f32 0.0, %v3859
    %v3861 = vpop.f32.mrb[0].mxu0
    %3862 = vdwg.mxu0
    %v3863 = vadd.f32 %v3680, %v3860
    %3864 = vmatprep.subr.mxu0 0.0
    %3865 = vmatpush1.msra.mxu0 %v2673
    %3866 = vmatprep.subr.mxu0 0.0
    %3867 = vmatpush1.msra.mxu0 %v2674
    %3868 = vmatprep.subr.mxu0 0.0
    %3869 = vmatpush1.msra.mxu0 %v2675
    %3870 = vmatprep.subr.mxu0 0.0
    %3871 = vmatpush1.msra.mxu0 %v2676
    %3872 = vmatprep.subr.mxu0 0.0
    %3873 = vmatpush1.msra.mxu0 0.0
    %3874 = vmatprep.subr.mxu0 0.0
    %3875 = vmatpush1.msra.mxu0 0.0
    %3876 = vmatprep.subr.mxu0 0.0
    %3877 = vmatpush1.msra.mxu0 0.0
    %3878 = vmatprep.subr.mxu0 0.0
    %3879 = vmatpush1.msra.mxu0 0.0
    %3880 = vmatprep.subr.mxu0 0.0
    %3881 = vmatpush1.msra.mxu0 0.0
    %3882 = vmatprep.subr.mxu0 0.0
    %3883 = vmatpush1.msra.mxu0 0.0
    %3884 = vmatprep.subr.mxu0 0.0
    %3885 = vmatpush1.msra.mxu0 0.0
    %3886 = vmatprep.subr.mxu0 0.0
    %3887 = vmatpush1.msra.mxu0 0.0
    %3888 = vmatprep.subr.mxu0 0.0
    %3889 = vmatpush1.msra.mxu0 0.0
    %3890 = vmatprep.subr.mxu0 0.0
    %3891 = vmatpush1.msra.mxu0 0.0
    %3892 = vmatprep.subr.mxu0 0.0
    %3893 = vmatpush1.msra.mxu0 0.0
    %3894 = vmatprep.subr.mxu0 0.0
    %3895 = vmatpush1.msra.mxu0 0.0
    %3896 = vmatprep.subr.mxu0 0.0
    %3897 = vmatpush1.msra.mxu0 0.0
    %3898 = vmatprep.subr.mxu0 0.0
    %3899 = vmatpush1.msra.mxu0 0.0
    %3900 = vmatprep.subr.mxu0 0.0
    %3901 = vmatpush1.msra.mxu0 0.0
    %3902 = vmatprep.subr.mxu0 0.0
    %3903 = vmatpush1.msra.mxu0 0.0
    %3904 = vmatprep.subr.mxu0 0.0
    %3905 = vmatpush1.msra.mxu0 0.0
    %3906 = vmatprep.subr.mxu0 0.0
    %3907 = vmatpush1.msra.mxu0 0.0
    %3908 = vmatprep.subr.mxu0 0.0
    %3909 = vmatpush1.msra.mxu0 0.0
    %3910 = vmatprep.subr.mxu0 0.0
    %3911 = vmatpush1.msra.mxu0 0.0
    %3912 = vmatprep.subr.mxu0 0.0
    %3913 = vmatpush1.msra.mxu0 0.0
    %3914 = vmatprep.subr.mxu0 0.0
    %3915 = vmatpush1.msra.mxu0 0.0
    %3916 = vmatprep.subr.mxu0 0.0
    %3917 = vmatpush1.msra.mxu0 0.0
    %3918 = vmatprep.subr.mxu0 0.0
    %3919 = vmatpush1.msra.mxu0 0.0
    %3920 = vmatprep.subr.mxu0 0.0
    %3921 = vmatpush1.msra.mxu0 0.0
    %3922 = vmatprep.subr.mxu0 0.0
    %3923 = vmatpush1.msra.mxu0 0.0
    %3924 = vmatprep.subr.mxu0 0.0
    %3925 = vmatpush1.msra.mxu0 0.0
    %3926 = vmatprep.subr.mxu0 0.0
    %3927 = vmatpush1.msra.mxu0 0.0
    %3928 = vmatprep.mubr.f32.mxu0 0.0
    %3929 = vmatmul.mubr.f32.gmra.mrb[0].mxu0 %v3791
    %v3930 = vpop.f32.mrb[0].mxu0
    %v3931 = vadd.f32 0.0, %v3930
    %v3932 = vpop.f32.mrb[0].mxu0
    %3933 = vdwg.mxu0
    %v3935 = vrot.slane %v3931, 4
    %v3937 = vadd.f32 %v2768, %v3935
    %v3938 = vxor.u32 %v3937, 2147483648
    %v3939 = vmul.f32 %v3938, 1.442695
    %v3940 = vpow.pop %v3939
    %v3941 = vadd.f32 %v3940, 1.0
    %v3942 = vrcp.pop %v3941
    %v3943 = vmul.f32 1.0, %v3942
    %v3944 = vtanh.pop %v3937
    %v3946 = vrot.slane %v3775, 6
    %v3948 = vmul.f32 %v3943, %v3946
    %3950 = vrot.lane.b32.xlu0 %v3944, 64
    %v3951 = vpop.permute.xlu0 %3950
    %v3953 = vmul.f32 %v3943, %v3951
    %3955 = vrot.lane.b32.xlu0 %v3953, 32
    %v3956 = vpop.permute.xlu0 %3955
    %v3958 = vadd.f32 %v3948, %v3956
    %v3959 = vtanh.pop %v3958
    %3961 = vrot.lane.b32.xlu0 %v3959, 64
    %v3962 = vpop.permute.xlu0 %3961
    %v3964 = vmul.f32 %v3943, %v3962
    %s3965 = scalar_lea.vmem [#allocation24], 192
    %v3966 = vld [vmem:[%s3965] sm:$0xff]
    %v3967 = vld [vmem:[%s3965 + $0x8] sm:$0xff]
    %v3968 = vld [vmem:[%s3965 + $0x10] sm:$0xff]
    %v3969 = vld [vmem:[%s3965 + $0x18] sm:$0xff]
    %v3971 = vrot.slane %v3964, 4
    %3972 = vrot.lane.b32.xlu0 %v3971, 32
    %v3973 = vpop.permute.xlu0 %3972
    %v3974 = vsel %vm540, %v3973, 0
    %3976 = vmatprep.subr.mxu0 0.0
    %3977 = vmatpush1.msra.mxu0 %v3966
    %3978 = vmatprep.subr.mxu0 0.0
    %3979 = vmatpush1.msra.mxu0 %v3967
    %3980 = vmatprep.subr.mxu0 0.0
    %3981 = vmatpush1.msra.mxu0 %v3968
    %3982 = vmatprep.subr.mxu0 0.0
    %3983 = vmatpush1.msra.mxu0 %v3969
    %3984 = vmatprep.subr.mxu0 0.0
    %3985 = vmatpush1.msra.mxu0 0.0
    %3986 = vmatprep.subr.mxu0 0.0
    %3987 = vmatpush1.msra.mxu0 0.0
    %3988 = vmatprep.subr.mxu0 0.0
    %3989 = vmatpush1.msra.mxu0 0.0
    %3990 = vmatprep.subr.mxu0 0.0
    %3991 = vmatpush1.msra.mxu0 0.0
    %3992 = vmatprep.subr.mxu0 0.0
    %3993 = vmatpush1.msra.mxu0 0.0
    %3994 = vmatprep.subr.mxu0 0.0
    %3995 = vmatpush1.msra.mxu0 0.0
    %3996 = vmatprep.subr.mxu0 0.0
    %3997 = vmatpush1.msra.mxu0 0.0
    %3998 = vmatprep.subr.mxu0 0.0
    %3999 = vmatpush1.msra.mxu0 0.0
    %4000 = vmatprep.subr.mxu0 0.0
    %4001 = vmatpush1.msra.mxu0 0.0
    %4002 = vmatprep.subr.mxu0 0.0
    %4003 = vmatpush1.msra.mxu0 0.0
    %4004 = vmatprep.subr.mxu0 0.0
    %4005 = vmatpush1.msra.mxu0 0.0
    %4006 = vmatprep.subr.mxu0 0.0
    %4007 = vmatpush1.msra.mxu0 0.0
    %4008 = vmatprep.subr.mxu0 0.0
    %4009 = vmatpush1.msra.mxu0 0.0
    %4010 = vmatprep.subr.mxu0 0.0
    %4011 = vmatpush1.msra.mxu0 0.0
    %4012 = vmatprep.subr.mxu0 0.0
    %4013 = vmatpush1.msra.mxu0 0.0
    %4014 = vmatprep.subr.mxu0 0.0
    %4015 = vmatpush1.msra.mxu0 0.0
    %4016 = vmatprep.subr.mxu0 0.0
    %4017 = vmatpush1.msra.mxu0 0.0
    %4018 = vmatprep.subr.mxu0 0.0
    %4019 = vmatpush1.msra.mxu0 0.0
    %4020 = vmatprep.subr.mxu0 0.0
    %4021 = vmatpush1.msra.mxu0 0.0
    %4022 = vmatprep.subr.mxu0 0.0
    %4023 = vmatpush1.msra.mxu0 0.0
    %4024 = vmatprep.subr.mxu0 0.0
    %4025 = vmatpush1.msra.mxu0 0.0
    %4026 = vmatprep.subr.mxu0 0.0
    %4027 = vmatpush1.msra.mxu0 0.0
    %4028 = vmatprep.subr.mxu0 0.0
    %4029 = vmatpush1.msra.mxu0 0.0
    %4030 = vmatprep.subr.mxu0 0.0
    %4031 = vmatpush1.msra.mxu0 0.0
    %4032 = vmatprep.subr.mxu0 0.0
    %4033 = vmatpush1.msra.mxu0 0.0
    %4034 = vmatprep.subr.mxu0 0.0
    %4035 = vmatpush1.msra.mxu0 0.0
    %4036 = vmatprep.subr.mxu0 0.0
    %4037 = vmatpush1.msra.mxu0 0.0
    %4038 = vmatprep.subr.mxu0 0.0
    %4039 = vmatpush1.msra.mxu0 0.0
    %4040 = vmatprep.mubr.f32.mxu0 0.0
    %4041 = vmatmul.mubr.f32.gmra.mrb[0].mxu0 %v3974
    %v4042 = vpop.f32.mrb[0].mxu0
    %v4043 = vadd.f32 0.0, %v4042
    %v4044 = vpop.f32.mrb[0].mxu0
    %4045 = vdwg.mxu0
    %v4046 = vadd.f32 %v3863, %v4043
    %4047 = vmatprep.subr.mxu0 0.0
    %4048 = vmatpush1.msra.mxu0 %v2673
    %4049 = vmatprep.subr.mxu0 0.0
    %4050 = vmatpush1.msra.mxu0 %v2674
    %4051 = vmatprep.subr.mxu0 0.0
    %4052 = vmatpush1.msra.mxu0 %v2675
    %4053 = vmatprep.subr.mxu0 0.0
    %4054 = vmatpush1.msra.mxu0 %v2676
    %4055 = vmatprep.subr.mxu0 0.0
    %4056 = vmatpush1.msra.mxu0 0.0
    %4057 = vmatprep.subr.mxu0 0.0
    %4058 = vmatpush1.msra.mxu0 0.0
    %4059 = vmatprep.subr.mxu0 0.0
    %4060 = vmatpush1.msra.mxu0 0.0
    %4061 = vmatprep.subr.mxu0 0.0
    %4062 = vmatpush1.msra.mxu0 0.0
    %4063 = vmatprep.subr.mxu0 0.0
    %4064 = vmatpush1.msra.mxu0 0.0
    %4065 = vmatprep.subr.mxu0 0.0
    %4066 = vmatpush1.msra.mxu0 0.0
    %4067 = vmatprep.subr.mxu0 0.0
    %4068 = vmatpush1.msra.mxu0 0.0
    %4069 = vmatprep.subr.mxu0 0.0
    %4070 = vmatpush1.msra.mxu0 0.0
    %4071 = vmatprep.subr.mxu0 0.0
    %4072 = vmatpush1.msra.mxu0 0.0
    %4073 = vmatprep.subr.mxu0 0.0
    %4074 = vmatpush1.msra.mxu0 0.0
    %4075 = vmatprep.subr.mxu0 0.0
    %4076 = vmatpush1.msra.mxu0 0.0
    %4077 = vmatprep.subr.mxu0 0.0
    %4078 = vmatpush1.msra.mxu0 0.0
    %4079 = vmatprep.subr.mxu0 0.0
    %4080 = vmatpush1.msra.mxu0 0.0
    %4081 = vmatprep.subr.mxu0 0.0
    %4082 = vmatpush1.msra.mxu0 0.0
    %4083 = vmatprep.subr.mxu0 0.0
    %4084 = vmatpush1.msra.mxu0 0.0
    %4085 = vmatprep.subr.mxu0 0.0
    %4086 = vmatpush1.msra.mxu0 0.0
    %4087 = vmatprep.subr.mxu0 0.0
    %4088 = vmatpush1.msra.mxu0 0.0
    %4089 = vmatprep.subr.mxu0 0.0
    %4090 = vmatpush1.msra.mxu0 0.0
    %4091 = vmatprep.subr.mxu0 0.0
    %4092 = vmatpush1.msra.mxu0 0.0
    %4093 = vmatprep.subr.mxu0 0.0
    %4094 = vmatpush1.msra.mxu0 0.0
    %4095 = vmatprep.subr.mxu0 0.0
    %4096 = vmatpush1.msra.mxu0 0.0
    %4097 = vmatprep.subr.mxu0 0.0
    %4098 = vmatpush1.msra.mxu0 0.0
    %4099 = vmatprep.subr.mxu0 0.0
    %4100 = vmatpush1.msra.mxu0 0.0
    %4101 = vmatprep.subr.mxu0 0.0
    %4102 = vmatpush1.msra.mxu0 0.0
    %4103 = vmatprep.subr.mxu0 0.0
    %4104 = vmatpush1.msra.mxu0 0.0
    %4105 = vmatprep.subr.mxu0 0.0
    %4106 = vmatpush1.msra.mxu0 0.0
    %4107 = vmatprep.subr.mxu0 0.0
    %4108 = vmatpush1.msra.mxu0 0.0
    %4109 = vmatprep.subr.mxu0 0.0
    %4110 = vmatpush1.msra.mxu0 0.0
    %4111 = vmatprep.mubr.f32.mxu0 0.0
    %4112 = vmatmul.mubr.f32.gmra.mrb[0].mxu0 %v3974
    %v4113 = vpop.f32.mrb[0].mxu0
    %v4114 = vadd.f32 0.0, %v4113
    %v4115 = vpop.f32.mrb[0].mxu0
    %4116 = vdwg.mxu0
    %v4118 = vrot.slane %v4114, 2
    %v4120 = vadd.f32 %v2768, %v4118
    %v4121 = vxor.u32 %v4120, 2147483648
    %v4122 = vmul.f32 %v4121, 1.442695
    %v4123 = vpow.pop %v4122
    %v4124 = vadd.f32 %v4123, 1.0
    %v4125 = vrcp.pop %v4124
    %v4126 = vmul.f32 1.0, %v4125
    %v4127 = vtanh.pop %v4120
    %v4129 = vrot.slane %v3958, 6
    %v4131 = vmul.f32 %v4126, %v4129
    %4133 = vrot.lane.b32.xlu0 %v4127, 64
    %v4134 = vpop.permute.xlu0 %4133
    %v4136 = vmul.f32 %v4126, %v4134
    %4138 = vrot.lane.b32.xlu0 %v4136, 32
    %v4139 = vpop.permute.xlu0 %4138
    %v4141 = vadd.f32 %v4131, %v4139
    %v4142 = vtanh.pop %v4141
    %4144 = vrot.lane.b32.xlu0 %v4142, 64
    %v4145 = vpop.permute.xlu0 %4144
    %v4147 = vmul.f32 %v4126, %v4145
    %s4148 = scalar_lea.vmem [#allocation24], 224
    %v4149 = vld [vmem:[%s4148] sm:$0xff]
    %v4150 = vld [vmem:[%s4148 + $0x8] sm:$0xff]
    %v4151 = vld [vmem:[%s4148 + $0x10] sm:$0xff]
    %v4152 = vld [vmem:[%s4148 + $0x18] sm:$0xff]
    %v4154 = vrot.slane %v4147, 6
    %4155 = vrot.lane.b32.xlu0 %v4154, 32
    %v4156 = vpop.permute.xlu0 %4155
    %v4157 = vsel %vm540, %v4156, 0
    %4159 = vmatprep.subr.mxu0 0.0
    %4160 = vmatpush1.msra.mxu0 %v4149
    %4161 = vmatprep.subr.mxu0 0.0
    %4162 = vmatpush1.msra.mxu0 %v4150
    %4163 = vmatprep.subr.mxu0 0.0
    %4164 = vmatpush1.msra.mxu0 %v4151
    %4165 = vmatprep.subr.mxu0 0.0
    %4166 = vmatpush1.msra.mxu0 %v4152
    %4167 = vmatprep.subr.mxu0 0.0
    %4168 = vmatpush1.msra.mxu0 0.0
    %4169 = vmatprep.subr.mxu0 0.0
    %4170 = vmatpush1.msra.mxu0 0.0
    %4171 = vmatprep.subr.mxu0 0.0
    %4172 = vmatpush1.msra.mxu0 0.0
    %4173 = vmatprep.subr.mxu0 0.0
    %4174 = vmatpush1.msra.mxu0 0.0
    %4175 = vmatprep.subr.mxu0 0.0
    %4176 = vmatpush1.msra.mxu0 0.0
    %4177 = vmatprep.subr.mxu0 0.0
    %4178 = vmatpush1.msra.mxu0 0.0
    %4179 = vmatprep.subr.mxu0 0.0
    %4180 = vmatpush1.msra.mxu0 0.0
    %4181 = vmatprep.subr.mxu0 0.0
    %4182 = vmatpush1.msra.mxu0 0.0
    %4183 = vmatprep.subr.mxu0 0.0
    %4184 = vmatpush1.msra.mxu0 0.0
    %4185 = vmatprep.subr.mxu0 0.0
    %4186 = vmatpush1.msra.mxu0 0.0
    %4187 = vmatprep.subr.mxu0 0.0
    %4188 = vmatpush1.msra.mxu0 0.0
    %4189 = vmatprep.subr.mxu0 0.0
    %4190 = vmatpush1.msra.mxu0 0.0
    %4191 = vmatprep.subr.mxu0 0.0
    %4192 = vmatpush1.msra.mxu0 0.0
    %4193 = vmatprep.subr.mxu0 0.0
    %4194 = vmatpush1.msra.mxu0 0.0
    %4195 = vmatprep.subr.mxu0 0.0
    %4196 = vmatpush1.msra.mxu0 0.0
    %4197 = vmatprep.subr.mxu0 0.0
    %4198 = vmatpush1.msra.mxu0 0.0
    %4199 = vmatprep.subr.mxu0 0.0
    %4200 = vmatpush1.msra.mxu0 0.0
    %4201 = vmatprep.subr.mxu0 0.0
    %4202 = vmatpush1.msra.mxu0 0.0
    %4203 = vmatprep.subr.mxu0 0.0
    %4204 = vmatpush1.msra.mxu0 0.0
    %4205 = vmatprep.subr.mxu0 0.0
    %4206 = vmatpush1.msra.mxu0 0.0
    %4207 = vmatprep.subr.mxu0 0.0
    %4208 = vmatpush1.msra.mxu0 0.0
    %4209 = vmatprep.subr.mxu0 0.0
    %4210 = vmatpush1.msra.mxu0 0.0
    %4211 = vmatprep.subr.mxu0 0.0
    %4212 = vmatpush1.msra.mxu0 0.0
    %4213 = vmatprep.subr.mxu0 0.0
    %4214 = vmatpush1.msra.mxu0 0.0
    %4215 = vmatprep.subr.mxu0 0.0
    %4216 = vmatpush1.msra.mxu0 0.0
    %4217 = vmatprep.subr.mxu0 0.0
    %4218 = vmatpush1.msra.mxu0 0.0
    %4219 = vmatprep.subr.mxu0 0.0
    %4220 = vmatpush1.msra.mxu0 0.0
    %4221 = vmatprep.subr.mxu0 0.0
    %4222 = vmatpush1.msra.mxu0 0.0
    %4223 = vmatprep.mubr.f32.mxu0 0.0
    %4224 = vmatmul.mubr.f32.gmra.mrb[0].mxu0 %v4157
    %v4225 = vpop.f32.mrb[0].mxu0
    %v4226 = vadd.f32 0.0, %v4225
    %v4227 = vpop.f32.mrb[0].mxu0
    %4228 = vdwg.mxu0
    %v4229 = vadd.f32 %v4046, %v4226
    %v4230 = vld [vmem:[%s19] sm:$0x1]
    %v4232 = vlaneseq
    %v4233 = vshrl.u32 %v4232, 7
    %v4234 = vsub.s32 0, %v4233
    %v4235 = vrot.slane %v4230, %v4234
    %v4237 = vadd.f32 %v4229, %v4235
    %s4238 = smul.u32 4, 32
    %s4239 = smul.u32 %s4238, 8
    %s4240 = sshll.u32 %s4239, 4
    %4241 = dma.done [#allocation5], %s4240
    %s4242 = smul.u32 4, 128
    %s4243 = smul.u32 %s4242, 4
    %s4244 = sshll.u32 %s4243, 4
    %4245 = dma.done %s275, %s4244
    %s4246 = smul.u32 4, 64
    %s4247 = smul.u32 %s4246, 1
    %s4248 = sshll.u32 %s4247, 4
    %4249 = dma.done %s310, %s4248
    %v4250 = vpack.c.bf16 %v2672, %v2672
    %v4251 = vld [vmem:[#allocation2] sm:$0xff]
    %v4252 = vld [vmem:[#allocation2 + $0x8] sm:$0xff]
    %v4253 = vld [vmem:[#allocation2 + $0x10] sm:$0xff]
    %v4254 = vld [vmem:[#allocation2 + $0x18] sm:$0xff]
    %v4255 = vld [vmem:[#allocation2 + $0x20] sm:$0xff]
    %v4256 = vld [vmem:[#allocation2 + $0x28] sm:$0xff]
    %v4257 = vld [vmem:[#allocation2 + $0x30] sm:$0xff]
    %v4258 = vld [vmem:[#allocation2 + $0x38] sm:$0xff]
    %v4259 = vld [vmem:[#allocation2 + $0x40] sm:$0xff]
    %v4260 = vld [vmem:[#allocation2 + $0x48] sm:$0xff]
    %v4261 = vld [vmem:[#allocation2 + $0x50] sm:$0xff]
    %v4262 = vld [vmem:[#allocation2 + $0x58] sm:$0xff]
    %v4263 = vld [vmem:[#allocation2 + $0x60] sm:$0xff]
    %v4264 = vld [vmem:[#allocation2 + $0x68] sm:$0xff]
    %v4265 = vld [vmem:[#allocation2 + $0x70] sm:$0xff]
    %v4266 = vld [vmem:[#allocation2 + $0x78] sm:$0xff]
    %v4267 = vld [vmem:[#allocation2 + $0x80] sm:$0xff]
    %v4268 = vld [vmem:[#allocation2 + $0x88] sm:$0xff]
    %v4269 = vld [vmem:[#allocation2 + $0x90] sm:$0xff]
    %v4270 = vld [vmem:[#allocation2 + $0x98] sm:$0xff]
    %v4271 = vld [vmem:[#allocation2 + $0xa0] sm:$0xff]
    %v4272 = vld [vmem:[#allocation2 + $0xa8] sm:$0xff]
    %v4273 = vld [vmem:[#allocation2 + $0xb0] sm:$0xff]
    %v4274 = vld [vmem:[#allocation2 + $0xb8] sm:$0xff]
    %v4275 = vld [vmem:[#allocation2 + $0xc0] sm:$0xff]
    %v4276 = vld [vmem:[#allocation2 + $0xc8] sm:$0xff]
    %v4277 = vld [vmem:[#allocation2 + $0xd0] sm:$0xff]
    %v4278 = vld [vmem:[#allocation2 + $0xd8] sm:$0xff]
    %v4279 = vld [vmem:[#allocation2 + $0xe0] sm:$0xff]
    %v4280 = vld [vmem:[#allocation2 + $0xe8] sm:$0xff]
    %v4281 = vld [vmem:[#allocation2 + $0xf0] sm:$0xff]
    %v4282 = vld [vmem:[#allocation2 + $0xf8] sm:$0xff]
    %v4283 = vld [vmem:[#allocation2 + $0x100] sm:$0xff]
    %v4284 = vld [vmem:[#allocation2 + $0x108] sm:$0xff]
    %v4285 = vld [vmem:[#allocation2 + $0x110] sm:$0xff]
    %v4286 = vld [vmem:[#allocation2 + $0x118] sm:$0xff]
    %v4287 = vld [vmem:[#allocation2 + $0x120] sm:$0xff]
    %v4288 = vld [vmem:[#allocation2 + $0x128] sm:$0xff]
    %v4289 = vld [vmem:[#allocation2 + $0x130] sm:$0xff]
    %v4290 = vld [vmem:[#allocation2 + $0x138] sm:$0xff]
    %v4291 = vld [vmem:[#allocation2 + $0x140] sm:$0xff]
    %v4292 = vld [vmem:[#allocation2 + $0x148] sm:$0xff]
    %v4293 = vld [vmem:[#allocation2 + $0x150] sm:$0xff]
    %v4294 = vld [vmem:[#allocation2 + $0x158] sm:$0xff]
    %v4295 = vld [vmem:[#allocation2 + $0x160] sm:$0xff]
    %v4296 = vld [vmem:[#allocation2 + $0x168] sm:$0xff]
    %v4297 = vld [vmem:[#allocation2 + $0x170] sm:$0xff]
    %v4298 = vld [vmem:[#allocation2 + $0x178] sm:$0xff]
    %v4299 = vld [vmem:[#allocation2 + $0x180] sm:$0xff]
    %v4300 = vld [vmem:[#allocation2 + $0x188] sm:$0xff]
    %v4301 = vld [vmem:[#allocation2 + $0x190] sm:$0xff]
    %v4302 = vld [vmem:[#allocation2 + $0x198] sm:$0xff]
    %v4303 = vld [vmem:[#allocation2 + $0x1a0] sm:$0xff]
    %v4304 = vld [vmem:[#allocation2 + $0x1a8] sm:$0xff]
    %v4305 = vld [vmem:[#allocation2 + $0x1b0] sm:$0xff]
    %v4306 = vld [vmem:[#allocation2 + $0x1b8] sm:$0xff]
    %v4307 = vld [vmem:[#allocation2 + $0x1c0] sm:$0xff]
    %v4308 = vld [vmem:[#allocation2 + $0x1c8] sm:$0xff]
    %v4309 = vld [vmem:[#allocation2 + $0x1d0] sm:$0xff]
    %v4310 = vld [vmem:[#allocation2 + $0x1d8] sm:$0xff]
    %v4311 = vld [vmem:[#allocation2 + $0x1e0] sm:$0xff]
    %v4312 = vld [vmem:[#allocation2 + $0x1e8] sm:$0xff]
    %v4313 = vld [vmem:[#allocation2 + $0x1f0] sm:$0xff]
    %v4314 = vld [vmem:[#allocation2 + $0x1f8] sm:$0xff]
    %v4315 = vpack.c.bf16 %v4237, %v4237
    %v4316 = vld [vmem:[#allocation2 + $0x200] sm:$0xff]
    %v4317 = vld [vmem:[#allocation2 + $0x208] sm:$0xff]
    %v4318 = vld [vmem:[#allocation2 + $0x210] sm:$0xff]
    %v4319 = vld [vmem:[#allocation2 + $0x218] sm:$0xff]
    %v4320 = vld [vmem:[#allocation2 + $0x220] sm:$0xff]
    %v4321 = vld [vmem:[#allocation2 + $0x228] sm:$0xff]
    %v4322 = vld [vmem:[#allocation2 + $0x230] sm:$0xff]
    %v4323 = vld [vmem:[#allocation2 + $0x238] sm:$0xff]
    %v4324 = vld [vmem:[#allocation2 + $0x240] sm:$0xff]
    %v4325 = vld [vmem:[#allocation2 + $0x248] sm:$0xff]
    %v4326 = vld [vmem:[#allocation2 + $0x250] sm:$0xff]
    %v4327 = vld [vmem:[#allocation2 + $0x258] sm:$0xff]
    %v4328 = vld [vmem:[#allocation2 + $0x260] sm:$0xff]
    %v4329 = vld [vmem:[#allocation2 + $0x268] sm:$0xff]
    %v4330 = vld [vmem:[#allocation2 + $0x270] sm:$0xff]
    %v4331 = vld [vmem:[#allocation2 + $0x278] sm:$0xff]
    %v4332 = vld [vmem:[#allocation2 + $0x280] sm:$0xff]
    %v4333 = vld [vmem:[#allocation2 + $0x288] sm:$0xff]
    %v4334 = vld [vmem:[#allocation2 + $0x290] sm:$0xff]
    %v4335 = vld [vmem:[#allocation2 + $0x298] sm:$0xff]
    %v4336 = vld [vmem:[#allocation2 + $0x2a0] sm:$0xff]
    %v4337 = vld [vmem:[#allocation2 + $0x2a8] sm:$0xff]
    %v4338 = vld [vmem:[#allocation2 + $0x2b0] sm:$0xff]
    %v4339 = vld [vmem:[#allocation2 + $0x2b8] sm:$0xff]
    %v4340 = vld [vmem:[#allocation2 + $0x2c0] sm:$0xff]
    %v4341 = vld [vmem:[#allocation2 + $0x2c8] sm:$0xff]
    %v4342 = vld [vmem:[#allocation2 + $0x2d0] sm:$0xff]
    %v4343 = vld [vmem:[#allocation2 + $0x2d8] sm:$0xff]
    %v4344 = vld [vmem:[#allocation2 + $0x2e0] sm:$0xff]
    %v4345 = vld [vmem:[#allocation2 + $0x2e8] sm:$0xff]
    %v4346 = vld [vmem:[#allocation2 + $0x2f0] sm:$0xff]
    %v4347 = vld [vmem:[#allocation2 + $0x2f8] sm:$0xff]
    %v4348 = vld [vmem:[#allocation2 + $0x300] sm:$0xff]
    %v4349 = vld [vmem:[#allocation2 + $0x308] sm:$0xff]
    %v4350 = vld [vmem:[#allocation2 + $0x310] sm:$0xff]
    %v4351 = vld [vmem:[#allocation2 + $0x318] sm:$0xff]
    %v4352 = vld [vmem:[#allocation2 + $0x320] sm:$0xff]
    %v4353 = vld [vmem:[#allocation2 + $0x328] sm:$0xff]
    %v4354 = vld [vmem:[#allocation2 + $0x330] sm:$0xff]
    %v4355 = vld [vmem:[#allocation2 + $0x338] sm:$0xff]
    %v4356 = vld [vmem:[#allocation2 + $0x340] sm:$0xff]
    %v4357 = vld [vmem:[#allocation2 + $0x348] sm:$0xff]
    %v4358 = vld [vmem:[#allocation2 + $0x350] sm:$0xff]
    %v4359 = vld [vmem:[#allocation2 + $0x358] sm:$0xff]
    %v4360 = vld [vmem:[#allocation2 + $0x360] sm:$0xff]
    %v4361 = vld [vmem:[#allocation2 + $0x368] sm:$0xff]
    %v4362 = vld [vmem:[#allocation2 + $0x370] sm:$0xff]
    %v4363 = vld [vmem:[#allocation2 + $0x378] sm:$0xff]
    %v4364 = vld [vmem:[#allocation2 + $0x380] sm:$0xff]
    %v4365 = vld [vmem:[#allocation2 + $0x388] sm:$0xff]
    %v4366 = vld [vmem:[#allocation2 + $0x390] sm:$0xff]
    %v4367 = vld [vmem:[#allocation2 + $0x398] sm:$0xff]
    %v4368 = vld [vmem:[#allocation2 + $0x3a0] sm:$0xff]
    %v4369 = vld [vmem:[#allocation2 + $0x3a8] sm:$0xff]
    %v4370 = vld [vmem:[#allocation2 + $0x3b0] sm:$0xff]
    %v4371 = vld [vmem:[#allocation2 + $0x3b8] sm:$0xff]
    %v4372 = vld [vmem:[#allocation2 + $0x3c0] sm:$0xff]
    %v4373 = vld [vmem:[#allocation2 + $0x3c8] sm:$0xff]
    %v4374 = vld [vmem:[#allocation2 + $0x3d0] sm:$0xff]
    %v4375 = vld [vmem:[#allocation2 + $0x3d8] sm:$0xff]
    %v4376 = vld [vmem:[#allocation2 + $0x3e0] sm:$0xff]
    %v4377 = vld [vmem:[#allocation2 + $0x3e8] sm:$0xff]
    %v4378 = vld [vmem:[#allocation2 + $0x3f0] sm:$0xff]
    %v4379 = vld [vmem:[#allocation2 + $0x3f8] sm:$0xff]
    %4380 = vmatprep.subr.bf16.mxu0 %v4317
    %4381 = vmatpush1.bf16.msra.mxu0 %v4316
    %4382 = vmatprep.subr.bf16.mxu0 %v4325
    %4383 = vmatpush1.bf16.msra.mxu0 %v4324
    %4384 = vmatprep.subr.bf16.mxu0 %v4333
    %4385 = vmatpush1.bf16.msra.mxu0 %v4332
    %4386 = vmatprep.subr.bf16.mxu0 %v4341
    %4387 = vmatpush1.bf16.msra.mxu0 %v4340
    %4388 = vmatprep.subr.bf16.mxu0 %v4349
    %4389 = vmatpush1.bf16.msra.mxu0 %v4348
    %4390 = vmatprep.subr.bf16.mxu0 %v4357
    %4391 = vmatpush1.bf16.msra.mxu0 %v4356
    %4392 = vmatprep.subr.bf16.mxu0 %v4365
    %4393 = vmatpush1.bf16.msra.mxu0 %v4364
    %4394 = vmatprep.subr.bf16.mxu0 %v4373
    %4395 = vmatpush1.bf16.msra.mxu0 %v4372
    %4396 = vmatprep.subr.bf16.mxu0 0
    %4397 = vmatpush1.bf16.msra.mxu0 0
    %4398 = vmatprep.subr.bf16.mxu0 0
    %4399 = vmatpush1.bf16.msra.mxu0 0
    %4400 = vmatprep.subr.bf16.mxu0 0
    %4401 = vmatpush1.bf16.msra.mxu0 0
    %4402 = vmatprep.subr.bf16.mxu0 0
    %4403 = vmatpush1.bf16.msra.mxu0 0
    %4404 = vmatprep.subr.bf16.mxu0 0
    %4405 = vmatpush1.bf16.msra.mxu0 0
    %4406 = vmatprep.subr.bf16.mxu0 0
    %4407 = vmatpush1.bf16.msra.mxu0 0
    %4408 = vmatprep.subr.bf16.mxu0 0
    %4409 = vmatpush1.bf16.msra.mxu0 0
    %4410 = vmatprep.subr.bf16.mxu0 0
    %4411 = vmatpush1.bf16.msra.mxu0 0
    %4412 = vmatprep.mubr.bf16.mxu0 0
    %4413 = vmatmul.mubr.bf16.gmra.mrb[0].mxu0 %v4315
    %v4414 = vpop.f32.mrb[0].mxu0
    %v4415 = vadd.f32 0.0, %v4414
    %v4416 = vpop.f32.mrb[0].mxu0
    %v4417 = vadd.f32 0.0, %v4416
    %v4418 = vpop.f32.mrb[0].mxu0
    %v4419 = vpop.f32.mrb[0].mxu0
    %4420 = vdwg.mxu0
    %4421 = vmatprep.subr.bf16.mxu0 %v4319
    %4422 = vmatpush1.bf16.msra.mxu0 %v4318
    %4423 = vmatprep.subr.bf16.mxu0 %v4327
    %4424 = vmatpush1.bf16.msra.mxu0 %v4326
    %4425 = vmatprep.subr.bf16.mxu0 %v4335
    %4426 = vmatpush1.bf16.msra.mxu0 %v4334
    %4427 = vmatprep.subr.bf16.mxu0 %v4343
    %4428 = vmatpush1.bf16.msra.mxu0 %v4342
    %4429 = vmatprep.subr.bf16.mxu0 %v4351
    %4430 = vmatpush1.bf16.msra.mxu0 %v4350
    %4431 = vmatprep.subr.bf16.mxu0 %v4359
    %4432 = vmatpush1.bf16.msra.mxu0 %v4358
    %4433 = vmatprep.subr.bf16.mxu0 %v4367
    %4434 = vmatpush1.bf16.msra.mxu0 %v4366
    %4435 = vmatprep.subr.bf16.mxu0 %v4375
    %4436 = vmatpush1.bf16.msra.mxu0 %v4374
    %4437 = vmatprep.subr.bf16.mxu0 0
    %4438 = vmatpush1.bf16.msra.mxu0 0
    %4439 = vmatprep.subr.bf16.mxu0 0
    %4440 = vmatpush1.bf16.msra.mxu0 0
    %4441 = vmatprep.subr.bf16.mxu0 0
    %4442 = vmatpush1.bf16.msra.mxu0 0
    %4443 = vmatprep.subr.bf16.mxu0 0
    %4444 = vmatpush1.bf16.msra.mxu0 0
    %4445 = vmatprep.subr.bf16.mxu0 0
    %4446 = vmatpush1.bf16.msra.mxu0 0
    %4447 = vmatprep.subr.bf16.mxu0 0
    %4448 = vmatpush1.bf16.msra.mxu0 0
    %4449 = vmatprep.subr.bf16.mxu0 0
    %4450 = vmatpush1.bf16.msra.mxu0 0
    %4451 = vmatprep.subr.bf16.mxu0 0
    %4452 = vmatpush1.bf16.msra.mxu0 0
    %4453 = vmatprep.mubr.bf16.mxu0 0
    %4454 = vmatmul.mubr.bf16.gmra.mrb[0].mxu0 %v4315
    %v4455 = vpop.f32.mrb[0].mxu0
    %v4456 = vadd.f32 0.0, %v4455
    %v4457 = vpop.f32.mrb[0].mxu0
    %v4458 = vadd.f32 0.0, %v4457
    %v4459 = vpop.f32.mrb[0].mxu0
    %v4460 = vpop.f32.mrb[0].mxu0
    %4461 = vdwg.mxu0
    %4462 = vmatprep.subr.bf16.mxu0 %v4321
    %4463 = vmatpush1.bf16.msra.mxu0 %v4320
    %4464 = vmatprep.subr.bf16.mxu0 %v4329
    %4465 = vmatpush1.bf16.msra.mxu0 %v4328
    %4466 = vmatprep.subr.bf16.mxu0 %v4337
    %4467 = vmatpush1.bf16.msra.mxu0 %v4336
    %4468 = vmatprep.subr.bf16.mxu0 %v4345
    %4469 = vmatpush1.bf16.msra.mxu0 %v4344
    %4470 = vmatprep.subr.bf16.mxu0 %v4353
    %4471 = vmatpush1.bf16.msra.mxu0 %v4352
    %4472 = vmatprep.subr.bf16.mxu0 %v4361
    %4473 = vmatpush1.bf16.msra.mxu0 %v4360
    %4474 = vmatprep.subr.bf16.mxu0 %v4369
    %4475 = vmatpush1.bf16.msra.mxu0 %v4368
    %4476 = vmatprep.subr.bf16.mxu0 %v4377
    %4477 = vmatpush1.bf16.msra.mxu0 %v4376
    %4478 = vmatprep.subr.bf16.mxu0 0
    %4479 = vmatpush1.bf16.msra.mxu0 0
    %4480 = vmatprep.subr.bf16.mxu0 0
    %4481 = vmatpush1.bf16.msra.mxu0 0
    %4482 = vmatprep.subr.bf16.mxu0 0
    %4483 = vmatpush1.bf16.msra.mxu0 0
    %4484 = vmatprep.subr.bf16.mxu0 0
    %4485 = vmatpush1.bf16.msra.mxu0 0
    %4486 = vmatprep.subr.bf16.mxu0 0
    %4487 = vmatpush1.bf16.msra.mxu0 0
    %4488 = vmatprep.subr.bf16.mxu0 0
    %4489 = vmatpush1.bf16.msra.mxu0 0
    %4490 = vmatprep.subr.bf16.mxu0 0
    %4491 = vmatpush1.bf16.msra.mxu0 0
    %4492 = vmatprep.subr.bf16.mxu0 0
    %4493 = vmatpush1.bf16.msra.mxu0 0
    %4494 = vmatprep.mubr.bf16.mxu0 0
    %4495 = vmatmul.mubr.bf16.gmra.mrb[0].mxu0 %v4315
    %v4496 = vpop.f32.mrb[0].mxu0
    %v4497 = vadd.f32 0.0, %v4496
    %v4498 = vpop.f32.mrb[0].mxu0
    %v4499 = vadd.f32 0.0, %v4498
    %v4500 = vpop.f32.mrb[0].mxu0
    %v4501 = vpop.f32.mrb[0].mxu0
    %4502 = vdwg.mxu0
    %4503 = vmatprep.subr.bf16.mxu0 %v4323
    %4504 = vmatpush1.bf16.msra.mxu0 %v4322
    %4505 = vmatprep.subr.bf16.mxu0 %v4331
    %4506 = vmatpush1.bf16.msra.mxu0 %v4330
    %4507 = vmatprep.subr.bf16.mxu0 %v4339
    %4508 = vmatpush1.bf16.msra.mxu0 %v4338
    %4509 = vmatprep.subr.bf16.mxu0 %v4347
    %4510 = vmatpush1.bf16.msra.mxu0 %v4346
    %4511 = vmatprep.subr.bf16.mxu0 %v4355
    %4512 = vmatpush1.bf16.msra.mxu0 %v4354
    %4513 = vmatprep.subr.bf16.mxu0 %v4363
    %4514 = vmatpush1.bf16.msra.mxu0 %v4362
    %4515 = vmatprep.subr.bf16.mxu0 %v4371
    %4516 = vmatpush1.bf16.msra.mxu0 %v4370
    %4517 = vmatprep.subr.bf16.mxu0 %v4379
    %4518 = vmatpush1.bf16.msra.mxu0 %v4378
    %4519 = vmatprep.subr.bf16.mxu0 0
    %4520 = vmatpush1.bf16.msra.mxu0 0
    %4521 = vmatprep.subr.bf16.mxu0 0
    %4522 = vmatpush1.bf16.msra.mxu0 0
    %4523 = vmatprep.subr.bf16.mxu0 0
    %4524 = vmatpush1.bf16.msra.mxu0 0
    %4525 = vmatprep.subr.bf16.mxu0 0
    %4526 = vmatpush1.bf16.msra.mxu0 0
    %4527 = vmatprep.subr.bf16.mxu0 0
    %4528 = vmatpush1.bf16.msra.mxu0 0
    %4529 = vmatprep.subr.bf16.mxu0 0
    %4530 = vmatpush1.bf16.msra.mxu0 0
    %4531 = vmatprep.subr.bf16.mxu0 0
    %4532 = vmatpush1.bf16.msra.mxu0 0
    %4533 = vmatprep.subr.bf16.mxu0 0
    %4534 = vmatpush1.bf16.msra.mxu0 0
    %4535 = vmatprep.mubr.bf16.mxu0 0
    %4536 = vmatmul.mubr.bf16.gmra.mrb[0].mxu0 %v4315
    %v4537 = vpop.f32.mrb[0].mxu0
    %v4538 = vadd.f32 0.0, %v4537
    %v4539 = vpop.f32.mrb[0].mxu0
    %v4540 = vadd.f32 0.0, %v4539
    %v4541 = vpop.f32.mrb[0].mxu0
    %v4542 = vpop.f32.mrb[0].mxu0
    %4543 = vdwg.mxu0
    %4544 = vmatprep.subr.bf16.mxu0 %v4252
    %4545 = vmatpush1.bf16.msra.mxu0 %v4251
    %4546 = vmatprep.subr.bf16.mxu0 %v4260
    %4547 = vmatpush1.bf16.msra.mxu0 %v4259
    %4548 = vmatprep.subr.bf16.mxu0 %v4268
    %4549 = vmatpush1.bf16.msra.mxu0 %v4267
    %4550 = vmatprep.subr.bf16.mxu0 %v4276
    %4551 = vmatpush1.bf16.msra.mxu0 %v4275
    %4552 = vmatprep.subr.bf16.mxu0 %v4284
    %4553 = vmatpush1.bf16.msra.mxu0 %v4283
    %4554 = vmatprep.subr.bf16.mxu0 %v4292
    %4555 = vmatpush1.bf16.msra.mxu0 %v4291
    %4556 = vmatprep.subr.bf16.mxu0 %v4300
    %4557 = vmatpush1.bf16.msra.mxu0 %v4299
    %4558 = vmatprep.subr.bf16.mxu0 %v4308
    %4559 = vmatpush1.bf16.msra.mxu0 %v4307
    %4560 = vmatprep.subr.bf16.mxu0 0
    %4561 = vmatpush1.bf16.msra.mxu0 0
    %4562 = vmatprep.subr.bf16.mxu0 0
    %4563 = vmatpush1.bf16.msra.mxu0 0
    %4564 = vmatprep.subr.bf16.mxu0 0
    %4565 = vmatpush1.bf16.msra.mxu0 0
    %4566 = vmatprep.subr.bf16.mxu0 0
    %4567 = vmatpush1.bf16.msra.mxu0 0
    %4568 = vmatprep.subr.bf16.mxu0 0
    %4569 = vmatpush1.bf16.msra.mxu0 0
    %4570 = vmatprep.subr.bf16.mxu0 0
    %4571 = vmatpush1.bf16.msra.mxu0 0
    %4572 = vmatprep.subr.bf16.mxu0 0
    %4573 = vmatpush1.bf16.msra.mxu0 0
    %4574 = vmatprep.subr.bf16.mxu0 0
    %4575 = vmatpush1.bf16.msra.mxu0 0
    %4576 = vmatprep.mubr.bf16.mxu0 0
    %4577 = vmatmul.mubr.bf16.gmra.mrb[0].mxu0 %v4250
    %v4578 = vpop.f32.mrb[0].mxu0
    %v4579 = vadd.f32 %v4415, %v4578
    %v4580 = vpop.f32.mrb[0].mxu0
    %v4581 = vadd.f32 %v4417, %v4580
    %v4582 = vpop.f32.mrb[0].mxu0
    %v4583 = vpop.f32.mrb[0].mxu0
    %4584 = vdwg.mxu0
    %4585 = vmatprep.subr.bf16.mxu0 %v4254
    %4586 = vmatpush1.bf16.msra.mxu0 %v4253
    %4587 = vmatprep.subr.bf16.mxu0 %v4262
    %4588 = vmatpush1.bf16.msra.mxu0 %v4261
    %4589 = vmatprep.subr.bf16.mxu0 %v4270
    %4590 = vmatpush1.bf16.msra.mxu0 %v4269
    %4591 = vmatprep.subr.bf16.mxu0 %v4278
    %4592 = vmatpush1.bf16.msra.mxu0 %v4277
    %4593 = vmatprep.subr.bf16.mxu0 %v4286
    %4594 = vmatpush1.bf16.msra.mxu0 %v4285
    %4595 = vmatprep.subr.bf16.mxu0 %v4294
    %4596 = vmatpush1.bf16.msra.mxu0 %v4293
    %4597 = vmatprep.subr.bf16.mxu0 %v4302
    %4598 = vmatpush1.bf16.msra.mxu0 %v4301
    %4599 = vmatprep.subr.bf16.mxu0 %v4310
    %4600 = vmatpush1.bf16.msra.mxu0 %v4309
    %4601 = vmatprep.subr.bf16.mxu0 0
    %4602 = vmatpush1.bf16.msra.mxu0 0
    %4603 = vmatprep.subr.bf16.mxu0 0
    %4604 = vmatpush1.bf16.msra.mxu0 0
    %4605 = vmatprep.subr.bf16.mxu0 0
    %4606 = vmatpush1.bf16.msra.mxu0 0
    %4607 = vmatprep.subr.bf16.mxu0 0
    %4608 = vmatpush1.bf16.msra.mxu0 0
    %4609 = vmatprep.subr.bf16.mxu0 0
    %4610 = vmatpush1.bf16.msra.mxu0 0
    %4611 = vmatprep.subr.bf16.mxu0 0
    %4612 = vmatpush1.bf16.msra.mxu0 0
    %4613 = vmatprep.subr.bf16.mxu0 0
    %4614 = vmatpush1.bf16.msra.mxu0 0
    %4615 = vmatprep.subr.bf16.mxu0 0
    %4616 = vmatpush1.bf16.msra.mxu0 0
    %4617 = vmatprep.mubr.bf16.mxu0 0
    %4618 = vmatmul.mubr.bf16.gmra.mrb[0].mxu0 %v4250
    %v4619 = vpop.f32.mrb[0].mxu0
    %v4620 = vadd.f32 %v4456, %v4619
    %v4621 = vpop.f32.mrb[0].mxu0
    %v4622 = vadd.f32 %v4458, %v4621
    %v4623 = vpop.f32.mrb[0].mxu0
    %v4624 = vpop.f32.mrb[0].mxu0
    %4625 = vdwg.mxu0
    %4626 = vmatprep.subr.bf16.mxu0 %v4256
    %4627 = vmatpush1.bf16.msra.mxu0 %v4255
    %4628 = vmatprep.subr.bf16.mxu0 %v4264
    %4629 = vmatpush1.bf16.msra.mxu0 %v4263
    %4630 = vmatprep.subr.bf16.mxu0 %v4272
    %4631 = vmatpush1.bf16.msra.mxu0 %v4271
    %4632 = vmatprep.subr.bf16.mxu0 %v4280
    %4633 = vmatpush1.bf16.msra.mxu0 %v4279
    %4634 = vmatprep.subr.bf16.mxu0 %v4288
    %4635 = vmatpush1.bf16.msra.mxu0 %v4287
    %4636 = vmatprep.subr.bf16.mxu0 %v4296
    %4637 = vmatpush1.bf16.msra.mxu0 %v4295
    %4638 = vmatprep.subr.bf16.mxu0 %v4304
    %4639 = vmatpush1.bf16.msra.mxu0 %v4303
    %4640 = vmatprep.subr.bf16.mxu0 %v4312
    %4641 = vmatpush1.bf16.msra.mxu0 %v4311
    %4642 = vmatprep.subr.bf16.mxu0 0
    %4643 = vmatpush1.bf16.msra.mxu0 0
    %4644 = vmatprep.subr.bf16.mxu0 0
    %4645 = vmatpush1.bf16.msra.mxu0 0
    %4646 = vmatprep.subr.bf16.mxu0 0
    %4647 = vmatpush1.bf16.msra.mxu0 0
    %4648 = vmatprep.subr.bf16.mxu0 0
    %4649 = vmatpush1.bf16.msra.mxu0 0
    %4650 = vmatprep.subr.bf16.mxu0 0
    %4651 = vmatpush1.bf16.msra.mxu0 0
    %4652 = vmatprep.subr.bf16.mxu0 0
    %4653 = vmatpush1.bf16.msra.mxu0 0
    %4654 = vmatprep.subr.bf16.mxu0 0
    %4655 = vmatpush1.bf16.msra.mxu0 0
    %4656 = vmatprep.subr.bf16.mxu0 0
    %4657 = vmatpush1.bf16.msra.mxu0 0
    %4658 = vmatprep.mubr.bf16.mxu0 0
    %4659 = vmatmul.mubr.bf16.gmra.mrb[0].mxu0 %v4250
    %v4660 = vpop.f32.mrb[0].mxu0
    %v4661 = vadd.f32 %v4497, %v4660
    %v4662 = vpop.f32.mrb[0].mxu0
    %v4663 = vadd.f32 %v4499, %v4662
    %v4664 = vpop.f32.mrb[0].mxu0
    %v4665 = vpop.f32.mrb[0].mxu0
    %4666 = vdwg.mxu0
    %4667 = vmatprep.subr.bf16.mxu0 %v4258
    %4668 = vmatpush1.bf16.msra.mxu0 %v4257
    %4669 = vmatprep.subr.bf16.mxu0 %v4266
    %4670 = vmatpush1.bf16.msra.mxu0 %v4265
    %4671 = vmatprep.subr.bf16.mxu0 %v4274
    %4672 = vmatpush1.bf16.msra.mxu0 %v4273
    %4673 = vmatprep.subr.bf16.mxu0 %v4282
    %4674 = vmatpush1.bf16.msra.mxu0 %v4281
    %4675 = vmatprep.subr.bf16.mxu0 %v4290
    %4676 = vmatpush1.bf16.msra.mxu0 %v4289
    %4677 = vmatprep.subr.bf16.mxu0 %v4298
    %4678 = vmatpush1.bf16.msra.mxu0 %v4297
    %4679 = vmatprep.subr.bf16.mxu0 %v4306
    %4680 = vmatpush1.bf16.msra.mxu0 %v4305
    %4681 = vmatprep.subr.bf16.mxu0 %v4314
    %4682 = vmatpush1.bf16.msra.mxu0 %v4313
    %4683 = vmatprep.subr.bf16.mxu0 0
    %4684 = vmatpush1.bf16.msra.mxu0 0
    %4685 = vmatprep.subr.bf16.mxu0 0
    %4686 = vmatpush1.bf16.msra.mxu0 0
    %4687 = vmatprep.subr.bf16.mxu0 0
    %4688 = vmatpush1.bf16.msra.mxu0 0
    %4689 = vmatprep.subr.bf16.mxu0 0
    %4690 = vmatpush1.bf16.msra.mxu0 0
    %4691 = vmatprep.subr.bf16.mxu0 0
    %4692 = vmatpush1.bf16.msra.mxu0 0
    %4693 = vmatprep.subr.bf16.mxu0 0
    %4694 = vmatpush1.bf16.msra.mxu0 0
    %4695 = vmatprep.subr.bf16.mxu0 0
    %4696 = vmatpush1.bf16.msra.mxu0 0
    %4697 = vmatprep.subr.bf16.mxu0 0
    %4698 = vmatpush1.bf16.msra.mxu0 0
    %4699 = vmatprep.mubr.bf16.mxu0 0
    %4700 = vmatmul.mubr.bf16.gmra.mrb[0].mxu0 %v4250
    %v4701 = vpop.f32.mrb[0].mxu0
    %v4702 = vadd.f32 %v4538, %v4701
    %v4703 = vpop.f32.mrb[0].mxu0
    %v4704 = vadd.f32 %v4540, %v4703
    %v4705 = vpop.f32.mrb[0].mxu0
    %v4706 = vpop.f32.mrb[0].mxu0
    %4707 = vdwg.mxu0
    %v4708 = vld [vmem:[%s20] sm:$0xff]
    %v4710 = vlaneseq
    %v4711 = vshrl.u32 %v4710, 7
    %v4712 = vsub.s32 0, %v4711
    %v4713 = vrot.slane %v4708, %v4712
    %v4714 = vlaneseq
    %v4715 = vshrl.u32 %v4714, 7
    %v4716 = vsub.s32 1, %v4715
    %v4717 = vrot.slane %v4708, %v4716
    %v4718 = vlaneseq
    %v4719 = vshrl.u32 %v4718, 7
    %v4720 = vsub.s32 2, %v4719
    %v4721 = vrot.slane %v4708, %v4720
    %v4722 = vlaneseq
    %v4723 = vshrl.u32 %v4722, 7
    %v4724 = vsub.s32 3, %v4723
    %v4725 = vrot.slane %v4708, %v4724
    %v4726 = vlaneseq
    %v4727 = vshrl.u32 %v4726, 7
    %v4728 = vsub.s32 4, %v4727
    %v4729 = vrot.slane %v4708, %v4728
    %v4730 = vlaneseq
    %v4731 = vshrl.u32 %v4730, 7
    %v4732 = vsub.s32 5, %v4731
    %v4733 = vrot.slane %v4708, %v4732
    %v4734 = vlaneseq
    %v4735 = vshrl.u32 %v4734, 7
    %v4736 = vsub.s32 6, %v4735
    %v4737 = vrot.slane %v4708, %v4736
    %v4738 = vlaneseq
    %v4739 = vshrl.u32 %v4738, 7
    %v4740 = vsub.s32 7, %v4739
    %v4741 = vrot.slane %v4708, %v4740
    %v4750 = vadd.f32 %v4579, %v4713
    %v4751 = vadd.f32 %v4581, %v4717
    %v4752 = vadd.f32 %v4620, %v4721
    %v4753 = vadd.f32 %v4622, %v4725
    %v4754 = vadd.f32 %v4661, %v4729
    %v4755 = vadd.f32 %v4663, %v4733
    %v4756 = vadd.f32 %v4702, %v4737
    %v4757 = vadd.f32 %v4704, %v4741
    %v4758 = vmax.f32 %v4750, 0.0
    %v4759 = vmax.f32 %v4751, 0.0
    %v4760 = vmax.f32 %v4752, 0.0
    %v4761 = vmax.f32 %v4753, 0.0
    %v4762 = vmax.f32 %v4754, 0.0
    %v4763 = vmax.f32 %v4755, 0.0
    %v4764 = vmax.f32 %v4756, 0.0
    %v4765 = vmax.f32 %v4757, 0.0
    %v4766 = vpack.c.bf16 %v4758, %v4758
    %v4767 = vpack.c.bf16 %v4759, %v4759
    %v4768 = vpack.c.bf16 %v4760, %v4760
    %v4769 = vpack.c.bf16 %v4761, %v4761
    %v4770 = vpack.c.bf16 %v4762, %v4762
    %v4771 = vpack.c.bf16 %v4763, %v4763
    %v4772 = vpack.c.bf16 %v4764, %v4764
    %v4773 = vpack.c.bf16 %v4765, %v4765
    %v4774 = vld [vmem:[#allocation3] sm:$0xff]
    %v4775 = vld [vmem:[#allocation3 + $0x8] sm:$0xff]
    %v4776 = vld [vmem:[#allocation3 + $0x10] sm:$0xff]
    %v4777 = vld [vmem:[#allocation3 + $0x18] sm:$0xff]
    %v4778 = vld [vmem:[#allocation3 + $0x20] sm:$0xff]
    %v4779 = vld [vmem:[#allocation3 + $0x28] sm:$0xff]
    %v4780 = vld [vmem:[#allocation3 + $0x30] sm:$0xff]
    %v4781 = vld [vmem:[#allocation3 + $0x38] sm:$0xff]
    %v4782 = vld [vmem:[#allocation3 + $0x40] sm:$0xff]
    %v4783 = vld [vmem:[#allocation3 + $0x48] sm:$0xff]
    %v4784 = vld [vmem:[#allocation3 + $0x50] sm:$0xff]
    %v4785 = vld [vmem:[#allocation3 + $0x58] sm:$0xff]
    %v4786 = vld [vmem:[#allocation3 + $0x60] sm:$0xff]
    %v4787 = vld [vmem:[#allocation3 + $0x68] sm:$0xff]
    %v4788 = vld [vmem:[#allocation3 + $0x70] sm:$0xff]
    %v4789 = vld [vmem:[#allocation3 + $0x78] sm:$0xff]
    %v4790 = vld [vmem:[#allocation3 + $0x80] sm:$0xff]
    %v4791 = vld [vmem:[#allocation3 + $0x88] sm:$0xff]
    %v4792 = vld [vmem:[#allocation3 + $0x90] sm:$0xff]
    %v4793 = vld [vmem:[#allocation3 + $0x98] sm:$0xff]
    %v4794 = vld [vmem:[#allocation3 + $0xa0] sm:$0xff]
    %v4795 = vld [vmem:[#allocation3 + $0xa8] sm:$0xff]
    %v4796 = vld [vmem:[#allocation3 + $0xb0] sm:$0xff]
    %v4797 = vld [vmem:[#allocation3 + $0xb8] sm:$0xff]
    %v4798 = vld [vmem:[#allocation3 + $0xc0] sm:$0xff]
    %v4799 = vld [vmem:[#allocation3 + $0xc8] sm:$0xff]
    %v4800 = vld [vmem:[#allocation3 + $0xd0] sm:$0xff]
    %v4801 = vld [vmem:[#allocation3 + $0xd8] sm:$0xff]
    %v4802 = vld [vmem:[#allocation3 + $0xe0] sm:$0xff]
    %v4803 = vld [vmem:[#allocation3 + $0xe8] sm:$0xff]
    %v4804 = vld [vmem:[#allocation3 + $0xf0] sm:$0xff]
    %v4805 = vld [vmem:[#allocation3 + $0xf8] sm:$0xff]
    %v4806 = vld [vmem:[#allocation3 + $0x100] sm:$0xff]
    %v4807 = vld [vmem:[#allocation3 + $0x108] sm:$0xff]
    %v4808 = vld [vmem:[#allocation3 + $0x110] sm:$0xff]
    %v4809 = vld [vmem:[#allocation3 + $0x118] sm:$0xff]
    %v4810 = vld [vmem:[#allocation3 + $0x120] sm:$0xff]
    %v4811 = vld [vmem:[#allocation3 + $0x128] sm:$0xff]
    %v4812 = vld [vmem:[#allocation3 + $0x130] sm:$0xff]
    %v4813 = vld [vmem:[#allocation3 + $0x138] sm:$0xff]
    %v4814 = vld [vmem:[#allocation3 + $0x140] sm:$0xff]
    %v4815 = vld [vmem:[#allocation3 + $0x148] sm:$0xff]
    %v4816 = vld [vmem:[#allocation3 + $0x150] sm:$0xff]
    %v4817 = vld [vmem:[#allocation3 + $0x158] sm:$0xff]
    %v4818 = vld [vmem:[#allocation3 + $0x160] sm:$0xff]
    %v4819 = vld [vmem:[#allocation3 + $0x168] sm:$0xff]
    %v4820 = vld [vmem:[#allocation3 + $0x170] sm:$0xff]
    %v4821 = vld [vmem:[#allocation3 + $0x178] sm:$0xff]
    %v4822 = vld [vmem:[#allocation3 + $0x180] sm:$0xff]
    %v4823 = vld [vmem:[#allocation3 + $0x188] sm:$0xff]
    %v4824 = vld [vmem:[#allocation3 + $0x190] sm:$0xff]
    %v4825 = vld [vmem:[#allocation3 + $0x198] sm:$0xff]
    %v4826 = vld [vmem:[#allocation3 + $0x1a0] sm:$0xff]
    %v4827 = vld [vmem:[#allocation3 + $0x1a8] sm:$0xff]
    %v4828 = vld [vmem:[#allocation3 + $0x1b0] sm:$0xff]
    %v4829 = vld [vmem:[#allocation3 + $0x1b8] sm:$0xff]
    %v4830 = vld [vmem:[#allocation3 + $0x1c0] sm:$0xff]
    %v4831 = vld [vmem:[#allocation3 + $0x1c8] sm:$0xff]
    %v4832 = vld [vmem:[#allocation3 + $0x1d0] sm:$0xff]
    %v4833 = vld [vmem:[#allocation3 + $0x1d8] sm:$0xff]
    %v4834 = vld [vmem:[#allocation3 + $0x1e0] sm:$0xff]
    %v4835 = vld [vmem:[#allocation3 + $0x1e8] sm:$0xff]
    %v4836 = vld [vmem:[#allocation3 + $0x1f0] sm:$0xff]
    %v4837 = vld [vmem:[#allocation3 + $0x1f8] sm:$0xff]
    %v4838 = vld [vmem:[#allocation3 + $0x200] sm:$0xff]
    %v4839 = vld [vmem:[#allocation3 + $0x208] sm:$0xff]
    %v4840 = vld [vmem:[#allocation3 + $0x210] sm:$0xff]
    %v4841 = vld [vmem:[#allocation3 + $0x218] sm:$0xff]
    %v4842 = vld [vmem:[#allocation3 + $0x220] sm:$0xff]
    %v4843 = vld [vmem:[#allocation3 + $0x228] sm:$0xff]
    %v4844 = vld [vmem:[#allocation3 + $0x230] sm:$0xff]
    %v4845 = vld [vmem:[#allocation3 + $0x238] sm:$0xff]
    %v4846 = vld [vmem:[#allocation3 + $0x240] sm:$0xff]
    %v4847 = vld [vmem:[#allocation3 + $0x248] sm:$0xff]
    %v4848 = vld [vmem:[#allocation3 + $0x250] sm:$0xff]
    %v4849 = vld [vmem:[#allocation3 + $0x258] sm:$0xff]
    %v4850 = vld [vmem:[#allocation3 + $0x260] sm:$0xff]
    %v4851 = vld [vmem:[#allocation3 + $0x268] sm:$0xff]
    %v4852 = vld [vmem:[#allocation3 + $0x270] sm:$0xff]
    %v4853 = vld [vmem:[#allocation3 + $0x278] sm:$0xff]
    %v4854 = vld [vmem:[#allocation3 + $0x280] sm:$0xff]
    %v4855 = vld [vmem:[#allocation3 + $0x288] sm:$0xff]
    %v4856 = vld [vmem:[#allocation3 + $0x290] sm:$0xff]
    %v4857 = vld [vmem:[#allocation3 + $0x298] sm:$0xff]
    %v4858 = vld [vmem:[#allocation3 + $0x2a0] sm:$0xff]
    %v4859 = vld [vmem:[#allocation3 + $0x2a8] sm:$0xff]
    %v4860 = vld [vmem:[#allocation3 + $0x2b0] sm:$0xff]
    %v4861 = vld [vmem:[#allocation3 + $0x2b8] sm:$0xff]
    %v4862 = vld [vmem:[#allocation3 + $0x2c0] sm:$0xff]
    %v4863 = vld [vmem:[#allocation3 + $0x2c8] sm:$0xff]
    %v4864 = vld [vmem:[#allocation3 + $0x2d0] sm:$0xff]
    %v4865 = vld [vmem:[#allocation3 + $0x2d8] sm:$0xff]
    %v4866 = vld [vmem:[#allocation3 + $0x2e0] sm:$0xff]
    %v4867 = vld [vmem:[#allocation3 + $0x2e8] sm:$0xff]
    %v4868 = vld [vmem:[#allocation3 + $0x2f0] sm:$0xff]
    %v4869 = vld [vmem:[#allocation3 + $0x2f8] sm:$0xff]
    %v4870 = vld [vmem:[#allocation3 + $0x300] sm:$0xff]
    %v4871 = vld [vmem:[#allocation3 + $0x308] sm:$0xff]
    %v4872 = vld [vmem:[#allocation3 + $0x310] sm:$0xff]
    %v4873 = vld [vmem:[#allocation3 + $0x318] sm:$0xff]
    %v4874 = vld [vmem:[#allocation3 + $0x320] sm:$0xff]
    %v4875 = vld [vmem:[#allocation3 + $0x328] sm:$0xff]
    %v4876 = vld [vmem:[#allocation3 + $0x330] sm:$0xff]
    %v4877 = vld [vmem:[#allocation3 + $0x338] sm:$0xff]
    %v4878 = vld [vmem:[#allocation3 + $0x340] sm:$0xff]
    %v4879 = vld [vmem:[#allocation3 + $0x348] sm:$0xff]
    %v4880 = vld [vmem:[#allocation3 + $0x350] sm:$0xff]
    %v4881 = vld [vmem:[#allocation3 + $0x358] sm:$0xff]
    %v4882 = vld [vmem:[#allocation3 + $0x360] sm:$0xff]
    %v4883 = vld [vmem:[#allocation3 + $0x368] sm:$0xff]
    %v4884 = vld [vmem:[#allocation3 + $0x370] sm:$0xff]
    %v4885 = vld [vmem:[#allocation3 + $0x378] sm:$0xff]
    %v4886 = vld [vmem:[#allocation3 + $0x380] sm:$0xff]
    %v4887 = vld [vmem:[#allocation3 + $0x388] sm:$0xff]
    %v4888 = vld [vmem:[#allocation3 + $0x390] sm:$0xff]
    %v4889 = vld [vmem:[#allocation3 + $0x398] sm:$0xff]
    %v4890 = vld [vmem:[#allocation3 + $0x3a0] sm:$0xff]
    %v4891 = vld [vmem:[#allocation3 + $0x3a8] sm:$0xff]
    %v4892 = vld [vmem:[#allocation3 + $0x3b0] sm:$0xff]
    %v4893 = vld [vmem:[#allocation3 + $0x3b8] sm:$0xff]
    %v4894 = vld [vmem:[#allocation3 + $0x3c0] sm:$0xff]
    %v4895 = vld [vmem:[#allocation3 + $0x3c8] sm:$0xff]
    %v4896 = vld [vmem:[#allocation3 + $0x3d0] sm:$0xff]
    %v4897 = vld [vmem:[#allocation3 + $0x3d8] sm:$0xff]
    %v4898 = vld [vmem:[#allocation3 + $0x3e0] sm:$0xff]
    %v4899 = vld [vmem:[#allocation3 + $0x3e8] sm:$0xff]
    %v4900 = vld [vmem:[#allocation3 + $0x3f0] sm:$0xff]
    %v4901 = vld [vmem:[#allocation3 + $0x3f8] sm:$0xff]
    %v4902 = vld [vmem:[#allocation3 + $0x400] sm:$0xff]
    %v4903 = vld [vmem:[#allocation3 + $0x408] sm:$0xff]
    %v4904 = vld [vmem:[#allocation3 + $0x410] sm:$0xff]
    %v4905 = vld [vmem:[#allocation3 + $0x418] sm:$0xff]
    %v4906 = vld [vmem:[#allocation3 + $0x420] sm:$0xff]
    %v4907 = vld [vmem:[#allocation3 + $0x428] sm:$0xff]
    %v4908 = vld [vmem:[#allocation3 + $0x430] sm:$0xff]
    %v4909 = vld [vmem:[#allocation3 + $0x438] sm:$0xff]
    %v4910 = vld [vmem:[#allocation3 + $0x440] sm:$0xff]
    %v4911 = vld [vmem:[#allocation3 + $0x448] sm:$0xff]
    %v4912 = vld [vmem:[#allocation3 + $0x450] sm:$0xff]
    %v4913 = vld [vmem:[#allocation3 + $0x458] sm:$0xff]
    %v4914 = vld [vmem:[#allocation3 + $0x460] sm:$0xff]
    %v4915 = vld [vmem:[#allocation3 + $0x468] sm:$0xff]
    %v4916 = vld [vmem:[#allocation3 + $0x470] sm:$0xff]
    %v4917 = vld [vmem:[#allocation3 + $0x478] sm:$0xff]
    %v4918 = vld [vmem:[#allocation3 + $0x480] sm:$0xff]
    %v4919 = vld [vmem:[#allocation3 + $0x488] sm:$0xff]
    %v4920 = vld [vmem:[#allocation3 + $0x490] sm:$0xff]
    %v4921 = vld [vmem:[#allocation3 + $0x498] sm:$0xff]
    %v4922 = vld [vmem:[#allocation3 + $0x4a0] sm:$0xff]
    %v4923 = vld [vmem:[#allocation3 + $0x4a8] sm:$0xff]
    %v4924 = vld [vmem:[#allocation3 + $0x4b0] sm:$0xff]
    %v4925 = vld [vmem:[#allocation3 + $0x4b8] sm:$0xff]
    %v4926 = vld [vmem:[#allocation3 + $0x4c0] sm:$0xff]
    %v4927 = vld [vmem:[#allocation3 + $0x4c8] sm:$0xff]
    %v4928 = vld [vmem:[#allocation3 + $0x4d0] sm:$0xff]
    %v4929 = vld [vmem:[#allocation3 + $0x4d8] sm:$0xff]
    %v4930 = vld [vmem:[#allocation3 + $0x4e0] sm:$0xff]
    %v4931 = vld [vmem:[#allocation3 + $0x4e8] sm:$0xff]
    %v4932 = vld [vmem:[#allocation3 + $0x4f0] sm:$0xff]
    %v4933 = vld [vmem:[#allocation3 + $0x4f8] sm:$0xff]
    %v4934 = vld [vmem:[#allocation3 + $0x500] sm:$0xff]
    %v4935 = vld [vmem:[#allocation3 + $0x508] sm:$0xff]
    %v4936 = vld [vmem:[#allocation3 + $0x510] sm:$0xff]
    %v4937 = vld [vmem:[#allocation3 + $0x518] sm:$0xff]
    %v4938 = vld [vmem:[#allocation3 + $0x520] sm:$0xff]
    %v4939 = vld [vmem:[#allocation3 + $0x528] sm:$0xff]
    %v4940 = vld [vmem:[#allocation3 + $0x530] sm:$0xff]
    %v4941 = vld [vmem:[#allocation3 + $0x538] sm:$0xff]
    %v4942 = vld [vmem:[#allocation3 + $0x540] sm:$0xff]
    %v4943 = vld [vmem:[#allocation3 + $0x548] sm:$0xff]
    %v4944 = vld [vmem:[#allocation3 + $0x550] sm:$0xff]
    %v4945 = vld [vmem:[#allocation3 + $0x558] sm:$0xff]
    %v4946 = vld [vmem:[#allocation3 + $0x560] sm:$0xff]
    %v4947 = vld [vmem:[#allocation3 + $0x568] sm:$0xff]
    %v4948 = vld [vmem:[#allocation3 + $0x570] sm:$0xff]
    %v4949 = vld [vmem:[#allocation3 + $0x578] sm:$0xff]
    %v4950 = vld [vmem:[#allocation3 + $0x580] sm:$0xff]
    %v4951 = vld [vmem:[#allocation3 + $0x588] sm:$0xff]
    %v4952 = vld [vmem:[#allocation3 + $0x590] sm:$0xff]
    %v4953 = vld [vmem:[#allocation3 + $0x598] sm:$0xff]
    %v4954 = vld [vmem:[#allocation3 + $0x5a0] sm:$0xff]
    %v4955 = vld [vmem:[#allocation3 + $0x5a8] sm:$0xff]
    %v4956 = vld [vmem:[#allocation3 + $0x5b0] sm:$0xff]
    %v4957 = vld [vmem:[#allocation3 + $0x5b8] sm:$0xff]
    %v4958 = vld [vmem:[#allocation3 + $0x5c0] sm:$0xff]
    %v4959 = vld [vmem:[#allocation3 + $0x5c8] sm:$0xff]
    %v4960 = vld [vmem:[#allocation3 + $0x5d0] sm:$0xff]
    %v4961 = vld [vmem:[#allocation3 + $0x5d8] sm:$0xff]
    %v4962 = vld [vmem:[#allocation3 + $0x5e0] sm:$0xff]
    %v4963 = vld [vmem:[#allocation3 + $0x5e8] sm:$0xff]
    %v4964 = vld [vmem:[#allocation3 + $0x5f0] sm:$0xff]
    %v4965 = vld [vmem:[#allocation3 + $0x5f8] sm:$0xff]
    %v4966 = vld [vmem:[#allocation3 + $0x600] sm:$0xff]
    %v4967 = vld [vmem:[#allocation3 + $0x608] sm:$0xff]
    %v4968 = vld [vmem:[#allocation3 + $0x610] sm:$0xff]
    %v4969 = vld [vmem:[#allocation3 + $0x618] sm:$0xff]
    %v4970 = vld [vmem:[#allocation3 + $0x620] sm:$0xff]
    %v4971 = vld [vmem:[#allocation3 + $0x628] sm:$0xff]
    %v4972 = vld [vmem:[#allocation3 + $0x630] sm:$0xff]
    %v4973 = vld [vmem:[#allocation3 + $0x638] sm:$0xff]
    %v4974 = vld [vmem:[#allocation3 + $0x640] sm:$0xff]
    %v4975 = vld [vmem:[#allocation3 + $0x648] sm:$0xff]
    %v4976 = vld [vmem:[#allocation3 + $0x650] sm:$0xff]
    %v4977 = vld [vmem:[#allocation3 + $0x658] sm:$0xff]
    %v4978 = vld [vmem:[#allocation3 + $0x660] sm:$0xff]
    %v4979 = vld [vmem:[#allocation3 + $0x668] sm:$0xff]
    %v4980 = vld [vmem:[#allocation3 + $0x670] sm:$0xff]
    %v4981 = vld [vmem:[#allocation3 + $0x678] sm:$0xff]
    %v4982 = vld [vmem:[#allocation3 + $0x680] sm:$0xff]
    %v4983 = vld [vmem:[#allocation3 + $0x688] sm:$0xff]
    %v4984 = vld [vmem:[#allocation3 + $0x690] sm:$0xff]
    %v4985 = vld [vmem:[#allocation3 + $0x698] sm:$0xff]
    %v4986 = vld [vmem:[#allocation3 + $0x6a0] sm:$0xff]
    %v4987 = vld [vmem:[#allocation3 + $0x6a8] sm:$0xff]
    %v4988 = vld [vmem:[#allocation3 + $0x6b0] sm:$0xff]
    %v4989 = vld [vmem:[#allocation3 + $0x6b8] sm:$0xff]
    %v4990 = vld [vmem:[#allocation3 + $0x6c0] sm:$0xff]
    %v4991 = vld [vmem:[#allocation3 + $0x6c8] sm:$0xff]
    %v4992 = vld [vmem:[#allocation3 + $0x6d0] sm:$0xff]
    %v4993 = vld [vmem:[#allocation3 + $0x6d8] sm:$0xff]
    %v4994 = vld [vmem:[#allocation3 + $0x6e0] sm:$0xff]
    %v4995 = vld [vmem:[#allocation3 + $0x6e8] sm:$0xff]
    %v4996 = vld [vmem:[#allocation3 + $0x6f0] sm:$0xff]
    %v4997 = vld [vmem:[#allocation3 + $0x6f8] sm:$0xff]
    %v4998 = vld [vmem:[#allocation3 + $0x700] sm:$0xff]
    %v4999 = vld [vmem:[#allocation3 + $0x708] sm:$0xff]
    %v5000 = vld [vmem:[#allocation3 + $0x710] sm:$0xff]
    %v5001 = vld [vmem:[#allocation3 + $0x718] sm:$0xff]
    %v5002 = vld [vmem:[#allocation3 + $0x720] sm:$0xff]
    %v5003 = vld [vmem:[#allocation3 + $0x728] sm:$0xff]
    %v5004 = vld [vmem:[#allocation3 + $0x730] sm:$0xff]
    %v5005 = vld [vmem:[#allocation3 + $0x738] sm:$0xff]
    %v5006 = vld [vmem:[#allocation3 + $0x740] sm:$0xff]
    %v5007 = vld [vmem:[#allocation3 + $0x748] sm:$0xff]
    %v5008 = vld [vmem:[#allocation3 + $0x750] sm:$0xff]
    %v5009 = vld [vmem:[#allocation3 + $0x758] sm:$0xff]
    %v5010 = vld [vmem:[#allocation3 + $0x760] sm:$0xff]
    %v5011 = vld [vmem:[#allocation3 + $0x768] sm:$0xff]
    %v5012 = vld [vmem:[#allocation3 + $0x770] sm:$0xff]
    %v5013 = vld [vmem:[#allocation3 + $0x778] sm:$0xff]
    %v5014 = vld [vmem:[#allocation3 + $0x780] sm:$0xff]
    %v5015 = vld [vmem:[#allocation3 + $0x788] sm:$0xff]
    %v5016 = vld [vmem:[#allocation3 + $0x790] sm:$0xff]
    %v5017 = vld [vmem:[#allocation3 + $0x798] sm:$0xff]
    %v5018 = vld [vmem:[#allocation3 + $0x7a0] sm:$0xff]
    %v5019 = vld [vmem:[#allocation3 + $0x7a8] sm:$0xff]
    %v5020 = vld [vmem:[#allocation3 + $0x7b0] sm:$0xff]
    %v5021 = vld [vmem:[#allocation3 + $0x7b8] sm:$0xff]
    %v5022 = vld [vmem:[#allocation3 + $0x7c0] sm:$0xff]
    %v5023 = vld [vmem:[#allocation3 + $0x7c8] sm:$0xff]
    %v5024 = vld [vmem:[#allocation3 + $0x7d0] sm:$0xff]
    %v5025 = vld [vmem:[#allocation3 + $0x7d8] sm:$0xff]
    %v5026 = vld [vmem:[#allocation3 + $0x7e0] sm:$0xff]
    %v5027 = vld [vmem:[#allocation3 + $0x7e8] sm:$0xff]
    %v5028 = vld [vmem:[#allocation3 + $0x7f0] sm:$0xff]
    %v5029 = vld [vmem:[#allocation3 + $0x7f8] sm:$0xff]
    %v5030 = vld [vmem:[%s21] sm:$0xf]
    %v5032 = vlaneseq
    %v5033 = vshrl.u32 %v5032, 7
    %v5034 = vsub.s32 0, %v5033
    %v5035 = vrot.slane %v5030, %v5034
    %v5036 = vlaneseq
    %v5037 = vshrl.u32 %v5036, 7
    %v5038 = vsub.s32 1, %v5037
    %v5039 = vrot.slane %v5030, %v5038
    %v5040 = vlaneseq
    %v5041 = vshrl.u32 %v5040, 7
    %v5042 = vsub.s32 2, %v5041
    %v5043 = vrot.slane %v5030, %v5042
    %v5044 = vlaneseq
    %v5045 = vshrl.u32 %v5044, 7
    %v5046 = vsub.s32 3, %v5045
    %v5047 = vrot.slane %v5030, %v5046
    %5052 = vmatprep.subr.bf16.mxu0 %v4775
    %5053 = vmatpush1.bf16.msra.mxu0 %v4774
    %5054 = vmatprep.subr.bf16.mxu0 %v4779
    %5055 = vmatpush1.bf16.msra.mxu0 %v4778
    %5056 = vmatprep.subr.bf16.mxu0 %v4783
    %5057 = vmatpush1.bf16.msra.mxu0 %v4782
    %5058 = vmatprep.subr.bf16.mxu0 %v4787
    %5059 = vmatpush1.bf16.msra.mxu0 %v4786
    %5060 = vmatprep.subr.bf16.mxu0 %v4791
    %5061 = vmatpush1.bf16.msra.mxu0 %v4790
    %5062 = vmatprep.subr.bf16.mxu0 %v4795
    %5063 = vmatpush1.bf16.msra.mxu0 %v4794
    %5064 = vmatprep.subr.bf16.mxu0 %v4799
    %5065 = vmatpush1.bf16.msra.mxu0 %v4798
    %5066 = vmatprep.subr.bf16.mxu0 %v4803
    %5067 = vmatpush1.bf16.msra.mxu0 %v4802
    %5068 = vmatprep.subr.bf16.mxu0 %v4807
    %5069 = vmatpush1.bf16.msra.mxu0 %v4806
    %5070 = vmatprep.subr.bf16.mxu0 %v4811
    %5071 = vmatpush1.bf16.msra.mxu0 %v4810
    %5072 = vmatprep.subr.bf16.mxu0 %v4815
    %5073 = vmatpush1.bf16.msra.mxu0 %v4814
    %5074 = vmatprep.subr.bf16.mxu0 %v4819
    %5075 = vmatpush1.bf16.msra.mxu0 %v4818
    %5076 = vmatprep.subr.bf16.mxu0 %v4823
    %5077 = vmatpush1.bf16.msra.mxu0 %v4822
    %5078 = vmatprep.subr.bf16.mxu0 %v4827
    %5079 = vmatpush1.bf16.msra.mxu0 %v4826
    %5080 = vmatprep.subr.bf16.mxu0 %v4831
    %5081 = vmatpush1.bf16.msra.mxu0 %v4830
    %5082 = vmatprep.subr.bf16.mxu0 %v4835
    %5083 = vmatpush1.bf16.msra.mxu0 %v4834
    %5084 = vmatprep.mubr.bf16.mxu0 %v4767
    %5085 = vmatmul.mubr.bf16.gmra.mrb[0].mxu0 %v4766
    %v5086 = vpop.f32.mrb[0].mxu0
    %v5087 = vadd.f32 %v5035, %v5086
    %v5088 = vpop.f32.mrb[0].mxu0
    %v5089 = vadd.f32 %v5039, %v5088
    %v5090 = vpop.f32.mrb[0].mxu0
    %v5091 = vpop.f32.mrb[0].mxu0
    %5092 = vdwg.mxu0
    %5093 = vmatprep.subr.bf16.mxu0 %v4839
    %5094 = vmatpush1.bf16.msra.mxu0 %v4838
    %5095 = vmatprep.subr.bf16.mxu0 %v4843
    %5096 = vmatpush1.bf16.msra.mxu0 %v4842
    %5097 = vmatprep.subr.bf16.mxu0 %v4847
    %5098 = vmatpush1.bf16.msra.mxu0 %v4846
    %5099 = vmatprep.subr.bf16.mxu0 %v4851
    %5100 = vmatpush1.bf16.msra.mxu0 %v4850
    %5101 = vmatprep.subr.bf16.mxu0 %v4855
    %5102 = vmatpush1.bf16.msra.mxu0 %v4854
    %5103 = vmatprep.subr.bf16.mxu0 %v4859
    %5104 = vmatpush1.bf16.msra.mxu0 %v4858
    %5105 = vmatprep.subr.bf16.mxu0 %v4863
    %5106 = vmatpush1.bf16.msra.mxu0 %v4862
    %5107 = vmatprep.subr.bf16.mxu0 %v4867
    %5108 = vmatpush1.bf16.msra.mxu0 %v4866
    %5109 = vmatprep.subr.bf16.mxu0 %v4871
    %5110 = vmatpush1.bf16.msra.mxu0 %v4870
    %5111 = vmatprep.subr.bf16.mxu0 %v4875
    %5112 = vmatpush1.bf16.msra.mxu0 %v4874
    %5113 = vmatprep.subr.bf16.mxu0 %v4879
    %5114 = vmatpush1.bf16.msra.mxu0 %v4878
    %5115 = vmatprep.subr.bf16.mxu0 %v4883
    %5116 = vmatpush1.bf16.msra.mxu0 %v4882
    %5117 = vmatprep.subr.bf16.mxu0 %v4887
    %5118 = vmatpush1.bf16.msra.mxu0 %v4886
    %5119 = vmatprep.subr.bf16.mxu0 %v4891
    %5120 = vmatpush1.bf16.msra.mxu0 %v4890
    %5121 = vmatprep.subr.bf16.mxu0 %v4895
    %5122 = vmatpush1.bf16.msra.mxu0 %v4894
    %5123 = vmatprep.subr.bf16.mxu0 %v4899
    %5124 = vmatpush1.bf16.msra.mxu0 %v4898
    %5125 = vmatprep.mubr.bf16.mxu0 %v4769
    %5126 = vmatmul.mubr.bf16.gmra.mrb[0].mxu0 %v4768
    %v5127 = vpop.f32.mrb[0].mxu0
    %v5128 = vadd.f32 %v5087, %v5127
    %v5129 = vpop.f32.mrb[0].mxu0
    %v5130 = vadd.f32 %v5089, %v5129
    %v5131 = vpop.f32.mrb[0].mxu0
    %v5132 = vpop.f32.mrb[0].mxu0
    %5133 = vdwg.mxu0
    %5134 = vmatprep.subr.bf16.mxu0 %v4903
    %5135 = vmatpush1.bf16.msra.mxu0 %v4902
    %5136 = vmatprep.subr.bf16.mxu0 %v4907
    %5137 = vmatpush1.bf16.msra.mxu0 %v4906
    %5138 = vmatprep.subr.bf16.mxu0 %v4911
    %5139 = vmatpush1.bf16.msra.mxu0 %v4910
    %5140 = vmatprep.subr.bf16.mxu0 %v4915
    %5141 = vmatpush1.bf16.msra.mxu0 %v4914
    %5142 = vmatprep.subr.bf16.mxu0 %v4919
    %5143 = vmatpush1.bf16.msra.mxu0 %v4918
    %5144 = vmatprep.subr.bf16.mxu0 %v4923
    %5145 = vmatpush1.bf16.msra.mxu0 %v4922
    %5146 = vmatprep.subr.bf16.mxu0 %v4927
    %5147 = vmatpush1.bf16.msra.mxu0 %v4926
    %5148 = vmatprep.subr.bf16.mxu0 %v4931
    %5149 = vmatpush1.bf16.msra.mxu0 %v4930
    %5150 = vmatprep.subr.bf16.mxu0 %v4935
    %5151 = vmatpush1.bf16.msra.mxu0 %v4934
    %5152 = vmatprep.subr.bf16.mxu0 %v4939
    %5153 = vmatpush1.bf16.msra.mxu0 %v4938
    %5154 = vmatprep.subr.bf16.mxu0 %v4943
    %5155 = vmatpush1.bf16.msra.mxu0 %v4942
    %5156 = vmatprep.subr.bf16.mxu0 %v4947
    %5157 = vmatpush1.bf16.msra.mxu0 %v4946
    %5158 = vmatprep.subr.bf16.mxu0 %v4951
    %5159 = vmatpush1.bf16.msra.mxu0 %v4950
    %5160 = vmatprep.subr.bf16.mxu0 %v4955
    %5161 = vmatpush1.bf16.msra.mxu0 %v4954
    %5162 = vmatprep.subr.bf16.mxu0 %v4959
    %5163 = vmatpush1.bf16.msra.mxu0 %v4958
    %5164 = vmatprep.subr.bf16.mxu0 %v4963
    %5165 = vmatpush1.bf16.msra.mxu0 %v4962
    %5166 = vmatprep.mubr.bf16.mxu0 %v4771
    %5167 = vmatmul.mubr.bf16.gmra.mrb[0].mxu0 %v4770
    %v5168 = vpop.f32.mrb[0].mxu0
    %v5169 = vadd.f32 %v5128, %v5168
    %v5170 = vpop.f32.mrb[0].mxu0
    %v5171 = vadd.f32 %v5130, %v5170
    %v5172 = vpop.f32.mrb[0].mxu0
    %v5173 = vpop.f32.mrb[0].mxu0
    %5174 = vdwg.mxu0
    %5175 = vmatprep.subr.bf16.mxu0 %v4967
    %5176 = vmatpush1.bf16.msra.mxu0 %v4966
    %5177 = vmatprep.subr.bf16.mxu0 %v4971
    %5178 = vmatpush1.bf16.msra.mxu0 %v4970
    %5179 = vmatprep.subr.bf16.mxu0 %v4975
    %5180 = vmatpush1.bf16.msra.mxu0 %v4974
    %5181 = vmatprep.subr.bf16.mxu0 %v4979
    %5182 = vmatpush1.bf16.msra.mxu0 %v4978
    %5183 = vmatprep.subr.bf16.mxu0 %v4983
    %5184 = vmatpush1.bf16.msra.mxu0 %v4982
    %5185 = vmatprep.subr.bf16.mxu0 %v4987
    %5186 = vmatpush1.bf16.msra.mxu0 %v4986
    %5187 = vmatprep.subr.bf16.mxu0 %v4991
    %5188 = vmatpush1.bf16.msra.mxu0 %v4990
    %5189 = vmatprep.subr.bf16.mxu0 %v4995
    %5190 = vmatpush1.bf16.msra.mxu0 %v4994
    %5191 = vmatprep.subr.bf16.mxu0 %v4999
    %5192 = vmatpush1.bf16.msra.mxu0 %v4998
    %5193 = vmatprep.subr.bf16.mxu0 %v5003
    %5194 = vmatpush1.bf16.msra.mxu0 %v5002
    %5195 = vmatprep.subr.bf16.mxu0 %v5007
    %5196 = vmatpush1.bf16.msra.mxu0 %v5006
    %5197 = vmatprep.subr.bf16.mxu0 %v5011
    %5198 = vmatpush1.bf16.msra.mxu0 %v5010
    %5199 = vmatprep.subr.bf16.mxu0 %v5015
    %5200 = vmatpush1.bf16.msra.mxu0 %v5014
    %5201 = vmatprep.subr.bf16.mxu0 %v5019
    %5202 = vmatpush1.bf16.msra.mxu0 %v5018
    %5203 = vmatprep.subr.bf16.mxu0 %v5023
    %5204 = vmatpush1.bf16.msra.mxu0 %v5022
    %5205 = vmatprep.subr.bf16.mxu0 %v5027
    %5206 = vmatpush1.bf16.msra.mxu0 %v5026
    %5207 = vmatprep.mubr.bf16.mxu0 %v4773
    %5208 = vmatmul.mubr.bf16.gmra.mrb[0].mxu0 %v4772
    %v5209 = vpop.f32.mrb[0].mxu0
    %v5210 = vadd.f32 %v5169, %v5209
    %v5211 = vpop.f32.mrb[0].mxu0
    %v5212 = vadd.f32 %v5171, %v5211
    %v5213 = vpop.f32.mrb[0].mxu0
    %v5214 = vpop.f32.mrb[0].mxu0
    %5215 = vdwg.mxu0
    %5216 = vmatprep.subr.bf16.mxu0 %v4777
    %5217 = vmatpush1.bf16.msra.mxu0 %v4776
    %5218 = vmatprep.subr.bf16.mxu0 %v4781
    %5219 = vmatpush1.bf16.msra.mxu0 %v4780
    %5220 = vmatprep.subr.bf16.mxu0 %v4785
    %5221 = vmatpush1.bf16.msra.mxu0 %v4784
    %5222 = vmatprep.subr.bf16.mxu0 %v4789
    %5223 = vmatpush1.bf16.msra.mxu0 %v4788
    %5224 = vmatprep.subr.bf16.mxu0 %v4793
    %5225 = vmatpush1.bf16.msra.mxu0 %v4792
    %5226 = vmatprep.subr.bf16.mxu0 %v4797
    %5227 = vmatpush1.bf16.msra.mxu0 %v4796
    %5228 = vmatprep.subr.bf16.mxu0 %v4801
    %5229 = vmatpush1.bf16.msra.mxu0 %v4800
    %5230 = vmatprep.subr.bf16.mxu0 %v4805
    %5231 = vmatpush1.bf16.msra.mxu0 %v4804
    %5232 = vmatprep.subr.bf16.mxu0 %v4809
    %5233 = vmatpush1.bf16.msra.mxu0 %v4808
    %5234 = vmatprep.subr.bf16.mxu0 %v4813
    %5235 = vmatpush1.bf16.msra.mxu0 %v4812
    %5236 = vmatprep.subr.bf16.mxu0 %v4817
    %5237 = vmatpush1.bf16.msra.mxu0 %v4816
    %5238 = vmatprep.subr.bf16.mxu0 %v4821
    %5239 = vmatpush1.bf16.msra.mxu0 %v4820
    %5240 = vmatprep.subr.bf16.mxu0 %v4825
    %5241 = vmatpush1.bf16.msra.mxu0 %v4824
    %5242 = vmatprep.subr.bf16.mxu0 %v4829
    %5243 = vmatpush1.bf16.msra.mxu0 %v4828
    %5244 = vmatprep.subr.bf16.mxu0 %v4833
    %5245 = vmatpush1.bf16.msra.mxu0 %v4832
    %5246 = vmatprep.subr.bf16.mxu0 %v4837
    %5247 = vmatpush1.bf16.msra.mxu0 %v4836
    %5248 = vmatprep.mubr.bf16.mxu0 %v4767
    %5249 = vmatmul.mubr.bf16.gmra.mrb[0].mxu0 %v4766
    %v5250 = vpop.f32.mrb[0].mxu0
    %v5251 = vadd.f32 %v5043, %v5250
    %v5252 = vpop.f32.mrb[0].mxu0
    %v5253 = vadd.f32 %v5047, %v5252
    %v5254 = vpop.f32.mrb[0].mxu0
    %v5255 = vpop.f32.mrb[0].mxu0
    %5256 = vdwg.mxu0
    %5257 = vmatprep.subr.bf16.mxu0 %v4841
    %5258 = vmatpush1.bf16.msra.mxu0 %v4840
    %5259 = vmatprep.subr.bf16.mxu0 %v4845
    %5260 = vmatpush1.bf16.msra.mxu0 %v4844
    %5261 = vmatprep.subr.bf16.mxu0 %v4849
    %5262 = vmatpush1.bf16.msra.mxu0 %v4848
    %5263 = vmatprep.subr.bf16.mxu0 %v4853
    %5264 = vmatpush1.bf16.msra.mxu0 %v4852
    %5265 = vmatprep.subr.bf16.mxu0 %v4857
    %5266 = vmatpush1.bf16.msra.mxu0 %v4856
    %5267 = vmatprep.subr.bf16.mxu0 %v4861
    %5268 = vmatpush1.bf16.msra.mxu0 %v4860
    %5269 = vmatprep.subr.bf16.mxu0 %v4865
    %5270 = vmatpush1.bf16.msra.mxu0 %v4864
    %5271 = vmatprep.subr.bf16.mxu0 %v4869
    %5272 = vmatpush1.bf16.msra.mxu0 %v4868
    %5273 = vmatprep.subr.bf16.mxu0 %v4873
    %5274 = vmatpush1.bf16.msra.mxu0 %v4872
    %5275 = vmatprep.subr.bf16.mxu0 %v4877
    %5276 = vmatpush1.bf16.msra.mxu0 %v4876
    %5277 = vmatprep.subr.bf16.mxu0 %v4881
    %5278 = vmatpush1.bf16.msra.mxu0 %v4880
    %5279 = vmatprep.subr.bf16.mxu0 %v4885
    %5280 = vmatpush1.bf16.msra.mxu0 %v4884
    %5281 = vmatprep.subr.bf16.mxu0 %v4889
    %5282 = vmatpush1.bf16.msra.mxu0 %v4888
    %5283 = vmatprep.subr.bf16.mxu0 %v4893
    %5284 = vmatpush1.bf16.msra.mxu0 %v4892
    %5285 = vmatprep.subr.bf16.mxu0 %v4897
    %5286 = vmatpush1.bf16.msra.mxu0 %v4896
    %5287 = vmatprep.subr.bf16.mxu0 %v4901
    %5288 = vmatpush1.bf16.msra.mxu0 %v4900
    %5289 = vmatprep.mubr.bf16.mxu0 %v4769
    %5290 = vmatmul.mubr.bf16.gmra.mrb[0].mxu0 %v4768
    %v5291 = vpop.f32.mrb[0].mxu0
    %v5292 = vadd.f32 %v5251, %v5291
    %v5293 = vpop.f32.mrb[0].mxu0
    %v5294 = vadd.f32 %v5253, %v5293
    %v5295 = vpop.f32.mrb[0].mxu0
    %v5296 = vpop.f32.mrb[0].mxu0
    %5297 = vdwg.mxu0
    %5298 = vmatprep.subr.bf16.mxu0 %v4905
    %5299 = vmatpush1.bf16.msra.mxu0 %v4904
    %5300 = vmatprep.subr.bf16.mxu0 %v4909
    %5301 = vmatpush1.bf16.msra.mxu0 %v4908
    %5302 = vmatprep.subr.bf16.mxu0 %v4913
    %5303 = vmatpush1.bf16.msra.mxu0 %v4912
    %5304 = vmatprep.subr.bf16.mxu0 %v4917
    %5305 = vmatpush1.bf16.msra.mxu0 %v4916
    %5306 = vmatprep.subr.bf16.mxu0 %v4921
    %5307 = vmatpush1.bf16.msra.mxu0 %v4920
    %5308 = vmatprep.subr.bf16.mxu0 %v4925
    %5309 = vmatpush1.bf16.msra.mxu0 %v4924
    %5310 = vmatprep.subr.bf16.mxu0 %v4929
    %5311 = vmatpush1.bf16.msra.mxu0 %v4928
    %5312 = vmatprep.subr.bf16.mxu0 %v4933
    %5313 = vmatpush1.bf16.msra.mxu0 %v4932
    %5314 = vmatprep.subr.bf16.mxu0 %v4937
    %5315 = vmatpush1.bf16.msra.mxu0 %v4936
    %5316 = vmatprep.subr.bf16.mxu0 %v4941
    %5317 = vmatpush1.bf16.msra.mxu0 %v4940
    %5318 = vmatprep.subr.bf16.mxu0 %v4945
    %5319 = vmatpush1.bf16.msra.mxu0 %v4944
    %5320 = vmatprep.subr.bf16.mxu0 %v4949
    %5321 = vmatpush1.bf16.msra.mxu0 %v4948
    %5322 = vmatprep.subr.bf16.mxu0 %v4953
    %5323 = vmatpush1.bf16.msra.mxu0 %v4952
    %5324 = vmatprep.subr.bf16.mxu0 %v4957
    %5325 = vmatpush1.bf16.msra.mxu0 %v4956
    %5326 = vmatprep.subr.bf16.mxu0 %v4961
    %5327 = vmatpush1.bf16.msra.mxu0 %v4960
    %5328 = vmatprep.subr.bf16.mxu0 %v4965
    %5329 = vmatpush1.bf16.msra.mxu0 %v4964
    %5330 = vmatprep.mubr.bf16.mxu0 %v4771
    %5331 = vmatmul.mubr.bf16.gmra.mrb[0].mxu0 %v4770
    %v5332 = vpop.f32.mrb[0].mxu0
    %v5333 = vadd.f32 %v5292, %v5332
    %v5334 = vpop.f32.mrb[0].mxu0
    %v5335 = vadd.f32 %v5294, %v5334
    %v5336 = vpop.f32.mrb[0].mxu0
    %v5337 = vpop.f32.mrb[0].mxu0
    %5338 = vdwg.mxu0
    %5339 = vmatprep.subr.bf16.mxu0 %v4969
    %5340 = vmatpush1.bf16.msra.mxu0 %v4968
    %5341 = vmatprep.subr.bf16.mxu0 %v4973
    %5342 = vmatpush1.bf16.msra.mxu0 %v4972
    %5343 = vmatprep.subr.bf16.mxu0 %v4977
    %5344 = vmatpush1.bf16.msra.mxu0 %v4976
    %5345 = vmatprep.subr.bf16.mxu0 %v4981
    %5346 = vmatpush1.bf16.msra.mxu0 %v4980
    %5347 = vmatprep.subr.bf16.mxu0 %v4985
    %5348 = vmatpush1.bf16.msra.mxu0 %v4984
    %5349 = vmatprep.subr.bf16.mxu0 %v4989
    %5350 = vmatpush1.bf16.msra.mxu0 %v4988
    %5351 = vmatprep.subr.bf16.mxu0 %v4993
    %5352 = vmatpush1.bf16.msra.mxu0 %v4992
    %5353 = vmatprep.subr.bf16.mxu0 %v4997
    %5354 = vmatpush1.bf16.msra.mxu0 %v4996
    %5355 = vmatprep.subr.bf16.mxu0 %v5001
    %5356 = vmatpush1.bf16.msra.mxu0 %v5000
    %5357 = vmatprep.subr.bf16.mxu0 %v5005
    %5358 = vmatpush1.bf16.msra.mxu0 %v5004
    %5359 = vmatprep.subr.bf16.mxu0 %v5009
    %5360 = vmatpush1.bf16.msra.mxu0 %v5008
    %5361 = vmatprep.subr.bf16.mxu0 %v5013
    %5362 = vmatpush1.bf16.msra.mxu0 %v5012
    %5363 = vmatprep.subr.bf16.mxu0 %v5017
    %5364 = vmatpush1.bf16.msra.mxu0 %v5016
    %5365 = vmatprep.subr.bf16.mxu0 %v5021
    %5366 = vmatpush1.bf16.msra.mxu0 %v5020
    %5367 = vmatprep.subr.bf16.mxu0 %v5025
    %5368 = vmatpush1.bf16.msra.mxu0 %v5024
    %5369 = vmatprep.subr.bf16.mxu0 %v5029
    %5370 = vmatpush1.bf16.msra.mxu0 %v5028
    %5371 = vmatprep.mubr.bf16.mxu0 %v4773
    %5372 = vmatmul.mubr.bf16.gmra.mrb[0].mxu0 %v4772
    %v5373 = vpop.f32.mrb[0].mxu0
    %v5374 = vadd.f32 %v5333, %v5373
    %v5375 = vpop.f32.mrb[0].mxu0
    %v5376 = vadd.f32 %v5335, %v5375
    %v5377 = vpop.f32.mrb[0].mxu0
    %v5378 = vpop.f32.mrb[0].mxu0
    %5379 = vdwg.mxu0
    %v5380 = vmax.f32 %v5210, 0.0
    %v5381 = vmax.f32 %v5212, 0.0
    %v5382 = vmax.f32 %v5374, 0.0
    %v5383 = vmax.f32 %v5376, 0.0
    %v5384 = vpack.c.bf16 %v5380, %v5380
    %v5385 = vpack.c.bf16 %v5381, %v5381
    %v5386 = vpack.c.bf16 %v5382, %v5382
    %v5387 = vpack.c.bf16 %v5383, %v5383
    %v5388 = vld [vmem:[#allocation4] sm:$0xff]
    %v5389 = vld [vmem:[#allocation4 + $0x8] sm:$0xff]
    %v5390 = vld [vmem:[#allocation4 + $0x10] sm:$0xff]
    %v5391 = vld [vmem:[#allocation4 + $0x18] sm:$0xff]
    %v5392 = vld [vmem:[#allocation4 + $0x20] sm:$0xff]
    %v5393 = vld [vmem:[#allocation4 + $0x28] sm:$0xff]
    %v5394 = vld [vmem:[#allocation4 + $0x30] sm:$0xff]
    %v5395 = vld [vmem:[#allocation4 + $0x38] sm:$0xff]
    %v5396 = vld [vmem:[#allocation4 + $0x40] sm:$0xff]
    %v5397 = vld [vmem:[#allocation4 + $0x48] sm:$0xff]
    %v5398 = vld [vmem:[#allocation4 + $0x50] sm:$0xff]
    %v5399 = vld [vmem:[#allocation4 + $0x58] sm:$0xff]
    %v5400 = vld [vmem:[#allocation4 + $0x60] sm:$0xff]
    %v5401 = vld [vmem:[#allocation4 + $0x68] sm:$0xff]
    %v5402 = vld [vmem:[#allocation4 + $0x70] sm:$0xff]
    %v5403 = vld [vmem:[#allocation4 + $0x78] sm:$0xff]
    %v5404 = vld [vmem:[#allocation4 + $0x80] sm:$0xff]
    %v5405 = vld [vmem:[#allocation4 + $0x88] sm:$0xff]
    %v5406 = vld [vmem:[#allocation4 + $0x90] sm:$0xff]
    %v5407 = vld [vmem:[#allocation4 + $0x98] sm:$0xff]
    %v5408 = vld [vmem:[#allocation4 + $0xa0] sm:$0xff]
    %v5409 = vld [vmem:[#allocation4 + $0xa8] sm:$0xff]
    %v5410 = vld [vmem:[#allocation4 + $0xb0] sm:$0xff]
    %v5411 = vld [vmem:[#allocation4 + $0xb8] sm:$0xff]
    %v5412 = vld [vmem:[#allocation4 + $0xc0] sm:$0xff]
    %v5413 = vld [vmem:[#allocation4 + $0xc8] sm:$0xff]
    %v5414 = vld [vmem:[#allocation4 + $0xd0] sm:$0xff]
    %v5415 = vld [vmem:[#allocation4 + $0xd8] sm:$0xff]
    %v5416 = vld [vmem:[#allocation4 + $0xe0] sm:$0xff]
    %v5417 = vld [vmem:[#allocation4 + $0xe8] sm:$0xff]
    %v5418 = vld [vmem:[#allocation4 + $0xf0] sm:$0xff]
    %v5419 = vld [vmem:[#allocation4 + $0xf8] sm:$0xff]
    %v5420 = vld [vmem:[%s22] sm:$0x1]
    %v5422 = vlaneseq
    %v5423 = vshrl.u32 %v5422, 7
    %v5424 = vsub.s32 0, %v5423
    %v5425 = vrot.slane %v5420, %v5424
    %5427 = vmatprep.subr.bf16.mxu0 0
    %5428 = vmatpush1.bf16.msra.mxu0 %v5388
    %5429 = vmatprep.subr.bf16.mxu0 0
    %5430 = vmatpush1.bf16.msra.mxu0 %v5389
    %5431 = vmatprep.subr.bf16.mxu0 0
    %5432 = vmatpush1.bf16.msra.mxu0 %v5390
    %5433 = vmatprep.subr.bf16.mxu0 0
    %5434 = vmatpush1.bf16.msra.mxu0 %v5391
    %5435 = vmatprep.subr.bf16.mxu0 0
    %5436 = vmatpush1.bf16.msra.mxu0 %v5392
    %5437 = vmatprep.subr.bf16.mxu0 0
    %5438 = vmatpush1.bf16.msra.mxu0 %v5393
    %5439 = vmatprep.subr.bf16.mxu0 0
    %5440 = vmatpush1.bf16.msra.mxu0 %v5394
    %5441 = vmatprep.subr.bf16.mxu0 0
    %5442 = vmatpush1.bf16.msra.mxu0 %v5395
    %5443 = vmatprep.subr.bf16.mxu0 0
    %5444 = vmatpush1.bf16.msra.mxu0 %v5396
    %5445 = vmatprep.subr.bf16.mxu0 0
    %5446 = vmatpush1.bf16.msra.mxu0 %v5397
    %5447 = vmatprep.subr.bf16.mxu0 0
    %5448 = vmatpush1.bf16.msra.mxu0 %v5398
    %5449 = vmatprep.subr.bf16.mxu0 0
    %5450 = vmatpush1.bf16.msra.mxu0 %v5399
    %5451 = vmatprep.subr.bf16.mxu0 0
    %5452 = vmatpush1.bf16.msra.mxu0 %v5400
    %5453 = vmatprep.subr.bf16.mxu0 0
    %5454 = vmatpush1.bf16.msra.mxu0 %v5401
    %5455 = vmatprep.subr.bf16.mxu0 0
    %5456 = vmatpush1.bf16.msra.mxu0 %v5402
    %5457 = vmatprep.subr.bf16.mxu0 0
    %5458 = vmatpush1.bf16.msra.mxu0 %v5403
    %5459 = vmatprep.mubr.bf16.mxu0 %v5385
    %5460 = vmatmul.mubr.bf16.gmra.mrb[0].mxu0 %v5384
    %v5461 = vpop.f32.mrb[0].mxu0
    %v5462 = vadd.f32 %v5425, %v5461
    %v5463 = vpop.f32.mrb[0].mxu0
    %v5464 = vpop.f32.mrb[0].mxu0
    %v5465 = vpop.f32.mrb[0].mxu0
    %5466 = vdwg.mxu0
    %5467 = vmatprep.subr.bf16.mxu0 0
    %5468 = vmatpush1.bf16.msra.mxu0 %v5404
    %5469 = vmatprep.subr.bf16.mxu0 0
    %5470 = vmatpush1.bf16.msra.mxu0 %v5405
    %5471 = vmatprep.subr.bf16.mxu0 0
    %5472 = vmatpush1.bf16.msra.mxu0 %v5406
    %5473 = vmatprep.subr.bf16.mxu0 0
    %5474 = vmatpush1.bf16.msra.mxu0 %v5407
    %5475 = vmatprep.subr.bf16.mxu0 0
    %5476 = vmatpush1.bf16.msra.mxu0 %v5408
    %5477 = vmatprep.subr.bf16.mxu0 0
    %5478 = vmatpush1.bf16.msra.mxu0 %v5409
    %5479 = vmatprep.subr.bf16.mxu0 0
    %5480 = vmatpush1.bf16.msra.mxu0 %v5410
    %5481 = vmatprep.subr.bf16.mxu0 0
    %5482 = vmatpush1.bf16.msra.mxu0 %v5411
    %5483 = vmatprep.subr.bf16.mxu0 0
    %5484 = vmatpush1.bf16.msra.mxu0 %v5412
    %5485 = vmatprep.subr.bf16.mxu0 0
    %5486 = vmatpush1.bf16.msra.mxu0 %v5413
    %5487 = vmatprep.subr.bf16.mxu0 0
    %5488 = vmatpush1.bf16.msra.mxu0 %v5414
    %5489 = vmatprep.subr.bf16.mxu0 0
    %5490 = vmatpush1.bf16.msra.mxu0 %v5415
    %5491 = vmatprep.subr.bf16.mxu0 0
    %5492 = vmatpush1.bf16.msra.mxu0 %v5416
    %5493 = vmatprep.subr.bf16.mxu0 0
    %5494 = vmatpush1.bf16.msra.mxu0 %v5417
    %5495 = vmatprep.subr.bf16.mxu0 0
    %5496 = vmatpush1.bf16.msra.mxu0 %v5418
    %5497 = vmatprep.subr.bf16.mxu0 0
    %5498 = vmatpush1.bf16.msra.mxu0 %v5419
    %5499 = vmatprep.mubr.bf16.mxu0 %v5387
    %5500 = vmatmul.mubr.bf16.gmra.mrb[0].mxu0 %v5386
    %v5501 = vpop.f32.mrb[0].mxu0
    %v5502 = vadd.f32 %v5462, %v5501
    %v5503 = vpop.f32.mrb[0].mxu0
    %v5504 = vpop.f32.mrb[0].mxu0
    %v5505 = vpop.f32.mrb[0].mxu0
    %5506 = vdwg.mxu0
    %5507 = vst [vmem:[#allocation26] sm:$0x3] %v5502
    // Predicated region
    $region146: #{tpu_custom_call.1} parent=1 // pred_check
      _
    $region147: #{tpu_custom_call.1} parent=1 // pred_check_branch
      %5509 = sbr.rel (0) target = $region149
    $region148: #{tpu_custom_call.1} parent=1 // pred_region
      %s5511 = ssub.s32 32, 32
      %5512 = vsyncadd [#allocation8], %s5511
      %s5514 = sshll.u32 [#allocation26], 4
      %s5515 = int_to_ptr.vmem [resolvable:$true] %s5514
      %5517 = dma.vmem_to_hbm [thread:$0]  %s5515, 32, %s26, [#allocation8]
    $region149: #{tpu_custom_call.1} parent=1 // pred_fallthru
      _
    // Predicated region
    $region150: #{tpu_custom_call.1} parent=1 // pred_check
      _
    $region151: #{tpu_custom_call.1} parent=1 // pred_check_branch
      %5519 = sbr.rel (0) target = $region153
    $region152: #{tpu_custom_call.1} parent=1 // pred_region
      %5520 = dma.done [#allocation8], 32
    $region153: #{tpu_custom_call.1} parent=1 // pred_fallthru
      _
    %5521 = vsyncpa [#allocation7], 1
    %5522 = vsyncpa [#allocation10], 1
    %5523 = vsyncpa [#allocation13], 1
    %5524 = vsyncpa [#allocation16], 1
    %5525 = vsyncpa [#allocation19], 1
    %5526 = vsyncpa [#allocation22], 1
    %5527 = vsyncpa [#allocation25], 1
    %5528 = vsyncpa [#allocation8], 1
  %5529 = vsyncmov [#allocation5]
  %s5530 = vpop.sfrf %5529
  %p5531 = scmp.eq.s32.totalorder %s5530, 0
  %p5532 = pneg %p5531
  %5534 = shalt.err (%p5532)
  %s5535 = scalar_lea.sflag [#allocation5], 1
  %5536 = vsyncmov %s5535
  %s5537 = vpop.sfrf %5536
  %p5538 = scmp.eq.s32.totalorder %s5537, 0
  %p5539 = pneg %p5538
  %5541 = shalt.err (%p5539)
  %s5542 = scalar_lea.sflag [#allocation5], 2
  %5543 = vsyncmov %s5542
  %s5544 = vpop.sfrf %5543
  %p5545 = scmp.eq.s32.totalorder %s5544, 0
  %p5546 = pneg %p5545
  %5548 = shalt.err (%p5546)

</llo_original>
